<compile_context>
chip_gen: v7x
topology: tpu7x:2x2x1
jax: 0.10.0
libtpu: 0.0.40
codegen_flags: <defaults>
</compile_context>

<pallas_src>
import math
import functools

import jax
import jax.numpy as jnp
from jax.experimental import pallas as pl
from jax.experimental.pallas import tpu as pltpu

# ---- model constants (the PyTorch file leaves these undefined; chosen so the
#      residual connections in PlayerModel / PreviousSeasonsModel are shape-valid) ----
NUM_PLAYER_FEATURES = 8
NUM_OPP_META_FEATURES = 4
FEAT = NUM_PLAYER_FEATURES * NUM_OPP_META_FEATURES            # 32
ONE_SEASON_OUTPUT_N = 32
PREVIOUS_SEASONS_OUTPUT_N = 32
PLAYER_MODEL_OUTPUT_N = ONE_SEASON_OUTPUT_N + PREVIOUS_SEASONS_OUTPUT_N   # 64 == d_model
D_MODEL = PLAYER_MODEL_OUTPUT_N
NHEAD = 4
HEAD_DIM = D_MODEL // NHEAD                                   # 16
FFN_DIM = 2048                                                # TransformerEncoderLayer default
EPS = 1e-5                                                    # nn.LayerNorm default eps

# ---- packed-parameter layout --------------------------------------------------------
# wslab: player-pipeline weight matrices stacked by rows, zero-padded to 128 lanes.
W_TE, W_TO, W_PE, W_PO, W_F1, W_F2 = 0, 32, 96, 128, 160, 224   # row offsets (x8 aligned)
WSLAB_ROWS = 352
# vslab: every bias / LN gamma,beta / attn-pool vector / means / stds — one per 128-lane row.
(R_MEANS, R_STDS,
 R_TE_B, R_TE_G, R_TE_BE,
 R_TA_W, R_TA_B,
 R_TO_B, R_TO_G, R_TO_BE,
 R_PE_B, R_PE_G, R_PE_BE,
 R_PA_W, R_PA_B,
 R_PO_B, R_PO_G, R_PO_BE,
 R_F1_B, R_F1_G, R_F1_BE,
 R_F2_B, R_F2_G, R_F2_BE,
 R_BO,
 R_LN1_G, R_LN1_B, R_LN2_G, R_LN2_B,
 R_B2) = range(30)
VSLAB_ROWS = 32   # 30 used, padded to a multiple of 8


# --------------------------------------------------------------------------------------
# in-kernel helpers (traced inside the Pallas body)
# --------------------------------------------------------------------------------------
def _layernorm(h, g, b):
    mu = jnp.mean(h, axis=-1, keepdims=True)
    var = jnp.mean((h - mu) ** 2, axis=-1, keepdims=True)
    return (h - mu) * jax.lax.rsqrt(var + EPS) * g + b


def _attn_pool_grouped(x, aw_row, ab):
    # x: (P, S, Dm). AttentionPooling per player: scores via VPU multiply + lane reduce,
    # softmax over the season/game axis (axis=1), weighted sum of rows.
    s = jnp.sum(x * aw_row, axis=-1, keepdims=True) + ab          # (P, S, 1)
    s = s - jnp.max(s, axis=1, keepdims=True)
    e = jnp.exp(s)
    w = e / jnp.sum(e, axis=1, keepdims=True)
    return jnp.sum(w * x, axis=1)                                 # (P, Dm)


def _to_groups(x, groups):
    # (G*R, Dm) -> (G, R, Dm).  When R is a multiple of 8 the reshape is a free re-view
    # (whole sublane tiles); otherwise fall back to major-axis stacking of row slices.
    rows = x.shape[0] // groups
    if rows % 8 == 0:
        return x.reshape(groups, rows, x.shape[1])
    return jnp.stack([x[i * rows:(i + 1) * rows, :] for i in range(groups)], axis=0)


# --------------------------------------------------------------------------------------
# the single fused kernel
# --------------------------------------------------------------------------------------
def team_kernel(this_ref, prev_ref, wslab_ref, vslab_ref, attnw_ref, attnb_ref,
                b1_ref, w1_hbm, w2_hbm,
                out_ref,
                w1_buf, w2_buf, dma_sem, pemb,
                *, num_players, this_games, num_prev):
    P, S, NP = num_players, this_games, num_prev
    D = D_MODEL

    # ---- kick off the FFN-weight prefetch immediately (HBM -> VMEM); wait before FFN ----
    cp1 = pltpu.make_async_copy(w1_hbm, w1_buf, dma_sem.at[0])
    cp2 = pltpu.make_async_copy(w2_hbm, w2_buf, dma_sem.at[1])
    cp1.start()
    cp2.start()

    def vrow(r, d):                       # one packed vector row  -> (1, d)
        return vslab_ref[r:r + 1, 0:d]

    def wblk(r0, din, dout):              # one packed weight block -> (din, dout)
        return wslab_ref[r0:r0 + din, 0:dout]

    def linear_cell(x, r0, din, dout, rb):
        # LinearCell: LayerNorm(ReLU(x @ W + b)); Dropout == identity in eval
        h = jnp.dot(x, wblk(r0, din, dout), preferred_element_type=jnp.float32) + vrow(rb, dout)
        return _layernorm(jnp.maximum(h, 0.0), vrow(rb + 1, dout), vrow(rb + 2, dout))

    means = vrow(R_MEANS, FEAT)
    stds = vrow(R_STDS, FEAT)

    # ---- OneSeasonModel, all players batched: (P*S, FEAT) ----
    xt = (this_ref[...] - means) / stds
    emb_t = linear_cell(xt, W_TE, FEAT, 64, R_TE_B)                       # (P*S, 64)
    pooled_t = _attn_pool_grouped(_to_groups(emb_t, P),
                                  vrow(R_TA_W, 64), vrow(R_TA_B, 1))      # (P, 64)
    this_out = linear_cell(pooled_t, W_TO, 64, ONE_SEASON_OUTPUT_N, R_TO_B)   # (P, 32)

    # ---- PreviousSeasonsModel, all (player, season) pairs batched ----
    xp = (prev_ref[...] - means) / stds                                   # (P*NP, G, FEAT)
    avgs = jnp.mean(xp, axis=1)                                           # (P*NP, FEAT)
    emb_p = linear_cell(avgs, W_PE, FEAT, 32, R_PE_B)                     # (P*NP, 32)
    ppool = _attn_pool_grouped(_to_groups(emb_p, P),
                               vrow(R_PA_W, 32), vrow(R_PA_B, 1))         # (P, 32)
    prev_out = linear_cell(ppool, W_PO, 32, PREVIOUS_SEASONS_OUTPUT_N, R_PO_B) + ppool

    # ---- PlayerModel head: build player_input in a VMEM scratch (no lane concat) ----
    pemb[:, 0:ONE_SEASON_OUTPUT_N] = this_out
    pemb[:, ONE_SEASON_OUTPUT_N:D] = prev_out
    player_input = pemb[...]                                              # (P, 64)
    h = linear_cell(player_input, W_F1, D, 128, R_F1_B)                   # (P, 128)
    h = linear_cell(h, W_F2, 128, 64, R_F2_B)                             # (P, 64)
    x = h + player_input                                                  # (P, 64) player embeddings

    # ---- TeamModel: simple mean + 1-layer post-norm TransformerEncoder over players ----
    simple_mean = jnp.mean(x, axis=0, keepdims=True)                      # (1, 64)

    # multi-head self-attention, head-batched: weights are stored head-major (H, D, HD),
    # so there are no 16-lane activation slices and no lane concat of the heads.
    xb = jnp.broadcast_to(x[None, :, :], (NHEAD, P, D))                   # (H, P, D)
    q = jnp.einsum('hpd,hdk->hpk', xb, attnw_ref[0:4, :, :],
                   preferred_element_type=jnp.float32) + attnb_ref[0:4, :, :]
    k = jnp.einsum('hpd,hdk->hpk', xb, attnw_ref[4:8, :, :],
                   preferred_element_type=jnp.float32) + attnb_ref[4:8, :, :]
    v = jnp.einsum('hpd,hdk->hpk', xb, attnw_ref[8:12, :, :],
                   preferred_element_type=jnp.float32) + attnb_ref[8:12, :, :]
    s = jnp.einsum('hqk,hpk->hqp', q, k,
                   preferred_element_type=jnp.float32) * (1.0 / math.sqrt(HEAD_DIM))
    s = s - jnp.max(s, axis=-1, keepdims=True)
    e = jnp.exp(s)
    a = e / jnp.sum(e, axis=-1, keepdims=True)                            # (H, P, P)
    ctx = jnp.einsum('hqp,hpk->hqk', a, v, preferred_element_type=jnp.float32)    # (H, P, HD)
    attn = jnp.einsum('hqk,hdk->hqd', ctx, attnw_ref[12:16, :, :],
                      preferred_element_type=jnp.float32)                 # (H, P, D)
    attn_out = jnp.sum(attn, axis=0) + vrow(R_BO, D)                      # (P, D) sum over heads

    x1 = _layernorm(x + attn_out, vrow(R_LN1_G, D), vrow(R_LN1_B, D))

    # ---- FFN: bf16 weights (f32 accumulation); the HBM->VMEM copies started at kernel
    #      entry have been overlapping all of the compute above — wait only now.
    cp1.wait()
    hff = jnp.dot(x1.astype(jnp.bfloat16), w1_buf[...],
                  preferred_element_type=jnp.float32) + b1_ref[...]
    hff = jnp.maximum(hff, 0.0)
    cp2.wait()
    y = jnp.dot(hff.astype(jnp.bfloat16), w2_buf[...],
                preferred_element_type=jnp.float32) + vrow(R_B2, D)
    x2 = _layernorm(x1 + y, vrow(R_LN2_G, D), vrow(R_LN2_B, D))

    out_ref[...] = jnp.mean(x2, axis=0, keepdims=True) + simple_mean


# --------------------------------------------------------------------------------------
# parameter init (deterministic, synthetic; no checkpoint loading)
# --------------------------------------------------------------------------------------
def init_linear(key, din, dout):
    kw, kb = jax.random.split(key)
    lim = 1.0 / math.sqrt(din)
    w = jax.random.uniform(kw, (din, dout), jnp.float32, -lim, lim)   # pre-transposed [in, out]
    b = jax.random.uniform(kb, (1, dout), jnp.float32, -lim, lim)
    return w, b


def init_linear_cell(key, din, dout):
    w, b = init_linear(key, din, dout)
    return dict(w=w, b=b, g=jnp.ones((1, dout), jnp.float32),
                beta=jnp.zeros((1, dout), jnp.float32))


def init_attn_pool(key, din):
    w, b = init_linear(key, din, 1)
    return dict(w=w.T, b=b)          # (1, din) row: VPU multiply + lane reduce


def init_params(key):
    ks = jax.random.split(key, 16)
    D = D_MODEL
    player = dict(
        this=dict(emb=init_linear_cell(ks[0], FEAT, 64),
                  attn=init_attn_pool(ks[1], 64),
                  out=init_linear_cell(ks[2], 64, ONE_SEASON_OUTPUT_N)),
        prev=dict(emb=init_linear_cell(ks[3], FEAT, 32),
                  attn=init_attn_pool(ks[4], 32),
                  out=init_linear_cell(ks[5], 32, PREVIOUS_SEASONS_OUTPUT_N)),
        fc1=init_linear_cell(ks[6], D, 128),
        fc2=init_linear_cell(ks[7], 128, 64),
    )
    wq, bq = init_linear(ks[8], D, D)
    wk, bk = init_linear(ks[9], D, D)
    wv, bv = init_linear(ks[10], D, D)
    wo, bo = init_linear(ks[11], D, D)
    w1, b1 = init_linear(ks[12], D, FFN_DIM)
    w2, b2 = init_linear(ks[13], FFN_DIM, D)
    xf = dict(wq=wq, bq=bq, wk=wk, bk=bk, wv=wv, bv=bv, wo=wo, bo=bo,
              # bf16 halves the only substantial HBM bytes; ~1e-2 rel. deviation vs f32.
              w1=w1.astype(jnp.bfloat16), b1=b1,
              w2=w2.astype(jnp.bfloat16), b2=b2,
              ln1_g=jnp.ones((1, D), jnp.float32), ln1_b=jnp.zeros((1, D), jnp.float32),
              ln2_g=jnp.ones((1, D), jnp.float32), ln2_b=jnp.zeros((1, D), jnp.float32))
    means = (0.1 * jnp.arange(FEAT, dtype=jnp.float32)).reshape(1, FEAT)
    stds = (1.0 + 0.05 * jnp.arange(FEAT, dtype=jnp.float32)).reshape(1, FEAT)
    return dict(player=player, xf=xf, means=means, stds=stds)


def _pad_lanes(a, width=128):
    return jnp.pad(a, ((0, 0), (0, width - a.shape[1])))


def pack_params(params):
    """Pack the ~30 small arrays into 2 f32 slabs + one head-major attention tensor."""
    pp, xf = params["player"], params["xf"]
    D = D_MODEL

    wslab = jnp.concatenate([
        _pad_lanes(pp["this"]["emb"]["w"]),   # W_TE  (32, 64)
        _pad_lanes(pp["this"]["out"]["w"]),   # W_TO  (64, 32)
        _pad_lanes(pp["prev"]["emb"]["w"]),   # W_PE  (32, 32)
        _pad_lanes(pp["prev"]["out"]["w"]),   # W_PO  (32, 32)
        _pad_lanes(pp["fc1"]["w"]),           # W_F1  (64, 128)
        _pad_lanes(pp["fc2"]["w"]),           # W_F2  (128, 64)
    ], axis=0)
    assert wslab.shape == (WSLAB_ROWS, 128)

    vrows = [
        params["means"], params["stds"],
        pp["this"]["emb"]["b"], pp["this"]["emb"]["g"], pp["this"]["emb"]["beta"],
        pp["this"]["attn"]["w"], pp["this"]["attn"]["b"],
        pp["this"]["out"]["b"], pp["this"]["out"]["g"], pp["this"]["out"]["beta"],
        pp["prev"]["emb"]["b"], pp["prev"]["emb"]["g"], pp["prev"]["emb"]["beta"],
        pp["prev"]["attn"]["w"], pp["prev"]["attn"]["b"],
        pp["prev"]["out"]["b"], pp["prev"]["out"]["g"], pp["prev"]["out"]["beta"],
        pp["fc1"]["b"], pp["fc1"]["g"], pp["fc1"]["beta"],
        pp["fc2"]["b"], pp["fc2"]["g"], pp["fc2"]["beta"],
        xf["bo"], xf["ln1_g"], xf["ln1_b"], xf["ln2_g"], xf["ln2_b"], xf["b2"],
    ]
    vslab = jnp.concatenate([_pad_lanes(r) for r in vrows], axis=0)
    vslab = jnp.pad(vslab, ((0, VSLAB_ROWS - vslab.shape[0]), (0, 0)))

    def heads_in(w):     # (D, D) [in, out] -> (H, D, HD): w_h[d, k] = W[d, h*HD + k]
        return w.reshape(D, NHEAD, HEAD_DIM).transpose(1, 0, 2)

    # out-proj stored as (H, D, HD): wo_h[d, k] = Wo[h*HD + k, d]  (contracted over k)
    wo_heads = xf["wo"].reshape(NHEAD, HEAD_DIM, D).transpose(0, 2, 1)
    attn_w = jnp.concatenate([heads_in(xf["wq"]), heads_in(xf["wk"]),
                              heads_in(xf["wv"]), wo_heads], axis=0)      # (16, D, HD)

    def head_bias(b):    # (1, D) -> (H, 1, HD)
        return b.reshape(NHEAD, HEAD_DIM)[:, None, :]

    attn_b = jnp.concatenate([head_bias(xf["bq"]), head_bias(xf["bk"]),
                              head_bias(xf["bv"])], axis=0)               # (12, 1, HD)

    return dict(wslab=wslab, vslab=vslab, attn_w=attn_w, attn_b=attn_b,
                b1=xf["b1"], w1=xf["w1"], w2=xf["w2"])


# --------------------------------------------------------------------------------------
# wrapper: ONE pallas_call for the whole TeamModel forward
# --------------------------------------------------------------------------------------
@jax.jit
def team_forward(packed, this_seasons, prev_seasons):
    # this_seasons: (P, S, NPF, NOMF); prev_seasons: (P, NP, G, NPF, NOMF)
    # TODO(synk): dummy-player / empty-roster / empty-season early-return branches in the
    # PyTorch code are data-dependent Python control flow; inputs here are assumed
    # non-empty and rosters rectangular (same S / NP / G per player) so they can stack.
    P, S = this_seasons.shape[0], this_seasons.shape[1]
    NP, G = prev_seasons.shape[1], prev_seasons.shape[2]
    D = D_MODEL

    this_flat = this_seasons.reshape(P * S, FEAT)
    prev_flat = prev_seasons.reshape(P * NP, G, FEAT)

    vmem = pl.BlockSpec(memory_space=pltpu.MemorySpace.VMEM)
    hbm = pl.BlockSpec(memory_space=pl.ANY)

    kernel = functools.partial(team_kernel, num_players=P, this_games=S, num_prev=NP)
    out = pl.pallas_call(
        kernel,
        out_shape=jax.ShapeDtypeStruct((1, D), jnp.float32),
        in_specs=[vmem, vmem,            # this_flat, prev_flat
                  vmem, vmem,            # wslab, vslab
                  vmem, vmem,            # attn_w, attn_b
                  vmem,                  # b1
                  hbm, hbm],             # w1, w2  (bf16 FFN weights, manually prefetched)
        out_specs=vmem,
        scratch_shapes=[
            pltpu.VMEM((D, FFN_DIM), jnp.bfloat16),    # w1 prefetch buffer
            pltpu.VMEM((FFN_DIM, D), jnp.bfloat16),    # w2 prefetch buffer
            pltpu.SemaphoreType.DMA((2,)),             # one sem per FFN-weight DMA
            pltpu.VMEM((P, D), jnp.float32),           # player_input assembly scratch
        ],
    )(this_flat, prev_flat, packed["wslab"], packed["vslab"],
      packed["attn_w"], packed["attn_b"], packed["b1"],
      packed["w1"], packed["w2"])
    return out                                          # (1, 64)


# --------------------------------------------------------------------------------------
if __name__ == "__main__":
    key = jax.random.PRNGKey(0)
    pkey, k1, k2 = jax.random.split(key, 3)
    params = init_params(pkey)
    packed = pack_params(params)

    NUM_PLAYERS = 4
    THIS_SEASON_GAMES = 8
    NUM_PREV_SEASONS = 2
    PREV_SEASON_GAMES = 6

    this_seasons = jax.random.normal(
        k1, (NUM_PLAYERS, THIS_SEASON_GAMES,
             NUM_PLAYER_FEATURES, NUM_OPP_META_FEATURES), jnp.float32)
    prev_seasons = jax.random.normal(
        k2, (NUM_PLAYERS, NUM_PREV_SEASONS, PREV_SEASON_GAMES,
             NUM_PLAYER_FEATURES, NUM_OPP_META_FEATURES), jnp.float32)

    out = team_forward(packed, this_seasons, prev_seasons)
    out = jax.block_until_ready(out)
    assert out.shape == (1, PLAYER_MODEL_OUTPUT_N)
    print("KERNEL_OK")
</pallas_src>

<mosaic_0001>
module attributes {stable_mosaic.version = 11 : i64} {
  func.func @team_kernel(%arg0: memref<32x32xf32, #tpu.memory_space<vmem>>, %arg1: memref<8x6x32xf32, #tpu.memory_space<vmem>>, %arg2: memref<352x128xf32, #tpu.memory_space<vmem>>, %arg3: memref<32x128xf32, #tpu.memory_space<vmem>>, %arg4: memref<16x64x16xf32, #tpu.memory_space<vmem>>, %arg5: memref<12x1x16xf32, #tpu.memory_space<vmem>>, %arg6: memref<1x2048xf32, #tpu.memory_space<vmem>>, %arg7: memref<64x2048xbf16, #tpu.memory_space<any>>, %arg8: memref<2048x64xbf16, #tpu.memory_space<any>>, %arg9: memref<1x64xf32, #tpu.memory_space<vmem>>, %arg10: memref<64x2048xbf16, #tpu.memory_space<vmem>>, %arg11: memref<2048x64xbf16, #tpu.memory_space<vmem>>, %arg12: memref<2x!tpu.dma_semaphore, #tpu.memory_space<semaphore_mem>>, %arg13: memref<4x64xf32, #tpu.memory_space<vmem>>) attributes {dimension_semantics = [], scalar_prefetch = 0 : i64, scratch_operands = 4 : i64, tpu.core_type = #tpu.core_type<tc>} {
    %c0_i32 = arith.constant 0 : i32
    %0 = tpu.memref_slice %arg12[%c0_i32] : memref<2x!tpu.dma_semaphore, #tpu.memory_space<semaphore_mem>> -> memref<1x!tpu.dma_semaphore, #tpu.memory_space<semaphore_mem>>
    %1 = tpu.memref_squeeze %0 : memref<1x!tpu.dma_semaphore, #tpu.memory_space<semaphore_mem>> -> memref<!tpu.dma_semaphore, #tpu.memory_space<semaphore_mem>>
    tpu.enqueue_dma source(%arg7 : memref<64x2048xbf16, #tpu.memory_space<any>>) target(%arg10 : memref<64x2048xbf16, #tpu.memory_space<vmem>>) target_semaphore(%1 : memref<!tpu.dma_semaphore, #tpu.memory_space<semaphore_mem>>)
    %c1_i32 = arith.constant 1 : i32
    %2 = tpu.memref_slice %arg12[%c1_i32] : memref<2x!tpu.dma_semaphore, #tpu.memory_space<semaphore_mem>> -> memref<1x!tpu.dma_semaphore, #tpu.memory_space<semaphore_mem>>
    %3 = tpu.memref_squeeze %2 : memref<1x!tpu.dma_semaphore, #tpu.memory_space<semaphore_mem>> -> memref<!tpu.dma_semaphore, #tpu.memory_space<semaphore_mem>>
    tpu.enqueue_dma source(%arg8 : memref<2048x64xbf16, #tpu.memory_space<any>>) target(%arg11 : memref<2048x64xbf16, #tpu.memory_space<vmem>>) target_semaphore(%3 : memref<!tpu.dma_semaphore, #tpu.memory_space<semaphore_mem>>)
    %c0 = arith.constant 0 : index
    %c0_0 = arith.constant 0 : index
    %4 = vector.load %arg3[%c0, %c0_0] : memref<32x128xf32, #tpu.memory_space<vmem>>, vector<1x32xf32>
    %c1 = arith.constant 1 : index
    %c0_1 = arith.constant 0 : index
    %5 = vector.load %arg3[%c1, %c0_1] : memref<32x128xf32, #tpu.memory_space<vmem>>, vector<1x32xf32>
    %c0_2 = arith.constant 0 : index
    %c0_3 = arith.constant 0 : index
    %6 = vector.load %arg0[%c0_2, %c0_3] : memref<32x32xf32, #tpu.memory_space<vmem>>, vector<32x32xf32>
    %7 = vector.broadcast %4 : vector<1x32xf32> to vector<32x32xf32>
    %8 = arith.subf %6, %7 : vector<32x32xf32>
    %9 = vector.broadcast %5 : vector<1x32xf32> to vector<32x32xf32>
    %10 = arith.divf %8, %9 : vector<32x32xf32>
    %c0_4 = arith.constant 0 : index
    %c0_5 = arith.constant 0 : index
    %11 = vector.load %arg2[%c0_4, %c0_5] : memref<352x128xf32, #tpu.memory_space<vmem>>, vector<32x64xf32>
    %cst = arith.constant dense<0.000000e+00> : vector<32x64xf32>
    %12 = tpu.matmul %10, %11, %cst {dimension_numbers = #tpu.dot_dimension_numbers<[1], [0], [0], [1], [0, 0, 1, 1], [], []>} : vector<32x32xf32>, vector<32x64xf32>, vector<32x64xf32> -> vector<32x64xf32>
    %c2 = arith.constant 2 : index
    %c0_6 = arith.constant 0 : index
    %13 = vector.load %arg3[%c2, %c0_6] : memref<32x128xf32, #tpu.memory_space<vmem>>, vector<1x64xf32>
    %14 = vector.broadcast %13 : vector<1x64xf32> to vector<32x64xf32>
    %15 = arith.addf %12, %14 : vector<32x64xf32>
    %cst_7 = arith.constant 0.000000e+00 : f32
    %16 = vector.broadcast %cst_7 : f32 to vector<32x64xf32>
    %17 = arith.maximumf %15, %16 : vector<32x64xf32>
    %c3 = arith.constant 3 : index
    %c0_8 = arith.constant 0 : index
    %18 = vector.load %arg3[%c3, %c0_8] : memref<32x128xf32, #tpu.memory_space<vmem>>, vector<1x64xf32>
    %c4 = arith.constant 4 : index
    %c0_9 = arith.constant 0 : index
    %19 = vector.load %arg3[%c4, %c0_9] : memref<32x128xf32, #tpu.memory_space<vmem>>, vector<1x64xf32>
    %cst_10 = arith.constant dense<0.000000e+00> : vector<32xf32>
    %20 = vector.multi_reduction <add>, %17, %cst_10 [1] : vector<32x64xf32> to vector<32xf32>
    %21 = vector.shape_cast %20 : vector<32xf32> to vector<32x1xf32>
    %cst_11 = arith.constant 6.400000e+01 : f32
    %22 = vector.broadcast %cst_11 : f32 to vector<32x1xf32>
    %23 = arith.divf %21, %22 : vector<32x1xf32>
    %24 = vector.broadcast %23 : vector<32x1xf32> to vector<32x64xf32>
    %25 = arith.subf %17, %24 : vector<32x64xf32>
    %26 = arith.mulf %25, %25 : vector<32x64xf32>
    %cst_12 = arith.constant dense<0.000000e+00> : vector<32xf32>
    %27 = vector.multi_reduction <add>, %26, %cst_12 [1] : vector<32x64xf32> to vector<32xf32>
    %28 = vector.shape_cast %27 : vector<32xf32> to vector<32x1xf32>
    %cst_13 = arith.constant 6.400000e+01 : f32
    %29 = vector.broadcast %cst_13 : f32 to vector<32x1xf32>
    %30 = arith.divf %28, %29 : vector<32x1xf32>
    %31 = vector.broadcast %23 : vector<32x1xf32> to vector<32x64xf32>
    %32 = arith.subf %17, %31 : vector<32x64xf32>
    %cst_14 = arith.constant 9.99999974E-6 : f32
    %33 = vector.broadcast %cst_14 : f32 to vector<32x1xf32>
    %34 = arith.addf %30, %33 : vector<32x1xf32>
    %35 = math.rsqrt %34 : vector<32x1xf32>
    %36 = vector.broadcast %35 : vector<32x1xf32> to vector<32x64xf32>
    %37 = arith.mulf %32, %36 : vector<32x64xf32>
    %38 = vector.broadcast %18 : vector<1x64xf32> to vector<32x64xf32>
    %39 = arith.mulf %37, %38 : vector<32x64xf32>
    %40 = vector.broadcast %19 : vector<1x64xf32> to vector<32x64xf32>
    %41 = arith.addf %39, %40 : vector<32x64xf32>
    %42 = vector.shape_cast %41 : vector<32x64xf32> to vector<4x8x64xf32>
    %c5 = arith.constant 5 : index
    %c0_15 = arith.constant 0 : index
    %43 = vector.load %arg3[%c5, %c0_15] : memref<32x128xf32, #tpu.memory_space<vmem>>, vector<1x64xf32>
    %c6 = arith.constant 6 : index
    %c0_16 = arith.constant 0 : index
    %44 = vector.load %arg3[%c6, %c0_16] : memref<32x128xf32, #tpu.memory_space<vmem>>, vector<1x1xf32>
    %45 = vector.shape_cast %43 : vector<1x64xf32> to vector<1x1x64xf32>
    %46 = vector.broadcast %45 : vector<1x1x64xf32> to vector<4x8x64xf32>
    %47 = arith.mulf %42, %46 : vector<4x8x64xf32>
    %cst_17 = arith.constant dense<0.000000e+00> : vector<4x8xf32>
    %48 = vector.multi_reduction <add>, %47, %cst_17 [2] : vector<4x8x64xf32> to vector<4x8xf32>
    %49 = vector.shape_cast %48 : vector<4x8xf32> to vector<4x8x1xf32>
    %50 = vector.shape_cast %44 : vector<1x1xf32> to vector<1x1x1xf32>
    %51 = vector.broadcast %50 : vector<1x1x1xf32> to vector<4x8x1xf32>
    %52 = arith.addf %49, %51 : vector<4x8x1xf32>
    %cst_18 = arith.constant dense<0xFF800000> : vector<4x1xf32>
    %53 = vector.multi_reduction <maximumf>, %52, %cst_18 [1] : vector<4x8x1xf32> to vector<4x1xf32>
    %54 = vector.shape_cast %53 : vector<4x1xf32> to vector<4x1x1xf32>
    %55 = vector.broadcast %54 : vector<4x1x1xf32> to vector<4x8x1xf32>
    %56 = arith.subf %52, %55 : vector<4x8x1xf32>
    %57 = math.exp %56 : vector<4x8x1xf32>
    %cst_19 = arith.constant dense<0.000000e+00> : vector<4x1xf32>
    %58 = vector.multi_reduction <add>, %57, %cst_19 [1] : vector<4x8x1xf32> to vector<4x1xf32>
    %59 = vector.shape_cast %58 : vector<4x1xf32> to vector<4x1x1xf32>
    %60 = vector.broadcast %59 : vector<4x1x1xf32> to vector<4x8x1xf32>
    %61 = arith.divf %57, %60 : vector<4x8x1xf32>
    %62 = vector.broadcast %61 : vector<4x8x1xf32> to vector<4x8x64xf32>
    %63 = arith.mulf %62, %42 : vector<4x8x64xf32>
    %cst_20 = arith.constant dense<0.000000e+00> : vector<4x64xf32>
    %64 = vector.multi_reduction <add>, %63, %cst_20 [1] : vector<4x8x64xf32> to vector<4x64xf32>
    %c32 = arith.constant 32 : index
    %c0_21 = arith.constant 0 : index
    %65 = vector.load %arg2[%c32, %c0_21] : memref<352x128xf32, #tpu.memory_space<vmem>>, vector<64x32xf32>
    %cst_22 = arith.constant dense<0.000000e+00> : vector<4x32xf32>
    %66 = tpu.matmul %64, %65, %cst_22 {dimension_numbers = #tpu.dot_dimension_numbers<[1], [0], [0], [1], [0, 0, 1, 1], [], []>} : vector<4x64xf32>, vector<64x32xf32>, vector<4x32xf32> -> vector<4x32xf32>
    %c7 = arith.constant 7 : index
    %c0_23 = arith.constant 0 : index
    %67 = vector.load %arg3[%c7, %c0_23] : memref<32x128xf32, #tpu.memory_space<vmem>>, vector<1x32xf32>
    %68 = vector.broadcast %67 : vector<1x32xf32> to vector<4x32xf32>
    %69 = arith.addf %66, %68 : vector<4x32xf32>
    %cst_24 = arith.constant 0.000000e+00 : f32
    %70 = vector.broadcast %cst_24 : f32 to vector<4x32xf32>
    %71 = arith.maximumf %69, %70 : vector<4x32xf32>
    %c8 = arith.constant 8 : index
    %c0_25 = arith.constant 0 : index
    %72 = vector.load %arg3[%c8, %c0_25] : memref<32x128xf32, #tpu.memory_space<vmem>>, vector<1x32xf32>
    %c9 = arith.constant 9 : index
    %c0_26 = arith.constant 0 : index
    %73 = vector.load %arg3[%c9, %c0_26] : memref<32x128xf32, #tpu.memory_space<vmem>>, vector<1x32xf32>
    %cst_27 = arith.constant dense<0.000000e+00> : vector<4xf32>
    %74 = vector.multi_reduction <add>, %71, %cst_27 [1] : vector<4x32xf32> to vector<4xf32>
    %75 = vector.shape_cast %74 : vector<4xf32> to vector<4x1xf32>
    %cst_28 = arith.constant 3.200000e+01 : f32
    %76 = vector.broadcast %cst_28 : f32 to vector<4x1xf32>
    %77 = arith.divf %75, %76 : vector<4x1xf32>
    %78 = vector.broadcast %77 : vector<4x1xf32> to vector<4x32xf32>
    %79 = arith.subf %71, %78 : vector<4x32xf32>
    %80 = arith.mulf %79, %79 : vector<4x32xf32>
    %cst_29 = arith.constant dense<0.000000e+00> : vector<4xf32>
    %81 = vector.multi_reduction <add>, %80, %cst_29 [1] : vector<4x32xf32> to vector<4xf32>
    %82 = vector.shape_cast %81 : vector<4xf32> to vector<4x1xf32>
    %cst_30 = arith.constant 3.200000e+01 : f32
    %83 = vector.broadcast %cst_30 : f32 to vector<4x1xf32>
    %84 = arith.divf %82, %83 : vector<4x1xf32>
    %85 = vector.broadcast %77 : vector<4x1xf32> to vector<4x32xf32>
    %86 = arith.subf %71, %85 : vector<4x32xf32>
    %cst_31 = arith.constant 9.99999974E-6 : f32
    %87 = vector.broadcast %cst_31 : f32 to vector<4x1xf32>
    %88 = arith.addf %84, %87 : vector<4x1xf32>
    %89 = math.rsqrt %88 : vector<4x1xf32>
    %90 = vector.broadcast %89 : vector<4x1xf32> to vector<4x32xf32>
    %91 = arith.mulf %86, %90 : vector<4x32xf32>
    %92 = vector.broadcast %72 : vector<1x32xf32> to vector<4x32xf32>
    %93 = arith.mulf %91, %92 : vector<4x32xf32>
    %94 = vector.broadcast %73 : vector<1x32xf32> to vector<4x32xf32>
    %95 = arith.addf %93, %94 : vector<4x32xf32>
    %c0_32 = arith.constant 0 : index
    %c0_33 = arith.constant 0 : index
    %c0_34 = arith.constant 0 : index
    %96 = vector.load %arg1[%c0_32, %c0_33, %c0_34] : memref<8x6x32xf32, #tpu.memory_space<vmem>>, vector<8x6x32xf32>
    %97 = vector.shape_cast %4 : vector<1x32xf32> to vector<1x1x32xf32>
    %98 = vector.broadcast %97 : vector<1x1x32xf32> to vector<8x6x32xf32>
    %99 = arith.subf %96, %98 : vector<8x6x32xf32>
    %100 = vector.shape_cast %5 : vector<1x32xf32> to vector<1x1x32xf32>
    %101 = vector.broadcast %100 : vector<1x1x32xf32> to vector<8x6x32xf32>
    %102 = arith.divf %99, %101 : vector<8x6x32xf32>
    %cst_35 = arith.constant dense<0.000000e+00> : vector<8x32xf32>
    %103 = vector.multi_reduction <add>, %102, %cst_35 [1] : vector<8x6x32xf32> to vector<8x32xf32>
    %cst_36 = arith.constant 6.000000e+00 : f32
    %104 = vector.broadcast %cst_36 : f32 to vector<8x32xf32>
    %105 = arith.divf %103, %104 : vector<8x32xf32>
    %c96 = arith.constant 96 : index
    %c0_37 = arith.constant 0 : index
    %106 = vector.load %arg2[%c96, %c0_37] : memref<352x128xf32, #tpu.memory_space<vmem>>, vector<32x32xf32>
    %cst_38 = arith.constant dense<0.000000e+00> : vector<8x32xf32>
    %107 = tpu.matmul %105, %106, %cst_38 {dimension_numbers = #tpu.dot_dimension_numbers<[1], [0], [0], [1], [0, 0, 1, 1], [], []>} : vector<8x32xf32>, vector<32x32xf32>, vector<8x32xf32> -> vector<8x32xf32>
    %c10 = arith.constant 10 : index
    %c0_39 = arith.constant 0 : index
    %108 = vector.load %arg3[%c10, %c0_39] : memref<32x128xf32, #tpu.memory_space<vmem>>, vector<1x32xf32>
    %109 = vector.broadcast %108 : vector<1x32xf32> to vector<8x32xf32>
    %110 = arith.addf %107, %109 : vector<8x32xf32>
    %cst_40 = arith.constant 0.000000e+00 : f32
    %111 = vector.broadcast %cst_40 : f32 to vector<8x32xf32>
    %112 = arith.maximumf %110, %111 : vector<8x32xf32>
    %c11 = arith.constant 11 : index
    %c0_41 = arith.constant 0 : index
    %113 = vector.load %arg3[%c11, %c0_41] : memref<32x128xf32, #tpu.memory_space<vmem>>, vector<1x32xf32>
    %c12 = arith.constant 12 : index
    %c0_42 = arith.constant 0 : index
    %114 = vector.load %arg3[%c12, %c0_42] : memref<32x128xf32, #tpu.memory_space<vmem>>, vector<1x32xf32>
    %cst_43 = arith.constant dense<0.000000e+00> : vector<8xf32>
    %115 = vector.multi_reduction <add>, %112, %cst_43 [1] : vector<8x32xf32> to vector<8xf32>
    %116 = vector.shape_cast %115 : vector<8xf32> to vector<8x1xf32>
    %cst_44 = arith.constant 3.200000e+01 : f32
    %117 = vector.broadcast %cst_44 : f32 to vector<8x1xf32>
    %118 = arith.divf %116, %117 : vector<8x1xf32>
    %119 = vector.broadcast %118 : vector<8x1xf32> to vector<8x32xf32>
    %120 = arith.subf %112, %119 : vector<8x32xf32>
    %121 = arith.mulf %120, %120 : vector<8x32xf32>
    %cst_45 = arith.constant dense<0.000000e+00> : vector<8xf32>
    %122 = vector.multi_reduction <add>, %121, %cst_45 [1] : vector<8x32xf32> to vector<8xf32>
    %123 = vector.shape_cast %122 : vector<8xf32> to vector<8x1xf32>
    %cst_46 = arith.constant 3.200000e+01 : f32
    %124 = vector.broadcast %cst_46 : f32 to vector<8x1xf32>
    %125 = arith.divf %123, %124 : vector<8x1xf32>
    %126 = vector.broadcast %118 : vector<8x1xf32> to vector<8x32xf32>
    %127 = arith.subf %112, %126 : vector<8x32xf32>
    %cst_47 = arith.constant 9.99999974E-6 : f32
    %128 = vector.broadcast %cst_47 : f32 to vector<8x1xf32>
    %129 = arith.addf %125, %128 : vector<8x1xf32>
    %130 = math.rsqrt %129 : vector<8x1xf32>
    %131 = vector.broadcast %130 : vector<8x1xf32> to vector<8x32xf32>
    %132 = arith.mulf %127, %131 : vector<8x32xf32>
    %133 = vector.broadcast %113 : vector<1x32xf32> to vector<8x32xf32>
    %134 = arith.mulf %132, %133 : vector<8x32xf32>
    %135 = vector.broadcast %114 : vector<1x32xf32> to vector<8x32xf32>
    %136 = arith.addf %134, %135 : vector<8x32xf32>
    %137 = vector.extract_strided_slice %136 {offsets = [0, 0], sizes = [2, 32], strides = [1, 1]} : vector<8x32xf32> to vector<2x32xf32>
    %138 = vector.extract_strided_slice %136 {offsets = [2, 0], sizes = [2, 32], strides = [1, 1]} : vector<8x32xf32> to vector<2x32xf32>
    %139 = vector.extract_strided_slice %136 {offsets = [4, 0], sizes = [2, 32], strides = [1, 1]} : vector<8x32xf32> to vector<2x32xf32>
    %140 = vector.extract_strided_slice %136 {offsets = [6, 0], sizes = [2, 32], strides = [1, 1]} : vector<8x32xf32> to vector<2x32xf32>
    %141 = vector.shape_cast %137 : vector<2x32xf32> to vector<1x2x32xf32>
    %142 = vector.shape_cast %138 : vector<2x32xf32> to vector<1x2x32xf32>
    %143 = vector.shape_cast %139 : vector<2x32xf32> to vector<1x2x32xf32>
    %144 = vector.shape_cast %140 : vector<2x32xf32> to vector<1x2x32xf32>
    %145 = tpu.concatenate %141, %142, %143, %144 in 0 : vector<1x2x32xf32>, vector<1x2x32xf32>, vector<1x2x32xf32>, vector<1x2x32xf32> -> vector<4x2x32xf32>
    %c13 = arith.constant 13 : index
    %c0_48 = arith.constant 0 : index
    %146 = vector.load %arg3[%c13, %c0_48] : memref<32x128xf32, #tpu.memory_space<vmem>>, vector<1x32xf32>
    %c14 = arith.constant 14 : index
    %c0_49 = arith.constant 0 : index
    %147 = vector.load %arg3[%c14, %c0_49] : memref<32x128xf32, #tpu.memory_space<vmem>>, vector<1x1xf32>
    %148 = vector.shape_cast %146 : vector<1x32xf32> to vector<1x1x32xf32>
    %149 = vector.broadcast %148 : vector<1x1x32xf32> to vector<4x2x32xf32>
    %150 = arith.mulf %145, %149 : vector<4x2x32xf32>
    %cst_50 = arith.constant dense<0.000000e+00> : vector<4x2xf32>
    %151 = vector.multi_reduction <add>, %150, %cst_50 [2] : vector<4x2x32xf32> to vector<4x2xf32>
    %152 = vector.shape_cast %151 : vector<4x2xf32> to vector<4x2x1xf32>
    %153 = vector.shape_cast %147 : vector<1x1xf32> to vector<1x1x1xf32>
    %154 = vector.broadcast %153 : vector<1x1x1xf32> to vector<4x2x1xf32>
    %155 = arith.addf %152, %154 : vector<4x2x1xf32>
    %cst_51 = arith.constant dense<0xFF800000> : vector<4x1xf32>
    %156 = vector.multi_reduction <maximumf>, %155, %cst_51 [1] : vector<4x2x1xf32> to vector<4x1xf32>
    %157 = vector.shape_cast %156 : vector<4x1xf32> to vector<4x1x1xf32>
    %158 = vector.broadcast %157 : vector<4x1x1xf32> to vector<4x2x1xf32>
    %159 = arith.subf %155, %158 : vector<4x2x1xf32>
    %160 = math.exp %159 : vector<4x2x1xf32>
    %cst_52 = arith.constant dense<0.000000e+00> : vector<4x1xf32>
    %161 = vector.multi_reduction <add>, %160, %cst_52 [1] : vector<4x2x1xf32> to vector<4x1xf32>
    %162 = vector.shape_cast %161 : vector<4x1xf32> to vector<4x1x1xf32>
    %163 = vector.broadcast %162 : vector<4x1x1xf32> to vector<4x2x1xf32>
    %164 = arith.divf %160, %163 : vector<4x2x1xf32>
    %165 = vector.broadcast %164 : vector<4x2x1xf32> to vector<4x2x32xf32>
    %166 = arith.mulf %165, %145 : vector<4x2x32xf32>
    %cst_53 = arith.constant dense<0.000000e+00> : vector<4x32xf32>
    %167 = vector.multi_reduction <add>, %166, %cst_53 [1] : vector<4x2x32xf32> to vector<4x32xf32>
    %c128 = arith.constant 128 : index
    %c0_54 = arith.constant 0 : index
    %168 = vector.load %arg2[%c128, %c0_54] : memref<352x128xf32, #tpu.memory_space<vmem>>, vector<32x32xf32>
    %cst_55 = arith.constant dense<0.000000e+00> : vector<4x32xf32>
    %169 = tpu.matmul %167, %168, %cst_55 {dimension_numbers = #tpu.dot_dimension_numbers<[1], [0], [0], [1], [0, 0, 1, 1], [], []>} : vector<4x32xf32>, vector<32x32xf32>, vector<4x32xf32> -> vector<4x32xf32>
    %c15 = arith.constant 15 : index
    %c0_56 = arith.constant 0 : index
    %170 = vector.load %arg3[%c15, %c0_56] : memref<32x128xf32, #tpu.memory_space<vmem>>, vector<1x32xf32>
    %171 = vector.broadcast %170 : vector<1x32xf32> to vector<4x32xf32>
    %172 = arith.addf %169, %171 : vector<4x32xf32>
    %cst_57 = arith.constant 0.000000e+00 : f32
    %173 = vector.broadcast %cst_57 : f32 to vector<4x32xf32>
    %174 = arith.maximumf %172, %173 : vector<4x32xf32>
    %c16 = arith.constant 16 : index
    %c0_58 = arith.constant 0 : index
    %175 = vector.load %arg3[%c16, %c0_58] : memref<32x128xf32, #tpu.memory_space<vmem>>, vector<1x32xf32>
    %c17 = arith.constant 17 : index
    %c0_59 = arith.constant 0 : index
    %176 = vector.load %arg3[%c17, %c0_59] : memref<32x128xf32, #tpu.memory_space<vmem>>, vector<1x32xf32>
    %cst_60 = arith.constant dense<0.000000e+00> : vector<4xf32>
    %177 = vector.multi_reduction <add>, %174, %cst_60 [1] : vector<4x32xf32> to vector<4xf32>
    %178 = vector.shape_cast %177 : vector<4xf32> to vector<4x1xf32>
    %cst_61 = arith.constant 3.200000e+01 : f32
    %179 = vector.broadcast %cst_61 : f32 to vector<4x1xf32>
    %180 = arith.divf %178, %179 : vector<4x1xf32>
    %181 = vector.broadcast %180 : vector<4x1xf32> to vector<4x32xf32>
    %182 = arith.subf %174, %181 : vector<4x32xf32>
    %183 = arith.mulf %182, %182 : vector<4x32xf32>
    %cst_62 = arith.constant dense<0.000000e+00> : vector<4xf32>
    %184 = vector.multi_reduction <add>, %183, %cst_62 [1] : vector<4x32xf32> to vector<4xf32>
    %185 = vector.shape_cast %184 : vector<4xf32> to vector<4x1xf32>
    %cst_63 = arith.constant 3.200000e+01 : f32
    %186 = vector.broadcast %cst_63 : f32 to vector<4x1xf32>
    %187 = arith.divf %185, %186 : vector<4x1xf32>
    %188 = vector.broadcast %180 : vector<4x1xf32> to vector<4x32xf32>
    %189 = arith.subf %174, %188 : vector<4x32xf32>
    %cst_64 = arith.constant 9.99999974E-6 : f32
    %190 = vector.broadcast %cst_64 : f32 to vector<4x1xf32>
    %191 = arith.addf %187, %190 : vector<4x1xf32>
    %192 = math.rsqrt %191 : vector<4x1xf32>
    %193 = vector.broadcast %192 : vector<4x1xf32> to vector<4x32xf32>
    %194 = arith.mulf %189, %193 : vector<4x32xf32>
    %195 = vector.broadcast %175 : vector<1x32xf32> to vector<4x32xf32>
    %196 = arith.mulf %194, %195 : vector<4x32xf32>
    %197 = vector.broadcast %176 : vector<1x32xf32> to vector<4x32xf32>
    %198 = arith.addf %196, %197 : vector<4x32xf32>
    %199 = arith.addf %198, %167 : vector<4x32xf32>
    %c0_65 = arith.constant 0 : index
    %c0_66 = arith.constant 0 : index
    %200 = vector.load %arg13[%c0_65, %c0_66] : memref<4x64xf32, #tpu.memory_space<vmem>>, vector<4x32xf32>
    tpu.vector_store %arg13[%c0_65, %c0_66], %95 {strides = array<i32>} : memref<4x64xf32, #tpu.memory_space<vmem>>, vector<4x32xf32>,
    %c0_67 = arith.constant 0 : index
    %c32_68 = arith.constant 32 : index
    %201 = vector.load %arg13[%c0_67, %c32_68] : memref<4x64xf32, #tpu.memory_space<vmem>>, vector<4x32xf32>
    tpu.vector_store %arg13[%c0_67, %c32_68], %199 {strides = array<i32>} : memref<4x64xf32, #tpu.memory_space<vmem>>, vector<4x32xf32>,
    %c0_69 = arith.constant 0 : index
    %c0_70 = arith.constant 0 : index
    %202 = vector.load %arg13[%c0_69, %c0_70] : memref<4x64xf32, #tpu.memory_space<vmem>>, vector<4x64xf32>
    %c160 = arith.constant 160 : index
    %c0_71 = arith.constant 0 : index
    %203 = vector.load %arg2[%c160, %c0_71] : memref<352x128xf32, #tpu.memory_space<vmem>>, vector<64x128xf32>
    %cst_72 = arith.constant dense<0.000000e+00> : vector<4x128xf32>
    %204 = tpu.matmul %202, %203, %cst_72 {dimension_numbers = #tpu.dot_dimension_numbers<[1], [0], [0], [1], [0, 0, 1, 1], [], []>} : vector<4x64xf32>, vector<64x128xf32>, vector<4x128xf32> -> vector<4x128xf32>
    %c18 = arith.constant 18 : index
    %c0_73 = arith.constant 0 : index
    %205 = vector.load %arg3[%c18, %c0_73] : memref<32x128xf32, #tpu.memory_space<vmem>>, vector<1x128xf32>
    %206 = vector.broadcast %205 : vector<1x128xf32> to vector<4x128xf32>
    %207 = arith.addf %204, %206 : vector<4x128xf32>
    %cst_74 = arith.constant 0.000000e+00 : f32
    %208 = vector.broadcast %cst_74 : f32 to vector<4x128xf32>
    %209 = arith.maximumf %207, %208 : vector<4x128xf32>
    %c19 = arith.constant 19 : index
    %c0_75 = arith.constant 0 : index
    %210 = vector.load %arg3[%c19, %c0_75] : memref<32x128xf32, #tpu.memory_space<vmem>>, vector<1x128xf32>
    %c20 = arith.constant 20 : index
    %c0_76 = arith.constant 0 : index
    %211 = vector.load %arg3[%c20, %c0_76] : memref<32x128xf32, #tpu.memory_space<vmem>>, vector<1x128xf32>
    %cst_77 = arith.constant dense<0.000000e+00> : vector<4xf32>
    %212 = vector.multi_reduction <add>, %209, %cst_77 [1] : vector<4x128xf32> to vector<4xf32>
    %213 = vector.shape_cast %212 : vector<4xf32> to vector<4x1xf32>
    %cst_78 = arith.constant 1.280000e+02 : f32
    %214 = vector.broadcast %cst_78 : f32 to vector<4x1xf32>
    %215 = arith.divf %213, %214 : vector<4x1xf32>
    %216 = vector.broadcast %215 : vector<4x1xf32> to vector<4x128xf32>
    %217 = arith.subf %209, %216 : vector<4x128xf32>
    %218 = arith.mulf %217, %217 : vector<4x128xf32>
    %cst_79 = arith.constant dense<0.000000e+00> : vector<4xf32>
    %219 = vector.multi_reduction <add>, %218, %cst_79 [1] : vector<4x128xf32> to vector<4xf32>
    %220 = vector.shape_cast %219 : vector<4xf32> to vector<4x1xf32>
    %cst_80 = arith.constant 1.280000e+02 : f32
    %221 = vector.broadcast %cst_80 : f32 to vector<4x1xf32>
    %222 = arith.divf %220, %221 : vector<4x1xf32>
    %223 = vector.broadcast %215 : vector<4x1xf32> to vector<4x128xf32>
    %224 = arith.subf %209, %223 : vector<4x128xf32>
    %cst_81 = arith.constant 9.99999974E-6 : f32
    %225 = vector.broadcast %cst_81 : f32 to vector<4x1xf32>
    %226 = arith.addf %222, %225 : vector<4x1xf32>
    %227 = math.rsqrt %226 : vector<4x1xf32>
    %228 = vector.broadcast %227 : vector<4x1xf32> to vector<4x128xf32>
    %229 = arith.mulf %224, %228 : vector<4x128xf32>
    %230 = vector.broadcast %210 : vector<1x128xf32> to vector<4x128xf32>
    %231 = arith.mulf %229, %230 : vector<4x128xf32>
    %232 = vector.broadcast %211 : vector<1x128xf32> to vector<4x128xf32>
    %233 = arith.addf %231, %232 : vector<4x128xf32>
    %c224 = arith.constant 224 : index
    %c0_82 = arith.constant 0 : index
    %234 = vector.load %arg2[%c224, %c0_82] : memref<352x128xf32, #tpu.memory_space<vmem>>, vector<128x64xf32>
    %cst_83 = arith.constant dense<0.000000e+00> : vector<4x64xf32>
    %235 = tpu.matmul %233, %234, %cst_83 {dimension_numbers = #tpu.dot_dimension_numbers<[1], [0], [0], [1], [0, 0, 1, 1], [], []>} : vector<4x128xf32>, vector<128x64xf32>, vector<4x64xf32> -> vector<4x64xf32>
    %c21 = arith.constant 21 : index
    %c0_84 = arith.constant 0 : index
    %236 = vector.load %arg3[%c21, %c0_84] : memref<32x128xf32, #tpu.memory_space<vmem>>, vector<1x64xf32>
    %237 = vector.broadcast %236 : vector<1x64xf32> to vector<4x64xf32>
    %238 = arith.addf %235, %237 : vector<4x64xf32>
    %cst_85 = arith.constant 0.000000e+00 : f32
    %239 = vector.broadcast %cst_85 : f32 to vector<4x64xf32>
    %240 = arith.maximumf %238, %239 : vector<4x64xf32>
    %c22 = arith.constant 22 : index
    %c0_86 = arith.constant 0 : index
    %241 = vector.load %arg3[%c22, %c0_86] : memref<32x128xf32, #tpu.memory_space<vmem>>, vector<1x64xf32>
    %c23 = arith.constant 23 : index
    %c0_87 = arith.constant 0 : index
    %242 = vector.load %arg3[%c23, %c0_87] : memref<32x128xf32, #tpu.memory_space<vmem>>, vector<1x64xf32>
    %cst_88 = arith.constant dense<0.000000e+00> : vector<4xf32>
    %243 = vector.multi_reduction <add>, %240, %cst_88 [1] : vector<4x64xf32> to vector<4xf32>
    %244 = vector.shape_cast %243 : vector<4xf32> to vector<4x1xf32>
    %cst_89 = arith.constant 6.400000e+01 : f32
    %245 = vector.broadcast %cst_89 : f32 to vector<4x1xf32>
    %246 = arith.divf %244, %245 : vector<4x1xf32>
    %247 = vector.broadcast %246 : vector<4x1xf32> to vector<4x64xf32>
    %248 = arith.subf %240, %247 : vector<4x64xf32>
    %249 = arith.mulf %248, %248 : vector<4x64xf32>
    %cst_90 = arith.constant dense<0.000000e+00> : vector<4xf32>
    %250 = vector.multi_reduction <add>, %249, %cst_90 [1] : vector<4x64xf32> to vector<4xf32>
    %251 = vector.shape_cast %250 : vector<4xf32> to vector<4x1xf32>
    %cst_91 = arith.constant 6.400000e+01 : f32
    %252 = vector.broadcast %cst_91 : f32 to vector<4x1xf32>
    %253 = arith.divf %251, %252 : vector<4x1xf32>
    %254 = vector.broadcast %246 : vector<4x1xf32> to vector<4x64xf32>
    %255 = arith.subf %240, %254 : vector<4x64xf32>
    %cst_92 = arith.constant 9.99999974E-6 : f32
    %256 = vector.broadcast %cst_92 : f32 to vector<4x1xf32>
    %257 = arith.addf %253, %256 : vector<4x1xf32>
    %258 = math.rsqrt %257 : vector<4x1xf32>
    %259 = vector.broadcast %258 : vector<4x1xf32> to vector<4x64xf32>
    %260 = arith.mulf %255, %259 : vector<4x64xf32>
    %261 = vector.broadcast %241 : vector<1x64xf32> to vector<4x64xf32>
    %262 = arith.mulf %260, %261 : vector<4x64xf32>
    %263 = vector.broadcast %242 : vector<1x64xf32> to vector<4x64xf32>
    %264 = arith.addf %262, %263 : vector<4x64xf32>
    %265 = arith.addf %264, %202 : vector<4x64xf32>
    %cst_93 = arith.constant dense<0.000000e+00> : vector<64xf32>
    %266 = vector.multi_reduction <add>, %265, %cst_93 [0] : vector<4x64xf32> to vector<64xf32>
    %267 = vector.shape_cast %266 : vector<64xf32> to vector<1x64xf32>
    %cst_94 = arith.constant 4.000000e+00 : f32
    %268 = vector.broadcast %cst_94 : f32 to vector<1x64xf32>
    %269 = arith.divf %267, %268 : vector<1x64xf32>
    %270 = vector.shape_cast %265 : vector<4x64xf32> to vector<1x4x64xf32>
    %271 = vector.shape_cast %270 : vector<1x4x64xf32> to vector<1x4x64xf32>
    %272 = vector.broadcast %271 : vector<1x4x64xf32> to vector<4x4x64xf32>
    %c0_95 = arith.constant 0 : index
    %c0_96 = arith.constant 0 : index
    %c0_97 = arith.constant 0 : index
    %273 = vector.load %arg4[%c0_95, %c0_96, %c0_97] : memref<16x64x16xf32, #tpu.memory_space<vmem>>, vector<4x64x16xf32>
    "tpu.trace_start"() <{level = 10 : i32, message = "hpd,hdk->hpk"}> : () -> ()
    %cst_98 = arith.constant dense<0.000000e+00> : vector<4x4x16xf32>
    %274 = tpu.matmul %272, %273, %cst_98 {dimension_numbers = #tpu.dot_dimension_numbers<[2], [1], [1], [2], [0, 0, 0, 1, 1, 2], [0], [0]>} : vector<4x4x64xf32>, vector<4x64x16xf32>, vector<4x4x16xf32> -> vector<4x4x16xf32>
    "tpu.trace_stop"() : () -> ()
    %c0_99 = arith.constant 0 : index
    %c0_100 = arith.constant 0 : index
    %c0_101 = arith.constant 0 : index
    %275 = vector.load %arg5[%c0_99, %c0_100, %c0_101] : memref<12x1x16xf32, #tpu.memory_space<vmem>>, vector<4x1x16xf32>
    %276 = vector.broadcast %275 : vector<4x1x16xf32> to vector<4x4x16xf32>
    %277 = arith.addf %274, %276 : vector<4x4x16xf32>
    %c4_102 = arith.constant 4 : index
    %c0_103 = arith.constant 0 : index
    %c0_104 = arith.constant 0 : index
    %278 = vector.load %arg4[%c4_102, %c0_103, %c0_104] : memref<16x64x16xf32, #tpu.memory_space<vmem>>, vector<4x64x16xf32>
    "tpu.trace_start"() <{level = 10 : i32, message = "hpd,hdk->hpk"}> : () -> ()
    %cst_105 = arith.constant dense<0.000000e+00> : vector<4x4x16xf32>
    %279 = tpu.matmul %272, %278, %cst_105 {dimension_numbers = #tpu.dot_dimension_numbers<[2], [1], [1], [2], [0, 0, 0, 1, 1, 2], [0], [0]>} : vector<4x4x64xf32>, vector<4x64x16xf32>, vector<4x4x16xf32> -> vector<4x4x16xf32>
    "tpu.trace_stop"() : () -> ()
    %c4_106 = arith.constant 4 : index
    %c0_107 = arith.constant 0 : index
    %c0_108 = arith.constant 0 : index
    %280 = vector.load %arg5[%c4_106, %c0_107, %c0_108] : memref<12x1x16xf32, #tpu.memory_space<vmem>>, vector<4x1x16xf32>
    %281 = vector.broadcast %280 : vector<4x1x16xf32> to vector<4x4x16xf32>
    %282 = arith.addf %279, %281 : vector<4x4x16xf32>
    %c8_109 = arith.constant 8 : index
    %c0_110 = arith.constant 0 : index
    %c0_111 = arith.constant 0 : index
    %283 = vector.load %arg4[%c8_109, %c0_110, %c0_111] : memref<16x64x16xf32, #tpu.memory_space<vmem>>, vector<4x64x16xf32>
    "tpu.trace_start"() <{level = 10 : i32, message = "hpd,hdk->hpk"}> : () -> ()
    %cst_112 = arith.constant dense<0.000000e+00> : vector<4x4x16xf32>
    %284 = tpu.matmul %272, %283, %cst_112 {dimension_numbers = #tpu.dot_dimension_numbers<[2], [1], [1], [2], [0, 0, 0, 1, 1, 2], [0], [0]>} : vector<4x4x64xf32>, vector<4x64x16xf32>, vector<4x4x16xf32> -> vector<4x4x16xf32>
    "tpu.trace_stop"() : () -> ()
    %c8_113 = arith.constant 8 : index
    %c0_114 = arith.constant 0 : index
    %c0_115 = arith.constant 0 : index
    %285 = vector.load %arg5[%c8_113, %c0_114, %c0_115] : memref<12x1x16xf32, #tpu.memory_space<vmem>>, vector<4x1x16xf32>
    %286 = vector.broadcast %285 : vector<4x1x16xf32> to vector<4x4x16xf32>
    %287 = arith.addf %284, %286 : vector<4x4x16xf32>
    "tpu.trace_start"() <{level = 10 : i32, message = "hqk,hpk->hqp"}> : () -> ()
    %cst_116 = arith.constant dense<0.000000e+00> : vector<4x4x4xf32>
    %288 = tpu.matmul %277, %282, %cst_116 {dimension_numbers = #tpu.dot_dimension_numbers<[2], [2], [1], [1], [0, 0, 0, 1, 1, 1], [0], [0]>} : vector<4x4x16xf32>, vector<4x4x16xf32>, vector<4x4x4xf32> -> vector<4x4x4xf32>
    "tpu.trace_stop"() : () -> ()
    %cst_117 = arith.constant 2.500000e-01 : f32
    %289 = vector.broadcast %cst_117 : f32 to vector<4x4x4xf32>
    %290 = arith.mulf %288, %289 : vector<4x4x4xf32>
    %cst_118 = arith.constant dense<0xFF800000> : vector<4x4xf32>
    %291 = vector.multi_reduction <maximumf>, %290, %cst_118 [2] : vector<4x4x4xf32> to vector<4x4xf32>
    %292 = vector.shape_cast %291 : vector<4x4xf32> to vector<4x4x1xf32>
    %293 = vector.broadcast %292 : vector<4x4x1xf32> to vector<4x4x4xf32>
    %294 = arith.subf %290, %293 : vector<4x4x4xf32>
    %295 = math.exp %294 : vector<4x4x4xf32>
    %cst_119 = arith.constant dense<0.000000e+00> : vector<4x4xf32>
    %296 = vector.multi_reduction <add>, %295, %cst_119 [2] : vector<4x4x4xf32> to vector<4x4xf32>
    %297 = vector.shape_cast %296 : vector<4x4xf32> to vector<4x4x1xf32>
    %298 = vector.broadcast %297 : vector<4x4x1xf32> to vector<4x4x4xf32>
    %299 = arith.divf %295, %298 : vector<4x4x4xf32>
    "tpu.trace_start"() <{level = 10 : i32, message = "hqp,hpk->hqk"}> : () -> ()
    %cst_120 = arith.constant dense<0.000000e+00> : vector<4x4x16xf32>
    %300 = tpu.matmul %299, %287, %cst_120 {dimension_numbers = #tpu.dot_dimension_numbers<[2], [1], [1], [2], [0, 0, 0, 1, 1, 2], [0], [0]>} : vector<4x4x4xf32>, vector<4x4x16xf32>, vector<4x4x16xf32> -> vector<4x4x16xf32>
    "tpu.trace_stop"() : () -> ()
    %c12_121 = arith.constant 12 : index
    %c0_122 = arith.constant 0 : index
    %c0_123 = arith.constant 0 : index
    %301 = vector.load %arg4[%c12_121, %c0_122, %c0_123] : memref<16x64x16xf32, #tpu.memory_space<vmem>>, vector<4x64x16xf32>
    "tpu.trace_start"() <{level = 10 : i32, message = "hqk,hdk->hqd"}> : () -> ()
    %cst_124 = arith.constant dense<0.000000e+00> : vector<4x4x64xf32>
    %302 = tpu.matmul %300, %301, %cst_124 {dimension_numbers = #tpu.dot_dimension_numbers<[2], [2], [1], [1], [0, 0, 0, 1, 1, 1], [0], [0]>} : vector<4x4x16xf32>, vector<4x64x16xf32>, vector<4x4x64xf32> -> vector<4x4x64xf32>
    "tpu.trace_stop"() : () -> ()
    %cst_125 = arith.constant dense<0.000000e+00> : vector<4x64xf32>
    %303 = vector.multi_reduction <add>, %302, %cst_125 [0] : vector<4x4x64xf32> to vector<4x64xf32>
    %c24 = arith.constant 24 : index
    %c0_126 = arith.constant 0 : index
    %304 = vector.load %arg3[%c24, %c0_126] : memref<32x128xf32, #tpu.memory_space<vmem>>, vector<1x64xf32>
    %305 = vector.broadcast %304 : vector<1x64xf32> to vector<4x64xf32>
    %306 = arith.addf %303, %305 : vector<4x64xf32>
    %307 = arith.addf %265, %306 : vector<4x64xf32>
    %c25 = arith.constant 25 : index
    %c0_127 = arith.constant 0 : index
    %308 = vector.load %arg3[%c25, %c0_127] : memref<32x128xf32, #tpu.memory_space<vmem>>, vector<1x64xf32>
    %c26 = arith.constant 26 : index
    %c0_128 = arith.constant 0 : index
    %309 = vector.load %arg3[%c26, %c0_128] : memref<32x128xf32, #tpu.memory_space<vmem>>, vector<1x64xf32>
    %cst_129 = arith.constant dense<0.000000e+00> : vector<4xf32>
    %310 = vector.multi_reduction <add>, %307, %cst_129 [1] : vector<4x64xf32> to vector<4xf32>
    %311 = vector.shape_cast %310 : vector<4xf32> to vector<4x1xf32>
    %cst_130 = arith.constant 6.400000e+01 : f32
    %312 = vector.broadcast %cst_130 : f32 to vector<4x1xf32>
    %313 = arith.divf %311, %312 : vector<4x1xf32>
    %314 = vector.broadcast %313 : vector<4x1xf32> to vector<4x64xf32>
    %315 = arith.subf %307, %314 : vector<4x64xf32>
    %316 = arith.mulf %315, %315 : vector<4x64xf32>
    %cst_131 = arith.constant dense<0.000000e+00> : vector<4xf32>
    %317 = vector.multi_reduction <add>, %316, %cst_131 [1] : vector<4x64xf32> to vector<4xf32>
    %318 = vector.shape_cast %317 : vector<4xf32> to vector<4x1xf32>
    %cst_132 = arith.constant 6.400000e+01 : f32
    %319 = vector.broadcast %cst_132 : f32 to vector<4x1xf32>
    %320 = arith.divf %318, %319 : vector<4x1xf32>
    %321 = vector.broadcast %313 : vector<4x1xf32> to vector<4x64xf32>
    %322 = arith.subf %307, %321 : vector<4x64xf32>
    %cst_133 = arith.constant 9.99999974E-6 : f32
    %323 = vector.broadcast %cst_133 : f32 to vector<4x1xf32>
    %324 = arith.addf %320, %323 : vector<4x1xf32>
    %325 = math.rsqrt %324 : vector<4x1xf32>
    %326 = vector.broadcast %325 : vector<4x1xf32> to vector<4x64xf32>
    %327 = arith.mulf %322, %326 : vector<4x64xf32>
    %328 = vector.broadcast %308 : vector<1x64xf32> to vector<4x64xf32>
    %329 = arith.mulf %327, %328 : vector<4x64xf32>
    %330 = vector.broadcast %309 : vector<1x64xf32> to vector<4x64xf32>
    %331 = arith.addf %329, %330 : vector<4x64xf32>
    %c0_i32_134 = arith.constant 0 : i32
    %332 = tpu.memref_slice %arg12[%c0_i32_134] : memref<2x!tpu.dma_semaphore, #tpu.memory_space<semaphore_mem>> -> memref<1x!tpu.dma_semaphore, #tpu.memory_space<semaphore_mem>>
    %333 = tpu.memref_squeeze %332 : memref<1x!tpu.dma_semaphore, #tpu.memory_space<semaphore_mem>> -> memref<!tpu.dma_semaphore, #tpu.memory_space<semaphore_mem>>
    tpu.wait_dma2 semaphore(%333 : memref<!tpu.dma_semaphore, #tpu.memory_space<semaphore_mem>>) src(%arg7 : memref<64x2048xbf16, #tpu.memory_space<any>>) dst(%arg10 : memref<64x2048xbf16, #tpu.memory_space<vmem>>)
    %334 = arith.truncf %331 : vector<4x64xf32> to vector<4x64xbf16>
    %c0_135 = arith.constant 0 : index
    %c0_136 = arith.constant 0 : index
    %335 = vector.load %arg10[%c0_135, %c0_136] : memref<64x2048xbf16, #tpu.memory_space<vmem>>, vector<64x2048xbf16>
    %cst_137 = arith.constant dense<0.000000e+00> : vector<4x2048xf32>
    %336 = tpu.matmul %334, %335, %cst_137 {dimension_numbers = #tpu.dot_dimension_numbers<[1], [0], [0], [1], [0, 0, 1, 1], [], []>} : vector<4x64xbf16>, vector<64x2048xbf16>, vector<4x2048xf32> -> vector<4x2048xf32>
    %c0_138 = arith.constant 0 : index
    %c0_139 = arith.constant 0 : index
    %337 = vector.load %arg6[%c0_138, %c0_139] : memref<1x2048xf32, #tpu.memory_space<vmem>>, vector<1x2048xf32>
    %338 = vector.broadcast %337 : vector<1x2048xf32> to vector<4x2048xf32>
    %339 = arith.addf %336, %338 : vector<4x2048xf32>
    %cst_140 = arith.constant 0.000000e+00 : f32
    %340 = vector.broadcast %cst_140 : f32 to vector<4x2048xf32>
    %341 = arith.maximumf %339, %340 : vector<4x2048xf32>
    %c1_i32_141 = arith.constant 1 : i32
    %342 = tpu.memref_slice %arg12[%c1_i32_141] : memref<2x!tpu.dma_semaphore, #tpu.memory_space<semaphore_mem>> -> memref<1x!tpu.dma_semaphore, #tpu.memory_space<semaphore_mem>>
    %343 = tpu.memref_squeeze %342 : memref<1x!tpu.dma_semaphore, #tpu.memory_space<semaphore_mem>> -> memref<!tpu.dma_semaphore, #tpu.memory_space<semaphore_mem>>
    tpu.wait_dma2 semaphore(%343 : memref<!tpu.dma_semaphore, #tpu.memory_space<semaphore_mem>>) src(%arg8 : memref<2048x64xbf16, #tpu.memory_space<any>>) dst(%arg11 : memref<2048x64xbf16, #tpu.memory_space<vmem>>)
    %344 = arith.truncf %341 : vector<4x2048xf32> to vector<4x2048xbf16>
    %c0_142 = arith.constant 0 : index
    %c0_143 = arith.constant 0 : index
    %345 = vector.load %arg11[%c0_142, %c0_143] : memref<2048x64xbf16, #tpu.memory_space<vmem>>, vector<2048x64xbf16>
    %cst_144 = arith.constant dense<0.000000e+00> : vector<4x64xf32>
    %346 = tpu.matmul %344, %345, %cst_144 {dimension_numbers = #tpu.dot_dimension_numbers<[1], [0], [0], [1], [0, 0, 1, 1], [], []>} : vector<4x2048xbf16>, vector<2048x64xbf16>, vector<4x64xf32> -> vector<4x64xf32>
    %c29 = arith.constant 29 : index
    %c0_145 = arith.constant 0 : index
    %347 = vector.load %arg3[%c29, %c0_145] : memref<32x128xf32, #tpu.memory_space<vmem>>, vector<1x64xf32>
    %348 = vector.broadcast %347 : vector<1x64xf32> to vector<4x64xf32>
    %349 = arith.addf %346, %348 : vector<4x64xf32>
    %350 = arith.addf %331, %349 : vector<4x64xf32>
    %c27 = arith.constant 27 : index
    %c0_146 = arith.constant 0 : index
    %351 = vector.load %arg3[%c27, %c0_146] : memref<32x128xf32, #tpu.memory_space<vmem>>, vector<1x64xf32>
    %c28 = arith.constant 28 : index
    %c0_147 = arith.constant 0 : index
    %352 = vector.load %arg3[%c28, %c0_147] : memref<32x128xf32, #tpu.memory_space<vmem>>, vector<1x64xf32>
    %cst_148 = arith.constant dense<0.000000e+00> : vector<4xf32>
    %353 = vector.multi_reduction <add>, %350, %cst_148 [1] : vector<4x64xf32> to vector<4xf32>
    %354 = vector.shape_cast %353 : vector<4xf32> to vector<4x1xf32>
    %cst_149 = arith.constant 6.400000e+01 : f32
    %355 = vector.broadcast %cst_149 : f32 to vector<4x1xf32>
    %356 = arith.divf %354, %355 : vector<4x1xf32>
    %357 = vector.broadcast %356 : vector<4x1xf32> to vector<4x64xf32>
    %358 = arith.subf %350, %357 : vector<4x64xf32>
    %359 = arith.mulf %358, %358 : vector<4x64xf32>
    %cst_150 = arith.constant dense<0.000000e+00> : vector<4xf32>
    %360 = vector.multi_reduction <add>, %359, %cst_150 [1] : vector<4x64xf32> to vector<4xf32>
    %361 = vector.shape_cast %360 : vector<4xf32> to vector<4x1xf32>
    %cst_151 = arith.constant 6.400000e+01 : f32
    %362 = vector.broadcast %cst_151 : f32 to vector<4x1xf32>
    %363 = arith.divf %361, %362 : vector<4x1xf32>
    %364 = vector.broadcast %356 : vector<4x1xf32> to vector<4x64xf32>
    %365 = arith.subf %350, %364 : vector<4x64xf32>
    %cst_152 = arith.constant 9.99999974E-6 : f32
    %366 = vector.broadcast %cst_152 : f32 to vector<4x1xf32>
    %367 = arith.addf %363, %366 : vector<4x1xf32>
    %368 = math.rsqrt %367 : vector<4x1xf32>
    %369 = vector.broadcast %368 : vector<4x1xf32> to vector<4x64xf32>
    %370 = arith.mulf %365, %369 : vector<4x64xf32>
    %371 = vector.broadcast %351 : vector<1x64xf32> to vector<4x64xf32>
    %372 = arith.mulf %370, %371 : vector<4x64xf32>
    %373 = vector.broadcast %352 : vector<1x64xf32> to vector<4x64xf32>
    %374 = arith.addf %372, %373 : vector<4x64xf32>
    %cst_153 = arith.constant dense<0.000000e+00> : vector<64xf32>
    %375 = vector.multi_reduction <add>, %374, %cst_153 [0] : vector<4x64xf32> to vector<64xf32>
    %376 = vector.shape_cast %375 : vector<64xf32> to vector<1x64xf32>
    %cst_154 = arith.constant 4.000000e+00 : f32
    %377 = vector.broadcast %cst_154 : f32 to vector<1x64xf32>
    %378 = arith.divf %376, %377 : vector<1x64xf32>
    %379 = arith.addf %378, %269 : vector<1x64xf32>
    %c0_155 = arith.constant 0 : index
    %c0_156 = arith.constant 0 : index
    %380 = vector.load %arg9[%c0_155, %c0_156] : memref<1x64xf32, #tpu.memory_space<vmem>>, vector<1x64xf32>
    tpu.vector_store %arg9[%c0_155, %c0_156], %379 {strides = array<i32>} : memref<1x64xf32, #tpu.memory_space<vmem>>, vector<1x64xf32>,
    return
  }
}

</mosaic_0001>

<llo_original>
// kernel: team_forward.1
$region0: #{team_forward.1}
  #allocation0 [shape = 'u32[]', space=smem, size = 0x4, offset = 0x4, fixed_abs, tag = 'smem constant byte address 0x4 - core index']
  #allocation1 [shape = 'u32[144,128]{1,0:T(1,128)}', space=vmem, size = 0x12000, scoped, tag = 'internal scratch']
  #allocation2 [shape = 'bf16[64,2048]{1,0:T(16,128)(2,1)}', space=vmem, size = 0x40000, scoped, tag = 'scratch operand']
  #allocation3 [shape = 'bf16[2048,64]{1,0:T(16,128)(2,1)}', space=vmem, size = 0x80000, scoped, tag = 'scratch operand']
  #allocation4 [shape = 's32[2]{0}', space=sflag, size = 0x8, scoped, tag = 'scratch operand']
  #allocation5 [shape = 'f32[4,64]{1,0:T(4,128)}', space=vmem, size = 0x800, scoped, tag = 'scratch operand']
  #allocation8 [shape = 's32[]', space=sflag, size = 0x4, offset = 0, fixed_abs, tag = 'sflag constant byte address 0x0 - dummy sync flag']
  #allocation9 [shape = 's32[]', space=sflag, size = 0x4, offset = 0, fixed_abs, tag = 'sflag constant byte address 0x0 - dummy sync flag']
  %s0 = inlined_call_operand.vmem [shape: f32[32,32], index: 0, kind: input, shape index: {}]
  %s1 = inlined_call_operand.vmem [shape: f32[8,6,32], index: 1, kind: input, shape index: {}]
  %s2 = inlined_call_operand.vmem [shape: f32[352,128], index: 2, kind: input, shape index: {}]
  %s3 = inlined_call_operand.vmem [shape: f32[32,128], index: 3, kind: input, shape index: {}]
  %s4 = inlined_call_operand.vmem [shape: f32[16,64,16], index: 4, kind: input, shape index: {}]
  %s5 = inlined_call_operand.vmem [shape: f32[12,1,16], index: 5, kind: input, shape index: {}]
  %s6 = inlined_call_operand.vmem [shape: f32[1,2048], index: 6, kind: input, shape index: {}]
  %s7 = inlined_call_operand.vmem [shape: bf16[64,2048], index: 7, kind: input, shape index: {}]
  %s8 = inlined_call_operand.vmem [shape: bf16[2048,64], index: 8, kind: input, shape index: {}]
  %s9 = inlined_call_operand.hbm [shape: f32[1,64], index: 9, kind: output, shape index: {}]
  %s10 = sld [smem:[#allocation0]]
  $region109: #{team_forward.1} parent=0
    _
  %s12 = ssub.s32 1, %s10
  %s13 = scalar_select 0, %s12, %s10
  $region1: #{team_forward.1} parent=0
    #allocation6 [shape = 'u8[512]{0}', space=vmem, size = 0x400, scoped, tag = 'output window, operand 0, single buffered']
    #allocation7 [shape = 's32[1]{0}', space=sflag, size = 0x4, scoped, tag = 'scoped memory for team_forward.1']
    %14 = vsyncpa [#allocation7], 0
    // Predicated region
    $region2: #{team_forward.1} parent=1 // pred_check
      _
    $region3: #{team_forward.1} parent=1 // pred_check_branch
      %16 = sbr.rel (0) target = $region5
    $region4: #{team_forward.1} parent=1 // pred_region
      _
    $region5: #{team_forward.1} parent=1 // pred_fallthru
      _
    // Predicated region
    $region6: #{team_forward.1} parent=1 // pred_check
      _
    $region7: #{team_forward.1} parent=1 // pred_check_branch
      %18 = sbr.rel (0) target = $region9
    $region8: #{team_forward.1} parent=1 // pred_region
      _
    $region9: #{team_forward.1} parent=1 // pred_fallthru
      _
    // Predicated region
    $region10: #{team_forward.1} parent=1 // pred_check
      _
    $region11: #{team_forward.1} parent=1 // pred_check_branch
      %20 = sbr.rel (0) target = $region13
    $region12: #{team_forward.1} parent=1 // pred_region
      _
    $region13: #{team_forward.1} parent=1 // pred_fallthru
      _
    // Predicated region
    $region14: #{team_forward.1} parent=1 // pred_check
      _
    $region15: #{team_forward.1} parent=1 // pred_check_branch
      %22 = sbr.rel (0) target = $region17
    $region16: #{team_forward.1} parent=1 // pred_region
      _
    $region17: #{team_forward.1} parent=1 // pred_fallthru
      _
    // Predicated region
    $region18: #{team_forward.1} parent=1 // pred_check
      _
    $region19: #{team_forward.1} parent=1 // pred_check_branch
      %24 = sbr.rel (0) target = $region21
    $region20: #{team_forward.1} parent=1 // pred_region
      _
    $region21: #{team_forward.1} parent=1 // pred_fallthru
      _
    // Predicated region
    $region22: #{team_forward.1} parent=1 // pred_check
      _
    $region23: #{team_forward.1} parent=1 // pred_check_branch
      %26 = sbr.rel (0) target = $region25
    $region24: #{team_forward.1} parent=1 // pred_region
      _
    $region25: #{team_forward.1} parent=1 // pred_fallthru
      _
    // Predicated region
    $region26: #{team_forward.1} parent=1 // pred_check
      _
    $region27: #{team_forward.1} parent=1 // pred_check_branch
      %28 = sbr.rel (0) target = $region29
    $region28: #{team_forward.1} parent=1 // pred_region
      _
    $region29: #{team_forward.1} parent=1 // pred_fallthru
      _
    %p31 = scmp.lt.u32.totalorder 4, 8
    %p32 = pneg %p31
    // Predicated region
    $region30: #{team_forward.1} parent=1 // pred_check
      _
    $region31: #{team_forward.1} parent=1 // pred_check_branch
      %34 = sbr.rel (%p31) target = $region33
    $region32: #{team_forward.1} parent=1 // pred_region
      %s303 = sand.u32 4, 7
      %p304 = scmp.eq.s32.totalorder %s303, 0
      %p305 = pneg %p304
      // Predicated region
      $region45: #{team_forward.1} parent=32 // pred_check
        _
      $region46: #{team_forward.1} parent=32 // pred_check_branch
        %307 = sbr.rel (%p304) target = $region48
      $region47: #{team_forward.1} parent=32 // pred_region
        %s308 = sand.u32 4, 7
        %s309 = ssub.s32 4, %s308
        %s310 = scalar_lea.vmem %s7, %s309
        %s311 = ssub.s32 4, %s308
        %s312 = scalar_lea.vmem [#allocation2], %s311
        loop: start=0, step=1, limit=1
        $region49: #{team_forward.1} parent=47 // loop_pre_header
          _
        $region50: #{team_forward.1} parent=47 // loop_header
          %s314 = sphi 0, %s318
          %p315 = scmp.ge.s32.totalorder %s314, 1
          %s319 = sphi %s7, %s7
          %s320 = sphi [#allocation2], [#allocation2]
        $region51: #{team_forward.1} parent=47 // loop_header_branch
          %317 = sbr.rel (%p315) target = $region55
        $region52: #{team_forward.1} parent=47 // loop_body
          _
        $region53: #{team_forward.1} parent=47 // loop_footer
          %s318 = sadd.s32 1, %s314
        $region54: #{team_forward.1} parent=47 // loop_footer_branch
          %313 = sbr.rel target = $region50
        $region55: #{team_forward.1} parent=47 // loop_exit
          _
        %s321 = sshllo.u32 0, %s308
        loop: start=0, step=1, limit=1
        $region56: #{team_forward.1} parent=47 // loop_pre_header
          _
        $region57: #{team_forward.1} parent=47 // loop_header
          %s323 = sphi 0, %s327
          %p324 = scmp.ge.s32.totalorder %s323, 1
          %s328 = sphi %s310, %s310
          %s329 = sphi %s312, %s312
        $region58: #{team_forward.1} parent=47 // loop_header_branch
          %326 = sbr.rel (%p324) target = $region62
        $region59: #{team_forward.1} parent=47 // loop_body
          %v330 = vld [vmem:[%s328] sm:%s321]
          %331 = vst [vmem:[%s329] sm:%s321] %v330
          %v332 = vld [vmem:[%s328 + $0x40] sm:%s321]
          %333 = vst [vmem:[%s329 + $0x4] sm:%s321] %v332
          %v334 = vld [vmem:[%s328 + $0x4] sm:%s321]
          %335 = vst [vmem:[%s329 + $0x8] sm:%s321] %v334
          %v336 = vld [vmem:[%s328 + $0x44] sm:%s321]
          %337 = vst [vmem:[%s329 + $0xc] sm:%s321] %v336
          %v338 = vld [vmem:[%s328 + $0x8] sm:%s321]
          %339 = vst [vmem:[%s329 + $0x10] sm:%s321] %v338
          %v340 = vld [vmem:[%s328 + $0x48] sm:%s321]
          %341 = vst [vmem:[%s329 + $0x14] sm:%s321] %v340
          %v342 = vld [vmem:[%s328 + $0xc] sm:%s321]
          %343 = vst [vmem:[%s329 + $0x18] sm:%s321] %v342
          %v344 = vld [vmem:[%s328 + $0x4c] sm:%s321]
          %345 = vst [vmem:[%s329 + $0x1c] sm:%s321] %v344
          %v346 = vld [vmem:[%s328 + $0x10] sm:%s321]
          %347 = vst [vmem:[%s329 + $0x20] sm:%s321] %v346
          %v348 = vld [vmem:[%s328 + $0x50] sm:%s321]
          %349 = vst [vmem:[%s329 + $0x24] sm:%s321] %v348
          %v350 = vld [vmem:[%s328 + $0x14] sm:%s321]
          %351 = vst [vmem:[%s329 + $0x28] sm:%s321] %v350
          %v352 = vld [vmem:[%s328 + $0x54] sm:%s321]
          %353 = vst [vmem:[%s329 + $0x2c] sm:%s321] %v352
          %v354 = vld [vmem:[%s328 + $0x18] sm:%s321]
          %355 = vst [vmem:[%s329 + $0x30] sm:%s321] %v354
          %v356 = vld [vmem:[%s328 + $0x58] sm:%s321]
          %357 = vst [vmem:[%s329 + $0x34] sm:%s321] %v356
          %v358 = vld [vmem:[%s328 + $0x1c] sm:%s321]
          %359 = vst [vmem:[%s329 + $0x38] sm:%s321] %v358
          %v360 = vld [vmem:[%s328 + $0x5c] sm:%s321]
          %361 = vst [vmem:[%s329 + $0x3c] sm:%s321] %v360
          %v362 = vld [vmem:[%s328 + $0x20] sm:%s321]
          %363 = vst [vmem:[%s329 + $0x40] sm:%s321] %v362
          %v364 = vld [vmem:[%s328 + $0x60] sm:%s321]
          %365 = vst [vmem:[%s329 + $0x44] sm:%s321] %v364
          %v366 = vld [vmem:[%s328 + $0x24] sm:%s321]
          %367 = vst [vmem:[%s329 + $0x48] sm:%s321] %v366
          %v368 = vld [vmem:[%s328 + $0x64] sm:%s321]
          %369 = vst [vmem:[%s329 + $0x4c] sm:%s321] %v368
          %v370 = vld [vmem:[%s328 + $0x28] sm:%s321]
          %371 = vst [vmem:[%s329 + $0x50] sm:%s321] %v370
          %v372 = vld [vmem:[%s328 + $0x68] sm:%s321]
          %373 = vst [vmem:[%s329 + $0x54] sm:%s321] %v372
          %v374 = vld [vmem:[%s328 + $0x2c] sm:%s321]
          %375 = vst [vmem:[%s329 + $0x58] sm:%s321] %v374
          %v376 = vld [vmem:[%s328 + $0x6c] sm:%s321]
          %377 = vst [vmem:[%s329 + $0x5c] sm:%s321] %v376
          %v378 = vld [vmem:[%s328 + $0x30] sm:%s321]
          %379 = vst [vmem:[%s329 + $0x60] sm:%s321] %v378
          %v380 = vld [vmem:[%s328 + $0x70] sm:%s321]
          %381 = vst [vmem:[%s329 + $0x64] sm:%s321] %v380
          %v382 = vld [vmem:[%s328 + $0x34] sm:%s321]
          %383 = vst [vmem:[%s329 + $0x68] sm:%s321] %v382
          %v384 = vld [vmem:[%s328 + $0x74] sm:%s321]
          %385 = vst [vmem:[%s329 + $0x6c] sm:%s321] %v384
          %v386 = vld [vmem:[%s328 + $0x38] sm:%s321]
          %387 = vst [vmem:[%s329 + $0x70] sm:%s321] %v386
          %v388 = vld [vmem:[%s328 + $0x78] sm:%s321]
          %389 = vst [vmem:[%s329 + $0x74] sm:%s321] %v388
          %v390 = vld [vmem:[%s328 + $0x3c] sm:%s321]
          %391 = vst [vmem:[%s329 + $0x78] sm:%s321] %v390
          %v392 = vld [vmem:[%s328 + $0x7c] sm:%s321]
          %393 = vst [vmem:[%s329 + $0x7c] sm:%s321] %v392
          %v394 = vld [vmem:[%s328 + $0x80] sm:%s321]
          %395 = vst [vmem:[%s329 + $0x80] sm:%s321] %v394
          %v396 = vld [vmem:[%s328 + $0xc0] sm:%s321]
          %397 = vst [vmem:[%s329 + $0x84] sm:%s321] %v396
          %v398 = vld [vmem:[%s328 + $0x84] sm:%s321]
          %399 = vst [vmem:[%s329 + $0x88] sm:%s321] %v398
          %v400 = vld [vmem:[%s328 + $0xc4] sm:%s321]
          %401 = vst [vmem:[%s329 + $0x8c] sm:%s321] %v400
          %v402 = vld [vmem:[%s328 + $0x88] sm:%s321]
          %403 = vst [vmem:[%s329 + $0x90] sm:%s321] %v402
          %v404 = vld [vmem:[%s328 + $0xc8] sm:%s321]
          %405 = vst [vmem:[%s329 + $0x94] sm:%s321] %v404
          %v406 = vld [vmem:[%s328 + $0x8c] sm:%s321]
          %407 = vst [vmem:[%s329 + $0x98] sm:%s321] %v406
          %v408 = vld [vmem:[%s328 + $0xcc] sm:%s321]
          %409 = vst [vmem:[%s329 + $0x9c] sm:%s321] %v408
          %v410 = vld [vmem:[%s328 + $0x90] sm:%s321]
          %411 = vst [vmem:[%s329 + $0xa0] sm:%s321] %v410
          %v412 = vld [vmem:[%s328 + $0xd0] sm:%s321]
          %413 = vst [vmem:[%s329 + $0xa4] sm:%s321] %v412
          %v414 = vld [vmem:[%s328 + $0x94] sm:%s321]
          %415 = vst [vmem:[%s329 + $0xa8] sm:%s321] %v414
          %v416 = vld [vmem:[%s328 + $0xd4] sm:%s321]
          %417 = vst [vmem:[%s329 + $0xac] sm:%s321] %v416
          %v418 = vld [vmem:[%s328 + $0x98] sm:%s321]
          %419 = vst [vmem:[%s329 + $0xb0] sm:%s321] %v418
          %v420 = vld [vmem:[%s328 + $0xd8] sm:%s321]
          %421 = vst [vmem:[%s329 + $0xb4] sm:%s321] %v420
          %v422 = vld [vmem:[%s328 + $0x9c] sm:%s321]
          %423 = vst [vmem:[%s329 + $0xb8] sm:%s321] %v422
          %v424 = vld [vmem:[%s328 + $0xdc] sm:%s321]
          %425 = vst [vmem:[%s329 + $0xbc] sm:%s321] %v424
          %v426 = vld [vmem:[%s328 + $0xa0] sm:%s321]
          %427 = vst [vmem:[%s329 + $0xc0] sm:%s321] %v426
          %v428 = vld [vmem:[%s328 + $0xe0] sm:%s321]
          %429 = vst [vmem:[%s329 + $0xc4] sm:%s321] %v428
          %v430 = vld [vmem:[%s328 + $0xa4] sm:%s321]
          %431 = vst [vmem:[%s329 + $0xc8] sm:%s321] %v430
          %v432 = vld [vmem:[%s328 + $0xe4] sm:%s321]
          %433 = vst [vmem:[%s329 + $0xcc] sm:%s321] %v432
          %v434 = vld [vmem:[%s328 + $0xa8] sm:%s321]
          %435 = vst [vmem:[%s329 + $0xd0] sm:%s321] %v434
          %v436 = vld [vmem:[%s328 + $0xe8] sm:%s321]
          %437 = vst [vmem:[%s329 + $0xd4] sm:%s321] %v436
          %v438 = vld [vmem:[%s328 + $0xac] sm:%s321]
          %439 = vst [vmem:[%s329 + $0xd8] sm:%s321] %v438
          %v440 = vld [vmem:[%s328 + $0xec] sm:%s321]
          %441 = vst [vmem:[%s329 + $0xdc] sm:%s321] %v440
          %v442 = vld [vmem:[%s328 + $0xb0] sm:%s321]
          %443 = vst [vmem:[%s329 + $0xe0] sm:%s321] %v442
          %v444 = vld [vmem:[%s328 + $0xf0] sm:%s321]
          %445 = vst [vmem:[%s329 + $0xe4] sm:%s321] %v444
          %v446 = vld [vmem:[%s328 + $0xb4] sm:%s321]
          %447 = vst [vmem:[%s329 + $0xe8] sm:%s321] %v446
          %v448 = vld [vmem:[%s328 + $0xf4] sm:%s321]
          %449 = vst [vmem:[%s329 + $0xec] sm:%s321] %v448
          %v450 = vld [vmem:[%s328 + $0xb8] sm:%s321]
          %451 = vst [vmem:[%s329 + $0xf0] sm:%s321] %v450
          %v452 = vld [vmem:[%s328 + $0xf8] sm:%s321]
          %453 = vst [vmem:[%s329 + $0xf4] sm:%s321] %v452
          %v454 = vld [vmem:[%s328 + $0xbc] sm:%s321]
          %455 = vst [vmem:[%s329 + $0xf8] sm:%s321] %v454
          %v456 = vld [vmem:[%s328 + $0xfc] sm:%s321]
          %457 = vst [vmem:[%s329 + $0xfc] sm:%s321] %v456
          %v458 = vld [vmem:[%s328 + $0x100] sm:%s321]
          %459 = vst [vmem:[%s329 + $0x100] sm:%s321] %v458
          %v460 = vld [vmem:[%s328 + $0x140] sm:%s321]
          %461 = vst [vmem:[%s329 + $0x104] sm:%s321] %v460
          %v462 = vld [vmem:[%s328 + $0x104] sm:%s321]
          %463 = vst [vmem:[%s329 + $0x108] sm:%s321] %v462
          %v464 = vld [vmem:[%s328 + $0x144] sm:%s321]
          %465 = vst [vmem:[%s329 + $0x10c] sm:%s321] %v464
          %v466 = vld [vmem:[%s328 + $0x108] sm:%s321]
          %467 = vst [vmem:[%s329 + $0x110] sm:%s321] %v466
          %v468 = vld [vmem:[%s328 + $0x148] sm:%s321]
          %469 = vst [vmem:[%s329 + $0x114] sm:%s321] %v468
          %v470 = vld [vmem:[%s328 + $0x10c] sm:%s321]
          %471 = vst [vmem:[%s329 + $0x118] sm:%s321] %v470
          %v472 = vld [vmem:[%s328 + $0x14c] sm:%s321]
          %473 = vst [vmem:[%s329 + $0x11c] sm:%s321] %v472
          %v474 = vld [vmem:[%s328 + $0x110] sm:%s321]
          %475 = vst [vmem:[%s329 + $0x120] sm:%s321] %v474
          %v476 = vld [vmem:[%s328 + $0x150] sm:%s321]
          %477 = vst [vmem:[%s329 + $0x124] sm:%s321] %v476
          %v478 = vld [vmem:[%s328 + $0x114] sm:%s321]
          %479 = vst [vmem:[%s329 + $0x128] sm:%s321] %v478
          %v480 = vld [vmem:[%s328 + $0x154] sm:%s321]
          %481 = vst [vmem:[%s329 + $0x12c] sm:%s321] %v480
          %v482 = vld [vmem:[%s328 + $0x118] sm:%s321]
          %483 = vst [vmem:[%s329 + $0x130] sm:%s321] %v482
          %v484 = vld [vmem:[%s328 + $0x158] sm:%s321]
          %485 = vst [vmem:[%s329 + $0x134] sm:%s321] %v484
          %v486 = vld [vmem:[%s328 + $0x11c] sm:%s321]
          %487 = vst [vmem:[%s329 + $0x138] sm:%s321] %v486
          %v488 = vld [vmem:[%s328 + $0x15c] sm:%s321]
          %489 = vst [vmem:[%s329 + $0x13c] sm:%s321] %v488
          %v490 = vld [vmem:[%s328 + $0x120] sm:%s321]
          %491 = vst [vmem:[%s329 + $0x140] sm:%s321] %v490
          %v492 = vld [vmem:[%s328 + $0x160] sm:%s321]
          %493 = vst [vmem:[%s329 + $0x144] sm:%s321] %v492
          %v494 = vld [vmem:[%s328 + $0x124] sm:%s321]
          %495 = vst [vmem:[%s329 + $0x148] sm:%s321] %v494
          %v496 = vld [vmem:[%s328 + $0x164] sm:%s321]
          %497 = vst [vmem:[%s329 + $0x14c] sm:%s321] %v496
          %v498 = vld [vmem:[%s328 + $0x128] sm:%s321]
          %499 = vst [vmem:[%s329 + $0x150] sm:%s321] %v498
          %v500 = vld [vmem:[%s328 + $0x168] sm:%s321]
          %501 = vst [vmem:[%s329 + $0x154] sm:%s321] %v500
          %v502 = vld [vmem:[%s328 + $0x12c] sm:%s321]
          %503 = vst [vmem:[%s329 + $0x158] sm:%s321] %v502
          %v504 = vld [vmem:[%s328 + $0x16c] sm:%s321]
          %505 = vst [vmem:[%s329 + $0x15c] sm:%s321] %v504
          %v506 = vld [vmem:[%s328 + $0x130] sm:%s321]
          %507 = vst [vmem:[%s329 + $0x160] sm:%s321] %v506
          %v508 = vld [vmem:[%s328 + $0x170] sm:%s321]
          %509 = vst [vmem:[%s329 + $0x164] sm:%s321] %v508
          %v510 = vld [vmem:[%s328 + $0x134] sm:%s321]
          %511 = vst [vmem:[%s329 + $0x168] sm:%s321] %v510
          %v512 = vld [vmem:[%s328 + $0x174] sm:%s321]
          %513 = vst [vmem:[%s329 + $0x16c] sm:%s321] %v512
          %v514 = vld [vmem:[%s328 + $0x138] sm:%s321]
          %515 = vst [vmem:[%s329 + $0x170] sm:%s321] %v514
          %v516 = vld [vmem:[%s328 + $0x178] sm:%s321]
          %517 = vst [vmem:[%s329 + $0x174] sm:%s321] %v516
          %v518 = vld [vmem:[%s328 + $0x13c] sm:%s321]
          %519 = vst [vmem:[%s329 + $0x178] sm:%s321] %v518
          %v520 = vld [vmem:[%s328 + $0x17c] sm:%s321]
          %521 = vst [vmem:[%s329 + $0x17c] sm:%s321] %v520
          %v522 = vld [vmem:[%s328 + $0x180] sm:%s321]
          %523 = vst [vmem:[%s329 + $0x180] sm:%s321] %v522
          %v524 = vld [vmem:[%s328 + $0x1c0] sm:%s321]
          %525 = vst [vmem:[%s329 + $0x184] sm:%s321] %v524
          %v526 = vld [vmem:[%s328 + $0x184] sm:%s321]
          %527 = vst [vmem:[%s329 + $0x188] sm:%s321] %v526
          %v528 = vld [vmem:[%s328 + $0x1c4] sm:%s321]
          %529 = vst [vmem:[%s329 + $0x18c] sm:%s321] %v528
          %v530 = vld [vmem:[%s328 + $0x188] sm:%s321]
          %531 = vst [vmem:[%s329 + $0x190] sm:%s321] %v530
          %v532 = vld [vmem:[%s328 + $0x1c8] sm:%s321]
          %533 = vst [vmem:[%s329 + $0x194] sm:%s321] %v532
          %v534 = vld [vmem:[%s328 + $0x18c] sm:%s321]
          %535 = vst [vmem:[%s329 + $0x198] sm:%s321] %v534
          %v536 = vld [vmem:[%s328 + $0x1cc] sm:%s321]
          %537 = vst [vmem:[%s329 + $0x19c] sm:%s321] %v536
          %v538 = vld [vmem:[%s328 + $0x190] sm:%s321]
          %539 = vst [vmem:[%s329 + $0x1a0] sm:%s321] %v538
          %v540 = vld [vmem:[%s328 + $0x1d0] sm:%s321]
          %541 = vst [vmem:[%s329 + $0x1a4] sm:%s321] %v540
          %v542 = vld [vmem:[%s328 + $0x194] sm:%s321]
          %543 = vst [vmem:[%s329 + $0x1a8] sm:%s321] %v542
          %v544 = vld [vmem:[%s328 + $0x1d4] sm:%s321]
          %545 = vst [vmem:[%s329 + $0x1ac] sm:%s321] %v544
          %v546 = vld [vmem:[%s328 + $0x198] sm:%s321]
          %547 = vst [vmem:[%s329 + $0x1b0] sm:%s321] %v546
          %v548 = vld [vmem:[%s328 + $0x1d8] sm:%s321]
          %549 = vst [vmem:[%s329 + $0x1b4] sm:%s321] %v548
          %v550 = vld [vmem:[%s328 + $0x19c] sm:%s321]
          %551 = vst [vmem:[%s329 + $0x1b8] sm:%s321] %v550
          %v552 = vld [vmem:[%s328 + $0x1dc] sm:%s321]
          %553 = vst [vmem:[%s329 + $0x1bc] sm:%s321] %v552
          %v554 = vld [vmem:[%s328 + $0x1a0] sm:%s321]
          %555 = vst [vmem:[%s329 + $0x1c0] sm:%s321] %v554
          %v556 = vld [vmem:[%s328 + $0x1e0] sm:%s321]
          %557 = vst [vmem:[%s329 + $0x1c4] sm:%s321] %v556
          %v558 = vld [vmem:[%s328 + $0x1a4] sm:%s321]
          %559 = vst [vmem:[%s329 + $0x1c8] sm:%s321] %v558
          %v560 = vld [vmem:[%s328 + $0x1e4] sm:%s321]
          %561 = vst [vmem:[%s329 + $0x1cc] sm:%s321] %v560
          %v562 = vld [vmem:[%s328 + $0x1a8] sm:%s321]
          %563 = vst [vmem:[%s329 + $0x1d0] sm:%s321] %v562
          %v564 = vld [vmem:[%s328 + $0x1e8] sm:%s321]
          %565 = vst [vmem:[%s329 + $0x1d4] sm:%s321] %v564
          %v566 = vld [vmem:[%s328 + $0x1ac] sm:%s321]
          %567 = vst [vmem:[%s329 + $0x1d8] sm:%s321] %v566
          %v568 = vld [vmem:[%s328 + $0x1ec] sm:%s321]
          %569 = vst [vmem:[%s329 + $0x1dc] sm:%s321] %v568
          %v570 = vld [vmem:[%s328 + $0x1b0] sm:%s321]
          %571 = vst [vmem:[%s329 + $0x1e0] sm:%s321] %v570
          %v572 = vld [vmem:[%s328 + $0x1f0] sm:%s321]
          %573 = vst [vmem:[%s329 + $0x1e4] sm:%s321] %v572
          %v574 = vld [vmem:[%s328 + $0x1b4] sm:%s321]
          %575 = vst [vmem:[%s329 + $0x1e8] sm:%s321] %v574
          %v576 = vld [vmem:[%s328 + $0x1f4] sm:%s321]
          %577 = vst [vmem:[%s329 + $0x1ec] sm:%s321] %v576
          %v578 = vld [vmem:[%s328 + $0x1b8] sm:%s321]
          %579 = vst [vmem:[%s329 + $0x1f0] sm:%s321] %v578
          %v580 = vld [vmem:[%s328 + $0x1f8] sm:%s321]
          %581 = vst [vmem:[%s329 + $0x1f4] sm:%s321] %v580
          %v582 = vld [vmem:[%s328 + $0x1bc] sm:%s321]
          %583 = vst [vmem:[%s329 + $0x1f8] sm:%s321] %v582
          %v584 = vld [vmem:[%s328 + $0x1fc] sm:%s321]
          %585 = vst [vmem:[%s329 + $0x1fc] sm:%s321] %v584
        $region60: #{team_forward.1} parent=47 // loop_footer
          %s327 = sadd.s32 1, %s323
        $region61: #{team_forward.1} parent=47 // loop_footer_branch
          %322 = sbr.rel target = $region57
        $region62: #{team_forward.1} parent=47 // loop_exit
          _
      $region48: #{team_forward.1} parent=32 // pred_fallthru
        _
    $region33: #{team_forward.1} parent=1 // pred_fallthru
      _
    // Predicated region
    $region34: #{team_forward.1} parent=1 // pred_check
      %p35 = pneg %p31
    $region35: #{team_forward.1} parent=1 // pred_check_branch
      %37 = sbr.rel (%p35) target = $region37
    $region36: #{team_forward.1} parent=1 // pred_region
      %s38 = sshllo.u32 0, 4
      loop: start=0, step=1, limit=1
      $region38: #{team_forward.1} parent=36 // loop_pre_header
        _
      $region39: #{team_forward.1} parent=36 // loop_header
        %s40 = sphi 0, %s44
        %p41 = scmp.ge.s32.totalorder %s40, 1
        %s45 = sphi %s7, %s7
        %s46 = sphi [#allocation2], [#allocation2]
      $region40: #{team_forward.1} parent=36 // loop_header_branch
        %43 = sbr.rel (%p41) target = $region44
      $region41: #{team_forward.1} parent=36 // loop_body
        %v47 = vld [vmem:[%s45] sm:%s38]
        %48 = vst [vmem:[%s46] sm:%s38] %v47
        %v49 = vld [vmem:[%s45 + $0x40] sm:%s38]
        %50 = vst [vmem:[%s46 + $0x4] sm:%s38] %v49
        %v51 = vld [vmem:[%s45 + $0x4] sm:%s38]
        %52 = vst [vmem:[%s46 + $0x8] sm:%s38] %v51
        %v53 = vld [vmem:[%s45 + $0x44] sm:%s38]
        %54 = vst [vmem:[%s46 + $0xc] sm:%s38] %v53
        %v55 = vld [vmem:[%s45 + $0x8] sm:%s38]
        %56 = vst [vmem:[%s46 + $0x10] sm:%s38] %v55
        %v57 = vld [vmem:[%s45 + $0x48] sm:%s38]
        %58 = vst [vmem:[%s46 + $0x14] sm:%s38] %v57
        %v59 = vld [vmem:[%s45 + $0xc] sm:%s38]
        %60 = vst [vmem:[%s46 + $0x18] sm:%s38] %v59
        %v61 = vld [vmem:[%s45 + $0x4c] sm:%s38]
        %62 = vst [vmem:[%s46 + $0x1c] sm:%s38] %v61
        %v63 = vld [vmem:[%s45 + $0x10] sm:%s38]
        %64 = vst [vmem:[%s46 + $0x20] sm:%s38] %v63
        %v65 = vld [vmem:[%s45 + $0x50] sm:%s38]
        %66 = vst [vmem:[%s46 + $0x24] sm:%s38] %v65
        %v67 = vld [vmem:[%s45 + $0x14] sm:%s38]
        %68 = vst [vmem:[%s46 + $0x28] sm:%s38] %v67
        %v69 = vld [vmem:[%s45 + $0x54] sm:%s38]
        %70 = vst [vmem:[%s46 + $0x2c] sm:%s38] %v69
        %v71 = vld [vmem:[%s45 + $0x18] sm:%s38]
        %72 = vst [vmem:[%s46 + $0x30] sm:%s38] %v71
        %v73 = vld [vmem:[%s45 + $0x58] sm:%s38]
        %74 = vst [vmem:[%s46 + $0x34] sm:%s38] %v73
        %v75 = vld [vmem:[%s45 + $0x1c] sm:%s38]
        %76 = vst [vmem:[%s46 + $0x38] sm:%s38] %v75
        %v77 = vld [vmem:[%s45 + $0x5c] sm:%s38]
        %78 = vst [vmem:[%s46 + $0x3c] sm:%s38] %v77
        %v79 = vld [vmem:[%s45 + $0x20] sm:%s38]
        %80 = vst [vmem:[%s46 + $0x40] sm:%s38] %v79
        %v81 = vld [vmem:[%s45 + $0x60] sm:%s38]
        %82 = vst [vmem:[%s46 + $0x44] sm:%s38] %v81
        %v83 = vld [vmem:[%s45 + $0x24] sm:%s38]
        %84 = vst [vmem:[%s46 + $0x48] sm:%s38] %v83
        %v85 = vld [vmem:[%s45 + $0x64] sm:%s38]
        %86 = vst [vmem:[%s46 + $0x4c] sm:%s38] %v85
        %v87 = vld [vmem:[%s45 + $0x28] sm:%s38]
        %88 = vst [vmem:[%s46 + $0x50] sm:%s38] %v87
        %v89 = vld [vmem:[%s45 + $0x68] sm:%s38]
        %90 = vst [vmem:[%s46 + $0x54] sm:%s38] %v89
        %v91 = vld [vmem:[%s45 + $0x2c] sm:%s38]
        %92 = vst [vmem:[%s46 + $0x58] sm:%s38] %v91
        %v93 = vld [vmem:[%s45 + $0x6c] sm:%s38]
        %94 = vst [vmem:[%s46 + $0x5c] sm:%s38] %v93
        %v95 = vld [vmem:[%s45 + $0x30] sm:%s38]
        %96 = vst [vmem:[%s46 + $0x60] sm:%s38] %v95
        %v97 = vld [vmem:[%s45 + $0x70] sm:%s38]
        %98 = vst [vmem:[%s46 + $0x64] sm:%s38] %v97
        %v99 = vld [vmem:[%s45 + $0x34] sm:%s38]
        %100 = vst [vmem:[%s46 + $0x68] sm:%s38] %v99
        %v101 = vld [vmem:[%s45 + $0x74] sm:%s38]
        %102 = vst [vmem:[%s46 + $0x6c] sm:%s38] %v101
        %v103 = vld [vmem:[%s45 + $0x38] sm:%s38]
        %104 = vst [vmem:[%s46 + $0x70] sm:%s38] %v103
        %v105 = vld [vmem:[%s45 + $0x78] sm:%s38]
        %106 = vst [vmem:[%s46 + $0x74] sm:%s38] %v105
        %v107 = vld [vmem:[%s45 + $0x3c] sm:%s38]
        %108 = vst [vmem:[%s46 + $0x78] sm:%s38] %v107
        %v109 = vld [vmem:[%s45 + $0x7c] sm:%s38]
        %110 = vst [vmem:[%s46 + $0x7c] sm:%s38] %v109
        %v111 = vld [vmem:[%s45 + $0x80] sm:%s38]
        %112 = vst [vmem:[%s46 + $0x80] sm:%s38] %v111
        %v113 = vld [vmem:[%s45 + $0xc0] sm:%s38]
        %114 = vst [vmem:[%s46 + $0x84] sm:%s38] %v113
        %v115 = vld [vmem:[%s45 + $0x84] sm:%s38]
        %116 = vst [vmem:[%s46 + $0x88] sm:%s38] %v115
        %v117 = vld [vmem:[%s45 + $0xc4] sm:%s38]
        %118 = vst [vmem:[%s46 + $0x8c] sm:%s38] %v117
        %v119 = vld [vmem:[%s45 + $0x88] sm:%s38]
        %120 = vst [vmem:[%s46 + $0x90] sm:%s38] %v119
        %v121 = vld [vmem:[%s45 + $0xc8] sm:%s38]
        %122 = vst [vmem:[%s46 + $0x94] sm:%s38] %v121
        %v123 = vld [vmem:[%s45 + $0x8c] sm:%s38]
        %124 = vst [vmem:[%s46 + $0x98] sm:%s38] %v123
        %v125 = vld [vmem:[%s45 + $0xcc] sm:%s38]
        %126 = vst [vmem:[%s46 + $0x9c] sm:%s38] %v125
        %v127 = vld [vmem:[%s45 + $0x90] sm:%s38]
        %128 = vst [vmem:[%s46 + $0xa0] sm:%s38] %v127
        %v129 = vld [vmem:[%s45 + $0xd0] sm:%s38]
        %130 = vst [vmem:[%s46 + $0xa4] sm:%s38] %v129
        %v131 = vld [vmem:[%s45 + $0x94] sm:%s38]
        %132 = vst [vmem:[%s46 + $0xa8] sm:%s38] %v131
        %v133 = vld [vmem:[%s45 + $0xd4] sm:%s38]
        %134 = vst [vmem:[%s46 + $0xac] sm:%s38] %v133
        %v135 = vld [vmem:[%s45 + $0x98] sm:%s38]
        %136 = vst [vmem:[%s46 + $0xb0] sm:%s38] %v135
        %v137 = vld [vmem:[%s45 + $0xd8] sm:%s38]
        %138 = vst [vmem:[%s46 + $0xb4] sm:%s38] %v137
        %v139 = vld [vmem:[%s45 + $0x9c] sm:%s38]
        %140 = vst [vmem:[%s46 + $0xb8] sm:%s38] %v139
        %v141 = vld [vmem:[%s45 + $0xdc] sm:%s38]
        %142 = vst [vmem:[%s46 + $0xbc] sm:%s38] %v141
        %v143 = vld [vmem:[%s45 + $0xa0] sm:%s38]
        %144 = vst [vmem:[%s46 + $0xc0] sm:%s38] %v143
        %v145 = vld [vmem:[%s45 + $0xe0] sm:%s38]
        %146 = vst [vmem:[%s46 + $0xc4] sm:%s38] %v145
        %v147 = vld [vmem:[%s45 + $0xa4] sm:%s38]
        %148 = vst [vmem:[%s46 + $0xc8] sm:%s38] %v147
        %v149 = vld [vmem:[%s45 + $0xe4] sm:%s38]
        %150 = vst [vmem:[%s46 + $0xcc] sm:%s38] %v149
        %v151 = vld [vmem:[%s45 + $0xa8] sm:%s38]
        %152 = vst [vmem:[%s46 + $0xd0] sm:%s38] %v151
        %v153 = vld [vmem:[%s45 + $0xe8] sm:%s38]
        %154 = vst [vmem:[%s46 + $0xd4] sm:%s38] %v153
        %v155 = vld [vmem:[%s45 + $0xac] sm:%s38]
        %156 = vst [vmem:[%s46 + $0xd8] sm:%s38] %v155
        %v157 = vld [vmem:[%s45 + $0xec] sm:%s38]
        %158 = vst [vmem:[%s46 + $0xdc] sm:%s38] %v157
        %v159 = vld [vmem:[%s45 + $0xb0] sm:%s38]
        %160 = vst [vmem:[%s46 + $0xe0] sm:%s38] %v159
        %v161 = vld [vmem:[%s45 + $0xf0] sm:%s38]
        %162 = vst [vmem:[%s46 + $0xe4] sm:%s38] %v161
        %v163 = vld [vmem:[%s45 + $0xb4] sm:%s38]
        %164 = vst [vmem:[%s46 + $0xe8] sm:%s38] %v163
        %v165 = vld [vmem:[%s45 + $0xf4] sm:%s38]
        %166 = vst [vmem:[%s46 + $0xec] sm:%s38] %v165
        %v167 = vld [vmem:[%s45 + $0xb8] sm:%s38]
        %168 = vst [vmem:[%s46 + $0xf0] sm:%s38] %v167
        %v169 = vld [vmem:[%s45 + $0xf8] sm:%s38]
        %170 = vst [vmem:[%s46 + $0xf4] sm:%s38] %v169
        %v171 = vld [vmem:[%s45 + $0xbc] sm:%s38]
        %172 = vst [vmem:[%s46 + $0xf8] sm:%s38] %v171
        %v173 = vld [vmem:[%s45 + $0xfc] sm:%s38]
        %174 = vst [vmem:[%s46 + $0xfc] sm:%s38] %v173
        %v175 = vld [vmem:[%s45 + $0x100] sm:%s38]
        %176 = vst [vmem:[%s46 + $0x100] sm:%s38] %v175
        %v177 = vld [vmem:[%s45 + $0x140] sm:%s38]
        %178 = vst [vmem:[%s46 + $0x104] sm:%s38] %v177
        %v179 = vld [vmem:[%s45 + $0x104] sm:%s38]
        %180 = vst [vmem:[%s46 + $0x108] sm:%s38] %v179
        %v181 = vld [vmem:[%s45 + $0x144] sm:%s38]
        %182 = vst [vmem:[%s46 + $0x10c] sm:%s38] %v181
        %v183 = vld [vmem:[%s45 + $0x108] sm:%s38]
        %184 = vst [vmem:[%s46 + $0x110] sm:%s38] %v183
        %v185 = vld [vmem:[%s45 + $0x148] sm:%s38]
        %186 = vst [vmem:[%s46 + $0x114] sm:%s38] %v185
        %v187 = vld [vmem:[%s45 + $0x10c] sm:%s38]
        %188 = vst [vmem:[%s46 + $0x118] sm:%s38] %v187
        %v189 = vld [vmem:[%s45 + $0x14c] sm:%s38]
        %190 = vst [vmem:[%s46 + $0x11c] sm:%s38] %v189
        %v191 = vld [vmem:[%s45 + $0x110] sm:%s38]
        %192 = vst [vmem:[%s46 + $0x120] sm:%s38] %v191
        %v193 = vld [vmem:[%s45 + $0x150] sm:%s38]
        %194 = vst [vmem:[%s46 + $0x124] sm:%s38] %v193
        %v195 = vld [vmem:[%s45 + $0x114] sm:%s38]
        %196 = vst [vmem:[%s46 + $0x128] sm:%s38] %v195
        %v197 = vld [vmem:[%s45 + $0x154] sm:%s38]
        %198 = vst [vmem:[%s46 + $0x12c] sm:%s38] %v197
        %v199 = vld [vmem:[%s45 + $0x118] sm:%s38]
        %200 = vst [vmem:[%s46 + $0x130] sm:%s38] %v199
        %v201 = vld [vmem:[%s45 + $0x158] sm:%s38]
        %202 = vst [vmem:[%s46 + $0x134] sm:%s38] %v201
        %v203 = vld [vmem:[%s45 + $0x11c] sm:%s38]
        %204 = vst [vmem:[%s46 + $0x138] sm:%s38] %v203
        %v205 = vld [vmem:[%s45 + $0x15c] sm:%s38]
        %206 = vst [vmem:[%s46 + $0x13c] sm:%s38] %v205
        %v207 = vld [vmem:[%s45 + $0x120] sm:%s38]
        %208 = vst [vmem:[%s46 + $0x140] sm:%s38] %v207
        %v209 = vld [vmem:[%s45 + $0x160] sm:%s38]
        %210 = vst [vmem:[%s46 + $0x144] sm:%s38] %v209
        %v211 = vld [vmem:[%s45 + $0x124] sm:%s38]
        %212 = vst [vmem:[%s46 + $0x148] sm:%s38] %v211
        %v213 = vld [vmem:[%s45 + $0x164] sm:%s38]
        %214 = vst [vmem:[%s46 + $0x14c] sm:%s38] %v213
        %v215 = vld [vmem:[%s45 + $0x128] sm:%s38]
        %216 = vst [vmem:[%s46 + $0x150] sm:%s38] %v215
        %v217 = vld [vmem:[%s45 + $0x168] sm:%s38]
        %218 = vst [vmem:[%s46 + $0x154] sm:%s38] %v217
        %v219 = vld [vmem:[%s45 + $0x12c] sm:%s38]
        %220 = vst [vmem:[%s46 + $0x158] sm:%s38] %v219
        %v221 = vld [vmem:[%s45 + $0x16c] sm:%s38]
        %222 = vst [vmem:[%s46 + $0x15c] sm:%s38] %v221
        %v223 = vld [vmem:[%s45 + $0x130] sm:%s38]
        %224 = vst [vmem:[%s46 + $0x160] sm:%s38] %v223
        %v225 = vld [vmem:[%s45 + $0x170] sm:%s38]
        %226 = vst [vmem:[%s46 + $0x164] sm:%s38] %v225
        %v227 = vld [vmem:[%s45 + $0x134] sm:%s38]
        %228 = vst [vmem:[%s46 + $0x168] sm:%s38] %v227
        %v229 = vld [vmem:[%s45 + $0x174] sm:%s38]
        %230 = vst [vmem:[%s46 + $0x16c] sm:%s38] %v229
        %v231 = vld [vmem:[%s45 + $0x138] sm:%s38]
        %232 = vst [vmem:[%s46 + $0x170] sm:%s38] %v231
        %v233 = vld [vmem:[%s45 + $0x178] sm:%s38]
        %234 = vst [vmem:[%s46 + $0x174] sm:%s38] %v233
        %v235 = vld [vmem:[%s45 + $0x13c] sm:%s38]
        %236 = vst [vmem:[%s46 + $0x178] sm:%s38] %v235
        %v237 = vld [vmem:[%s45 + $0x17c] sm:%s38]
        %238 = vst [vmem:[%s46 + $0x17c] sm:%s38] %v237
        %v239 = vld [vmem:[%s45 + $0x180] sm:%s38]
        %240 = vst [vmem:[%s46 + $0x180] sm:%s38] %v239
        %v241 = vld [vmem:[%s45 + $0x1c0] sm:%s38]
        %242 = vst [vmem:[%s46 + $0x184] sm:%s38] %v241
        %v243 = vld [vmem:[%s45 + $0x184] sm:%s38]
        %244 = vst [vmem:[%s46 + $0x188] sm:%s38] %v243
        %v245 = vld [vmem:[%s45 + $0x1c4] sm:%s38]
        %246 = vst [vmem:[%s46 + $0x18c] sm:%s38] %v245
        %v247 = vld [vmem:[%s45 + $0x188] sm:%s38]
        %248 = vst [vmem:[%s46 + $0x190] sm:%s38] %v247
        %v249 = vld [vmem:[%s45 + $0x1c8] sm:%s38]
        %250 = vst [vmem:[%s46 + $0x194] sm:%s38] %v249
        %v251 = vld [vmem:[%s45 + $0x18c] sm:%s38]
        %252 = vst [vmem:[%s46 + $0x198] sm:%s38] %v251
        %v253 = vld [vmem:[%s45 + $0x1cc] sm:%s38]
        %254 = vst [vmem:[%s46 + $0x19c] sm:%s38] %v253
        %v255 = vld [vmem:[%s45 + $0x190] sm:%s38]
        %256 = vst [vmem:[%s46 + $0x1a0] sm:%s38] %v255
        %v257 = vld [vmem:[%s45 + $0x1d0] sm:%s38]
        %258 = vst [vmem:[%s46 + $0x1a4] sm:%s38] %v257
        %v259 = vld [vmem:[%s45 + $0x194] sm:%s38]
        %260 = vst [vmem:[%s46 + $0x1a8] sm:%s38] %v259
        %v261 = vld [vmem:[%s45 + $0x1d4] sm:%s38]
        %262 = vst [vmem:[%s46 + $0x1ac] sm:%s38] %v261
        %v263 = vld [vmem:[%s45 + $0x198] sm:%s38]
        %264 = vst [vmem:[%s46 + $0x1b0] sm:%s38] %v263
        %v265 = vld [vmem:[%s45 + $0x1d8] sm:%s38]
        %266 = vst [vmem:[%s46 + $0x1b4] sm:%s38] %v265
        %v267 = vld [vmem:[%s45 + $0x19c] sm:%s38]
        %268 = vst [vmem:[%s46 + $0x1b8] sm:%s38] %v267
        %v269 = vld [vmem:[%s45 + $0x1dc] sm:%s38]
        %270 = vst [vmem:[%s46 + $0x1bc] sm:%s38] %v269
        %v271 = vld [vmem:[%s45 + $0x1a0] sm:%s38]
        %272 = vst [vmem:[%s46 + $0x1c0] sm:%s38] %v271
        %v273 = vld [vmem:[%s45 + $0x1e0] sm:%s38]
        %274 = vst [vmem:[%s46 + $0x1c4] sm:%s38] %v273
        %v275 = vld [vmem:[%s45 + $0x1a4] sm:%s38]
        %276 = vst [vmem:[%s46 + $0x1c8] sm:%s38] %v275
        %v277 = vld [vmem:[%s45 + $0x1e4] sm:%s38]
        %278 = vst [vmem:[%s46 + $0x1cc] sm:%s38] %v277
        %v279 = vld [vmem:[%s45 + $0x1a8] sm:%s38]
        %280 = vst [vmem:[%s46 + $0x1d0] sm:%s38] %v279
        %v281 = vld [vmem:[%s45 + $0x1e8] sm:%s38]
        %282 = vst [vmem:[%s46 + $0x1d4] sm:%s38] %v281
        %v283 = vld [vmem:[%s45 + $0x1ac] sm:%s38]
        %284 = vst [vmem:[%s46 + $0x1d8] sm:%s38] %v283
        %v285 = vld [vmem:[%s45 + $0x1ec] sm:%s38]
        %286 = vst [vmem:[%s46 + $0x1dc] sm:%s38] %v285
        %v287 = vld [vmem:[%s45 + $0x1b0] sm:%s38]
        %288 = vst [vmem:[%s46 + $0x1e0] sm:%s38] %v287
        %v289 = vld [vmem:[%s45 + $0x1f0] sm:%s38]
        %290 = vst [vmem:[%s46 + $0x1e4] sm:%s38] %v289
        %v291 = vld [vmem:[%s45 + $0x1b4] sm:%s38]
        %292 = vst [vmem:[%s46 + $0x1e8] sm:%s38] %v291
        %v293 = vld [vmem:[%s45 + $0x1f4] sm:%s38]
        %294 = vst [vmem:[%s46 + $0x1ec] sm:%s38] %v293
        %v295 = vld [vmem:[%s45 + $0x1b8] sm:%s38]
        %296 = vst [vmem:[%s46 + $0x1f0] sm:%s38] %v295
        %v297 = vld [vmem:[%s45 + $0x1f8] sm:%s38]
        %298 = vst [vmem:[%s46 + $0x1f4] sm:%s38] %v297
        %v299 = vld [vmem:[%s45 + $0x1bc] sm:%s38]
        %300 = vst [vmem:[%s46 + $0x1f8] sm:%s38] %v299
        %v301 = vld [vmem:[%s45 + $0x1fc] sm:%s38]
        %302 = vst [vmem:[%s46 + $0x1fc] sm:%s38] %v301
      $region42: #{team_forward.1} parent=36 // loop_footer
        %s44 = sadd.s32 1, %s40
      $region43: #{team_forward.1} parent=36 // loop_footer_branch
        %39 = sbr.rel target = $region39
      $region44: #{team_forward.1} parent=36 // loop_exit
        _
    $region37: #{team_forward.1} parent=1 // pred_fallthru
      _
    // Predicated region
    $region63: #{team_forward.1} parent=1 // pred_check
      _
    $region64: #{team_forward.1} parent=1 // pred_check_branch
      %588 = sbr.rel (0) target = $region66
    $region65: #{team_forward.1} parent=1 // pred_region
      %589 = vsyncadd [#allocation4], 8192
    $region66: #{team_forward.1} parent=1 // pred_fallthru
      _
    %s590 = scalar_lea.sflag [#allocation4], 1
    %p592 = scmp.lt.u32.totalorder 1024, 8
    %p593 = pneg %p592
    // Predicated region
    $region67: #{team_forward.1} parent=1 // pred_check
      _
    $region68: #{team_forward.1} parent=1 // pred_check_branch
      %595 = sbr.rel (%p592) target = $region70
    $region69: #{team_forward.1} parent=1 // pred_region
      %s610 = sand.u32 1024, 7
      %p611 = scmp.eq.s32.totalorder %s610, 0
      // Predicated region
      $region82: #{team_forward.1} parent=69 // pred_check
        %p612 = pneg %p611
      $region83: #{team_forward.1} parent=69 // pred_check_branch
        %614 = sbr.rel (%p612) target = $region85
      $region84: #{team_forward.1} parent=69 // pred_region
        loop: start=0, step=1, limit=1
        $region86: #{team_forward.1} parent=84 // loop_pre_header
          _
        $region87: #{team_forward.1} parent=84 // loop_header
          %s616 = sphi 0, %s620
          %p617 = scmp.ge.s32.totalorder %s616, 1
          %s621 = sphi %s8, %s8
          %s622 = sphi [#allocation3], [#allocation3]
        $region88: #{team_forward.1} parent=84 // loop_header_branch
          %619 = sbr.rel (%p617) target = $region92
        $region89: #{team_forward.1} parent=84 // loop_body
          %v623 = vld [vmem:[%s621] sm:$0xff]
          %624 = vst [vmem:[%s622] sm:$0xff] %v623
          %v625 = vld [vmem:[%s621 + $0x8] sm:$0xff]
          %626 = vst [vmem:[%s622 + $0x8] sm:$0xff] %v625
          %v627 = vld [vmem:[%s621 + $0x10] sm:$0xff]
          %628 = vst [vmem:[%s622 + $0x10] sm:$0xff] %v627
          %v629 = vld [vmem:[%s621 + $0x18] sm:$0xff]
          %630 = vst [vmem:[%s622 + $0x18] sm:$0xff] %v629
          %v631 = vld [vmem:[%s621 + $0x20] sm:$0xff]
          %632 = vst [vmem:[%s622 + $0x20] sm:$0xff] %v631
          %v633 = vld [vmem:[%s621 + $0x28] sm:$0xff]
          %634 = vst [vmem:[%s622 + $0x28] sm:$0xff] %v633
          %v635 = vld [vmem:[%s621 + $0x30] sm:$0xff]
          %636 = vst [vmem:[%s622 + $0x30] sm:$0xff] %v635
          %v637 = vld [vmem:[%s621 + $0x38] sm:$0xff]
          %638 = vst [vmem:[%s622 + $0x38] sm:$0xff] %v637
          %v639 = vld [vmem:[%s621 + $0x40] sm:$0xff]
          %640 = vst [vmem:[%s622 + $0x40] sm:$0xff] %v639
          %v641 = vld [vmem:[%s621 + $0x48] sm:$0xff]
          %642 = vst [vmem:[%s622 + $0x48] sm:$0xff] %v641
          %v643 = vld [vmem:[%s621 + $0x50] sm:$0xff]
          %644 = vst [vmem:[%s622 + $0x50] sm:$0xff] %v643
          %v645 = vld [vmem:[%s621 + $0x58] sm:$0xff]
          %646 = vst [vmem:[%s622 + $0x58] sm:$0xff] %v645
          %v647 = vld [vmem:[%s621 + $0x60] sm:$0xff]
          %648 = vst [vmem:[%s622 + $0x60] sm:$0xff] %v647
          %v649 = vld [vmem:[%s621 + $0x68] sm:$0xff]
          %650 = vst [vmem:[%s622 + $0x68] sm:$0xff] %v649
          %v651 = vld [vmem:[%s621 + $0x70] sm:$0xff]
          %652 = vst [vmem:[%s622 + $0x70] sm:$0xff] %v651
          %v653 = vld [vmem:[%s621 + $0x78] sm:$0xff]
          %654 = vst [vmem:[%s622 + $0x78] sm:$0xff] %v653
          %v655 = vld [vmem:[%s621 + $0x80] sm:$0xff]
          %656 = vst [vmem:[%s622 + $0x80] sm:$0xff] %v655
          %v657 = vld [vmem:[%s621 + $0x88] sm:$0xff]
          %658 = vst [vmem:[%s622 + $0x88] sm:$0xff] %v657
          %v659 = vld [vmem:[%s621 + $0x90] sm:$0xff]
          %660 = vst [vmem:[%s622 + $0x90] sm:$0xff] %v659
          %v661 = vld [vmem:[%s621 + $0x98] sm:$0xff]
          %662 = vst [vmem:[%s622 + $0x98] sm:$0xff] %v661
          %v663 = vld [vmem:[%s621 + $0xa0] sm:$0xff]
          %664 = vst [vmem:[%s622 + $0xa0] sm:$0xff] %v663
          %v665 = vld [vmem:[%s621 + $0xa8] sm:$0xff]
          %666 = vst [vmem:[%s622 + $0xa8] sm:$0xff] %v665
          %v667 = vld [vmem:[%s621 + $0xb0] sm:$0xff]
          %668 = vst [vmem:[%s622 + $0xb0] sm:$0xff] %v667
          %v669 = vld [vmem:[%s621 + $0xb8] sm:$0xff]
          %670 = vst [vmem:[%s622 + $0xb8] sm:$0xff] %v669
          %v671 = vld [vmem:[%s621 + $0xc0] sm:$0xff]
          %672 = vst [vmem:[%s622 + $0xc0] sm:$0xff] %v671
          %v673 = vld [vmem:[%s621 + $0xc8] sm:$0xff]
          %674 = vst [vmem:[%s622 + $0xc8] sm:$0xff] %v673
          %v675 = vld [vmem:[%s621 + $0xd0] sm:$0xff]
          %676 = vst [vmem:[%s622 + $0xd0] sm:$0xff] %v675
          %v677 = vld [vmem:[%s621 + $0xd8] sm:$0xff]
          %678 = vst [vmem:[%s622 + $0xd8] sm:$0xff] %v677
          %v679 = vld [vmem:[%s621 + $0xe0] sm:$0xff]
          %680 = vst [vmem:[%s622 + $0xe0] sm:$0xff] %v679
          %v681 = vld [vmem:[%s621 + $0xe8] sm:$0xff]
          %682 = vst [vmem:[%s622 + $0xe8] sm:$0xff] %v681
          %v683 = vld [vmem:[%s621 + $0xf0] sm:$0xff]
          %684 = vst [vmem:[%s622 + $0xf0] sm:$0xff] %v683
          %v685 = vld [vmem:[%s621 + $0xf8] sm:$0xff]
          %686 = vst [vmem:[%s622 + $0xf8] sm:$0xff] %v685
          %v687 = vld [vmem:[%s621 + $0x100] sm:$0xff]
          %688 = vst [vmem:[%s622 + $0x100] sm:$0xff] %v687
          %v689 = vld [vmem:[%s621 + $0x108] sm:$0xff]
          %690 = vst [vmem:[%s622 + $0x108] sm:$0xff] %v689
          %v691 = vld [vmem:[%s621 + $0x110] sm:$0xff]
          %692 = vst [vmem:[%s622 + $0x110] sm:$0xff] %v691
          %v693 = vld [vmem:[%s621 + $0x118] sm:$0xff]
          %694 = vst [vmem:[%s622 + $0x118] sm:$0xff] %v693
          %v695 = vld [vmem:[%s621 + $0x120] sm:$0xff]
          %696 = vst [vmem:[%s622 + $0x120] sm:$0xff] %v695
          %v697 = vld [vmem:[%s621 + $0x128] sm:$0xff]
          %698 = vst [vmem:[%s622 + $0x128] sm:$0xff] %v697
          %v699 = vld [vmem:[%s621 + $0x130] sm:$0xff]
          %700 = vst [vmem:[%s622 + $0x130] sm:$0xff] %v699
          %v701 = vld [vmem:[%s621 + $0x138] sm:$0xff]
          %702 = vst [vmem:[%s622 + $0x138] sm:$0xff] %v701
          %v703 = vld [vmem:[%s621 + $0x140] sm:$0xff]
          %704 = vst [vmem:[%s622 + $0x140] sm:$0xff] %v703
          %v705 = vld [vmem:[%s621 + $0x148] sm:$0xff]
          %706 = vst [vmem:[%s622 + $0x148] sm:$0xff] %v705
          %v707 = vld [vmem:[%s621 + $0x150] sm:$0xff]
          %708 = vst [vmem:[%s622 + $0x150] sm:$0xff] %v707
          %v709 = vld [vmem:[%s621 + $0x158] sm:$0xff]
          %710 = vst [vmem:[%s622 + $0x158] sm:$0xff] %v709
          %v711 = vld [vmem:[%s621 + $0x160] sm:$0xff]
          %712 = vst [vmem:[%s622 + $0x160] sm:$0xff] %v711
          %v713 = vld [vmem:[%s621 + $0x168] sm:$0xff]
          %714 = vst [vmem:[%s622 + $0x168] sm:$0xff] %v713
          %v715 = vld [vmem:[%s621 + $0x170] sm:$0xff]
          %716 = vst [vmem:[%s622 + $0x170] sm:$0xff] %v715
          %v717 = vld [vmem:[%s621 + $0x178] sm:$0xff]
          %718 = vst [vmem:[%s622 + $0x178] sm:$0xff] %v717
          %v719 = vld [vmem:[%s621 + $0x180] sm:$0xff]
          %720 = vst [vmem:[%s622 + $0x180] sm:$0xff] %v719
          %v721 = vld [vmem:[%s621 + $0x188] sm:$0xff]
          %722 = vst [vmem:[%s622 + $0x188] sm:$0xff] %v721
          %v723 = vld [vmem:[%s621 + $0x190] sm:$0xff]
          %724 = vst [vmem:[%s622 + $0x190] sm:$0xff] %v723
          %v725 = vld [vmem:[%s621 + $0x198] sm:$0xff]
          %726 = vst [vmem:[%s622 + $0x198] sm:$0xff] %v725
          %v727 = vld [vmem:[%s621 + $0x1a0] sm:$0xff]
          %728 = vst [vmem:[%s622 + $0x1a0] sm:$0xff] %v727
          %v729 = vld [vmem:[%s621 + $0x1a8] sm:$0xff]
          %730 = vst [vmem:[%s622 + $0x1a8] sm:$0xff] %v729
          %v731 = vld [vmem:[%s621 + $0x1b0] sm:$0xff]
          %732 = vst [vmem:[%s622 + $0x1b0] sm:$0xff] %v731
          %v733 = vld [vmem:[%s621 + $0x1b8] sm:$0xff]
          %734 = vst [vmem:[%s622 + $0x1b8] sm:$0xff] %v733
          %v735 = vld [vmem:[%s621 + $0x1c0] sm:$0xff]
          %736 = vst [vmem:[%s622 + $0x1c0] sm:$0xff] %v735
          %v737 = vld [vmem:[%s621 + $0x1c8] sm:$0xff]
          %738 = vst [vmem:[%s622 + $0x1c8] sm:$0xff] %v737
          %v739 = vld [vmem:[%s621 + $0x1d0] sm:$0xff]
          %740 = vst [vmem:[%s622 + $0x1d0] sm:$0xff] %v739
          %v741 = vld [vmem:[%s621 + $0x1d8] sm:$0xff]
          %742 = vst [vmem:[%s622 + $0x1d8] sm:$0xff] %v741
          %v743 = vld [vmem:[%s621 + $0x1e0] sm:$0xff]
          %744 = vst [vmem:[%s622 + $0x1e0] sm:$0xff] %v743
          %v745 = vld [vmem:[%s621 + $0x1e8] sm:$0xff]
          %746 = vst [vmem:[%s622 + $0x1e8] sm:$0xff] %v745
          %v747 = vld [vmem:[%s621 + $0x1f0] sm:$0xff]
          %748 = vst [vmem:[%s622 + $0x1f0] sm:$0xff] %v747
          %v749 = vld [vmem:[%s621 + $0x1f8] sm:$0xff]
          %750 = vst [vmem:[%s622 + $0x1f8] sm:$0xff] %v749
          %v751 = vld [vmem:[%s621 + $0x200] sm:$0xff]
          %752 = vst [vmem:[%s622 + $0x200] sm:$0xff] %v751
          %v753 = vld [vmem:[%s621 + $0x208] sm:$0xff]
          %754 = vst [vmem:[%s622 + $0x208] sm:$0xff] %v753
          %v755 = vld [vmem:[%s621 + $0x210] sm:$0xff]
          %756 = vst [vmem:[%s622 + $0x210] sm:$0xff] %v755
          %v757 = vld [vmem:[%s621 + $0x218] sm:$0xff]
          %758 = vst [vmem:[%s622 + $0x218] sm:$0xff] %v757
          %v759 = vld [vmem:[%s621 + $0x220] sm:$0xff]
          %760 = vst [vmem:[%s622 + $0x220] sm:$0xff] %v759
          %v761 = vld [vmem:[%s621 + $0x228] sm:$0xff]
          %762 = vst [vmem:[%s622 + $0x228] sm:$0xff] %v761
          %v763 = vld [vmem:[%s621 + $0x230] sm:$0xff]
          %764 = vst [vmem:[%s622 + $0x230] sm:$0xff] %v763
          %v765 = vld [vmem:[%s621 + $0x238] sm:$0xff]
          %766 = vst [vmem:[%s622 + $0x238] sm:$0xff] %v765
          %v767 = vld [vmem:[%s621 + $0x240] sm:$0xff]
          %768 = vst [vmem:[%s622 + $0x240] sm:$0xff] %v767
          %v769 = vld [vmem:[%s621 + $0x248] sm:$0xff]
          %770 = vst [vmem:[%s622 + $0x248] sm:$0xff] %v769
          %v771 = vld [vmem:[%s621 + $0x250] sm:$0xff]
          %772 = vst [vmem:[%s622 + $0x250] sm:$0xff] %v771
          %v773 = vld [vmem:[%s621 + $0x258] sm:$0xff]
          %774 = vst [vmem:[%s622 + $0x258] sm:$0xff] %v773
          %v775 = vld [vmem:[%s621 + $0x260] sm:$0xff]
          %776 = vst [vmem:[%s622 + $0x260] sm:$0xff] %v775
          %v777 = vld [vmem:[%s621 + $0x268] sm:$0xff]
          %778 = vst [vmem:[%s622 + $0x268] sm:$0xff] %v777
          %v779 = vld [vmem:[%s621 + $0x270] sm:$0xff]
          %780 = vst [vmem:[%s622 + $0x270] sm:$0xff] %v779
          %v781 = vld [vmem:[%s621 + $0x278] sm:$0xff]
          %782 = vst [vmem:[%s622 + $0x278] sm:$0xff] %v781
          %v783 = vld [vmem:[%s621 + $0x280] sm:$0xff]
          %784 = vst [vmem:[%s622 + $0x280] sm:$0xff] %v783
          %v785 = vld [vmem:[%s621 + $0x288] sm:$0xff]
          %786 = vst [vmem:[%s622 + $0x288] sm:$0xff] %v785
          %v787 = vld [vmem:[%s621 + $0x290] sm:$0xff]
          %788 = vst [vmem:[%s622 + $0x290] sm:$0xff] %v787
          %v789 = vld [vmem:[%s621 + $0x298] sm:$0xff]
          %790 = vst [vmem:[%s622 + $0x298] sm:$0xff] %v789
          %v791 = vld [vmem:[%s621 + $0x2a0] sm:$0xff]
          %792 = vst [vmem:[%s622 + $0x2a0] sm:$0xff] %v791
          %v793 = vld [vmem:[%s621 + $0x2a8] sm:$0xff]
          %794 = vst [vmem:[%s622 + $0x2a8] sm:$0xff] %v793
          %v795 = vld [vmem:[%s621 + $0x2b0] sm:$0xff]
          %796 = vst [vmem:[%s622 + $0x2b0] sm:$0xff] %v795
          %v797 = vld [vmem:[%s621 + $0x2b8] sm:$0xff]
          %798 = vst [vmem:[%s622 + $0x2b8] sm:$0xff] %v797
          %v799 = vld [vmem:[%s621 + $0x2c0] sm:$0xff]
          %800 = vst [vmem:[%s622 + $0x2c0] sm:$0xff] %v799
          %v801 = vld [vmem:[%s621 + $0x2c8] sm:$0xff]
          %802 = vst [vmem:[%s622 + $0x2c8] sm:$0xff] %v801
          %v803 = vld [vmem:[%s621 + $0x2d0] sm:$0xff]
          %804 = vst [vmem:[%s622 + $0x2d0] sm:$0xff] %v803
          %v805 = vld [vmem:[%s621 + $0x2d8] sm:$0xff]
          %806 = vst [vmem:[%s622 + $0x2d8] sm:$0xff] %v805
          %v807 = vld [vmem:[%s621 + $0x2e0] sm:$0xff]
          %808 = vst [vmem:[%s622 + $0x2e0] sm:$0xff] %v807
          %v809 = vld [vmem:[%s621 + $0x2e8] sm:$0xff]
          %810 = vst [vmem:[%s622 + $0x2e8] sm:$0xff] %v809
          %v811 = vld [vmem:[%s621 + $0x2f0] sm:$0xff]
          %812 = vst [vmem:[%s622 + $0x2f0] sm:$0xff] %v811
          %v813 = vld [vmem:[%s621 + $0x2f8] sm:$0xff]
          %814 = vst [vmem:[%s622 + $0x2f8] sm:$0xff] %v813
          %v815 = vld [vmem:[%s621 + $0x300] sm:$0xff]
          %816 = vst [vmem:[%s622 + $0x300] sm:$0xff] %v815
          %v817 = vld [vmem:[%s621 + $0x308] sm:$0xff]
          %818 = vst [vmem:[%s622 + $0x308] sm:$0xff] %v817
          %v819 = vld [vmem:[%s621 + $0x310] sm:$0xff]
          %820 = vst [vmem:[%s622 + $0x310] sm:$0xff] %v819
          %v821 = vld [vmem:[%s621 + $0x318] sm:$0xff]
          %822 = vst [vmem:[%s622 + $0x318] sm:$0xff] %v821
          %v823 = vld [vmem:[%s621 + $0x320] sm:$0xff]
          %824 = vst [vmem:[%s622 + $0x320] sm:$0xff] %v823
          %v825 = vld [vmem:[%s621 + $0x328] sm:$0xff]
          %826 = vst [vmem:[%s622 + $0x328] sm:$0xff] %v825
          %v827 = vld [vmem:[%s621 + $0x330] sm:$0xff]
          %828 = vst [vmem:[%s622 + $0x330] sm:$0xff] %v827
          %v829 = vld [vmem:[%s621 + $0x338] sm:$0xff]
          %830 = vst [vmem:[%s622 + $0x338] sm:$0xff] %v829
          %v831 = vld [vmem:[%s621 + $0x340] sm:$0xff]
          %832 = vst [vmem:[%s622 + $0x340] sm:$0xff] %v831
          %v833 = vld [vmem:[%s621 + $0x348] sm:$0xff]
          %834 = vst [vmem:[%s622 + $0x348] sm:$0xff] %v833
          %v835 = vld [vmem:[%s621 + $0x350] sm:$0xff]
          %836 = vst [vmem:[%s622 + $0x350] sm:$0xff] %v835
          %v837 = vld [vmem:[%s621 + $0x358] sm:$0xff]
          %838 = vst [vmem:[%s622 + $0x358] sm:$0xff] %v837
          %v839 = vld [vmem:[%s621 + $0x360] sm:$0xff]
          %840 = vst [vmem:[%s622 + $0x360] sm:$0xff] %v839
          %v841 = vld [vmem:[%s621 + $0x368] sm:$0xff]
          %842 = vst [vmem:[%s622 + $0x368] sm:$0xff] %v841
          %v843 = vld [vmem:[%s621 + $0x370] sm:$0xff]
          %844 = vst [vmem:[%s622 + $0x370] sm:$0xff] %v843
          %v845 = vld [vmem:[%s621 + $0x378] sm:$0xff]
          %846 = vst [vmem:[%s622 + $0x378] sm:$0xff] %v845
          %v847 = vld [vmem:[%s621 + $0x380] sm:$0xff]
          %848 = vst [vmem:[%s622 + $0x380] sm:$0xff] %v847
          %v849 = vld [vmem:[%s621 + $0x388] sm:$0xff]
          %850 = vst [vmem:[%s622 + $0x388] sm:$0xff] %v849
          %v851 = vld [vmem:[%s621 + $0x390] sm:$0xff]
          %852 = vst [vmem:[%s622 + $0x390] sm:$0xff] %v851
          %v853 = vld [vmem:[%s621 + $0x398] sm:$0xff]
          %854 = vst [vmem:[%s622 + $0x398] sm:$0xff] %v853
          %v855 = vld [vmem:[%s621 + $0x3a0] sm:$0xff]
          %856 = vst [vmem:[%s622 + $0x3a0] sm:$0xff] %v855
          %v857 = vld [vmem:[%s621 + $0x3a8] sm:$0xff]
          %858 = vst [vmem:[%s622 + $0x3a8] sm:$0xff] %v857
          %v859 = vld [vmem:[%s621 + $0x3b0] sm:$0xff]
          %860 = vst [vmem:[%s622 + $0x3b0] sm:$0xff] %v859
          %v861 = vld [vmem:[%s621 + $0x3b8] sm:$0xff]
          %862 = vst [vmem:[%s622 + $0x3b8] sm:$0xff] %v861
          %v863 = vld [vmem:[%s621 + $0x3c0] sm:$0xff]
          %864 = vst [vmem:[%s622 + $0x3c0] sm:$0xff] %v863
          %v865 = vld [vmem:[%s621 + $0x3c8] sm:$0xff]
          %866 = vst [vmem:[%s622 + $0x3c8] sm:$0xff] %v865
          %v867 = vld [vmem:[%s621 + $0x3d0] sm:$0xff]
          %868 = vst [vmem:[%s622 + $0x3d0] sm:$0xff] %v867
          %v869 = vld [vmem:[%s621 + $0x3d8] sm:$0xff]
          %870 = vst [vmem:[%s622 + $0x3d8] sm:$0xff] %v869
          %v871 = vld [vmem:[%s621 + $0x3e0] sm:$0xff]
          %872 = vst [vmem:[%s622 + $0x3e0] sm:$0xff] %v871
          %v873 = vld [vmem:[%s621 + $0x3e8] sm:$0xff]
          %874 = vst [vmem:[%s622 + $0x3e8] sm:$0xff] %v873
          %v875 = vld [vmem:[%s621 + $0x3f0] sm:$0xff]
          %876 = vst [vmem:[%s622 + $0x3f0] sm:$0xff] %v875
          %v877 = vld [vmem:[%s621 + $0x3f8] sm:$0xff]
          %878 = vst [vmem:[%s622 + $0x3f8] sm:$0xff] %v877
        $region90: #{team_forward.1} parent=84 // loop_footer
          %s620 = sadd.s32 1, %s616
        $region91: #{team_forward.1} parent=84 // loop_footer_branch
          %615 = sbr.rel target = $region87
        $region92: #{team_forward.1} parent=84 // loop_exit
          _
      $region85: #{team_forward.1} parent=69 // pred_fallthru
        _
      %p879 = pneg %p611
      // Predicated region
      $region93: #{team_forward.1} parent=69 // pred_check
        _
      $region94: #{team_forward.1} parent=69 // pred_check_branch
        %881 = sbr.rel (%p611) target = $region96
      $region95: #{team_forward.1} parent=69 // pred_region
        %s882 = sand.u32 1024, 7
      $region96: #{team_forward.1} parent=69 // pred_fallthru
        _
    $region70: #{team_forward.1} parent=1 // pred_fallthru
      _
    // Predicated region
    $region71: #{team_forward.1} parent=1 // pred_check
      %p596 = pneg %p592
    $region72: #{team_forward.1} parent=1 // pred_check_branch
      %598 = sbr.rel (%p596) target = $region74
    $region73: #{team_forward.1} parent=1 // pred_region
      %s599 = sshllo.u32 0, 1024
      loop: start=0, step=1, limit=1
      $region75: #{team_forward.1} parent=73 // loop_pre_header
        _
      $region76: #{team_forward.1} parent=73 // loop_header
        %s601 = sphi 0, %s605
        %p602 = scmp.ge.s32.totalorder %s601, 1
        %s606 = sphi %s8, %s8
        %s607 = sphi [#allocation3], [#allocation3]
      $region77: #{team_forward.1} parent=73 // loop_header_branch
        %604 = sbr.rel (%p602) target = $region81
      $region78: #{team_forward.1} parent=73 // loop_body
        %v608 = vld [vmem:[%s606] sm:%s599]
        %609 = vst [vmem:[%s607] sm:%s599] %v608
      $region79: #{team_forward.1} parent=73 // loop_footer
        %s605 = sadd.s32 1, %s601
      $region80: #{team_forward.1} parent=73 // loop_footer_branch
        %600 = sbr.rel target = $region76
      $region81: #{team_forward.1} parent=73 // loop_exit
        _
    $region74: #{team_forward.1} parent=1 // pred_fallthru
      _
    // Predicated region
    $region97: #{team_forward.1} parent=1 // pred_check
      _
    $region98: #{team_forward.1} parent=1 // pred_check_branch
      %885 = sbr.rel (0) target = $region100
    $region99: #{team_forward.1} parent=1 // pred_region
      %886 = vsyncadd %s590, 16384
    $region100: #{team_forward.1} parent=1 // pred_fallthru
      _
    %v887 = vld [vmem:[%s3] sm:$0x1]
    %v888 = vld [vmem:[%s3 + $0x1] sm:$0x1]
    %v889 = vld [vmem:[%s0] sm:$0xff]
    %v890 = vld [vmem:[%s0 + $0x8] sm:$0xff]
    %v891 = vld [vmem:[%s0 + $0x10] sm:$0xff]
    %v892 = vld [vmem:[%s0 + $0x18] sm:$0xff]
    %v893 = vlaneseq
    %v894 = vshrl.u32 %v893, 7
    %v895 = vsub.s32 0, %v894
    %v896 = vrot.slane %v887, %v895
    %v897 = vsub.f32 %v889, %v896
    %v898 = vsub.f32 %v890, %v896
    %v899 = vsub.f32 %v891, %v896
    %v900 = vsub.f32 %v892, %v896
    %v901 = vlaneseq
    %v902 = vshrl.u32 %v901, 7
    %v903 = vsub.s32 0, %v902
    %v904 = vrot.slane %v888, %v903
    %v905 = vrcp.pop %v904
    %v906 = vmul.f32 %v897, %v905
    %v907 = vmul.f32 %v898, %v905
    %v908 = vmul.f32 %v899, %v905
    %v909 = vmul.f32 %v900, %v905
    %v910 = vld [vmem:[%s2] sm:$0xff]
    %v911 = vld [vmem:[%s2 + $0x8] sm:$0xff]
    %v912 = vld [vmem:[%s2 + $0x10] sm:$0xff]
    %v913 = vld [vmem:[%s2 + $0x18] sm:$0xff]
    %v914 = vld [vmem:[%s3 + $0x2] sm:$0x1]
    %v915 = vlaneseq
    %v916 = vshrl.u32 %v915, 7
    %v917 = vsub.s32 0, %v916
    %v918 = vrot.slane %v914, %v917
    %vm919 = vcmask 261120
    %v921 = vsel %vm919, %v906, 0
    %v924 = vsel %vm919, %v907, 0
    %v927 = vsel %vm919, %v908, 0
    %v930 = vsel %vm919, %v909, 0
    %932 = vmatprep.subr.mxu0 0.0
    %933 = vmatpush1.msra.mxu0 %v910
    %934 = vmatprep.subr.mxu0 0.0
    %935 = vmatpush1.msra.mxu0 %v911
    %936 = vmatprep.subr.mxu0 0.0
    %937 = vmatpush1.msra.mxu0 %v912
    %938 = vmatprep.subr.mxu0 0.0
    %939 = vmatpush1.msra.mxu0 %v913
    %940 = vmatprep.subr.mxu0 0.0
    %941 = vmatpush1.msra.mxu0 0.0
    %942 = vmatprep.subr.mxu0 0.0
    %943 = vmatpush1.msra.mxu0 0.0
    %944 = vmatprep.subr.mxu0 0.0
    %945 = vmatpush1.msra.mxu0 0.0
    %946 = vmatprep.subr.mxu0 0.0
    %947 = vmatpush1.msra.mxu0 0.0
    %948 = vmatprep.subr.mxu0 0.0
    %949 = vmatpush1.msra.mxu0 0.0
    %950 = vmatprep.subr.mxu0 0.0
    %951 = vmatpush1.msra.mxu0 0.0
    %952 = vmatprep.subr.mxu0 0.0
    %953 = vmatpush1.msra.mxu0 0.0
    %954 = vmatprep.subr.mxu0 0.0
    %955 = vmatpush1.msra.mxu0 0.0
    %956 = vmatprep.subr.mxu0 0.0
    %957 = vmatpush1.msra.mxu0 0.0
    %958 = vmatprep.subr.mxu0 0.0
    %959 = vmatpush1.msra.mxu0 0.0
    %960 = vmatprep.subr.mxu0 0.0
    %961 = vmatpush1.msra.mxu0 0.0
    %962 = vmatprep.subr.mxu0 0.0
    %963 = vmatpush1.msra.mxu0 0.0
    %964 = vmatprep.subr.mxu0 0.0
    %965 = vmatpush1.msra.mxu0 0.0
    %966 = vmatprep.subr.mxu0 0.0
    %967 = vmatpush1.msra.mxu0 0.0
    %968 = vmatprep.subr.mxu0 0.0
    %969 = vmatpush1.msra.mxu0 0.0
    %970 = vmatprep.subr.mxu0 0.0
    %971 = vmatpush1.msra.mxu0 0.0
    %972 = vmatprep.subr.mxu0 0.0
    %973 = vmatpush1.msra.mxu0 0.0
    %974 = vmatprep.subr.mxu0 0.0
    %975 = vmatpush1.msra.mxu0 0.0
    %976 = vmatprep.subr.mxu0 0.0
    %977 = vmatpush1.msra.mxu0 0.0
    %978 = vmatprep.subr.mxu0 0.0
    %979 = vmatpush1.msra.mxu0 0.0
    %980 = vmatprep.subr.mxu0 0.0
    %981 = vmatpush1.msra.mxu0 0.0
    %982 = vmatprep.subr.mxu0 0.0
    %983 = vmatpush1.msra.mxu0 0.0
    %984 = vmatprep.subr.mxu0 0.0
    %985 = vmatpush1.msra.mxu0 0.0
    %986 = vmatprep.subr.mxu0 0.0
    %987 = vmatpush1.msra.mxu0 0.0
    %988 = vmatprep.subr.mxu0 0.0
    %989 = vmatpush1.msra.mxu0 0.0
    %990 = vmatprep.subr.mxu0 0.0
    %991 = vmatpush1.msra.mxu0 0.0
    %992 = vmatprep.subr.mxu0 0.0
    %993 = vmatpush1.msra.mxu0 0.0
    %994 = vmatprep.subr.mxu0 0.0
    %995 = vmatpush1.msra.mxu0 0.0
    %996 = vmatprep.mubr.f32.mxu0 0.0
    %997 = vmatmul.mubr.f32.gmra.mrb[0].mxu0 %v921
    %v998 = vpop.f32.mrb[0].mxu0
    %v999 = vadd.f32 %v918, %v998
    %v1000 = vpop.f32.mrb[0].mxu0
    %1001 = vmatprep.mubr.f32.mxu0 0.0
    %1002 = vmatmul.mubr.f32.gmra.mrb[0].mxu0 %v924
    %v1003 = vpop.f32.mrb[0].mxu0
    %v1004 = vadd.f32 %v918, %v1003
    %v1005 = vpop.f32.mrb[0].mxu0
    %1006 = vmatprep.mubr.f32.mxu0 0.0
    %1007 = vmatmul.mubr.f32.gmra.mrb[0].mxu0 %v927
    %v1008 = vpop.f32.mrb[0].mxu0
    %v1009 = vadd.f32 %v918, %v1008
    %v1010 = vpop.f32.mrb[0].mxu0
    %1011 = vmatprep.mubr.f32.mxu0 0.0
    %1012 = vmatmul.mubr.f32.gmra.mrb[0].mxu0 %v930
    %v1013 = vpop.f32.mrb[0].mxu0
    %v1014 = vadd.f32 %v918, %v1013
    %v1015 = vpop.f32.mrb[0].mxu0
    %1016 = vdwg.mxu0
    %v1017 = vmax.f32 %v999, 0.0
    %v1018 = vmax.f32 %v1004, 0.0
    %v1019 = vmax.f32 %v1009, 0.0
    %v1020 = vmax.f32 %v1014, 0.0
    %v1021 = vld [vmem:[%s3 + $0x3] sm:$0x1]
    %v1022 = vld [vmem:[%s3 + $0x4] sm:$0x1]
    %vm1023 = vcmask 523264
    %v1024 = vsel %vm1023, %v1017, 0.0
    %1025 = vadd.xlane.f32.xlu0 %v1024
    %v1026 = vpop.xlane.xlu0 %1025
    %v1027 = vsel %vm1023, %v1018, 0.0
    %1028 = vadd.xlane.f32.xlu0 %v1027
    %v1029 = vpop.xlane.xlu0 %1028
    %v1030 = vsel %vm1023, %v1019, 0.0
    %1031 = vadd.xlane.f32.xlu0 %v1030
    %v1032 = vpop.xlane.xlu0 %1031
    %v1033 = vsel %vm1023, %v1020, 0.0
    %1034 = vadd.xlane.f32.xlu0 %v1033
    %v1035 = vpop.xlane.xlu0 %1034
    %v1036 = vrcp.pop 64.0
    %v1037 = vmul.f32 %v1026, %v1036
    %v1038 = vmul.f32 %v1029, %v1036
    %v1039 = vmul.f32 %v1032, %v1036
    %v1040 = vmul.f32 %v1035, %v1036
    %v1041 = vsub.f32 %v1017, %v1037
    %v1042 = vsub.f32 %v1018, %v1038
    %v1043 = vsub.f32 %v1019, %v1039
    %v1044 = vsub.f32 %v1020, %v1040
    %v1045 = vmul.f32 %v1041, %v1041
    %v1046 = vmul.f32 %v1042, %v1042
    %v1047 = vmul.f32 %v1043, %v1043
    %v1048 = vmul.f32 %v1044, %v1044
    %v1049 = vsel %vm1023, %v1045, 0.0
    %1050 = vadd.xlane.f32.xlu0 %v1049
    %v1051 = vpop.xlane.xlu0 %1050
    %v1052 = vsel %vm1023, %v1046, 0.0
    %1053 = vadd.xlane.f32.xlu0 %v1052
    %v1054 = vpop.xlane.xlu0 %1053
    %v1055 = vsel %vm1023, %v1047, 0.0
    %1056 = vadd.xlane.f32.xlu0 %v1055
    %v1057 = vpop.xlane.xlu0 %1056
    %v1058 = vsel %vm1023, %v1048, 0.0
    %1059 = vadd.xlane.f32.xlu0 %v1058
    %v1060 = vpop.xlane.xlu0 %1059
    %v1061 = vmul.f32 %v1051, %v1036
    %v1062 = vmul.f32 %v1054, %v1036
    %v1063 = vmul.f32 %v1057, %v1036
    %v1064 = vmul.f32 %v1060, %v1036
    %v1065 = vadd.f32 %v1061, 1e-05
    %v1066 = vadd.f32 %v1062, 1e-05
    %v1067 = vadd.f32 %v1063, 1e-05
    %v1068 = vadd.f32 %v1064, 1e-05
    %v1069 = vrsqrt.pop %v1065
    %v1070 = vrsqrt.pop %v1066
    %v1071 = vrsqrt.pop %v1067
    %v1072 = vrsqrt.pop %v1068
    %v1073 = vmul.f32 %v1041, %v1069
    %v1074 = vmul.f32 %v1042, %v1070
    %v1075 = vmul.f32 %v1043, %v1071
    %v1076 = vmul.f32 %v1044, %v1072
    %v1077 = vlaneseq
    %v1078 = vshrl.u32 %v1077, 7
    %v1079 = vsub.s32 0, %v1078
    %v1080 = vrot.slane %v1021, %v1079
    %v1081 = vmul.f32 %v1073, %v1080
    %v1082 = vmul.f32 %v1074, %v1080
    %v1083 = vmul.f32 %v1075, %v1080
    %v1084 = vmul.f32 %v1076, %v1080
    %v1085 = vlaneseq
    %v1086 = vshrl.u32 %v1085, 7
    %v1087 = vsub.s32 0, %v1086
    %v1088 = vrot.slane %v1022, %v1087
    %v1089 = vadd.f32 %v1081, %v1088
    %v1090 = vadd.f32 %v1082, %v1088
    %v1091 = vadd.f32 %v1083, %v1088
    %v1092 = vadd.f32 %v1084, %v1088
    %v1093 = vld [vmem:[%s3 + $0x5] sm:$0x1]
    %v1094 = vld [vmem:[%s3 + $0x6] sm:$0x1]
    %v1095 = vlaneseq
    %v1096 = vshrl.u32 %v1095, 7
    %v1097 = vsub.s32 0, %v1096
    %v1098 = vrot.slane %v1093, %v1097
    %v1099 = vmul.f32 %v1089, %v1098
    %v1100 = vmul.f32 %v1090, %v1098
    %v1101 = vmul.f32 %v1091, %v1098
    %v1102 = vmul.f32 %v1092, %v1098
    %v1103 = vsel %vm1023, %v1099, 0.0
    %1104 = vadd.xlane.f32.xlu0 %v1103
    %v1105 = vpop.xlane.xlu0 %1104
    %v1106 = vsel %vm1023, %v1100, 0.0
    %1107 = vadd.xlane.f32.xlu0 %v1106
    %v1108 = vpop.xlane.xlu0 %1107
    %v1109 = vsel %vm1023, %v1101, 0.0
    %1110 = vadd.xlane.f32.xlu0 %v1109
    %v1111 = vpop.xlane.xlu0 %1110
    %v1112 = vsel %vm1023, %v1102, 0.0
    %1113 = vadd.xlane.f32.xlu0 %v1112
    %v1114 = vpop.xlane.xlu0 %1113
    %v1115 = vlaneseq
    %v1116 = vshrl.u32 %v1115, 7
    %v1117 = vsub.s32 0, %v1116
    %v1118 = vrot.slane %v1094, %v1117
    %v1119 = vadd.f32 %v1105, %v1118
    %v1120 = vadd.f32 %v1108, %v1118
    %v1121 = vadd.f32 %v1111, %v1118
    %v1122 = vadd.f32 %v1114, %v1118
    %vm1123 = vcmask 7168
    %v1124 = vsel %vm1123, %v1119, -inf
    %v1125 = vrot.slane %v1124, 4
    %v1126 = vmax.f32 %v1124, %v1125
    %v1127 = vrot.slane %v1126, 2
    %v1128 = vmax.f32 %v1126, %v1127
    %v1129 = vrot.slane %v1128, 1
    %v1130 = vmax.f32 %v1128, %v1129
    %v1131 = vsel %vm1123, %v1120, -inf
    %v1132 = vrot.slane %v1131, 4
    %v1133 = vmax.f32 %v1131, %v1132
    %v1134 = vrot.slane %v1133, 2
    %v1135 = vmax.f32 %v1133, %v1134
    %v1136 = vrot.slane %v1135, 1
    %v1137 = vmax.f32 %v1135, %v1136
    %v1138 = vsel %vm1123, %v1121, -inf
    %v1139 = vrot.slane %v1138, 4
    %v1140 = vmax.f32 %v1138, %v1139
    %v1141 = vrot.slane %v1140, 2
    %v1142 = vmax.f32 %v1140, %v1141
    %v1143 = vrot.slane %v1142, 1
    %v1144 = vmax.f32 %v1142, %v1143
    %v1145 = vsel %vm1123, %v1122, -inf
    %v1146 = vrot.slane %v1145, 4
    %v1147 = vmax.f32 %v1145, %v1146
    %v1148 = vrot.slane %v1147, 2
    %v1149 = vmax.f32 %v1147, %v1148
    %v1150 = vrot.slane %v1149, 1
    %v1151 = vmax.f32 %v1149, %v1150
    %v1152 = vsub.f32 %v1119, %v1130
    %v1153 = vsub.f32 %v1120, %v1137
    %v1154 = vsub.f32 %v1121, %v1144
    %v1155 = vsub.f32 %v1122, %v1151
    %v1156 = vmul.f32 %v1152, 1.442695
    %v1157 = vpow.pop %v1156
    %v1158 = vmul.f32 %v1153, 1.442695
    %v1159 = vpow.pop %v1158
    %v1160 = vmul.f32 %v1154, 1.442695
    %v1161 = vpow.pop %v1160
    %v1162 = vmul.f32 %v1155, 1.442695
    %v1163 = vpow.pop %v1162
    %v1164 = vsel %vm1123, %v1157, 0.0
    %v1165 = vrot.slane %v1164, 4
    %v1166 = vadd.f32 %v1164, %v1165
    %v1167 = vrot.slane %v1166, 2
    %v1168 = vadd.f32 %v1166, %v1167
    %v1169 = vrot.slane %v1168, 1
    %v1170 = vadd.f32 %v1168, %v1169
    %v1171 = vsel %vm1123, %v1159, 0.0
    %v1172 = vrot.slane %v1171, 4
    %v1173 = vadd.f32 %v1171, %v1172
    %v1174 = vrot.slane %v1173, 2
    %v1175 = vadd.f32 %v1173, %v1174
    %v1176 = vrot.slane %v1175, 1
    %v1177 = vadd.f32 %v1175, %v1176
    %v1178 = vsel %vm1123, %v1161, 0.0
    %v1179 = vrot.slane %v1178, 4
    %v1180 = vadd.f32 %v1178, %v1179
    %v1181 = vrot.slane %v1180, 2
    %v1182 = vadd.f32 %v1180, %v1181
    %v1183 = vrot.slane %v1182, 1
    %v1184 = vadd.f32 %v1182, %v1183
    %v1185 = vsel %vm1123, %v1163, 0.0
    %v1186 = vrot.slane %v1185, 4
    %v1187 = vadd.f32 %v1185, %v1186
    %v1188 = vrot.slane %v1187, 2
    %v1189 = vadd.f32 %v1187, %v1188
    %v1190 = vrot.slane %v1189, 1
    %v1191 = vadd.f32 %v1189, %v1190
    %v1192 = vrcp.pop %v1170
    %v1193 = vmul.f32 %v1157, %v1192
    %v1194 = vrcp.pop %v1177
    %v1195 = vmul.f32 %v1159, %v1194
    %v1196 = vrcp.pop %v1184
    %v1197 = vmul.f32 %v1161, %v1196
    %v1198 = vrcp.pop %v1191
    %v1199 = vmul.f32 %v1163, %v1198
    %1201 = vset.pattern.permute.xlu0 0
    %1202 = vperm.xlu0 %1201, %v1193
    %v1203 = vpop.permute.xlu0 %1202
    %1206 = vset.pattern.permute.xlu0 0
    %1207 = vperm.xlu0 %1206, %v1195
    %v1208 = vpop.permute.xlu0 %1207
    %1211 = vset.pattern.permute.xlu0 0
    %1212 = vperm.xlu0 %1211, %v1197
    %v1213 = vpop.permute.xlu0 %1212
    %1216 = vset.pattern.permute.xlu0 0
    %1217 = vperm.xlu0 %1216, %v1199
    %v1218 = vpop.permute.xlu0 %1217
    %v1220 = vmul.f32 %v1203, %v1089
    %v1221 = vmul.f32 %v1208, %v1090
    %v1222 = vmul.f32 %v1213, %v1091
    %v1223 = vmul.f32 %v1218, %v1092
    %v1224 = vsel %vm1023, %v1220, 0.0
    %v1225 = vrot.slane %v1224, 4
    %v1226 = vadd.f32 %v1224, %v1225
    %v1227 = vrot.slane %v1226, 2
    %v1228 = vadd.f32 %v1226, %v1227
    %v1229 = vrot.slane %v1228, 1
    %v1230 = vadd.f32 %v1228, %v1229
    %v1231 = vsel %vm1023, %v1221, 0.0
    %v1232 = vrot.slane %v1231, 4
    %v1233 = vadd.f32 %v1231, %v1232
    %v1234 = vrot.slane %v1233, 2
    %v1235 = vadd.f32 %v1233, %v1234
    %v1236 = vrot.slane %v1235, 1
    %v1237 = vadd.f32 %v1235, %v1236
    %v1238 = vsel %vm1023, %v1222, 0.0
    %v1239 = vrot.slane %v1238, 4
    %v1240 = vadd.f32 %v1238, %v1239
    %v1241 = vrot.slane %v1240, 2
    %v1242 = vadd.f32 %v1240, %v1241
    %v1243 = vrot.slane %v1242, 1
    %v1244 = vadd.f32 %v1242, %v1243
    %v1245 = vsel %vm1023, %v1223, 0.0
    %v1246 = vrot.slane %v1245, 4
    %v1247 = vadd.f32 %v1245, %v1246
    %v1248 = vrot.slane %v1247, 2
    %v1249 = vadd.f32 %v1247, %v1248
    %v1250 = vrot.slane %v1249, 1
    %v1251 = vadd.f32 %v1249, %v1250
    %v1252 = vld [vmem:[%s2 + $0x20] sm:$0xff]
    %v1253 = vld [vmem:[%s2 + $0x28] sm:$0xff]
    %v1254 = vld [vmem:[%s2 + $0x30] sm:$0xff]
    %v1255 = vld [vmem:[%s2 + $0x38] sm:$0xff]
    %v1256 = vld [vmem:[%s2 + $0x40] sm:$0xff]
    %v1257 = vld [vmem:[%s2 + $0x48] sm:$0xff]
    %v1258 = vld [vmem:[%s2 + $0x50] sm:$0xff]
    %v1259 = vld [vmem:[%s2 + $0x58] sm:$0xff]
    %v1260 = vld [vmem:[%s3 + $0x7] sm:$0x1]
    %v1261 = vlaneseq
    %v1262 = vshrl.u32 %v1261, 7
    %v1263 = vsub.s32 0, %v1262
    %v1264 = vrot.slane %v1260, %v1263
    %vm1269 = vcmask 1041409
    %v1270 = vsel %vm1269, %v1237, %v1230
    %vm1271 = vcmask 1042434
    %v1272 = vsel %vm1271, %v1244, %v1270
    %vm1273 = vcmask 1043459
    %v1274 = vsel %vm1273, %v1251, %v1272
    %v1275 = vsel %vm1023, %v1274, 0
    %1277 = vmatprep.subr.mxu0 0.0
    %1278 = vmatpush1.msra.mxu0 %v1252
    %1279 = vmatprep.subr.mxu0 0.0
    %1280 = vmatpush1.msra.mxu0 %v1253
    %1281 = vmatprep.subr.mxu0 0.0
    %1282 = vmatpush1.msra.mxu0 %v1254
    %1283 = vmatprep.subr.mxu0 0.0
    %1284 = vmatpush1.msra.mxu0 %v1255
    %1285 = vmatprep.subr.mxu0 0.0
    %1286 = vmatpush1.msra.mxu0 %v1256
    %1287 = vmatprep.subr.mxu0 0.0
    %1288 = vmatpush1.msra.mxu0 %v1257
    %1289 = vmatprep.subr.mxu0 0.0
    %1290 = vmatpush1.msra.mxu0 %v1258
    %1291 = vmatprep.subr.mxu0 0.0
    %1292 = vmatpush1.msra.mxu0 %v1259
    %1293 = vmatprep.subr.mxu0 0.0
    %1294 = vmatpush1.msra.mxu0 0.0
    %1295 = vmatprep.subr.mxu0 0.0
    %1296 = vmatpush1.msra.mxu0 0.0
    %1297 = vmatprep.subr.mxu0 0.0
    %1298 = vmatpush1.msra.mxu0 0.0
    %1299 = vmatprep.subr.mxu0 0.0
    %1300 = vmatpush1.msra.mxu0 0.0
    %1301 = vmatprep.subr.mxu0 0.0
    %1302 = vmatpush1.msra.mxu0 0.0
    %1303 = vmatprep.subr.mxu0 0.0
    %1304 = vmatpush1.msra.mxu0 0.0
    %1305 = vmatprep.subr.mxu0 0.0
    %1306 = vmatpush1.msra.mxu0 0.0
    %1307 = vmatprep.subr.mxu0 0.0
    %1308 = vmatpush1.msra.mxu0 0.0
    %1309 = vmatprep.subr.mxu0 0.0
    %1310 = vmatpush1.msra.mxu0 0.0
    %1311 = vmatprep.subr.mxu0 0.0
    %1312 = vmatpush1.msra.mxu0 0.0
    %1313 = vmatprep.subr.mxu0 0.0
    %1314 = vmatpush1.msra.mxu0 0.0
    %1315 = vmatprep.subr.mxu0 0.0
    %1316 = vmatpush1.msra.mxu0 0.0
    %1317 = vmatprep.subr.mxu0 0.0
    %1318 = vmatpush1.msra.mxu0 0.0
    %1319 = vmatprep.subr.mxu0 0.0
    %1320 = vmatpush1.msra.mxu0 0.0
    %1321 = vmatprep.subr.mxu0 0.0
    %1322 = vmatpush1.msra.mxu0 0.0
    %1323 = vmatprep.subr.mxu0 0.0
    %1324 = vmatpush1.msra.mxu0 0.0
    %1325 = vmatprep.subr.mxu0 0.0
    %1326 = vmatpush1.msra.mxu0 0.0
    %1327 = vmatprep.subr.mxu0 0.0
    %1328 = vmatpush1.msra.mxu0 0.0
    %1329 = vmatprep.subr.mxu0 0.0
    %1330 = vmatpush1.msra.mxu0 0.0
    %1331 = vmatprep.subr.mxu0 0.0
    %1332 = vmatpush1.msra.mxu0 0.0
    %1333 = vmatprep.subr.mxu0 0.0
    %1334 = vmatpush1.msra.mxu0 0.0
    %1335 = vmatprep.subr.mxu0 0.0
    %1336 = vmatpush1.msra.mxu0 0.0
    %1337 = vmatprep.subr.mxu0 0.0
    %1338 = vmatpush1.msra.mxu0 0.0
    %1339 = vmatprep.subr.mxu0 0.0
    %1340 = vmatpush1.msra.mxu0 0.0
    %1341 = vmatprep.mubr.f32.mxu0 0.0
    %1342 = vmatmul.mubr.f32.gmra.mrb[0].mxu0 %v1275
    %v1343 = vpop.f32.mrb[0].mxu0
    %v1344 = vadd.f32 %v1264, %v1343
    %v1345 = vpop.f32.mrb[0].mxu0
    %1346 = vdwg.mxu0
    %v1347 = vmax.f32 %v1344, 0.0
    %v1348 = vld [vmem:[%s3 + $0x8] sm:$0x1]
    %v1349 = vld [vmem:[%s3 + $0x9] sm:$0x1]
    %vm1350 = vcmask 257024
    %v1351 = vsel %vm1350, %v1347, 0.0
    %1352 = vadd.xlane.f32.xlu0 %v1351
    %v1353 = vpop.xlane.xlu0 %1352
    %v1354 = vrcp.pop 32.0
    %v1355 = vmul.f32 %v1353, %v1354
    %v1356 = vsub.f32 %v1347, %v1355
    %v1357 = vmul.f32 %v1356, %v1356
    %v1358 = vsel %vm1350, %v1357, 0.0
    %1359 = vadd.xlane.f32.xlu0 %v1358
    %v1360 = vpop.xlane.xlu0 %1359
    %v1361 = vmul.f32 %v1360, %v1354
    %v1362 = vadd.f32 %v1361, 1e-05
    %v1363 = vrsqrt.pop %v1362
    %v1364 = vmul.f32 %v1356, %v1363
    %v1365 = vlaneseq
    %v1366 = vshrl.u32 %v1365, 7
    %v1367 = vsub.s32 0, %v1366
    %v1368 = vrot.slane %v1348, %v1367
    %v1369 = vmul.f32 %v1364, %v1368
    %v1370 = vlaneseq
    %v1371 = vshrl.u32 %v1370, 7
    %v1372 = vsub.s32 0, %v1371
    %v1373 = vrot.slane %v1349, %v1372
    %v1374 = vadd.f32 %v1369, %v1373
    %v1375 = vld [vmem:[%s1] sm:$0x3f]
    %v1376 = vld [vmem:[%s1 + $0x8] sm:$0x3f]
    %v1377 = vld [vmem:[%s1 + $0x10] sm:$0x3f]
    %v1378 = vld [vmem:[%s1 + $0x18] sm:$0x3f]
    %v1379 = vld [vmem:[%s1 + $0x20] sm:$0x3f]
    %v1380 = vld [vmem:[%s1 + $0x28] sm:$0x3f]
    %v1381 = vld [vmem:[%s1 + $0x30] sm:$0x3f]
    %v1382 = vld [vmem:[%s1 + $0x38] sm:$0x3f]
    %v1383 = vsub.f32 %v1375, %v896
    %v1384 = vsub.f32 %v1376, %v896
    %v1385 = vsub.f32 %v1377, %v896
    %v1386 = vsub.f32 %v1378, %v896
    %v1387 = vsub.f32 %v1379, %v896
    %v1388 = vsub.f32 %v1380, %v896
    %v1389 = vsub.f32 %v1381, %v896
    %v1390 = vsub.f32 %v1382, %v896
    %v1391 = vmul.f32 %v1383, %v905
    %v1392 = vmul.f32 %v1384, %v905
    %v1393 = vmul.f32 %v1385, %v905
    %v1394 = vmul.f32 %v1386, %v905
    %v1395 = vmul.f32 %v1387, %v905
    %v1396 = vmul.f32 %v1388, %v905
    %v1397 = vmul.f32 %v1389, %v905
    %v1398 = vmul.f32 %v1390, %v905
    %vm1399 = vcmask 259072
    %v1400 = vsel %vm1399, %v1391, 0.0
    %v1401 = vrot.slane %v1400, 4
    %v1402 = vadd.f32 %v1400, %v1401
    %v1403 = vrot.slane %v1402, 2
    %v1404 = vadd.f32 %v1402, %v1403
    %v1405 = vrot.slane %v1404, 1
    %v1406 = vadd.f32 %v1404, %v1405
    %v1407 = vsel %vm1399, %v1392, 0.0
    %v1408 = vrot.slane %v1407, 4
    %v1409 = vadd.f32 %v1407, %v1408
    %v1410 = vrot.slane %v1409, 2
    %v1411 = vadd.f32 %v1409, %v1410
    %v1412 = vrot.slane %v1411, 1
    %v1413 = vadd.f32 %v1411, %v1412
    %v1414 = vsel %vm1399, %v1393, 0.0
    %v1415 = vrot.slane %v1414, 4
    %v1416 = vadd.f32 %v1414, %v1415
    %v1417 = vrot.slane %v1416, 2
    %v1418 = vadd.f32 %v1416, %v1417
    %v1419 = vrot.slane %v1418, 1
    %v1420 = vadd.f32 %v1418, %v1419
    %v1421 = vsel %vm1399, %v1394, 0.0
    %v1422 = vrot.slane %v1421, 4
    %v1423 = vadd.f32 %v1421, %v1422
    %v1424 = vrot.slane %v1423, 2
    %v1425 = vadd.f32 %v1423, %v1424
    %v1426 = vrot.slane %v1425, 1
    %v1427 = vadd.f32 %v1425, %v1426
    %v1428 = vsel %vm1399, %v1395, 0.0
    %v1429 = vrot.slane %v1428, 4
    %v1430 = vadd.f32 %v1428, %v1429
    %v1431 = vrot.slane %v1430, 2
    %v1432 = vadd.f32 %v1430, %v1431
    %v1433 = vrot.slane %v1432, 1
    %v1434 = vadd.f32 %v1432, %v1433
    %v1435 = vsel %vm1399, %v1396, 0.0
    %v1436 = vrot.slane %v1435, 4
    %v1437 = vadd.f32 %v1435, %v1436
    %v1438 = vrot.slane %v1437, 2
    %v1439 = vadd.f32 %v1437, %v1438
    %v1440 = vrot.slane %v1439, 1
    %v1441 = vadd.f32 %v1439, %v1440
    %v1442 = vsel %vm1399, %v1397, 0.0
    %v1443 = vrot.slane %v1442, 4
    %v1444 = vadd.f32 %v1442, %v1443
    %v1445 = vrot.slane %v1444, 2
    %v1446 = vadd.f32 %v1444, %v1445
    %v1447 = vrot.slane %v1446, 1
    %v1448 = vadd.f32 %v1446, %v1447
    %v1449 = vsel %vm1399, %v1398, 0.0
    %v1450 = vrot.slane %v1449, 4
    %v1451 = vadd.f32 %v1449, %v1450
    %v1452 = vrot.slane %v1451, 2
    %v1453 = vadd.f32 %v1451, %v1452
    %v1454 = vrot.slane %v1453, 1
    %v1455 = vadd.f32 %v1453, %v1454
    %v1456 = vrcp.pop 6.0
    %v1457 = vmul.f32 %v1406, %v1456
    %v1458 = vmul.f32 %v1413, %v1456
    %v1459 = vmul.f32 %v1420, %v1456
    %v1460 = vmul.f32 %v1427, %v1456
    %v1461 = vmul.f32 %v1434, %v1456
    %v1462 = vmul.f32 %v1441, %v1456
    %v1463 = vmul.f32 %v1448, %v1456
    %v1464 = vmul.f32 %v1455, %v1456
    %v1465 = vld [vmem:[%s2 + $0x60] sm:$0xff]
    %v1466 = vld [vmem:[%s2 + $0x68] sm:$0xff]
    %v1467 = vld [vmem:[%s2 + $0x70] sm:$0xff]
    %v1468 = vld [vmem:[%s2 + $0x78] sm:$0xff]
    %v1469 = vld [vmem:[%s3 + $0xa] sm:$0x1]
    %v1470 = vlaneseq
    %v1471 = vshrl.u32 %v1470, 7
    %v1472 = vsub.s32 0, %v1471
    %v1473 = vrot.slane %v1469, %v1472
    %v1482 = vsel %vm1269, %v1458, %v1457
    %v1483 = vsel %vm1271, %v1459, %v1482
    %v1484 = vsel %vm1273, %v1460, %v1483
    %vm1485 = vcmask 1044484
    %v1486 = vsel %vm1485, %v1461, %v1484
    %vm1487 = vcmask 1045509
    %v1488 = vsel %vm1487, %v1462, %v1486
    %vm1489 = vcmask 1046534
    %v1490 = vsel %vm1489, %v1463, %v1488
    %vm1491 = vcmask 1047559
    %v1492 = vsel %vm1491, %v1464, %v1490
    %v1493 = vsel %vm919, %v1492, 0
    %1495 = vmatprep.subr.mxu0 0.0
    %1496 = vmatpush1.msra.mxu0 %v1465
    %1497 = vmatprep.subr.mxu0 0.0
    %1498 = vmatpush1.msra.mxu0 %v1466
    %1499 = vmatprep.subr.mxu0 0.0
    %1500 = vmatpush1.msra.mxu0 %v1467
    %1501 = vmatprep.subr.mxu0 0.0
    %1502 = vmatpush1.msra.mxu0 %v1468
    %1503 = vmatprep.subr.mxu0 0.0
    %1504 = vmatpush1.msra.mxu0 0.0
    %1505 = vmatprep.subr.mxu0 0.0
    %1506 = vmatpush1.msra.mxu0 0.0
    %1507 = vmatprep.subr.mxu0 0.0
    %1508 = vmatpush1.msra.mxu0 0.0
    %1509 = vmatprep.subr.mxu0 0.0
    %1510 = vmatpush1.msra.mxu0 0.0
    %1511 = vmatprep.subr.mxu0 0.0
    %1512 = vmatpush1.msra.mxu0 0.0
    %1513 = vmatprep.subr.mxu0 0.0
    %1514 = vmatpush1.msra.mxu0 0.0
    %1515 = vmatprep.subr.mxu0 0.0
    %1516 = vmatpush1.msra.mxu0 0.0
    %1517 = vmatprep.subr.mxu0 0.0
    %1518 = vmatpush1.msra.mxu0 0.0
    %1519 = vmatprep.subr.mxu0 0.0
    %1520 = vmatpush1.msra.mxu0 0.0
    %1521 = vmatprep.subr.mxu0 0.0
    %1522 = vmatpush1.msra.mxu0 0.0
    %1523 = vmatprep.subr.mxu0 0.0
    %1524 = vmatpush1.msra.mxu0 0.0
    %1525 = vmatprep.subr.mxu0 0.0
    %1526 = vmatpush1.msra.mxu0 0.0
    %1527 = vmatprep.subr.mxu0 0.0
    %1528 = vmatpush1.msra.mxu0 0.0
    %1529 = vmatprep.subr.mxu0 0.0
    %1530 = vmatpush1.msra.mxu0 0.0
    %1531 = vmatprep.subr.mxu0 0.0
    %1532 = vmatpush1.msra.mxu0 0.0
    %1533 = vmatprep.subr.mxu0 0.0
    %1534 = vmatpush1.msra.mxu0 0.0
    %1535 = vmatprep.subr.mxu0 0.0
    %1536 = vmatpush1.msra.mxu0 0.0
    %1537 = vmatprep.subr.mxu0 0.0
    %1538 = vmatpush1.msra.mxu0 0.0
    %1539 = vmatprep.subr.mxu0 0.0
    %1540 = vmatpush1.msra.mxu0 0.0
    %1541 = vmatprep.subr.mxu0 0.0
    %1542 = vmatpush1.msra.mxu0 0.0
    %1543 = vmatprep.subr.mxu0 0.0
    %1544 = vmatpush1.msra.mxu0 0.0
    %1545 = vmatprep.subr.mxu0 0.0
    %1546 = vmatpush1.msra.mxu0 0.0
    %1547 = vmatprep.subr.mxu0 0.0
    %1548 = vmatpush1.msra.mxu0 0.0
    %1549 = vmatprep.subr.mxu0 0.0
    %1550 = vmatpush1.msra.mxu0 0.0
    %1551 = vmatprep.subr.mxu0 0.0
    %1552 = vmatpush1.msra.mxu0 0.0
    %1553 = vmatprep.subr.mxu0 0.0
    %1554 = vmatpush1.msra.mxu0 0.0
    %1555 = vmatprep.subr.mxu0 0.0
    %1556 = vmatpush1.msra.mxu0 0.0
    %1557 = vmatprep.subr.mxu0 0.0
    %1558 = vmatpush1.msra.mxu0 0.0
    %1559 = vmatprep.mubr.f32.mxu0 0.0
    %1560 = vmatmul.mubr.f32.gmra.mrb[0].mxu0 %v1493
    %v1561 = vpop.f32.mrb[0].mxu0
    %v1562 = vadd.f32 %v1473, %v1561
    %v1563 = vpop.f32.mrb[0].mxu0
    %1564 = vdwg.mxu0
    %v1565 = vmax.f32 %v1562, 0.0
    %v1566 = vld [vmem:[%s3 + $0xb] sm:$0x1]
    %v1567 = vld [vmem:[%s3 + $0xc] sm:$0x1]
    %v1568 = vsel %vm919, %v1565, 0.0
    %1569 = vadd.xlane.f32.xlu0 %v1568
    %v1570 = vpop.xlane.xlu0 %1569
    %v1571 = vmul.f32 %v1570, %v1354
    %v1572 = vsub.f32 %v1565, %v1571
    %v1573 = vmul.f32 %v1572, %v1572
    %v1574 = vsel %vm919, %v1573, 0.0
    %1575 = vadd.xlane.f32.xlu0 %v1574
    %v1576 = vpop.xlane.xlu0 %1575
    %v1577 = vmul.f32 %v1576, %v1354
    %v1578 = vadd.f32 %v1577, 1e-05
    %v1579 = vrsqrt.pop %v1578
    %v1580 = vmul.f32 %v1572, %v1579
    %v1581 = vlaneseq
    %v1582 = vshrl.u32 %v1581, 7
    %v1583 = vsub.s32 0, %v1582
    %v1584 = vrot.slane %v1566, %v1583
    %v1585 = vmul.f32 %v1580, %v1584
    %v1586 = vlaneseq
    %v1587 = vshrl.u32 %v1586, 7
    %v1588 = vsub.s32 0, %v1587
    %v1589 = vrot.slane %v1567, %v1588
    %v1590 = vadd.f32 %v1585, %v1589
    %v1592 = vrot.slane %v1590, 2
    %v1594 = vrot.slane %v1590, 4
    %v1596 = vrot.slane %v1590, 6
    %v1598 = vld [vmem:[%s3 + $0xd] sm:$0x1]
    %v1599 = vld [vmem:[%s3 + $0xe] sm:$0x1]
    %v1600 = vlaneseq
    %v1601 = vshrl.u32 %v1600, 7
    %v1602 = vsub.s32 0, %v1601
    %v1603 = vrot.slane %v1598, %v1602
    %v1604 = vmul.f32 %v1590, %v1603
    %v1605 = vmul.f32 %v1592, %v1603
    %v1606 = vmul.f32 %v1594, %v1603
    %v1607 = vmul.f32 %v1596, %v1603
    %vm1608 = vcmask 254976
    %v1609 = vsel %vm1608, %v1604, 0.0
    %1610 = vadd.xlane.f32.xlu0 %v1609
    %v1611 = vpop.xlane.xlu0 %1610
    %v1612 = vsel %vm1608, %v1605, 0.0
    %1613 = vadd.xlane.f32.xlu0 %v1612
    %v1614 = vpop.xlane.xlu0 %1613
    %v1615 = vsel %vm1608, %v1606, 0.0
    %1616 = vadd.xlane.f32.xlu0 %v1615
    %v1617 = vpop.xlane.xlu0 %1616
    %v1618 = vsel %vm1608, %v1607, 0.0
    %1619 = vadd.xlane.f32.xlu0 %v1618
    %v1620 = vpop.xlane.xlu0 %1619
    %v1621 = vlaneseq
    %v1622 = vshrl.u32 %v1621, 7
    %v1623 = vsub.s32 0, %v1622
    %v1624 = vrot.slane %v1599, %v1623
    %v1625 = vadd.f32 %v1611, %v1624
    %v1626 = vadd.f32 %v1614, %v1624
    %v1627 = vadd.f32 %v1617, %v1624
    %v1628 = vadd.f32 %v1620, %v1624
    %vm1629 = vcmask 1024
    %v1630 = vsel %vm1629, %v1625, -inf
    %v1631 = vrot.slane %v1630, 4
    %v1632 = vmax.f32 %v1630, %v1631
    %v1633 = vrot.slane %v1632, 2
    %v1634 = vmax.f32 %v1632, %v1633
    %v1635 = vrot.slane %v1634, 1
    %v1636 = vmax.f32 %v1634, %v1635
    %v1637 = vsel %vm1629, %v1626, -inf
    %v1638 = vrot.slane %v1637, 4
    %v1639 = vmax.f32 %v1637, %v1638
    %v1640 = vrot.slane %v1639, 2
    %v1641 = vmax.f32 %v1639, %v1640
    %v1642 = vrot.slane %v1641, 1
    %v1643 = vmax.f32 %v1641, %v1642
    %v1644 = vsel %vm1629, %v1627, -inf
    %v1645 = vrot.slane %v1644, 4
    %v1646 = vmax.f32 %v1644, %v1645
    %v1647 = vrot.slane %v1646, 2
    %v1648 = vmax.f32 %v1646, %v1647
    %v1649 = vrot.slane %v1648, 1
    %v1650 = vmax.f32 %v1648, %v1649
    %v1651 = vsel %vm1629, %v1628, -inf
    %v1652 = vrot.slane %v1651, 4
    %v1653 = vmax.f32 %v1651, %v1652
    %v1654 = vrot.slane %v1653, 2
    %v1655 = vmax.f32 %v1653, %v1654
    %v1656 = vrot.slane %v1655, 1
    %v1657 = vmax.f32 %v1655, %v1656
    %v1658 = vsub.f32 %v1625, %v1636
    %v1659 = vsub.f32 %v1626, %v1643
    %v1660 = vsub.f32 %v1627, %v1650
    %v1661 = vsub.f32 %v1628, %v1657
    %v1662 = vmul.f32 %v1658, 1.442695
    %v1663 = vpow.pop %v1662
    %v1664 = vmul.f32 %v1659, 1.442695
    %v1665 = vpow.pop %v1664
    %v1666 = vmul.f32 %v1660, 1.442695
    %v1667 = vpow.pop %v1666
    %v1668 = vmul.f32 %v1661, 1.442695
    %v1669 = vpow.pop %v1668
    %v1670 = vsel %vm1629, %v1663, 0.0
    %v1671 = vrot.slane %v1670, 4
    %v1672 = vadd.f32 %v1670, %v1671
    %v1673 = vrot.slane %v1672, 2
    %v1674 = vadd.f32 %v1672, %v1673
    %v1675 = vrot.slane %v1674, 1
    %v1676 = vadd.f32 %v1674, %v1675
    %v1677 = vsel %vm1629, %v1665, 0.0
    %v1678 = vrot.slane %v1677, 4
    %v1679 = vadd.f32 %v1677, %v1678
    %v1680 = vrot.slane %v1679, 2
    %v1681 = vadd.f32 %v1679, %v1680
    %v1682 = vrot.slane %v1681, 1
    %v1683 = vadd.f32 %v1681, %v1682
    %v1684 = vsel %vm1629, %v1667, 0.0
    %v1685 = vrot.slane %v1684, 4
    %v1686 = vadd.f32 %v1684, %v1685
    %v1687 = vrot.slane %v1686, 2
    %v1688 = vadd.f32 %v1686, %v1687
    %v1689 = vrot.slane %v1688, 1
    %v1690 = vadd.f32 %v1688, %v1689
    %v1691 = vsel %vm1629, %v1669, 0.0
    %v1692 = vrot.slane %v1691, 4
    %v1693 = vadd.f32 %v1691, %v1692
    %v1694 = vrot.slane %v1693, 2
    %v1695 = vadd.f32 %v1693, %v1694
    %v1696 = vrot.slane %v1695, 1
    %v1697 = vadd.f32 %v1695, %v1696
    %v1698 = vrcp.pop %v1676
    %v1699 = vmul.f32 %v1663, %v1698
    %v1700 = vrcp.pop %v1683
    %v1701 = vmul.f32 %v1665, %v1700
    %v1702 = vrcp.pop %v1690
    %v1703 = vmul.f32 %v1667, %v1702
    %v1704 = vrcp.pop %v1697
    %v1705 = vmul.f32 %v1669, %v1704
    %1707 = vset.pattern.permute.xlu0 0
    %1708 = vperm.xlu0 %1707, %v1699
    %v1709 = vpop.permute.xlu0 %1708
    %1712 = vset.pattern.permute.xlu0 0
    %1713 = vperm.xlu0 %1712, %v1701
    %v1714 = vpop.permute.xlu0 %1713
    %1717 = vset.pattern.permute.xlu0 0
    %1718 = vperm.xlu0 %1717, %v1703
    %v1719 = vpop.permute.xlu0 %1718
    %1722 = vset.pattern.permute.xlu0 0
    %1723 = vperm.xlu0 %1722, %v1705
    %v1724 = vpop.permute.xlu0 %1723
    %v1726 = vmul.f32 %v1709, %v1590
    %v1727 = vmul.f32 %v1714, %v1592
    %v1728 = vmul.f32 %v1719, %v1594
    %v1729 = vmul.f32 %v1724, %v1596
    %v1730 = vsel %vm1608, %v1726, 0.0
    %v1731 = vrot.slane %v1730, 4
    %v1732 = vadd.f32 %v1730, %v1731
    %v1733 = vrot.slane %v1732, 2
    %v1734 = vadd.f32 %v1732, %v1733
    %v1735 = vrot.slane %v1734, 1
    %v1736 = vadd.f32 %v1734, %v1735
    %v1737 = vsel %vm1608, %v1727, 0.0
    %v1738 = vrot.slane %v1737, 4
    %v1739 = vadd.f32 %v1737, %v1738
    %v1740 = vrot.slane %v1739, 2
    %v1741 = vadd.f32 %v1739, %v1740
    %v1742 = vrot.slane %v1741, 1
    %v1743 = vadd.f32 %v1741, %v1742
    %v1744 = vsel %vm1608, %v1728, 0.0
    %v1745 = vrot.slane %v1744, 4
    %v1746 = vadd.f32 %v1744, %v1745
    %v1747 = vrot.slane %v1746, 2
    %v1748 = vadd.f32 %v1746, %v1747
    %v1749 = vrot.slane %v1748, 1
    %v1750 = vadd.f32 %v1748, %v1749
    %v1751 = vsel %vm1608, %v1729, 0.0
    %v1752 = vrot.slane %v1751, 4
    %v1753 = vadd.f32 %v1751, %v1752
    %v1754 = vrot.slane %v1753, 2
    %v1755 = vadd.f32 %v1753, %v1754
    %v1756 = vrot.slane %v1755, 1
    %v1757 = vadd.f32 %v1755, %v1756
    %v1758 = vld [vmem:[%s2 + $0x80] sm:$0xff]
    %v1759 = vld [vmem:[%s2 + $0x88] sm:$0xff]
    %v1760 = vld [vmem:[%s2 + $0x90] sm:$0xff]
    %v1761 = vld [vmem:[%s2 + $0x98] sm:$0xff]
    %v1762 = vld [vmem:[%s3 + $0xf] sm:$0x1]
    %v1763 = vlaneseq
    %v1764 = vshrl.u32 %v1763, 7
    %v1765 = vsub.s32 0, %v1764
    %v1766 = vrot.slane %v1762, %v1765
    %v1771 = vsel %vm1269, %v1743, %v1736
    %v1772 = vsel %vm1271, %v1750, %v1771
    %v1773 = vsel %vm1273, %v1757, %v1772
    %v1774 = vsel %vm919, %v1773, 0
    %1776 = vmatprep.subr.mxu0 0.0
    %1777 = vmatpush1.msra.mxu0 %v1758
    %1778 = vmatprep.subr.mxu0 0.0
    %1779 = vmatpush1.msra.mxu0 %v1759
    %1780 = vmatprep.subr.mxu0 0.0
    %1781 = vmatpush1.msra.mxu0 %v1760
    %1782 = vmatprep.subr.mxu0 0.0
    %1783 = vmatpush1.msra.mxu0 %v1761
    %1784 = vmatprep.subr.mxu0 0.0
    %1785 = vmatpush1.msra.mxu0 0.0
    %1786 = vmatprep.subr.mxu0 0.0
    %1787 = vmatpush1.msra.mxu0 0.0
    %1788 = vmatprep.subr.mxu0 0.0
    %1789 = vmatpush1.msra.mxu0 0.0
    %1790 = vmatprep.subr.mxu0 0.0
    %1791 = vmatpush1.msra.mxu0 0.0
    %1792 = vmatprep.subr.mxu0 0.0
    %1793 = vmatpush1.msra.mxu0 0.0
    %1794 = vmatprep.subr.mxu0 0.0
    %1795 = vmatpush1.msra.mxu0 0.0
    %1796 = vmatprep.subr.mxu0 0.0
    %1797 = vmatpush1.msra.mxu0 0.0
    %1798 = vmatprep.subr.mxu0 0.0
    %1799 = vmatpush1.msra.mxu0 0.0
    %1800 = vmatprep.subr.mxu0 0.0
    %1801 = vmatpush1.msra.mxu0 0.0
    %1802 = vmatprep.subr.mxu0 0.0
    %1803 = vmatpush1.msra.mxu0 0.0
    %1804 = vmatprep.subr.mxu0 0.0
    %1805 = vmatpush1.msra.mxu0 0.0
    %1806 = vmatprep.subr.mxu0 0.0
    %1807 = vmatpush1.msra.mxu0 0.0
    %1808 = vmatprep.subr.mxu0 0.0
    %1809 = vmatpush1.msra.mxu0 0.0
    %1810 = vmatprep.subr.mxu0 0.0
    %1811 = vmatpush1.msra.mxu0 0.0
    %1812 = vmatprep.subr.mxu0 0.0
    %1813 = vmatpush1.msra.mxu0 0.0
    %1814 = vmatprep.subr.mxu0 0.0
    %1815 = vmatpush1.msra.mxu0 0.0
    %1816 = vmatprep.subr.mxu0 0.0
    %1817 = vmatpush1.msra.mxu0 0.0
    %1818 = vmatprep.subr.mxu0 0.0
    %1819 = vmatpush1.msra.mxu0 0.0
    %1820 = vmatprep.subr.mxu0 0.0
    %1821 = vmatpush1.msra.mxu0 0.0
    %1822 = vmatprep.subr.mxu0 0.0
    %1823 = vmatpush1.msra.mxu0 0.0
    %1824 = vmatprep.subr.mxu0 0.0
    %1825 = vmatpush1.msra.mxu0 0.0
    %1826 = vmatprep.subr.mxu0 0.0
    %1827 = vmatpush1.msra.mxu0 0.0
    %1828 = vmatprep.subr.mxu0 0.0
    %1829 = vmatpush1.msra.mxu0 0.0
    %1830 = vmatprep.subr.mxu0 0.0
    %1831 = vmatpush1.msra.mxu0 0.0
    %1832 = vmatprep.subr.mxu0 0.0
    %1833 = vmatpush1.msra.mxu0 0.0
    %1834 = vmatprep.subr.mxu0 0.0
    %1835 = vmatpush1.msra.mxu0 0.0
    %1836 = vmatprep.subr.mxu0 0.0
    %1837 = vmatpush1.msra.mxu0 0.0
    %1838 = vmatprep.subr.mxu0 0.0
    %1839 = vmatpush1.msra.mxu0 0.0
    %1840 = vmatprep.mubr.f32.mxu0 0.0
    %1841 = vmatmul.mubr.f32.gmra.mrb[0].mxu0 %v1774
    %v1842 = vpop.f32.mrb[0].mxu0
    %v1843 = vadd.f32 %v1766, %v1842
    %v1844 = vpop.f32.mrb[0].mxu0
    %1845 = vdwg.mxu0
    %v1846 = vmax.f32 %v1843, 0.0
    %v1847 = vld [vmem:[%s3 + $0x10] sm:$0x1]
    %v1848 = vld [vmem:[%s3 + $0x11] sm:$0x1]
    %v1849 = vsel %vm1350, %v1846, 0.0
    %1850 = vadd.xlane.f32.xlu0 %v1849
    %v1851 = vpop.xlane.xlu0 %1850
    %v1852 = vmul.f32 %v1851, %v1354
    %v1853 = vsub.f32 %v1846, %v1852
    %v1854 = vmul.f32 %v1853, %v1853
    %v1855 = vsel %vm1350, %v1854, 0.0
    %1856 = vadd.xlane.f32.xlu0 %v1855
    %v1857 = vpop.xlane.xlu0 %1856
    %v1858 = vmul.f32 %v1857, %v1354
    %v1859 = vadd.f32 %v1858, 1e-05
    %v1860 = vrsqrt.pop %v1859
    %v1861 = vmul.f32 %v1853, %v1860
    %v1862 = vlaneseq
    %v1863 = vshrl.u32 %v1862, 7
    %v1864 = vsub.s32 0, %v1863
    %v1865 = vrot.slane %v1847, %v1864
    %v1866 = vmul.f32 %v1861, %v1865
    %v1867 = vlaneseq
    %v1868 = vshrl.u32 %v1867, 7
    %v1869 = vsub.s32 0, %v1868
    %v1870 = vrot.slane %v1848, %v1869
    %v1871 = vadd.f32 %v1866, %v1870
    %v1873 = vadd.f32 %v1871, %v1773
    %1874 = vst.msk [vmem:[#allocation5] sm:$0xf] %vm1350, %v1374
    %1876 = vrot.lane.b32.xlu0 %v1873, 32
    %v1877 = vpop.permute.xlu0 %1876
    %vm1879 = vcmask 519424
    %1880 = vst.msk [vmem:[#allocation5] sm:$0xf] %vm1879, %v1877
    %v1881 = vld [vmem:[#allocation5] sm:$0xf]
    %v1882 = vld [vmem:[%s2 + $0xa0] sm:$0xff]
    %v1883 = vld [vmem:[%s2 + $0xa8] sm:$0xff]
    %v1884 = vld [vmem:[%s2 + $0xb0] sm:$0xff]
    %v1885 = vld [vmem:[%s2 + $0xb8] sm:$0xff]
    %v1886 = vld [vmem:[%s2 + $0xc0] sm:$0xff]
    %v1887 = vld [vmem:[%s2 + $0xc8] sm:$0xff]
    %v1888 = vld [vmem:[%s2 + $0xd0] sm:$0xff]
    %v1889 = vld [vmem:[%s2 + $0xd8] sm:$0xff]
    %v1890 = vld [vmem:[%s3 + $0x12] sm:$0x1]
    %v1891 = vlaneseq
    %v1892 = vshrl.u32 %v1891, 7
    %v1893 = vsub.s32 0, %v1892
    %v1894 = vrot.slane %v1890, %v1893
    %v1896 = vsel %vm1023, %v1881, 0
    %1898 = vmatprep.subr.mxu0 0.0
    %1899 = vmatpush1.msra.mxu0 %v1882
    %1900 = vmatprep.subr.mxu0 0.0
    %1901 = vmatpush1.msra.mxu0 %v1883
    %1902 = vmatprep.subr.mxu0 0.0
    %1903 = vmatpush1.msra.mxu0 %v1884
    %1904 = vmatprep.subr.mxu0 0.0
    %1905 = vmatpush1.msra.mxu0 %v1885
    %1906 = vmatprep.subr.mxu0 0.0
    %1907 = vmatpush1.msra.mxu0 %v1886
    %1908 = vmatprep.subr.mxu0 0.0
    %1909 = vmatpush1.msra.mxu0 %v1887
    %1910 = vmatprep.subr.mxu0 0.0
    %1911 = vmatpush1.msra.mxu0 %v1888
    %1912 = vmatprep.subr.mxu0 0.0
    %1913 = vmatpush1.msra.mxu0 %v1889
    %1914 = vmatprep.subr.mxu0 0.0
    %1915 = vmatpush1.msra.mxu0 0.0
    %1916 = vmatprep.subr.mxu0 0.0
    %1917 = vmatpush1.msra.mxu0 0.0
    %1918 = vmatprep.subr.mxu0 0.0
    %1919 = vmatpush1.msra.mxu0 0.0
    %1920 = vmatprep.subr.mxu0 0.0
    %1921 = vmatpush1.msra.mxu0 0.0
    %1922 = vmatprep.subr.mxu0 0.0
    %1923 = vmatpush1.msra.mxu0 0.0
    %1924 = vmatprep.subr.mxu0 0.0
    %1925 = vmatpush1.msra.mxu0 0.0
    %1926 = vmatprep.subr.mxu0 0.0
    %1927 = vmatpush1.msra.mxu0 0.0
    %1928 = vmatprep.subr.mxu0 0.0
    %1929 = vmatpush1.msra.mxu0 0.0
    %1930 = vmatprep.subr.mxu0 0.0
    %1931 = vmatpush1.msra.mxu0 0.0
    %1932 = vmatprep.subr.mxu0 0.0
    %1933 = vmatpush1.msra.mxu0 0.0
    %1934 = vmatprep.subr.mxu0 0.0
    %1935 = vmatpush1.msra.mxu0 0.0
    %1936 = vmatprep.subr.mxu0 0.0
    %1937 = vmatpush1.msra.mxu0 0.0
    %1938 = vmatprep.subr.mxu0 0.0
    %1939 = vmatpush1.msra.mxu0 0.0
    %1940 = vmatprep.subr.mxu0 0.0
    %1941 = vmatpush1.msra.mxu0 0.0
    %1942 = vmatprep.subr.mxu0 0.0
    %1943 = vmatpush1.msra.mxu0 0.0
    %1944 = vmatprep.subr.mxu0 0.0
    %1945 = vmatpush1.msra.mxu0 0.0
    %1946 = vmatprep.subr.mxu0 0.0
    %1947 = vmatpush1.msra.mxu0 0.0
    %1948 = vmatprep.subr.mxu0 0.0
    %1949 = vmatpush1.msra.mxu0 0.0
    %1950 = vmatprep.subr.mxu0 0.0
    %1951 = vmatpush1.msra.mxu0 0.0
    %1952 = vmatprep.subr.mxu0 0.0
    %1953 = vmatpush1.msra.mxu0 0.0
    %1954 = vmatprep.subr.mxu0 0.0
    %1955 = vmatpush1.msra.mxu0 0.0
    %1956 = vmatprep.subr.mxu0 0.0
    %1957 = vmatpush1.msra.mxu0 0.0
    %1958 = vmatprep.subr.mxu0 0.0
    %1959 = vmatpush1.msra.mxu0 0.0
    %1960 = vmatprep.subr.mxu0 0.0
    %1961 = vmatpush1.msra.mxu0 0.0
    %1962 = vmatprep.mubr.f32.mxu0 0.0
    %1963 = vmatmul.mubr.f32.gmra.mrb[0].mxu0 %v1896
    %v1964 = vpop.f32.mrb[0].mxu0
    %v1965 = vadd.f32 %v1894, %v1964
    %v1966 = vpop.f32.mrb[0].mxu0
    %1967 = vdwg.mxu0
    %v1968 = vmax.f32 %v1965, 0.0
    %v1969 = vld [vmem:[%s3 + $0x13] sm:$0x1]
    %v1970 = vld [vmem:[%s3 + $0x14] sm:$0x1]
    %vm1971 = vcmask 1043456
    %v1972 = vsel %vm1971, %v1968, 0.0
    %1973 = vadd.xlane.f32.xlu0 %v1972
    %v1974 = vpop.xlane.xlu0 %1973
    %v1975 = vrcp.pop 128.0
    %v1976 = vmul.f32 %v1974, %v1975
    %v1977 = vsub.f32 %v1968, %v1976
    %v1978 = vmul.f32 %v1977, %v1977
    %v1979 = vsel %vm1971, %v1978, 0.0
    %1980 = vadd.xlane.f32.xlu0 %v1979
    %v1981 = vpop.xlane.xlu0 %1980
    %v1982 = vmul.f32 %v1981, %v1975
    %v1983 = vadd.f32 %v1982, 1e-05
    %v1984 = vrsqrt.pop %v1983
    %v1985 = vmul.f32 %v1977, %v1984
    %v1986 = vlaneseq
    %v1987 = vshrl.u32 %v1986, 7
    %v1988 = vsub.s32 0, %v1987
    %v1989 = vrot.slane %v1969, %v1988
    %v1990 = vmul.f32 %v1985, %v1989
    %v1991 = vlaneseq
    %v1992 = vshrl.u32 %v1991, 7
    %v1993 = vsub.s32 0, %v1992
    %v1994 = vrot.slane %v1970, %v1993
    %v1995 = vadd.f32 %v1990, %v1994
    %v1996 = vld [vmem:[%s2 + $0xe0] sm:$0xff]
    %v1997 = vld [vmem:[%s2 + $0xe8] sm:$0xff]
    %v1998 = vld [vmem:[%s2 + $0xf0] sm:$0xff]
    %v1999 = vld [vmem:[%s2 + $0xf8] sm:$0xff]
    %v2000 = vld [vmem:[%s2 + $0x100] sm:$0xff]
    %v2001 = vld [vmem:[%s2 + $0x108] sm:$0xff]
    %v2002 = vld [vmem:[%s2 + $0x110] sm:$0xff]
    %v2003 = vld [vmem:[%s2 + $0x118] sm:$0xff]
    %v2004 = vld [vmem:[%s2 + $0x120] sm:$0xff]
    %v2005 = vld [vmem:[%s2 + $0x128] sm:$0xff]
    %v2006 = vld [vmem:[%s2 + $0x130] sm:$0xff]
    %v2007 = vld [vmem:[%s2 + $0x138] sm:$0xff]
    %v2008 = vld [vmem:[%s2 + $0x140] sm:$0xff]
    %v2009 = vld [vmem:[%s2 + $0x148] sm:$0xff]
    %v2010 = vld [vmem:[%s2 + $0x150] sm:$0xff]
    %v2011 = vld [vmem:[%s2 + $0x158] sm:$0xff]
    %v2012 = vld [vmem:[%s3 + $0x15] sm:$0x1]
    %v2013 = vlaneseq
    %v2014 = vshrl.u32 %v2013, 7
    %v2015 = vsub.s32 0, %v2014
    %v2016 = vrot.slane %v2012, %v2015
    %2017 = vmatprep.subr.mxu0 0.0
    %2018 = vmatpush1.msra.mxu0 %v1996
    %2019 = vmatprep.subr.mxu0 0.0
    %2020 = vmatpush1.msra.mxu0 %v1997
    %2021 = vmatprep.subr.mxu0 0.0
    %2022 = vmatpush1.msra.mxu0 %v1998
    %2023 = vmatprep.subr.mxu0 0.0
    %2024 = vmatpush1.msra.mxu0 %v1999
    %2025 = vmatprep.subr.mxu0 0.0
    %2026 = vmatpush1.msra.mxu0 %v2000
    %2027 = vmatprep.subr.mxu0 0.0
    %2028 = vmatpush1.msra.mxu0 %v2001
    %2029 = vmatprep.subr.mxu0 0.0
    %2030 = vmatpush1.msra.mxu0 %v2002
    %2031 = vmatprep.subr.mxu0 0.0
    %2032 = vmatpush1.msra.mxu0 %v2003
    %2033 = vmatprep.subr.mxu0 0.0
    %2034 = vmatpush1.msra.mxu0 %v2004
    %2035 = vmatprep.subr.mxu0 0.0
    %2036 = vmatpush1.msra.mxu0 %v2005
    %2037 = vmatprep.subr.mxu0 0.0
    %2038 = vmatpush1.msra.mxu0 %v2006
    %2039 = vmatprep.subr.mxu0 0.0
    %2040 = vmatpush1.msra.mxu0 %v2007
    %2041 = vmatprep.subr.mxu0 0.0
    %2042 = vmatpush1.msra.mxu0 %v2008
    %2043 = vmatprep.subr.mxu0 0.0
    %2044 = vmatpush1.msra.mxu0 %v2009
    %2045 = vmatprep.subr.mxu0 0.0
    %2046 = vmatpush1.msra.mxu0 %v2010
    %2047 = vmatprep.subr.mxu0 0.0
    %2048 = vmatpush1.msra.mxu0 %v2011
    %2049 = vmatprep.subr.mxu0 0.0
    %2050 = vmatpush1.msra.mxu0 0.0
    %2051 = vmatprep.subr.mxu0 0.0
    %2052 = vmatpush1.msra.mxu0 0.0
    %2053 = vmatprep.subr.mxu0 0.0
    %2054 = vmatpush1.msra.mxu0 0.0
    %2055 = vmatprep.subr.mxu0 0.0
    %2056 = vmatpush1.msra.mxu0 0.0
    %2057 = vmatprep.subr.mxu0 0.0
    %2058 = vmatpush1.msra.mxu0 0.0
    %2059 = vmatprep.subr.mxu0 0.0
    %2060 = vmatpush1.msra.mxu0 0.0
    %2061 = vmatprep.subr.mxu0 0.0
    %2062 = vmatpush1.msra.mxu0 0.0
    %2063 = vmatprep.subr.mxu0 0.0
    %2064 = vmatpush1.msra.mxu0 0.0
    %2065 = vmatprep.subr.mxu0 0.0
    %2066 = vmatpush1.msra.mxu0 0.0
    %2067 = vmatprep.subr.mxu0 0.0
    %2068 = vmatpush1.msra.mxu0 0.0
    %2069 = vmatprep.subr.mxu0 0.0
    %2070 = vmatpush1.msra.mxu0 0.0
    %2071 = vmatprep.subr.mxu0 0.0
    %2072 = vmatpush1.msra.mxu0 0.0
    %2073 = vmatprep.subr.mxu0 0.0
    %2074 = vmatpush1.msra.mxu0 0.0
    %2075 = vmatprep.subr.mxu0 0.0
    %2076 = vmatpush1.msra.mxu0 0.0
    %2077 = vmatprep.subr.mxu0 0.0
    %2078 = vmatpush1.msra.mxu0 0.0
    %2079 = vmatprep.subr.mxu0 0.0
    %2080 = vmatpush1.msra.mxu0 0.0
    %2081 = vmatprep.mubr.f32.mxu0 0.0
    %2082 = vmatmul.mubr.f32.gmra.mrb[0].mxu0 %v1995
    %v2083 = vpop.f32.mrb[0].mxu0
    %v2084 = vadd.f32 %v2016, %v2083
    %v2085 = vpop.f32.mrb[0].mxu0
    %2086 = vdwg.mxu0
    %v2087 = vmax.f32 %v2084, 0.0
    %v2088 = vld [vmem:[%s3 + $0x16] sm:$0x1]
    %v2089 = vld [vmem:[%s3 + $0x17] sm:$0x1]
    %vm2090 = vcmask 519168
    %v2091 = vsel %vm2090, %v2087, 0.0
    %2092 = vadd.xlane.f32.xlu0 %v2091
    %v2093 = vpop.xlane.xlu0 %2092
    %v2094 = vmul.f32 %v2093, %v1036
    %v2095 = vsub.f32 %v2087, %v2094
    %v2096 = vmul.f32 %v2095, %v2095
    %v2097 = vsel %vm2090, %v2096, 0.0
    %2098 = vadd.xlane.f32.xlu0 %v2097
    %v2099 = vpop.xlane.xlu0 %2098
    %v2100 = vmul.f32 %v2099, %v1036
    %v2101 = vadd.f32 %v2100, 1e-05
    %v2102 = vrsqrt.pop %v2101
    %v2103 = vmul.f32 %v2095, %v2102
    %v2104 = vlaneseq
    %v2105 = vshrl.u32 %v2104, 7
    %v2106 = vsub.s32 0, %v2105
    %v2107 = vrot.slane %v2088, %v2106
    %v2108 = vmul.f32 %v2103, %v2107
    %v2109 = vlaneseq
    %v2110 = vshrl.u32 %v2109, 7
    %v2111 = vsub.s32 0, %v2110
    %v2112 = vrot.slane %v2089, %v2111
    %v2113 = vadd.f32 %v2108, %v2112
    %v2114 = vadd.f32 %v2113, %v1881
    %v2115 = vsel %vm2090, %v2114, 0.0
    %v2116 = vrot.slane %v2115, 4
    %v2117 = vadd.f32 %v2115, %v2116
    %v2118 = vrot.slane %v2117, 2
    %v2119 = vadd.f32 %v2117, %v2118
    %v2120 = vrot.slane %v2119, 1
    %v2121 = vadd.f32 %v2119, %v2120
    %v2122 = vrcp.pop 4.0
    %v2123 = vmul.f32 %v2121, %v2122
    %v2124 = vld [vmem:[%s4] sm:$0xff]
    %v2125 = vld [vmem:[%s4 + $0x8] sm:$0xff]
    %v2126 = vld [vmem:[%s4 + $0x10] sm:$0xff]
    %v2127 = vld [vmem:[%s4 + $0x18] sm:$0xff]
    %v2128 = vld [vmem:[%s4 + $0x20] sm:$0xff]
    %v2129 = vld [vmem:[%s4 + $0x28] sm:$0xff]
    %v2130 = vld [vmem:[%s4 + $0x30] sm:$0xff]
    %v2131 = vld [vmem:[%s4 + $0x38] sm:$0xff]
    %v2132 = vld [vmem:[%s4 + $0x40] sm:$0xff]
    %v2133 = vld [vmem:[%s4 + $0x48] sm:$0xff]
    %v2134 = vld [vmem:[%s4 + $0x50] sm:$0xff]
    %v2135 = vld [vmem:[%s4 + $0x58] sm:$0xff]
    %v2136 = vld [vmem:[%s4 + $0x60] sm:$0xff]
    %v2137 = vld [vmem:[%s4 + $0x68] sm:$0xff]
    %v2138 = vld [vmem:[%s4 + $0x70] sm:$0xff]
    %v2139 = vld [vmem:[%s4 + $0x78] sm:$0xff]
    %v2140 = vld [vmem:[%s4 + $0x80] sm:$0xff]
    %v2141 = vld [vmem:[%s4 + $0x88] sm:$0xff]
    %v2142 = vld [vmem:[%s4 + $0x90] sm:$0xff]
    %v2143 = vld [vmem:[%s4 + $0x98] sm:$0xff]
    %v2144 = vld [vmem:[%s4 + $0xa0] sm:$0xff]
    %v2145 = vld [vmem:[%s4 + $0xa8] sm:$0xff]
    %v2146 = vld [vmem:[%s4 + $0xb0] sm:$0xff]
    %v2147 = vld [vmem:[%s4 + $0xb8] sm:$0xff]
    %v2148 = vld [vmem:[%s4 + $0xc0] sm:$0xff]
    %v2149 = vld [vmem:[%s4 + $0xc8] sm:$0xff]
    %v2150 = vld [vmem:[%s4 + $0xd0] sm:$0xff]
    %v2151 = vld [vmem:[%s4 + $0xd8] sm:$0xff]
    %v2152 = vld [vmem:[%s4 + $0xe0] sm:$0xff]
    %v2153 = vld [vmem:[%s4 + $0xe8] sm:$0xff]
    %v2154 = vld [vmem:[%s4 + $0xf0] sm:$0xff]
    %v2155 = vld [vmem:[%s4 + $0xf8] sm:$0xff]
    %v2156 = vld [vmem:[%s5] sm:$0x1]
    %v2157 = vld [vmem:[%s5 + $0x1] sm:$0x1]
    %v2158 = vld [vmem:[%s5 + $0x2] sm:$0x1]
    %v2159 = vld [vmem:[%s5 + $0x3] sm:$0x1]
    %v2164 = vlaneseq
    %v2165 = vshrl.u32 %v2164, 7
    %v2166 = vsub.s32 0, %v2165
    %v2167 = vrot.slane %v2156, %v2166
    %v2168 = vlaneseq
    %v2169 = vshrl.u32 %v2168, 7
    %v2170 = vsub.s32 0, %v2169
    %v2171 = vrot.slane %v2157, %v2170
    %v2172 = vlaneseq
    %v2173 = vshrl.u32 %v2172, 7
    %v2174 = vsub.s32 0, %v2173
    %v2175 = vrot.slane %v2158, %v2174
    %v2176 = vlaneseq
    %v2177 = vshrl.u32 %v2176, 7
    %v2178 = vsub.s32 0, %v2177
    %v2179 = vrot.slane %v2159, %v2178
    %v2185 = vsel %vm1023, %v2114, 0
    %2187 = vmatprep.subr.mxu0 0.0
    %2188 = vmatpush1.msra.mxu0 %v2124
    %2189 = vmatprep.subr.mxu0 0.0
    %2190 = vmatpush1.msra.mxu0 %v2125
    %2191 = vmatprep.subr.mxu0 0.0
    %2192 = vmatpush1.msra.mxu0 %v2126
    %2193 = vmatprep.subr.mxu0 0.0
    %2194 = vmatpush1.msra.mxu0 %v2127
    %2195 = vmatprep.subr.mxu0 0.0
    %2196 = vmatpush1.msra.mxu0 %v2128
    %2197 = vmatprep.subr.mxu0 0.0
    %2198 = vmatpush1.msra.mxu0 %v2129
    %2199 = vmatprep.subr.mxu0 0.0
    %2200 = vmatpush1.msra.mxu0 %v2130
    %2201 = vmatprep.subr.mxu0 0.0
    %2202 = vmatpush1.msra.mxu0 %v2131
    %2203 = vmatprep.subr.mxu0 0.0
    %2204 = vmatpush1.msra.mxu0 0.0
    %2205 = vmatprep.subr.mxu0 0.0
    %2206 = vmatpush1.msra.mxu0 0.0
    %2207 = vmatprep.subr.mxu0 0.0
    %2208 = vmatpush1.msra.mxu0 0.0
    %2209 = vmatprep.subr.mxu0 0.0
    %2210 = vmatpush1.msra.mxu0 0.0
    %2211 = vmatprep.subr.mxu0 0.0
    %2212 = vmatpush1.msra.mxu0 0.0
    %2213 = vmatprep.subr.mxu0 0.0
    %2214 = vmatpush1.msra.mxu0 0.0
    %2215 = vmatprep.subr.mxu0 0.0
    %2216 = vmatpush1.msra.mxu0 0.0
    %2217 = vmatprep.subr.mxu0 0.0
    %2218 = vmatpush1.msra.mxu0 0.0
    %2219 = vmatprep.subr.mxu0 0.0
    %2220 = vmatpush1.msra.mxu0 0.0
    %2221 = vmatprep.subr.mxu0 0.0
    %2222 = vmatpush1.msra.mxu0 0.0
    %2223 = vmatprep.subr.mxu0 0.0
    %2224 = vmatpush1.msra.mxu0 0.0
    %2225 = vmatprep.subr.mxu0 0.0
    %2226 = vmatpush1.msra.mxu0 0.0
    %2227 = vmatprep.subr.mxu0 0.0
    %2228 = vmatpush1.msra.mxu0 0.0
    %2229 = vmatprep.subr.mxu0 0.0
    %2230 = vmatpush1.msra.mxu0 0.0
    %2231 = vmatprep.subr.mxu0 0.0
    %2232 = vmatpush1.msra.mxu0 0.0
    %2233 = vmatprep.subr.mxu0 0.0
    %2234 = vmatpush1.msra.mxu0 0.0
    %2235 = vmatprep.subr.mxu0 0.0
    %2236 = vmatpush1.msra.mxu0 0.0
    %2237 = vmatprep.subr.mxu0 0.0
    %2238 = vmatpush1.msra.mxu0 0.0
    %2239 = vmatprep.subr.mxu0 0.0
    %2240 = vmatpush1.msra.mxu0 0.0
    %2241 = vmatprep.subr.mxu0 0.0
    %2242 = vmatpush1.msra.mxu0 0.0
    %2243 = vmatprep.subr.mxu0 0.0
    %2244 = vmatpush1.msra.mxu0 0.0
    %2245 = vmatprep.subr.mxu0 0.0
    %2246 = vmatpush1.msra.mxu0 0.0
    %2247 = vmatprep.subr.mxu0 0.0
    %2248 = vmatpush1.msra.mxu0 0.0
    %2249 = vmatprep.subr.mxu0 0.0
    %2250 = vmatpush1.msra.mxu0 0.0
    %2251 = vmatprep.mubr.f32.mxu0 0.0
    %2252 = vmatmul.mubr.f32.gmra.mrb[0].mxu0 %v2185
    %v2253 = vpop.f32.mrb[0].mxu0
    %v2254 = vadd.f32 %v2167, %v2253
    %v2255 = vpop.f32.mrb[0].mxu0
    %2256 = vdwg.mxu0
    %2257 = vmatprep.subr.mxu0 0.0
    %2258 = vmatpush1.msra.mxu0 %v2132
    %2259 = vmatprep.subr.mxu0 0.0
    %2260 = vmatpush1.msra.mxu0 %v2133
    %2261 = vmatprep.subr.mxu0 0.0
    %2262 = vmatpush1.msra.mxu0 %v2134
    %2263 = vmatprep.subr.mxu0 0.0
    %2264 = vmatpush1.msra.mxu0 %v2135
    %2265 = vmatprep.subr.mxu0 0.0
    %2266 = vmatpush1.msra.mxu0 %v2136
    %2267 = vmatprep.subr.mxu0 0.0
    %2268 = vmatpush1.msra.mxu0 %v2137
    %2269 = vmatprep.subr.mxu0 0.0
    %2270 = vmatpush1.msra.mxu0 %v2138
    %2271 = vmatprep.subr.mxu0 0.0
    %2272 = vmatpush1.msra.mxu0 %v2139
    %2273 = vmatprep.subr.mxu0 0.0
    %2274 = vmatpush1.msra.mxu0 0.0
    %2275 = vmatprep.subr.mxu0 0.0
    %2276 = vmatpush1.msra.mxu0 0.0
    %2277 = vmatprep.subr.mxu0 0.0
    %2278 = vmatpush1.msra.mxu0 0.0
    %2279 = vmatprep.subr.mxu0 0.0
    %2280 = vmatpush1.msra.mxu0 0.0
    %2281 = vmatprep.subr.mxu0 0.0
    %2282 = vmatpush1.msra.mxu0 0.0
    %2283 = vmatprep.subr.mxu0 0.0
    %2284 = vmatpush1.msra.mxu0 0.0
    %2285 = vmatprep.subr.mxu0 0.0
    %2286 = vmatpush1.msra.mxu0 0.0
    %2287 = vmatprep.subr.mxu0 0.0
    %2288 = vmatpush1.msra.mxu0 0.0
    %2289 = vmatprep.subr.mxu0 0.0
    %2290 = vmatpush1.msra.mxu0 0.0
    %2291 = vmatprep.subr.mxu0 0.0
    %2292 = vmatpush1.msra.mxu0 0.0
    %2293 = vmatprep.subr.mxu0 0.0
    %2294 = vmatpush1.msra.mxu0 0.0
    %2295 = vmatprep.subr.mxu0 0.0
    %2296 = vmatpush1.msra.mxu0 0.0
    %2297 = vmatprep.subr.mxu0 0.0
    %2298 = vmatpush1.msra.mxu0 0.0
    %2299 = vmatprep.subr.mxu0 0.0
    %2300 = vmatpush1.msra.mxu0 0.0
    %2301 = vmatprep.subr.mxu0 0.0
    %2302 = vmatpush1.msra.mxu0 0.0
    %2303 = vmatprep.subr.mxu0 0.0
    %2304 = vmatpush1.msra.mxu0 0.0
    %2305 = vmatprep.subr.mxu0 0.0
    %2306 = vmatpush1.msra.mxu0 0.0
    %2307 = vmatprep.subr.mxu0 0.0
    %2308 = vmatpush1.msra.mxu0 0.0
    %2309 = vmatprep.subr.mxu0 0.0
    %2310 = vmatpush1.msra.mxu0 0.0
    %2311 = vmatprep.subr.mxu0 0.0
    %2312 = vmatpush1.msra.mxu0 0.0
    %2313 = vmatprep.subr.mxu0 0.0
    %2314 = vmatpush1.msra.mxu0 0.0
    %2315 = vmatprep.subr.mxu0 0.0
    %2316 = vmatpush1.msra.mxu0 0.0
    %2317 = vmatprep.subr.mxu0 0.0
    %2318 = vmatpush1.msra.mxu0 0.0
    %2319 = vmatprep.subr.mxu0 0.0
    %2320 = vmatpush1.msra.mxu0 0.0
    %2321 = vmatprep.mubr.f32.mxu0 0.0
    %2322 = vmatmul.mubr.f32.gmra.mrb[0].mxu0 %v2185
    %v2323 = vpop.f32.mrb[0].mxu0
    %v2324 = vadd.f32 %v2171, %v2323
    %v2325 = vpop.f32.mrb[0].mxu0
    %2326 = vdwg.mxu0
    %2327 = vmatprep.subr.mxu0 0.0
    %2328 = vmatpush1.msra.mxu0 %v2140
    %2329 = vmatprep.subr.mxu0 0.0
    %2330 = vmatpush1.msra.mxu0 %v2141
    %2331 = vmatprep.subr.mxu0 0.0
    %2332 = vmatpush1.msra.mxu0 %v2142
    %2333 = vmatprep.subr.mxu0 0.0
    %2334 = vmatpush1.msra.mxu0 %v2143
    %2335 = vmatprep.subr.mxu0 0.0
    %2336 = vmatpush1.msra.mxu0 %v2144
    %2337 = vmatprep.subr.mxu0 0.0
    %2338 = vmatpush1.msra.mxu0 %v2145
    %2339 = vmatprep.subr.mxu0 0.0
    %2340 = vmatpush1.msra.mxu0 %v2146
    %2341 = vmatprep.subr.mxu0 0.0
    %2342 = vmatpush1.msra.mxu0 %v2147
    %2343 = vmatprep.subr.mxu0 0.0
    %2344 = vmatpush1.msra.mxu0 0.0
    %2345 = vmatprep.subr.mxu0 0.0
    %2346 = vmatpush1.msra.mxu0 0.0
    %2347 = vmatprep.subr.mxu0 0.0
    %2348 = vmatpush1.msra.mxu0 0.0
    %2349 = vmatprep.subr.mxu0 0.0
    %2350 = vmatpush1.msra.mxu0 0.0
    %2351 = vmatprep.subr.mxu0 0.0
    %2352 = vmatpush1.msra.mxu0 0.0
    %2353 = vmatprep.subr.mxu0 0.0
    %2354 = vmatpush1.msra.mxu0 0.0
    %2355 = vmatprep.subr.mxu0 0.0
    %2356 = vmatpush1.msra.mxu0 0.0
    %2357 = vmatprep.subr.mxu0 0.0
    %2358 = vmatpush1.msra.mxu0 0.0
    %2359 = vmatprep.subr.mxu0 0.0
    %2360 = vmatpush1.msra.mxu0 0.0
    %2361 = vmatprep.subr.mxu0 0.0
    %2362 = vmatpush1.msra.mxu0 0.0
    %2363 = vmatprep.subr.mxu0 0.0
    %2364 = vmatpush1.msra.mxu0 0.0
    %2365 = vmatprep.subr.mxu0 0.0
    %2366 = vmatpush1.msra.mxu0 0.0
    %2367 = vmatprep.subr.mxu0 0.0
    %2368 = vmatpush1.msra.mxu0 0.0
    %2369 = vmatprep.subr.mxu0 0.0
    %2370 = vmatpush1.msra.mxu0 0.0
    %2371 = vmatprep.subr.mxu0 0.0
    %2372 = vmatpush1.msra.mxu0 0.0
    %2373 = vmatprep.subr.mxu0 0.0
    %2374 = vmatpush1.msra.mxu0 0.0
    %2375 = vmatprep.subr.mxu0 0.0
    %2376 = vmatpush1.msra.mxu0 0.0
    %2377 = vmatprep.subr.mxu0 0.0
    %2378 = vmatpush1.msra.mxu0 0.0
    %2379 = vmatprep.subr.mxu0 0.0
    %2380 = vmatpush1.msra.mxu0 0.0
    %2381 = vmatprep.subr.mxu0 0.0
    %2382 = vmatpush1.msra.mxu0 0.0
    %2383 = vmatprep.subr.mxu0 0.0
    %2384 = vmatpush1.msra.mxu0 0.0
    %2385 = vmatprep.subr.mxu0 0.0
    %2386 = vmatpush1.msra.mxu0 0.0
    %2387 = vmatprep.subr.mxu0 0.0
    %2388 = vmatpush1.msra.mxu0 0.0
    %2389 = vmatprep.subr.mxu0 0.0
    %2390 = vmatpush1.msra.mxu0 0.0
    %2391 = vmatprep.mubr.f32.mxu0 0.0
    %2392 = vmatmul.mubr.f32.gmra.mrb[0].mxu0 %v2185
    %v2393 = vpop.f32.mrb[0].mxu0
    %v2394 = vadd.f32 %v2175, %v2393
    %v2395 = vpop.f32.mrb[0].mxu0
    %2396 = vdwg.mxu0
    %2397 = vmatprep.subr.mxu0 0.0
    %2398 = vmatpush1.msra.mxu0 %v2148
    %2399 = vmatprep.subr.mxu0 0.0
    %2400 = vmatpush1.msra.mxu0 %v2149
    %2401 = vmatprep.subr.mxu0 0.0
    %2402 = vmatpush1.msra.mxu0 %v2150
    %2403 = vmatprep.subr.mxu0 0.0
    %2404 = vmatpush1.msra.mxu0 %v2151
    %2405 = vmatprep.subr.mxu0 0.0
    %2406 = vmatpush1.msra.mxu0 %v2152
    %2407 = vmatprep.subr.mxu0 0.0
    %2408 = vmatpush1.msra.mxu0 %v2153
    %2409 = vmatprep.subr.mxu0 0.0
    %2410 = vmatpush1.msra.mxu0 %v2154
    %2411 = vmatprep.subr.mxu0 0.0
    %2412 = vmatpush1.msra.mxu0 %v2155
    %2413 = vmatprep.subr.mxu0 0.0
    %2414 = vmatpush1.msra.mxu0 0.0
    %2415 = vmatprep.subr.mxu0 0.0
    %2416 = vmatpush1.msra.mxu0 0.0
    %2417 = vmatprep.subr.mxu0 0.0
    %2418 = vmatpush1.msra.mxu0 0.0
    %2419 = vmatprep.subr.mxu0 0.0
    %2420 = vmatpush1.msra.mxu0 0.0
    %2421 = vmatprep.subr.mxu0 0.0
    %2422 = vmatpush1.msra.mxu0 0.0
    %2423 = vmatprep.subr.mxu0 0.0
    %2424 = vmatpush1.msra.mxu0 0.0
    %2425 = vmatprep.subr.mxu0 0.0
    %2426 = vmatpush1.msra.mxu0 0.0
    %2427 = vmatprep.subr.mxu0 0.0
    %2428 = vmatpush1.msra.mxu0 0.0
    %2429 = vmatprep.subr.mxu0 0.0
    %2430 = vmatpush1.msra.mxu0 0.0
    %2431 = vmatprep.subr.mxu0 0.0
    %2432 = vmatpush1.msra.mxu0 0.0
    %2433 = vmatprep.subr.mxu0 0.0
    %2434 = vmatpush1.msra.mxu0 0.0
    %2435 = vmatprep.subr.mxu0 0.0
    %2436 = vmatpush1.msra.mxu0 0.0
    %2437 = vmatprep.subr.mxu0 0.0
    %2438 = vmatpush1.msra.mxu0 0.0
    %2439 = vmatprep.subr.mxu0 0.0
    %2440 = vmatpush1.msra.mxu0 0.0
    %2441 = vmatprep.subr.mxu0 0.0
    %2442 = vmatpush1.msra.mxu0 0.0
    %2443 = vmatprep.subr.mxu0 0.0
    %2444 = vmatpush1.msra.mxu0 0.0
    %2445 = vmatprep.subr.mxu0 0.0
    %2446 = vmatpush1.msra.mxu0 0.0
    %2447 = vmatprep.subr.mxu0 0.0
    %2448 = vmatpush1.msra.mxu0 0.0
    %2449 = vmatprep.subr.mxu0 0.0
    %2450 = vmatpush1.msra.mxu0 0.0
    %2451 = vmatprep.subr.mxu0 0.0
    %2452 = vmatpush1.msra.mxu0 0.0
    %2453 = vmatprep.subr.mxu0 0.0
    %2454 = vmatpush1.msra.mxu0 0.0
    %2455 = vmatprep.subr.mxu0 0.0
    %2456 = vmatpush1.msra.mxu0 0.0
    %2457 = vmatprep.subr.mxu0 0.0
    %2458 = vmatpush1.msra.mxu0 0.0
    %2459 = vmatprep.subr.mxu0 0.0
    %2460 = vmatpush1.msra.mxu0 0.0
    %2461 = vmatprep.mubr.f32.mxu0 0.0
    %2462 = vmatmul.mubr.f32.gmra.mrb[0].mxu0 %v2185
    %v2463 = vpop.f32.mrb[0].mxu0
    %v2464 = vadd.f32 %v2179, %v2463
    %v2465 = vpop.f32.mrb[0].mxu0
    %2466 = vdwg.mxu0
    %s2467 = scalar_lea.vmem %s4, 256
    %v2468 = vld [vmem:[%s2467] sm:$0xff]
    %v2469 = vld [vmem:[%s2467 + $0x8] sm:$0xff]
    %v2470 = vld [vmem:[%s2467 + $0x10] sm:$0xff]
    %v2471 = vld [vmem:[%s2467 + $0x18] sm:$0xff]
    %v2472 = vld [vmem:[%s2467 + $0x20] sm:$0xff]
    %v2473 = vld [vmem:[%s2467 + $0x28] sm:$0xff]
    %v2474 = vld [vmem:[%s2467 + $0x30] sm:$0xff]
    %v2475 = vld [vmem:[%s2467 + $0x38] sm:$0xff]
    %v2476 = vld [vmem:[%s2467 + $0x40] sm:$0xff]
    %v2477 = vld [vmem:[%s2467 + $0x48] sm:$0xff]
    %v2478 = vld [vmem:[%s2467 + $0x50] sm:$0xff]
    %v2479 = vld [vmem:[%s2467 + $0x58] sm:$0xff]
    %v2480 = vld [vmem:[%s2467 + $0x60] sm:$0xff]
    %v2481 = vld [vmem:[%s2467 + $0x68] sm:$0xff]
    %v2482 = vld [vmem:[%s2467 + $0x70] sm:$0xff]
    %v2483 = vld [vmem:[%s2467 + $0x78] sm:$0xff]
    %v2484 = vld [vmem:[%s2467 + $0x80] sm:$0xff]
    %v2485 = vld [vmem:[%s2467 + $0x88] sm:$0xff]
    %v2486 = vld [vmem:[%s2467 + $0x90] sm:$0xff]
    %v2487 = vld [vmem:[%s2467 + $0x98] sm:$0xff]
    %v2488 = vld [vmem:[%s2467 + $0xa0] sm:$0xff]
    %v2489 = vld [vmem:[%s2467 + $0xa8] sm:$0xff]
    %v2490 = vld [vmem:[%s2467 + $0xb0] sm:$0xff]
    %v2491 = vld [vmem:[%s2467 + $0xb8] sm:$0xff]
    %v2492 = vld [vmem:[%s2467 + $0xc0] sm:$0xff]
    %v2493 = vld [vmem:[%s2467 + $0xc8] sm:$0xff]
    %v2494 = vld [vmem:[%s2467 + $0xd0] sm:$0xff]
    %v2495 = vld [vmem:[%s2467 + $0xd8] sm:$0xff]
    %v2496 = vld [vmem:[%s2467 + $0xe0] sm:$0xff]
    %v2497 = vld [vmem:[%s2467 + $0xe8] sm:$0xff]
    %v2498 = vld [vmem:[%s2467 + $0xf0] sm:$0xff]
    %v2499 = vld [vmem:[%s2467 + $0xf8] sm:$0xff]
    %s2500 = scalar_lea.vmem %s5, 4
    %v2501 = vld [vmem:[%s2500] sm:$0x1]
    %v2502 = vld [vmem:[%s2500 + $0x1] sm:$0x1]
    %v2503 = vld [vmem:[%s2500 + $0x2] sm:$0x1]
    %v2504 = vld [vmem:[%s2500 + $0x3] sm:$0x1]
    %v2509 = vlaneseq
    %v2510 = vshrl.u32 %v2509, 7
    %v2511 = vsub.s32 0, %v2510
    %v2512 = vrot.slane %v2501, %v2511
    %v2513 = vlaneseq
    %v2514 = vshrl.u32 %v2513, 7
    %v2515 = vsub.s32 0, %v2514
    %v2516 = vrot.slane %v2502, %v2515
    %v2517 = vlaneseq
    %v2518 = vshrl.u32 %v2517, 7
    %v2519 = vsub.s32 0, %v2518
    %v2520 = vrot.slane %v2503, %v2519
    %v2521 = vlaneseq
    %v2522 = vshrl.u32 %v2521, 7
    %v2523 = vsub.s32 0, %v2522
    %v2524 = vrot.slane %v2504, %v2523
    %2529 = vmatprep.subr.mxu0 0.0
    %2530 = vmatpush1.msra.mxu0 %v2468
    %2531 = vmatprep.subr.mxu0 0.0
    %2532 = vmatpush1.msra.mxu0 %v2469
    %2533 = vmatprep.subr.mxu0 0.0
    %2534 = vmatpush1.msra.mxu0 %v2470
    %2535 = vmatprep.subr.mxu0 0.0
    %2536 = vmatpush1.msra.mxu0 %v2471
    %2537 = vmatprep.subr.mxu0 0.0
    %2538 = vmatpush1.msra.mxu0 %v2472
    %2539 = vmatprep.subr.mxu0 0.0
    %2540 = vmatpush1.msra.mxu0 %v2473
    %2541 = vmatprep.subr.mxu0 0.0
    %2542 = vmatpush1.msra.mxu0 %v2474
    %2543 = vmatprep.subr.mxu0 0.0
    %2544 = vmatpush1.msra.mxu0 %v2475
    %2545 = vmatprep.subr.mxu0 0.0
    %2546 = vmatpush1.msra.mxu0 0.0
    %2547 = vmatprep.subr.mxu0 0.0
    %2548 = vmatpush1.msra.mxu0 0.0
    %2549 = vmatprep.subr.mxu0 0.0
    %2550 = vmatpush1.msra.mxu0 0.0
    %2551 = vmatprep.subr.mxu0 0.0
    %2552 = vmatpush1.msra.mxu0 0.0
    %2553 = vmatprep.subr.mxu0 0.0
    %2554 = vmatpush1.msra.mxu0 0.0
    %2555 = vmatprep.subr.mxu0 0.0
    %2556 = vmatpush1.msra.mxu0 0.0
    %2557 = vmatprep.subr.mxu0 0.0
    %2558 = vmatpush1.msra.mxu0 0.0
    %2559 = vmatprep.subr.mxu0 0.0
    %2560 = vmatpush1.msra.mxu0 0.0
    %2561 = vmatprep.subr.mxu0 0.0
    %2562 = vmatpush1.msra.mxu0 0.0
    %2563 = vmatprep.subr.mxu0 0.0
    %2564 = vmatpush1.msra.mxu0 0.0
    %2565 = vmatprep.subr.mxu0 0.0
    %2566 = vmatpush1.msra.mxu0 0.0
    %2567 = vmatprep.subr.mxu0 0.0
    %2568 = vmatpush1.msra.mxu0 0.0
    %2569 = vmatprep.subr.mxu0 0.0
    %2570 = vmatpush1.msra.mxu0 0.0
    %2571 = vmatprep.subr.mxu0 0.0
    %2572 = vmatpush1.msra.mxu0 0.0
    %2573 = vmatprep.subr.mxu0 0.0
    %2574 = vmatpush1.msra.mxu0 0.0
    %2575 = vmatprep.subr.mxu0 0.0
    %2576 = vmatpush1.msra.mxu0 0.0
    %2577 = vmatprep.subr.mxu0 0.0
    %2578 = vmatpush1.msra.mxu0 0.0
    %2579 = vmatprep.subr.mxu0 0.0
    %2580 = vmatpush1.msra.mxu0 0.0
    %2581 = vmatprep.subr.mxu0 0.0
    %2582 = vmatpush1.msra.mxu0 0.0
    %2583 = vmatprep.subr.mxu0 0.0
    %2584 = vmatpush1.msra.mxu0 0.0
    %2585 = vmatprep.subr.mxu0 0.0
    %2586 = vmatpush1.msra.mxu0 0.0
    %2587 = vmatprep.subr.mxu0 0.0
    %2588 = vmatpush1.msra.mxu0 0.0
    %2589 = vmatprep.subr.mxu0 0.0
    %2590 = vmatpush1.msra.mxu0 0.0
    %2591 = vmatprep.subr.mxu0 0.0
    %2592 = vmatpush1.msra.mxu0 0.0
    %2593 = vmatprep.mubr.f32.mxu0 0.0
    %2594 = vmatmul.mubr.f32.gmra.mrb[0].mxu0 %v2185
    %v2595 = vpop.f32.mrb[0].mxu0
    %v2596 = vadd.f32 %v2512, %v2595
    %v2597 = vpop.f32.mrb[0].mxu0
    %2598 = vdwg.mxu0
    %2599 = vmatprep.subr.mxu0 0.0
    %2600 = vmatpush1.msra.mxu0 %v2476
    %2601 = vmatprep.subr.mxu0 0.0
    %2602 = vmatpush1.msra.mxu0 %v2477
    %2603 = vmatprep.subr.mxu0 0.0
    %2604 = vmatpush1.msra.mxu0 %v2478
    %2605 = vmatprep.subr.mxu0 0.0
    %2606 = vmatpush1.msra.mxu0 %v2479
    %2607 = vmatprep.subr.mxu0 0.0
    %2608 = vmatpush1.msra.mxu0 %v2480
    %2609 = vmatprep.subr.mxu0 0.0
    %2610 = vmatpush1.msra.mxu0 %v2481
    %2611 = vmatprep.subr.mxu0 0.0
    %2612 = vmatpush1.msra.mxu0 %v2482
    %2613 = vmatprep.subr.mxu0 0.0
    %2614 = vmatpush1.msra.mxu0 %v2483
    %2615 = vmatprep.subr.mxu0 0.0
    %2616 = vmatpush1.msra.mxu0 0.0
    %2617 = vmatprep.subr.mxu0 0.0
    %2618 = vmatpush1.msra.mxu0 0.0
    %2619 = vmatprep.subr.mxu0 0.0
    %2620 = vmatpush1.msra.mxu0 0.0
    %2621 = vmatprep.subr.mxu0 0.0
    %2622 = vmatpush1.msra.mxu0 0.0
    %2623 = vmatprep.subr.mxu0 0.0
    %2624 = vmatpush1.msra.mxu0 0.0
    %2625 = vmatprep.subr.mxu0 0.0
    %2626 = vmatpush1.msra.mxu0 0.0
    %2627 = vmatprep.subr.mxu0 0.0
    %2628 = vmatpush1.msra.mxu0 0.0
    %2629 = vmatprep.subr.mxu0 0.0
    %2630 = vmatpush1.msra.mxu0 0.0
    %2631 = vmatprep.subr.mxu0 0.0
    %2632 = vmatpush1.msra.mxu0 0.0
    %2633 = vmatprep.subr.mxu0 0.0
    %2634 = vmatpush1.msra.mxu0 0.0
    %2635 = vmatprep.subr.mxu0 0.0
    %2636 = vmatpush1.msra.mxu0 0.0
    %2637 = vmatprep.subr.mxu0 0.0
    %2638 = vmatpush1.msra.mxu0 0.0
    %2639 = vmatprep.subr.mxu0 0.0
    %2640 = vmatpush1.msra.mxu0 0.0
    %2641 = vmatprep.subr.mxu0 0.0
    %2642 = vmatpush1.msra.mxu0 0.0
    %2643 = vmatprep.subr.mxu0 0.0
    %2644 = vmatpush1.msra.mxu0 0.0
    %2645 = vmatprep.subr.mxu0 0.0
    %2646 = vmatpush1.msra.mxu0 0.0
    %2647 = vmatprep.subr.mxu0 0.0
    %2648 = vmatpush1.msra.mxu0 0.0
    %2649 = vmatprep.subr.mxu0 0.0
    %2650 = vmatpush1.msra.mxu0 0.0
    %2651 = vmatprep.subr.mxu0 0.0
    %2652 = vmatpush1.msra.mxu0 0.0
    %2653 = vmatprep.subr.mxu0 0.0
    %2654 = vmatpush1.msra.mxu0 0.0
    %2655 = vmatprep.subr.mxu0 0.0
    %2656 = vmatpush1.msra.mxu0 0.0
    %2657 = vmatprep.subr.mxu0 0.0
    %2658 = vmatpush1.msra.mxu0 0.0
    %2659 = vmatprep.subr.mxu0 0.0
    %2660 = vmatpush1.msra.mxu0 0.0
    %2661 = vmatprep.subr.mxu0 0.0
    %2662 = vmatpush1.msra.mxu0 0.0
    %2663 = vmatprep.mubr.f32.mxu0 0.0
    %2664 = vmatmul.mubr.f32.gmra.mrb[0].mxu0 %v2185
    %v2665 = vpop.f32.mrb[0].mxu0
    %v2666 = vadd.f32 %v2516, %v2665
    %v2667 = vpop.f32.mrb[0].mxu0
    %2668 = vdwg.mxu0
    %2669 = vmatprep.subr.mxu0 0.0
    %2670 = vmatpush1.msra.mxu0 %v2484
    %2671 = vmatprep.subr.mxu0 0.0
    %2672 = vmatpush1.msra.mxu0 %v2485
    %2673 = vmatprep.subr.mxu0 0.0
    %2674 = vmatpush1.msra.mxu0 %v2486
    %2675 = vmatprep.subr.mxu0 0.0
    %2676 = vmatpush1.msra.mxu0 %v2487
    %2677 = vmatprep.subr.mxu0 0.0
    %2678 = vmatpush1.msra.mxu0 %v2488
    %2679 = vmatprep.subr.mxu0 0.0
    %2680 = vmatpush1.msra.mxu0 %v2489
    %2681 = vmatprep.subr.mxu0 0.0
    %2682 = vmatpush1.msra.mxu0 %v2490
    %2683 = vmatprep.subr.mxu0 0.0
    %2684 = vmatpush1.msra.mxu0 %v2491
    %2685 = vmatprep.subr.mxu0 0.0
    %2686 = vmatpush1.msra.mxu0 0.0
    %2687 = vmatprep.subr.mxu0 0.0
    %2688 = vmatpush1.msra.mxu0 0.0
    %2689 = vmatprep.subr.mxu0 0.0
    %2690 = vmatpush1.msra.mxu0 0.0
    %2691 = vmatprep.subr.mxu0 0.0
    %2692 = vmatpush1.msra.mxu0 0.0
    %2693 = vmatprep.subr.mxu0 0.0
    %2694 = vmatpush1.msra.mxu0 0.0
    %2695 = vmatprep.subr.mxu0 0.0
    %2696 = vmatpush1.msra.mxu0 0.0
    %2697 = vmatprep.subr.mxu0 0.0
    %2698 = vmatpush1.msra.mxu0 0.0
    %2699 = vmatprep.subr.mxu0 0.0
    %2700 = vmatpush1.msra.mxu0 0.0
    %2701 = vmatprep.subr.mxu0 0.0
    %2702 = vmatpush1.msra.mxu0 0.0
    %2703 = vmatprep.subr.mxu0 0.0
    %2704 = vmatpush1.msra.mxu0 0.0
    %2705 = vmatprep.subr.mxu0 0.0
    %2706 = vmatpush1.msra.mxu0 0.0
    %2707 = vmatprep.subr.mxu0 0.0
    %2708 = vmatpush1.msra.mxu0 0.0
    %2709 = vmatprep.subr.mxu0 0.0
    %2710 = vmatpush1.msra.mxu0 0.0
    %2711 = vmatprep.subr.mxu0 0.0
    %2712 = vmatpush1.msra.mxu0 0.0
    %2713 = vmatprep.subr.mxu0 0.0
    %2714 = vmatpush1.msra.mxu0 0.0
    %2715 = vmatprep.subr.mxu0 0.0
    %2716 = vmatpush1.msra.mxu0 0.0
    %2717 = vmatprep.subr.mxu0 0.0
    %2718 = vmatpush1.msra.mxu0 0.0
    %2719 = vmatprep.subr.mxu0 0.0
    %2720 = vmatpush1.msra.mxu0 0.0
    %2721 = vmatprep.subr.mxu0 0.0
    %2722 = vmatpush1.msra.mxu0 0.0
    %2723 = vmatprep.subr.mxu0 0.0
    %2724 = vmatpush1.msra.mxu0 0.0
    %2725 = vmatprep.subr.mxu0 0.0
    %2726 = vmatpush1.msra.mxu0 0.0
    %2727 = vmatprep.subr.mxu0 0.0
    %2728 = vmatpush1.msra.mxu0 0.0
    %2729 = vmatprep.subr.mxu0 0.0
    %2730 = vmatpush1.msra.mxu0 0.0
    %2731 = vmatprep.subr.mxu0 0.0
    %2732 = vmatpush1.msra.mxu0 0.0
    %2733 = vmatprep.mubr.f32.mxu0 0.0
    %2734 = vmatmul.mubr.f32.gmra.mrb[0].mxu0 %v2185
    %v2735 = vpop.f32.mrb[0].mxu0
    %v2736 = vadd.f32 %v2520, %v2735
    %v2737 = vpop.f32.mrb[0].mxu0
    %2738 = vdwg.mxu0
    %2739 = vmatprep.subr.mxu0 0.0
    %2740 = vmatpush1.msra.mxu0 %v2492
    %2741 = vmatprep.subr.mxu0 0.0
    %2742 = vmatpush1.msra.mxu0 %v2493
    %2743 = vmatprep.subr.mxu0 0.0
    %2744 = vmatpush1.msra.mxu0 %v2494
    %2745 = vmatprep.subr.mxu0 0.0
    %2746 = vmatpush1.msra.mxu0 %v2495
    %2747 = vmatprep.subr.mxu0 0.0
    %2748 = vmatpush1.msra.mxu0 %v2496
    %2749 = vmatprep.subr.mxu0 0.0
    %2750 = vmatpush1.msra.mxu0 %v2497
    %2751 = vmatprep.subr.mxu0 0.0
    %2752 = vmatpush1.msra.mxu0 %v2498
    %2753 = vmatprep.subr.mxu0 0.0
    %2754 = vmatpush1.msra.mxu0 %v2499
    %2755 = vmatprep.subr.mxu0 0.0
    %2756 = vmatpush1.msra.mxu0 0.0
    %2757 = vmatprep.subr.mxu0 0.0
    %2758 = vmatpush1.msra.mxu0 0.0
    %2759 = vmatprep.subr.mxu0 0.0
    %2760 = vmatpush1.msra.mxu0 0.0
    %2761 = vmatprep.subr.mxu0 0.0
    %2762 = vmatpush1.msra.mxu0 0.0
    %2763 = vmatprep.subr.mxu0 0.0
    %2764 = vmatpush1.msra.mxu0 0.0
    %2765 = vmatprep.subr.mxu0 0.0
    %2766 = vmatpush1.msra.mxu0 0.0
    %2767 = vmatprep.subr.mxu0 0.0
    %2768 = vmatpush1.msra.mxu0 0.0
    %2769 = vmatprep.subr.mxu0 0.0
    %2770 = vmatpush1.msra.mxu0 0.0
    %2771 = vmatprep.subr.mxu0 0.0
    %2772 = vmatpush1.msra.mxu0 0.0
    %2773 = vmatprep.subr.mxu0 0.0
    %2774 = vmatpush1.msra.mxu0 0.0
    %2775 = vmatprep.subr.mxu0 0.0
    %2776 = vmatpush1.msra.mxu0 0.0
    %2777 = vmatprep.subr.mxu0 0.0
    %2778 = vmatpush1.msra.mxu0 0.0
    %2779 = vmatprep.subr.mxu0 0.0
    %2780 = vmatpush1.msra.mxu0 0.0
    %2781 = vmatprep.subr.mxu0 0.0
    %2782 = vmatpush1.msra.mxu0 0.0
    %2783 = vmatprep.subr.mxu0 0.0
    %2784 = vmatpush1.msra.mxu0 0.0
    %2785 = vmatprep.subr.mxu0 0.0
    %2786 = vmatpush1.msra.mxu0 0.0
    %2787 = vmatprep.subr.mxu0 0.0
    %2788 = vmatpush1.msra.mxu0 0.0
    %2789 = vmatprep.subr.mxu0 0.0
    %2790 = vmatpush1.msra.mxu0 0.0
    %2791 = vmatprep.subr.mxu0 0.0
    %2792 = vmatpush1.msra.mxu0 0.0
    %2793 = vmatprep.subr.mxu0 0.0
    %2794 = vmatpush1.msra.mxu0 0.0
    %2795 = vmatprep.subr.mxu0 0.0
    %2796 = vmatpush1.msra.mxu0 0.0
    %2797 = vmatprep.subr.mxu0 0.0
    %2798 = vmatpush1.msra.mxu0 0.0
    %2799 = vmatprep.subr.mxu0 0.0
    %2800 = vmatpush1.msra.mxu0 0.0
    %2801 = vmatprep.subr.mxu0 0.0
    %2802 = vmatpush1.msra.mxu0 0.0
    %2803 = vmatprep.mubr.f32.mxu0 0.0
    %2804 = vmatmul.mubr.f32.gmra.mrb[0].mxu0 %v2185
    %v2805 = vpop.f32.mrb[0].mxu0
    %v2806 = vadd.f32 %v2524, %v2805
    %v2807 = vpop.f32.mrb[0].mxu0
    %2808 = vdwg.mxu0
    %s2809 = scalar_lea.vmem %s4, 512
    %v2810 = vld [vmem:[%s2809] sm:$0xff]
    %v2811 = vld [vmem:[%s2809 + $0x8] sm:$0xff]
    %v2812 = vld [vmem:[%s2809 + $0x10] sm:$0xff]
    %v2813 = vld [vmem:[%s2809 + $0x18] sm:$0xff]
    %v2814 = vld [vmem:[%s2809 + $0x20] sm:$0xff]
    %v2815 = vld [vmem:[%s2809 + $0x28] sm:$0xff]
    %v2816 = vld [vmem:[%s2809 + $0x30] sm:$0xff]
    %v2817 = vld [vmem:[%s2809 + $0x38] sm:$0xff]
    %v2818 = vld [vmem:[%s2809 + $0x40] sm:$0xff]
    %v2819 = vld [vmem:[%s2809 + $0x48] sm:$0xff]
    %v2820 = vld [vmem:[%s2809 + $0x50] sm:$0xff]
    %v2821 = vld [vmem:[%s2809 + $0x58] sm:$0xff]
    %v2822 = vld [vmem:[%s2809 + $0x60] sm:$0xff]
    %v2823 = vld [vmem:[%s2809 + $0x68] sm:$0xff]
    %v2824 = vld [vmem:[%s2809 + $0x70] sm:$0xff]
    %v2825 = vld [vmem:[%s2809 + $0x78] sm:$0xff]
    %v2826 = vld [vmem:[%s2809 + $0x80] sm:$0xff]
    %v2827 = vld [vmem:[%s2809 + $0x88] sm:$0xff]
    %v2828 = vld [vmem:[%s2809 + $0x90] sm:$0xff]
    %v2829 = vld [vmem:[%s2809 + $0x98] sm:$0xff]
    %v2830 = vld [vmem:[%s2809 + $0xa0] sm:$0xff]
    %v2831 = vld [vmem:[%s2809 + $0xa8] sm:$0xff]
    %v2832 = vld [vmem:[%s2809 + $0xb0] sm:$0xff]
    %v2833 = vld [vmem:[%s2809 + $0xb8] sm:$0xff]
    %v2834 = vld [vmem:[%s2809 + $0xc0] sm:$0xff]
    %v2835 = vld [vmem:[%s2809 + $0xc8] sm:$0xff]
    %v2836 = vld [vmem:[%s2809 + $0xd0] sm:$0xff]
    %v2837 = vld [vmem:[%s2809 + $0xd8] sm:$0xff]
    %v2838 = vld [vmem:[%s2809 + $0xe0] sm:$0xff]
    %v2839 = vld [vmem:[%s2809 + $0xe8] sm:$0xff]
    %v2840 = vld [vmem:[%s2809 + $0xf0] sm:$0xff]
    %v2841 = vld [vmem:[%s2809 + $0xf8] sm:$0xff]
    %s2842 = scalar_lea.vmem %s5, 8
    %v2843 = vld [vmem:[%s2842] sm:$0x1]
    %v2844 = vld [vmem:[%s2842 + $0x1] sm:$0x1]
    %v2845 = vld [vmem:[%s2842 + $0x2] sm:$0x1]
    %v2846 = vld [vmem:[%s2842 + $0x3] sm:$0x1]
    %v2851 = vlaneseq
    %v2852 = vshrl.u32 %v2851, 7
    %v2853 = vsub.s32 0, %v2852
    %v2854 = vrot.slane %v2843, %v2853
    %v2855 = vlaneseq
    %v2856 = vshrl.u32 %v2855, 7
    %v2857 = vsub.s32 0, %v2856
    %v2858 = vrot.slane %v2844, %v2857
    %v2859 = vlaneseq
    %v2860 = vshrl.u32 %v2859, 7
    %v2861 = vsub.s32 0, %v2860
    %v2862 = vrot.slane %v2845, %v2861
    %v2863 = vlaneseq
    %v2864 = vshrl.u32 %v2863, 7
    %v2865 = vsub.s32 0, %v2864
    %v2866 = vrot.slane %v2846, %v2865
    %2871 = vmatprep.subr.mxu0 0.0
    %2872 = vmatpush1.msra.mxu0 %v2810
    %2873 = vmatprep.subr.mxu0 0.0
    %2874 = vmatpush1.msra.mxu0 %v2811
    %2875 = vmatprep.subr.mxu0 0.0
    %2876 = vmatpush1.msra.mxu0 %v2812
    %2877 = vmatprep.subr.mxu0 0.0
    %2878 = vmatpush1.msra.mxu0 %v2813
    %2879 = vmatprep.subr.mxu0 0.0
    %2880 = vmatpush1.msra.mxu0 %v2814
    %2881 = vmatprep.subr.mxu0 0.0
    %2882 = vmatpush1.msra.mxu0 %v2815
    %2883 = vmatprep.subr.mxu0 0.0
    %2884 = vmatpush1.msra.mxu0 %v2816
    %2885 = vmatprep.subr.mxu0 0.0
    %2886 = vmatpush1.msra.mxu0 %v2817
    %2887 = vmatprep.subr.mxu0 0.0
    %2888 = vmatpush1.msra.mxu0 0.0
    %2889 = vmatprep.subr.mxu0 0.0
    %2890 = vmatpush1.msra.mxu0 0.0
    %2891 = vmatprep.subr.mxu0 0.0
    %2892 = vmatpush1.msra.mxu0 0.0
    %2893 = vmatprep.subr.mxu0 0.0
    %2894 = vmatpush1.msra.mxu0 0.0
    %2895 = vmatprep.subr.mxu0 0.0
    %2896 = vmatpush1.msra.mxu0 0.0
    %2897 = vmatprep.subr.mxu0 0.0
    %2898 = vmatpush1.msra.mxu0 0.0
    %2899 = vmatprep.subr.mxu0 0.0
    %2900 = vmatpush1.msra.mxu0 0.0
    %2901 = vmatprep.subr.mxu0 0.0
    %2902 = vmatpush1.msra.mxu0 0.0
    %2903 = vmatprep.subr.mxu0 0.0
    %2904 = vmatpush1.msra.mxu0 0.0
    %2905 = vmatprep.subr.mxu0 0.0
    %2906 = vmatpush1.msra.mxu0 0.0
    %2907 = vmatprep.subr.mxu0 0.0
    %2908 = vmatpush1.msra.mxu0 0.0
    %2909 = vmatprep.subr.mxu0 0.0
    %2910 = vmatpush1.msra.mxu0 0.0
    %2911 = vmatprep.subr.mxu0 0.0
    %2912 = vmatpush1.msra.mxu0 0.0
    %2913 = vmatprep.subr.mxu0 0.0
    %2914 = vmatpush1.msra.mxu0 0.0
    %2915 = vmatprep.subr.mxu0 0.0
    %2916 = vmatpush1.msra.mxu0 0.0
    %2917 = vmatprep.subr.mxu0 0.0
    %2918 = vmatpush1.msra.mxu0 0.0
    %2919 = vmatprep.subr.mxu0 0.0
    %2920 = vmatpush1.msra.mxu0 0.0
    %2921 = vmatprep.subr.mxu0 0.0
    %2922 = vmatpush1.msra.mxu0 0.0
    %2923 = vmatprep.subr.mxu0 0.0
    %2924 = vmatpush1.msra.mxu0 0.0
    %2925 = vmatprep.subr.mxu0 0.0
    %2926 = vmatpush1.msra.mxu0 0.0
    %2927 = vmatprep.subr.mxu0 0.0
    %2928 = vmatpush1.msra.mxu0 0.0
    %2929 = vmatprep.subr.mxu0 0.0
    %2930 = vmatpush1.msra.mxu0 0.0
    %2931 = vmatprep.subr.mxu0 0.0
    %2932 = vmatpush1.msra.mxu0 0.0
    %2933 = vmatprep.subr.mxu0 0.0
    %2934 = vmatpush1.msra.mxu0 0.0
    %2935 = vmatprep.mubr.f32.mxu0 0.0
    %2936 = vmatmul.mubr.f32.gmra.mrb[0].mxu0 %v2185
    %v2937 = vpop.f32.mrb[0].mxu0
    %v2938 = vadd.f32 %v2854, %v2937
    %v2939 = vpop.f32.mrb[0].mxu0
    %2940 = vdwg.mxu0
    %2941 = vmatprep.subr.mxu0 0.0
    %2942 = vmatpush1.msra.mxu0 %v2818
    %2943 = vmatprep.subr.mxu0 0.0
    %2944 = vmatpush1.msra.mxu0 %v2819
    %2945 = vmatprep.subr.mxu0 0.0
    %2946 = vmatpush1.msra.mxu0 %v2820
    %2947 = vmatprep.subr.mxu0 0.0
    %2948 = vmatpush1.msra.mxu0 %v2821
    %2949 = vmatprep.subr.mxu0 0.0
    %2950 = vmatpush1.msra.mxu0 %v2822
    %2951 = vmatprep.subr.mxu0 0.0
    %2952 = vmatpush1.msra.mxu0 %v2823
    %2953 = vmatprep.subr.mxu0 0.0
    %2954 = vmatpush1.msra.mxu0 %v2824
    %2955 = vmatprep.subr.mxu0 0.0
    %2956 = vmatpush1.msra.mxu0 %v2825
    %2957 = vmatprep.subr.mxu0 0.0
    %2958 = vmatpush1.msra.mxu0 0.0
    %2959 = vmatprep.subr.mxu0 0.0
    %2960 = vmatpush1.msra.mxu0 0.0
    %2961 = vmatprep.subr.mxu0 0.0
    %2962 = vmatpush1.msra.mxu0 0.0
    %2963 = vmatprep.subr.mxu0 0.0
    %2964 = vmatpush1.msra.mxu0 0.0
    %2965 = vmatprep.subr.mxu0 0.0
    %2966 = vmatpush1.msra.mxu0 0.0
    %2967 = vmatprep.subr.mxu0 0.0
    %2968 = vmatpush1.msra.mxu0 0.0
    %2969 = vmatprep.subr.mxu0 0.0
    %2970 = vmatpush1.msra.mxu0 0.0
    %2971 = vmatprep.subr.mxu0 0.0
    %2972 = vmatpush1.msra.mxu0 0.0
    %2973 = vmatprep.subr.mxu0 0.0
    %2974 = vmatpush1.msra.mxu0 0.0
    %2975 = vmatprep.subr.mxu0 0.0
    %2976 = vmatpush1.msra.mxu0 0.0
    %2977 = vmatprep.subr.mxu0 0.0
    %2978 = vmatpush1.msra.mxu0 0.0
    %2979 = vmatprep.subr.mxu0 0.0
    %2980 = vmatpush1.msra.mxu0 0.0
    %2981 = vmatprep.subr.mxu0 0.0
    %2982 = vmatpush1.msra.mxu0 0.0
    %2983 = vmatprep.subr.mxu0 0.0
    %2984 = vmatpush1.msra.mxu0 0.0
    %2985 = vmatprep.subr.mxu0 0.0
    %2986 = vmatpush1.msra.mxu0 0.0
    %2987 = vmatprep.subr.mxu0 0.0
    %2988 = vmatpush1.msra.mxu0 0.0
    %2989 = vmatprep.subr.mxu0 0.0
    %2990 = vmatpush1.msra.mxu0 0.0
    %2991 = vmatprep.subr.mxu0 0.0
    %2992 = vmatpush1.msra.mxu0 0.0
    %2993 = vmatprep.subr.mxu0 0.0
    %2994 = vmatpush1.msra.mxu0 0.0
    %2995 = vmatprep.subr.mxu0 0.0
    %2996 = vmatpush1.msra.mxu0 0.0
    %2997 = vmatprep.subr.mxu0 0.0
    %2998 = vmatpush1.msra.mxu0 0.0
    %2999 = vmatprep.subr.mxu0 0.0
    %3000 = vmatpush1.msra.mxu0 0.0
    %3001 = vmatprep.subr.mxu0 0.0
    %3002 = vmatpush1.msra.mxu0 0.0
    %3003 = vmatprep.subr.mxu0 0.0
    %3004 = vmatpush1.msra.mxu0 0.0
    %3005 = vmatprep.mubr.f32.mxu0 0.0
    %3006 = vmatmul.mubr.f32.gmra.mrb[0].mxu0 %v2185
    %v3007 = vpop.f32.mrb[0].mxu0
    %v3008 = vadd.f32 %v2858, %v3007
    %v3009 = vpop.f32.mrb[0].mxu0
    %3010 = vdwg.mxu0
    %3011 = vmatprep.subr.mxu0 0.0
    %3012 = vmatpush1.msra.mxu0 %v2826
    %3013 = vmatprep.subr.mxu0 0.0
    %3014 = vmatpush1.msra.mxu0 %v2827
    %3015 = vmatprep.subr.mxu0 0.0
    %3016 = vmatpush1.msra.mxu0 %v2828
    %3017 = vmatprep.subr.mxu0 0.0
    %3018 = vmatpush1.msra.mxu0 %v2829
    %3019 = vmatprep.subr.mxu0 0.0
    %3020 = vmatpush1.msra.mxu0 %v2830
    %3021 = vmatprep.subr.mxu0 0.0
    %3022 = vmatpush1.msra.mxu0 %v2831
    %3023 = vmatprep.subr.mxu0 0.0
    %3024 = vmatpush1.msra.mxu0 %v2832
    %3025 = vmatprep.subr.mxu0 0.0
    %3026 = vmatpush1.msra.mxu0 %v2833
    %3027 = vmatprep.subr.mxu0 0.0
    %3028 = vmatpush1.msra.mxu0 0.0
    %3029 = vmatprep.subr.mxu0 0.0
    %3030 = vmatpush1.msra.mxu0 0.0
    %3031 = vmatprep.subr.mxu0 0.0
    %3032 = vmatpush1.msra.mxu0 0.0
    %3033 = vmatprep.subr.mxu0 0.0
    %3034 = vmatpush1.msra.mxu0 0.0
    %3035 = vmatprep.subr.mxu0 0.0
    %3036 = vmatpush1.msra.mxu0 0.0
    %3037 = vmatprep.subr.mxu0 0.0
    %3038 = vmatpush1.msra.mxu0 0.0
    %3039 = vmatprep.subr.mxu0 0.0
    %3040 = vmatpush1.msra.mxu0 0.0
    %3041 = vmatprep.subr.mxu0 0.0
    %3042 = vmatpush1.msra.mxu0 0.0
    %3043 = vmatprep.subr.mxu0 0.0
    %3044 = vmatpush1.msra.mxu0 0.0
    %3045 = vmatprep.subr.mxu0 0.0
    %3046 = vmatpush1.msra.mxu0 0.0
    %3047 = vmatprep.subr.mxu0 0.0
    %3048 = vmatpush1.msra.mxu0 0.0
    %3049 = vmatprep.subr.mxu0 0.0
    %3050 = vmatpush1.msra.mxu0 0.0
    %3051 = vmatprep.subr.mxu0 0.0
    %3052 = vmatpush1.msra.mxu0 0.0
    %3053 = vmatprep.subr.mxu0 0.0
    %3054 = vmatpush1.msra.mxu0 0.0
    %3055 = vmatprep.subr.mxu0 0.0
    %3056 = vmatpush1.msra.mxu0 0.0
    %3057 = vmatprep.subr.mxu0 0.0
    %3058 = vmatpush1.msra.mxu0 0.0
    %3059 = vmatprep.subr.mxu0 0.0
    %3060 = vmatpush1.msra.mxu0 0.0
    %3061 = vmatprep.subr.mxu0 0.0
    %3062 = vmatpush1.msra.mxu0 0.0
    %3063 = vmatprep.subr.mxu0 0.0
    %3064 = vmatpush1.msra.mxu0 0.0
    %3065 = vmatprep.subr.mxu0 0.0
    %3066 = vmatpush1.msra.mxu0 0.0
    %3067 = vmatprep.subr.mxu0 0.0
    %3068 = vmatpush1.msra.mxu0 0.0
    %3069 = vmatprep.subr.mxu0 0.0
    %3070 = vmatpush1.msra.mxu0 0.0
    %3071 = vmatprep.subr.mxu0 0.0
    %3072 = vmatpush1.msra.mxu0 0.0
    %3073 = vmatprep.subr.mxu0 0.0
    %3074 = vmatpush1.msra.mxu0 0.0
    %3075 = vmatprep.mubr.f32.mxu0 0.0
    %3076 = vmatmul.mubr.f32.gmra.mrb[0].mxu0 %v2185
    %v3077 = vpop.f32.mrb[0].mxu0
    %v3078 = vadd.f32 %v2862, %v3077
    %v3079 = vpop.f32.mrb[0].mxu0
    %3080 = vdwg.mxu0
    %3081 = vmatprep.subr.mxu0 0.0
    %3082 = vmatpush1.msra.mxu0 %v2834
    %3083 = vmatprep.subr.mxu0 0.0
    %3084 = vmatpush1.msra.mxu0 %v2835
    %3085 = vmatprep.subr.mxu0 0.0
    %3086 = vmatpush1.msra.mxu0 %v2836
    %3087 = vmatprep.subr.mxu0 0.0
    %3088 = vmatpush1.msra.mxu0 %v2837
    %3089 = vmatprep.subr.mxu0 0.0
    %3090 = vmatpush1.msra.mxu0 %v2838
    %3091 = vmatprep.subr.mxu0 0.0
    %3092 = vmatpush1.msra.mxu0 %v2839
    %3093 = vmatprep.subr.mxu0 0.0
    %3094 = vmatpush1.msra.mxu0 %v2840
    %3095 = vmatprep.subr.mxu0 0.0
    %3096 = vmatpush1.msra.mxu0 %v2841
    %3097 = vmatprep.subr.mxu0 0.0
    %3098 = vmatpush1.msra.mxu0 0.0
    %3099 = vmatprep.subr.mxu0 0.0
    %3100 = vmatpush1.msra.mxu0 0.0
    %3101 = vmatprep.subr.mxu0 0.0
    %3102 = vmatpush1.msra.mxu0 0.0
    %3103 = vmatprep.subr.mxu0 0.0
    %3104 = vmatpush1.msra.mxu0 0.0
    %3105 = vmatprep.subr.mxu0 0.0
    %3106 = vmatpush1.msra.mxu0 0.0
    %3107 = vmatprep.subr.mxu0 0.0
    %3108 = vmatpush1.msra.mxu0 0.0
    %3109 = vmatprep.subr.mxu0 0.0
    %3110 = vmatpush1.msra.mxu0 0.0
    %3111 = vmatprep.subr.mxu0 0.0
    %3112 = vmatpush1.msra.mxu0 0.0
    %3113 = vmatprep.subr.mxu0 0.0
    %3114 = vmatpush1.msra.mxu0 0.0
    %3115 = vmatprep.subr.mxu0 0.0
    %3116 = vmatpush1.msra.mxu0 0.0
    %3117 = vmatprep.subr.mxu0 0.0
    %3118 = vmatpush1.msra.mxu0 0.0
    %3119 = vmatprep.subr.mxu0 0.0
    %3120 = vmatpush1.msra.mxu0 0.0
    %3121 = vmatprep.subr.mxu0 0.0
    %3122 = vmatpush1.msra.mxu0 0.0
    %3123 = vmatprep.subr.mxu0 0.0
    %3124 = vmatpush1.msra.mxu0 0.0
    %3125 = vmatprep.subr.mxu0 0.0
    %3126 = vmatpush1.msra.mxu0 0.0
    %3127 = vmatprep.subr.mxu0 0.0
    %3128 = vmatpush1.msra.mxu0 0.0
    %3129 = vmatprep.subr.mxu0 0.0
    %3130 = vmatpush1.msra.mxu0 0.0
    %3131 = vmatprep.subr.mxu0 0.0
    %3132 = vmatpush1.msra.mxu0 0.0
    %3133 = vmatprep.subr.mxu0 0.0
    %3134 = vmatpush1.msra.mxu0 0.0
    %3135 = vmatprep.subr.mxu0 0.0
    %3136 = vmatpush1.msra.mxu0 0.0
    %3137 = vmatprep.subr.mxu0 0.0
    %3138 = vmatpush1.msra.mxu0 0.0
    %3139 = vmatprep.subr.mxu0 0.0
    %3140 = vmatpush1.msra.mxu0 0.0
    %3141 = vmatprep.subr.mxu0 0.0
    %3142 = vmatpush1.msra.mxu0 0.0
    %3143 = vmatprep.subr.mxu0 0.0
    %3144 = vmatpush1.msra.mxu0 0.0
    %3145 = vmatprep.mubr.f32.mxu0 0.0
    %3146 = vmatmul.mubr.f32.gmra.mrb[0].mxu0 %v2185
    %v3147 = vpop.f32.mrb[0].mxu0
    %v3148 = vadd.f32 %v2866, %v3147
    %v3149 = vpop.f32.mrb[0].mxu0
    %3150 = vdwg.mxu0
    %vm3151 = vcmask 130048
    %v3153 = vsel %vm3151, %v2254, 0
    %v3156 = vsel %vm3151, %v2596, 0
    %3158 = vmatprep.subr.mxu0 0.0
    %3159 = vmatpush1.xpose.msra.mxu0 %v3156
    %3160 = vmatprep.subr.mxu0 0.0
    %3161 = vmatpush1.xpose.msra.mxu0 0.0
    %3162 = vmatprep.subr.mxu0 0.0
    %3163 = vmatpush1.xpose.msra.mxu0 0.0
    %3164 = vmatprep.subr.mxu0 0.0
    %3165 = vmatpush1.xpose.msra.mxu0 0.0
    %3166 = vmatprep.subr.mxu0 0.0
    %3167 = vmatpush1.xpose.msra.mxu0 0.0
    %3168 = vmatprep.subr.mxu0 0.0
    %3169 = vmatpush1.xpose.msra.mxu0 0.0
    %3170 = vmatprep.subr.mxu0 0.0
    %3171 = vmatpush1.xpose.msra.mxu0 0.0
    %3172 = vmatprep.subr.mxu0 0.0
    %3173 = vmatpush1.xpose.msra.mxu0 0.0
    %3174 = vmatprep.subr.mxu0 0.0
    %3175 = vmatpush1.xpose.msra.mxu0 0.0
    %3176 = vmatprep.subr.mxu0 0.0
    %3177 = vmatpush1.xpose.msra.mxu0 0.0
    %3178 = vmatprep.subr.mxu0 0.0
    %3179 = vmatpush1.xpose.msra.mxu0 0.0
    %3180 = vmatprep.subr.mxu0 0.0
    %3181 = vmatpush1.xpose.msra.mxu0 0.0
    %3182 = vmatprep.subr.mxu0 0.0
    %3183 = vmatpush1.xpose.msra.mxu0 0.0
    %3184 = vmatprep.subr.mxu0 0.0
    %3185 = vmatpush1.xpose.msra.mxu0 0.0
    %3186 = vmatprep.subr.mxu0 0.0
    %3187 = vmatpush1.xpose.msra.mxu0 0.0
    %3188 = vmatprep.subr.mxu0 0.0
    %3189 = vmatpush1.xpose.msra.mxu0 0.0
    %3190 = vmatprep.subr.mxu0 0.0
    %3191 = vmatpush1.xpose.msra.mxu0 0.0
    %3192 = vmatprep.subr.mxu0 0.0
    %3193 = vmatpush1.xpose.msra.mxu0 0.0
    %3194 = vmatprep.subr.mxu0 0.0
    %3195 = vmatpush1.xpose.msra.mxu0 0.0
    %3196 = vmatprep.subr.mxu0 0.0
    %3197 = vmatpush1.xpose.msra.mxu0 0.0
    %3198 = vmatprep.subr.mxu0 0.0
    %3199 = vmatpush1.xpose.msra.mxu0 0.0
    %3200 = vmatprep.subr.mxu0 0.0
    %3201 = vmatpush1.xpose.msra.mxu0 0.0
    %3202 = vmatprep.subr.mxu0 0.0
    %3203 = vmatpush1.xpose.msra.mxu0 0.0
    %3204 = vmatprep.subr.mxu0 0.0
    %3205 = vmatpush1.xpose.msra.mxu0 0.0
    %3206 = vmatprep.subr.mxu0 0.0
    %3207 = vmatpush1.xpose.msra.mxu0 0.0
    %3208 = vmatprep.subr.mxu0 0.0
    %3209 = vmatpush1.xpose.msra.mxu0 0.0
    %3210 = vmatprep.subr.mxu0 0.0
    %3211 = vmatpush1.xpose.msra.mxu0 0.0
    %3212 = vmatprep.subr.mxu0 0.0
    %3213 = vmatpush1.xpose.msra.mxu0 0.0
    %3214 = vmatprep.subr.mxu0 0.0
    %3215 = vmatpush1.xpose.msra.mxu0 0.0
    %3216 = vmatprep.subr.mxu0 0.0
    %3217 = vmatpush1.xpose.msra.mxu0 0.0
    %3218 = vmatprep.subr.mxu0 0.0
    %3219 = vmatpush1.xpose.msra.mxu0 0.0
    %3220 = vmatprep.subr.mxu0 0.0
    %3221 = vmatpush1.xpose.msra.mxu0 0.0
    %3222 = vmatprep.mubr.f32.mxu0 0.0
    %3223 = vmatmul.mubr.f32.gmra.mrb[0].mxu0 %v3153
    %v3224 = vpop.f32.mrb[0].mxu0
    %v3225 = vadd.f32 0.0, %v3224
    %v3226 = vpop.f32.mrb[0].mxu0
    %3227 = vdwg.mxu0
    %v3229 = vsel %vm3151, %v2324, 0
    %v3232 = vsel %vm3151, %v2666, 0
    %3234 = vmatprep.subr.mxu0 0.0
    %3235 = vmatpush1.xpose.msra.mxu0 %v3232
    %3236 = vmatprep.subr.mxu0 0.0
    %3237 = vmatpush1.xpose.msra.mxu0 0.0
    %3238 = vmatprep.subr.mxu0 0.0
    %3239 = vmatpush1.xpose.msra.mxu0 0.0
    %3240 = vmatprep.subr.mxu0 0.0
    %3241 = vmatpush1.xpose.msra.mxu0 0.0
    %3242 = vmatprep.subr.mxu0 0.0
    %3243 = vmatpush1.xpose.msra.mxu0 0.0
    %3244 = vmatprep.subr.mxu0 0.0
    %3245 = vmatpush1.xpose.msra.mxu0 0.0
    %3246 = vmatprep.subr.mxu0 0.0
    %3247 = vmatpush1.xpose.msra.mxu0 0.0
    %3248 = vmatprep.subr.mxu0 0.0
    %3249 = vmatpush1.xpose.msra.mxu0 0.0
    %3250 = vmatprep.subr.mxu0 0.0
    %3251 = vmatpush1.xpose.msra.mxu0 0.0
    %3252 = vmatprep.subr.mxu0 0.0
    %3253 = vmatpush1.xpose.msra.mxu0 0.0
    %3254 = vmatprep.subr.mxu0 0.0
    %3255 = vmatpush1.xpose.msra.mxu0 0.0
    %3256 = vmatprep.subr.mxu0 0.0
    %3257 = vmatpush1.xpose.msra.mxu0 0.0
    %3258 = vmatprep.subr.mxu0 0.0
    %3259 = vmatpush1.xpose.msra.mxu0 0.0
    %3260 = vmatprep.subr.mxu0 0.0
    %3261 = vmatpush1.xpose.msra.mxu0 0.0
    %3262 = vmatprep.subr.mxu0 0.0
    %3263 = vmatpush1.xpose.msra.mxu0 0.0
    %3264 = vmatprep.subr.mxu0 0.0
    %3265 = vmatpush1.xpose.msra.mxu0 0.0
    %3266 = vmatprep.subr.mxu0 0.0
    %3267 = vmatpush1.xpose.msra.mxu0 0.0
    %3268 = vmatprep.subr.mxu0 0.0
    %3269 = vmatpush1.xpose.msra.mxu0 0.0
    %3270 = vmatprep.subr.mxu0 0.0
    %3271 = vmatpush1.xpose.msra.mxu0 0.0
    %3272 = vmatprep.subr.mxu0 0.0
    %3273 = vmatpush1.xpose.msra.mxu0 0.0
    %3274 = vmatprep.subr.mxu0 0.0
    %3275 = vmatpush1.xpose.msra.mxu0 0.0
    %3276 = vmatprep.subr.mxu0 0.0
    %3277 = vmatpush1.xpose.msra.mxu0 0.0
    %3278 = vmatprep.subr.mxu0 0.0
    %3279 = vmatpush1.xpose.msra.mxu0 0.0
    %3280 = vmatprep.subr.mxu0 0.0
    %3281 = vmatpush1.xpose.msra.mxu0 0.0
    %3282 = vmatprep.subr.mxu0 0.0
    %3283 = vmatpush1.xpose.msra.mxu0 0.0
    %3284 = vmatprep.subr.mxu0 0.0
    %3285 = vmatpush1.xpose.msra.mxu0 0.0
    %3286 = vmatprep.subr.mxu0 0.0
    %3287 = vmatpush1.xpose.msra.mxu0 0.0
    %3288 = vmatprep.subr.mxu0 0.0
    %3289 = vmatpush1.xpose.msra.mxu0 0.0
    %3290 = vmatprep.subr.mxu0 0.0
    %3291 = vmatpush1.xpose.msra.mxu0 0.0
    %3292 = vmatprep.subr.mxu0 0.0
    %3293 = vmatpush1.xpose.msra.mxu0 0.0
    %3294 = vmatprep.subr.mxu0 0.0
    %3295 = vmatpush1.xpose.msra.mxu0 0.0
    %3296 = vmatprep.subr.mxu0 0.0
    %3297 = vmatpush1.xpose.msra.mxu0 0.0
    %3298 = vmatprep.mubr.f32.mxu0 0.0
    %3299 = vmatmul.mubr.f32.gmra.mrb[0].mxu0 %v3229
    %v3300 = vpop.f32.mrb[0].mxu0
    %v3301 = vadd.f32 0.0, %v3300
    %v3302 = vpop.f32.mrb[0].mxu0
    %3303 = vdwg.mxu0
    %v3305 = vsel %vm3151, %v2394, 0
    %v3308 = vsel %vm3151, %v2736, 0
    %3310 = vmatprep.subr.mxu0 0.0
    %3311 = vmatpush1.xpose.msra.mxu0 %v3308
    %3312 = vmatprep.subr.mxu0 0.0
    %3313 = vmatpush1.xpose.msra.mxu0 0.0
    %3314 = vmatprep.subr.mxu0 0.0
    %3315 = vmatpush1.xpose.msra.mxu0 0.0
    %3316 = vmatprep.subr.mxu0 0.0
    %3317 = vmatpush1.xpose.msra.mxu0 0.0
    %3318 = vmatprep.subr.mxu0 0.0
    %3319 = vmatpush1.xpose.msra.mxu0 0.0
    %3320 = vmatprep.subr.mxu0 0.0
    %3321 = vmatpush1.xpose.msra.mxu0 0.0
    %3322 = vmatprep.subr.mxu0 0.0
    %3323 = vmatpush1.xpose.msra.mxu0 0.0
    %3324 = vmatprep.subr.mxu0 0.0
    %3325 = vmatpush1.xpose.msra.mxu0 0.0
    %3326 = vmatprep.subr.mxu0 0.0
    %3327 = vmatpush1.xpose.msra.mxu0 0.0
    %3328 = vmatprep.subr.mxu0 0.0
    %3329 = vmatpush1.xpose.msra.mxu0 0.0
    %3330 = vmatprep.subr.mxu0 0.0
    %3331 = vmatpush1.xpose.msra.mxu0 0.0
    %3332 = vmatprep.subr.mxu0 0.0
    %3333 = vmatpush1.xpose.msra.mxu0 0.0
    %3334 = vmatprep.subr.mxu0 0.0
    %3335 = vmatpush1.xpose.msra.mxu0 0.0
    %3336 = vmatprep.subr.mxu0 0.0
    %3337 = vmatpush1.xpose.msra.mxu0 0.0
    %3338 = vmatprep.subr.mxu0 0.0
    %3339 = vmatpush1.xpose.msra.mxu0 0.0
    %3340 = vmatprep.subr.mxu0 0.0
    %3341 = vmatpush1.xpose.msra.mxu0 0.0
    %3342 = vmatprep.subr.mxu0 0.0
    %3343 = vmatpush1.xpose.msra.mxu0 0.0
    %3344 = vmatprep.subr.mxu0 0.0
    %3345 = vmatpush1.xpose.msra.mxu0 0.0
    %3346 = vmatprep.subr.mxu0 0.0
    %3347 = vmatpush1.xpose.msra.mxu0 0.0
    %3348 = vmatprep.subr.mxu0 0.0
    %3349 = vmatpush1.xpose.msra.mxu0 0.0
    %3350 = vmatprep.subr.mxu0 0.0
    %3351 = vmatpush1.xpose.msra.mxu0 0.0
    %3352 = vmatprep.subr.mxu0 0.0
    %3353 = vmatpush1.xpose.msra.mxu0 0.0
    %3354 = vmatprep.subr.mxu0 0.0
    %3355 = vmatpush1.xpose.msra.mxu0 0.0
    %3356 = vmatprep.subr.mxu0 0.0
    %3357 = vmatpush1.xpose.msra.mxu0 0.0
    %3358 = vmatprep.subr.mxu0 0.0
    %3359 = vmatpush1.xpose.msra.mxu0 0.0
    %3360 = vmatprep.subr.mxu0 0.0
    %3361 = vmatpush1.xpose.msra.mxu0 0.0
    %3362 = vmatprep.subr.mxu0 0.0
    %3363 = vmatpush1.xpose.msra.mxu0 0.0
    %3364 = vmatprep.subr.mxu0 0.0
    %3365 = vmatpush1.xpose.msra.mxu0 0.0
    %3366 = vmatprep.subr.mxu0 0.0
    %3367 = vmatpush1.xpose.msra.mxu0 0.0
    %3368 = vmatprep.subr.mxu0 0.0
    %3369 = vmatpush1.xpose.msra.mxu0 0.0
    %3370 = vmatprep.subr.mxu0 0.0
    %3371 = vmatpush1.xpose.msra.mxu0 0.0
    %3372 = vmatprep.subr.mxu0 0.0
    %3373 = vmatpush1.xpose.msra.mxu0 0.0
    %3374 = vmatprep.mubr.f32.mxu0 0.0
    %3375 = vmatmul.mubr.f32.gmra.mrb[0].mxu0 %v3305
    %v3376 = vpop.f32.mrb[0].mxu0
    %v3377 = vadd.f32 0.0, %v3376
    %v3378 = vpop.f32.mrb[0].mxu0
    %3379 = vdwg.mxu0
    %v3381 = vsel %vm3151, %v2464, 0
    %v3384 = vsel %vm3151, %v2806, 0
    %3386 = vmatprep.subr.mxu0 0.0
    %3387 = vmatpush1.xpose.msra.mxu0 %v3384
    %3388 = vmatprep.subr.mxu0 0.0
    %3389 = vmatpush1.xpose.msra.mxu0 0.0
    %3390 = vmatprep.subr.mxu0 0.0
    %3391 = vmatpush1.xpose.msra.mxu0 0.0
    %3392 = vmatprep.subr.mxu0 0.0
    %3393 = vmatpush1.xpose.msra.mxu0 0.0
    %3394 = vmatprep.subr.mxu0 0.0
    %3395 = vmatpush1.xpose.msra.mxu0 0.0
    %3396 = vmatprep.subr.mxu0 0.0
    %3397 = vmatpush1.xpose.msra.mxu0 0.0
    %3398 = vmatprep.subr.mxu0 0.0
    %3399 = vmatpush1.xpose.msra.mxu0 0.0
    %3400 = vmatprep.subr.mxu0 0.0
    %3401 = vmatpush1.xpose.msra.mxu0 0.0
    %3402 = vmatprep.subr.mxu0 0.0
    %3403 = vmatpush1.xpose.msra.mxu0 0.0
    %3404 = vmatprep.subr.mxu0 0.0
    %3405 = vmatpush1.xpose.msra.mxu0 0.0
    %3406 = vmatprep.subr.mxu0 0.0
    %3407 = vmatpush1.xpose.msra.mxu0 0.0
    %3408 = vmatprep.subr.mxu0 0.0
    %3409 = vmatpush1.xpose.msra.mxu0 0.0
    %3410 = vmatprep.subr.mxu0 0.0
    %3411 = vmatpush1.xpose.msra.mxu0 0.0
    %3412 = vmatprep.subr.mxu0 0.0
    %3413 = vmatpush1.xpose.msra.mxu0 0.0
    %3414 = vmatprep.subr.mxu0 0.0
    %3415 = vmatpush1.xpose.msra.mxu0 0.0
    %3416 = vmatprep.subr.mxu0 0.0
    %3417 = vmatpush1.xpose.msra.mxu0 0.0
    %3418 = vmatprep.subr.mxu0 0.0
    %3419 = vmatpush1.xpose.msra.mxu0 0.0
    %3420 = vmatprep.subr.mxu0 0.0
    %3421 = vmatpush1.xpose.msra.mxu0 0.0
    %3422 = vmatprep.subr.mxu0 0.0
    %3423 = vmatpush1.xpose.msra.mxu0 0.0
    %3424 = vmatprep.subr.mxu0 0.0
    %3425 = vmatpush1.xpose.msra.mxu0 0.0
    %3426 = vmatprep.subr.mxu0 0.0
    %3427 = vmatpush1.xpose.msra.mxu0 0.0
    %3428 = vmatprep.subr.mxu0 0.0
    %3429 = vmatpush1.xpose.msra.mxu0 0.0
    %3430 = vmatprep.subr.mxu0 0.0
    %3431 = vmatpush1.xpose.msra.mxu0 0.0
    %3432 = vmatprep.subr.mxu0 0.0
    %3433 = vmatpush1.xpose.msra.mxu0 0.0
    %3434 = vmatprep.subr.mxu0 0.0
    %3435 = vmatpush1.xpose.msra.mxu0 0.0
    %3436 = vmatprep.subr.mxu0 0.0
    %3437 = vmatpush1.xpose.msra.mxu0 0.0
    %3438 = vmatprep.subr.mxu0 0.0
    %3439 = vmatpush1.xpose.msra.mxu0 0.0
    %3440 = vmatprep.subr.mxu0 0.0
    %3441 = vmatpush1.xpose.msra.mxu0 0.0
    %3442 = vmatprep.subr.mxu0 0.0
    %3443 = vmatpush1.xpose.msra.mxu0 0.0
    %3444 = vmatprep.subr.mxu0 0.0
    %3445 = vmatpush1.xpose.msra.mxu0 0.0
    %3446 = vmatprep.subr.mxu0 0.0
    %3447 = vmatpush1.xpose.msra.mxu0 0.0
    %3448 = vmatprep.subr.mxu0 0.0
    %3449 = vmatpush1.xpose.msra.mxu0 0.0
    %3450 = vmatprep.mubr.f32.mxu0 0.0
    %3451 = vmatmul.mubr.f32.gmra.mrb[0].mxu0 %v3381
    %v3452 = vpop.f32.mrb[0].mxu0
    %v3453 = vadd.f32 0.0, %v3452
    %v3454 = vpop.f32.mrb[0].mxu0
    %3455 = vdwg.mxu0
    %v3456 = vmul.f32 %v3225, 0.25
    %v3457 = vmul.f32 %v3301, 0.25
    %v3458 = vmul.f32 %v3377, 0.25
    %v3459 = vmul.f32 %v3453, 0.25
    %vm3460 = vcmask 27648
    %v3461 = vsel %vm3460, %v3456, -inf
    %3462 = vmax.xlane.f32.xlu0 %v3461
    %v3463 = vpop.xlane.xlu0 %3462
    %v3464 = vsel %vm3460, %v3457, -inf
    %3465 = vmax.xlane.f32.xlu0 %v3464
    %v3466 = vpop.xlane.xlu0 %3465
    %v3467 = vsel %vm3460, %v3458, -inf
    %3468 = vmax.xlane.f32.xlu0 %v3467
    %v3469 = vpop.xlane.xlu0 %3468
    %v3470 = vsel %vm3460, %v3459, -inf
    %3471 = vmax.xlane.f32.xlu0 %v3470
    %v3472 = vpop.xlane.xlu0 %3471
    %v3473 = vsub.f32 %v3456, %v3463
    %v3474 = vsub.f32 %v3457, %v3466
    %v3475 = vsub.f32 %v3458, %v3469
    %v3476 = vsub.f32 %v3459, %v3472
    %v3477 = vmul.f32 %v3473, 1.442695
    %v3478 = vpow.pop %v3477
    %v3479 = vmul.f32 %v3474, 1.442695
    %v3480 = vpow.pop %v3479
    %v3481 = vmul.f32 %v3475, 1.442695
    %v3482 = vpow.pop %v3481
    %v3483 = vmul.f32 %v3476, 1.442695
    %v3484 = vpow.pop %v3483
    %v3485 = vsel %vm3460, %v3478, 0.0
    %3486 = vadd.xlane.f32.xlu0 %v3485
    %v3487 = vpop.xlane.xlu0 %3486
    %v3488 = vsel %vm3460, %v3480, 0.0
    %3489 = vadd.xlane.f32.xlu0 %v3488
    %v3490 = vpop.xlane.xlu0 %3489
    %v3491 = vsel %vm3460, %v3482, 0.0
    %3492 = vadd.xlane.f32.xlu0 %v3491
    %v3493 = vpop.xlane.xlu0 %3492
    %v3494 = vsel %vm3460, %v3484, 0.0
    %3495 = vadd.xlane.f32.xlu0 %v3494
    %v3496 = vpop.xlane.xlu0 %3495
    %v3497 = vrcp.pop %v3487
    %v3498 = vmul.f32 %v3478, %v3497
    %v3499 = vrcp.pop %v3490
    %v3500 = vmul.f32 %v3480, %v3499
    %v3501 = vrcp.pop %v3493
    %v3502 = vmul.f32 %v3482, %v3501
    %v3503 = vrcp.pop %v3496
    %v3504 = vmul.f32 %v3484, %v3503
    %vm3505 = vcmask 31744
    %v3507 = vsel %vm3505, %v3498, 0
    %v3510 = vsel %vm1971, %v2938, 0
    %3512 = vmatprep.subr.mxu0 0.0
    %3513 = vmatpush1.msra.mxu0 %v3510
    %3514 = vmatprep.subr.mxu0 0.0
    %3515 = vmatpush1.msra.mxu0 0.0
    %3516 = vmatprep.subr.mxu0 0.0
    %3517 = vmatpush1.msra.mxu0 0.0
    %3518 = vmatprep.subr.mxu0 0.0
    %3519 = vmatpush1.msra.mxu0 0.0
    %3520 = vmatprep.subr.mxu0 0.0
    %3521 = vmatpush1.msra.mxu0 0.0
    %3522 = vmatprep.subr.mxu0 0.0
    %3523 = vmatpush1.msra.mxu0 0.0
    %3524 = vmatprep.subr.mxu0 0.0
    %3525 = vmatpush1.msra.mxu0 0.0
    %3526 = vmatprep.subr.mxu0 0.0
    %3527 = vmatpush1.msra.mxu0 0.0
    %3528 = vmatprep.subr.mxu0 0.0
    %3529 = vmatpush1.msra.mxu0 0.0
    %3530 = vmatprep.subr.mxu0 0.0
    %3531 = vmatpush1.msra.mxu0 0.0
    %3532 = vmatprep.subr.mxu0 0.0
    %3533 = vmatpush1.msra.mxu0 0.0
    %3534 = vmatprep.subr.mxu0 0.0
    %3535 = vmatpush1.msra.mxu0 0.0
    %3536 = vmatprep.subr.mxu0 0.0
    %3537 = vmatpush1.msra.mxu0 0.0
    %3538 = vmatprep.subr.mxu0 0.0
    %3539 = vmatpush1.msra.mxu0 0.0
    %3540 = vmatprep.subr.mxu0 0.0
    %3541 = vmatpush1.msra.mxu0 0.0
    %3542 = vmatprep.subr.mxu0 0.0
    %3543 = vmatpush1.msra.mxu0 0.0
    %3544 = vmatprep.subr.mxu0 0.0
    %3545 = vmatpush1.msra.mxu0 0.0
    %3546 = vmatprep.subr.mxu0 0.0
    %3547 = vmatpush1.msra.mxu0 0.0
    %3548 = vmatprep.subr.mxu0 0.0
    %3549 = vmatpush1.msra.mxu0 0.0
    %3550 = vmatprep.subr.mxu0 0.0
    %3551 = vmatpush1.msra.mxu0 0.0
    %3552 = vmatprep.subr.mxu0 0.0
    %3553 = vmatpush1.msra.mxu0 0.0
    %3554 = vmatprep.subr.mxu0 0.0
    %3555 = vmatpush1.msra.mxu0 0.0
    %3556 = vmatprep.subr.mxu0 0.0
    %3557 = vmatpush1.msra.mxu0 0.0
    %3558 = vmatprep.subr.mxu0 0.0
    %3559 = vmatpush1.msra.mxu0 0.0
    %3560 = vmatprep.subr.mxu0 0.0
    %3561 = vmatpush1.msra.mxu0 0.0
    %3562 = vmatprep.subr.mxu0 0.0
    %3563 = vmatpush1.msra.mxu0 0.0
    %3564 = vmatprep.subr.mxu0 0.0
    %3565 = vmatpush1.msra.mxu0 0.0
    %3566 = vmatprep.subr.mxu0 0.0
    %3567 = vmatpush1.msra.mxu0 0.0
    %3568 = vmatprep.subr.mxu0 0.0
    %3569 = vmatpush1.msra.mxu0 0.0
    %3570 = vmatprep.subr.mxu0 0.0
    %3571 = vmatpush1.msra.mxu0 0.0
    %3572 = vmatprep.subr.mxu0 0.0
    %3573 = vmatpush1.msra.mxu0 0.0
    %3574 = vmatprep.subr.mxu0 0.0
    %3575 = vmatpush1.msra.mxu0 0.0
    %3576 = vmatprep.mubr.f32.mxu0 0.0
    %3577 = vmatmul.mubr.f32.gmra.mrb[0].mxu0 %v3507
    %v3578 = vpop.f32.mrb[0].mxu0
    %v3579 = vadd.f32 0.0, %v3578
    %v3580 = vpop.f32.mrb[0].mxu0
    %3581 = vdwg.mxu0
    %v3583 = vsel %vm3505, %v3500, 0
    %v3586 = vsel %vm1971, %v3008, 0
    %3588 = vmatprep.subr.mxu0 0.0
    %3589 = vmatpush1.msra.mxu0 %v3586
    %3590 = vmatprep.subr.mxu0 0.0
    %3591 = vmatpush1.msra.mxu0 0.0
    %3592 = vmatprep.subr.mxu0 0.0
    %3593 = vmatpush1.msra.mxu0 0.0
    %3594 = vmatprep.subr.mxu0 0.0
    %3595 = vmatpush1.msra.mxu0 0.0
    %3596 = vmatprep.subr.mxu0 0.0
    %3597 = vmatpush1.msra.mxu0 0.0
    %3598 = vmatprep.subr.mxu0 0.0
    %3599 = vmatpush1.msra.mxu0 0.0
    %3600 = vmatprep.subr.mxu0 0.0
    %3601 = vmatpush1.msra.mxu0 0.0
    %3602 = vmatprep.subr.mxu0 0.0
    %3603 = vmatpush1.msra.mxu0 0.0
    %3604 = vmatprep.subr.mxu0 0.0
    %3605 = vmatpush1.msra.mxu0 0.0
    %3606 = vmatprep.subr.mxu0 0.0
    %3607 = vmatpush1.msra.mxu0 0.0
    %3608 = vmatprep.subr.mxu0 0.0
    %3609 = vmatpush1.msra.mxu0 0.0
    %3610 = vmatprep.subr.mxu0 0.0
    %3611 = vmatpush1.msra.mxu0 0.0
    %3612 = vmatprep.subr.mxu0 0.0
    %3613 = vmatpush1.msra.mxu0 0.0
    %3614 = vmatprep.subr.mxu0 0.0
    %3615 = vmatpush1.msra.mxu0 0.0
    %3616 = vmatprep.subr.mxu0 0.0
    %3617 = vmatpush1.msra.mxu0 0.0
    %3618 = vmatprep.subr.mxu0 0.0
    %3619 = vmatpush1.msra.mxu0 0.0
    %3620 = vmatprep.subr.mxu0 0.0
    %3621 = vmatpush1.msra.mxu0 0.0
    %3622 = vmatprep.subr.mxu0 0.0
    %3623 = vmatpush1.msra.mxu0 0.0
    %3624 = vmatprep.subr.mxu0 0.0
    %3625 = vmatpush1.msra.mxu0 0.0
    %3626 = vmatprep.subr.mxu0 0.0
    %3627 = vmatpush1.msra.mxu0 0.0
    %3628 = vmatprep.subr.mxu0 0.0
    %3629 = vmatpush1.msra.mxu0 0.0
    %3630 = vmatprep.subr.mxu0 0.0
    %3631 = vmatpush1.msra.mxu0 0.0
    %3632 = vmatprep.subr.mxu0 0.0
    %3633 = vmatpush1.msra.mxu0 0.0
    %3634 = vmatprep.subr.mxu0 0.0
    %3635 = vmatpush1.msra.mxu0 0.0
    %3636 = vmatprep.subr.mxu0 0.0
    %3637 = vmatpush1.msra.mxu0 0.0
    %3638 = vmatprep.subr.mxu0 0.0
    %3639 = vmatpush1.msra.mxu0 0.0
    %3640 = vmatprep.subr.mxu0 0.0
    %3641 = vmatpush1.msra.mxu0 0.0
    %3642 = vmatprep.subr.mxu0 0.0
    %3643 = vmatpush1.msra.mxu0 0.0
    %3644 = vmatprep.subr.mxu0 0.0
    %3645 = vmatpush1.msra.mxu0 0.0
    %3646 = vmatprep.subr.mxu0 0.0
    %3647 = vmatpush1.msra.mxu0 0.0
    %3648 = vmatprep.subr.mxu0 0.0
    %3649 = vmatpush1.msra.mxu0 0.0
    %3650 = vmatprep.subr.mxu0 0.0
    %3651 = vmatpush1.msra.mxu0 0.0
    %3652 = vmatprep.mubr.f32.mxu0 0.0
    %3653 = vmatmul.mubr.f32.gmra.mrb[0].mxu0 %v3583
    %v3654 = vpop.f32.mrb[0].mxu0
    %v3655 = vadd.f32 0.0, %v3654
    %v3656 = vpop.f32.mrb[0].mxu0
    %3657 = vdwg.mxu0
    %v3659 = vsel %vm3505, %v3502, 0
    %v3662 = vsel %vm1971, %v3078, 0
    %3664 = vmatprep.subr.mxu0 0.0
    %3665 = vmatpush1.msra.mxu0 %v3662
    %3666 = vmatprep.subr.mxu0 0.0
    %3667 = vmatpush1.msra.mxu0 0.0
    %3668 = vmatprep.subr.mxu0 0.0
    %3669 = vmatpush1.msra.mxu0 0.0
    %3670 = vmatprep.subr.mxu0 0.0
    %3671 = vmatpush1.msra.mxu0 0.0
    %3672 = vmatprep.subr.mxu0 0.0
    %3673 = vmatpush1.msra.mxu0 0.0
    %3674 = vmatprep.subr.mxu0 0.0
    %3675 = vmatpush1.msra.mxu0 0.0
    %3676 = vmatprep.subr.mxu0 0.0
    %3677 = vmatpush1.msra.mxu0 0.0
    %3678 = vmatprep.subr.mxu0 0.0
    %3679 = vmatpush1.msra.mxu0 0.0
    %3680 = vmatprep.subr.mxu0 0.0
    %3681 = vmatpush1.msra.mxu0 0.0
    %3682 = vmatprep.subr.mxu0 0.0
    %3683 = vmatpush1.msra.mxu0 0.0
    %3684 = vmatprep.subr.mxu0 0.0
    %3685 = vmatpush1.msra.mxu0 0.0
    %3686 = vmatprep.subr.mxu0 0.0
    %3687 = vmatpush1.msra.mxu0 0.0
    %3688 = vmatprep.subr.mxu0 0.0
    %3689 = vmatpush1.msra.mxu0 0.0
    %3690 = vmatprep.subr.mxu0 0.0
    %3691 = vmatpush1.msra.mxu0 0.0
    %3692 = vmatprep.subr.mxu0 0.0
    %3693 = vmatpush1.msra.mxu0 0.0
    %3694 = vmatprep.subr.mxu0 0.0
    %3695 = vmatpush1.msra.mxu0 0.0
    %3696 = vmatprep.subr.mxu0 0.0
    %3697 = vmatpush1.msra.mxu0 0.0
    %3698 = vmatprep.subr.mxu0 0.0
    %3699 = vmatpush1.msra.mxu0 0.0
    %3700 = vmatprep.subr.mxu0 0.0
    %3701 = vmatpush1.msra.mxu0 0.0
    %3702 = vmatprep.subr.mxu0 0.0
    %3703 = vmatpush1.msra.mxu0 0.0
    %3704 = vmatprep.subr.mxu0 0.0
    %3705 = vmatpush1.msra.mxu0 0.0
    %3706 = vmatprep.subr.mxu0 0.0
    %3707 = vmatpush1.msra.mxu0 0.0
    %3708 = vmatprep.subr.mxu0 0.0
    %3709 = vmatpush1.msra.mxu0 0.0
    %3710 = vmatprep.subr.mxu0 0.0
    %3711 = vmatpush1.msra.mxu0 0.0
    %3712 = vmatprep.subr.mxu0 0.0
    %3713 = vmatpush1.msra.mxu0 0.0
    %3714 = vmatprep.subr.mxu0 0.0
    %3715 = vmatpush1.msra.mxu0 0.0
    %3716 = vmatprep.subr.mxu0 0.0
    %3717 = vmatpush1.msra.mxu0 0.0
    %3718 = vmatprep.subr.mxu0 0.0
    %3719 = vmatpush1.msra.mxu0 0.0
    %3720 = vmatprep.subr.mxu0 0.0
    %3721 = vmatpush1.msra.mxu0 0.0
    %3722 = vmatprep.subr.mxu0 0.0
    %3723 = vmatpush1.msra.mxu0 0.0
    %3724 = vmatprep.subr.mxu0 0.0
    %3725 = vmatpush1.msra.mxu0 0.0
    %3726 = vmatprep.subr.mxu0 0.0
    %3727 = vmatpush1.msra.mxu0 0.0
    %3728 = vmatprep.mubr.f32.mxu0 0.0
    %3729 = vmatmul.mubr.f32.gmra.mrb[0].mxu0 %v3659
    %v3730 = vpop.f32.mrb[0].mxu0
    %v3731 = vadd.f32 0.0, %v3730
    %v3732 = vpop.f32.mrb[0].mxu0
    %3733 = vdwg.mxu0
    %v3735 = vsel %vm3505, %v3504, 0
    %v3738 = vsel %vm1971, %v3148, 0
    %3740 = vmatprep.subr.mxu0 0.0
    %3741 = vmatpush1.msra.mxu0 %v3738
    %3742 = vmatprep.subr.mxu0 0.0
    %3743 = vmatpush1.msra.mxu0 0.0
    %3744 = vmatprep.subr.mxu0 0.0
    %3745 = vmatpush1.msra.mxu0 0.0
    %3746 = vmatprep.subr.mxu0 0.0
    %3747 = vmatpush1.msra.mxu0 0.0
    %3748 = vmatprep.subr.mxu0 0.0
    %3749 = vmatpush1.msra.mxu0 0.0
    %3750 = vmatprep.subr.mxu0 0.0
    %3751 = vmatpush1.msra.mxu0 0.0
    %3752 = vmatprep.subr.mxu0 0.0
    %3753 = vmatpush1.msra.mxu0 0.0
    %3754 = vmatprep.subr.mxu0 0.0
    %3755 = vmatpush1.msra.mxu0 0.0
    %3756 = vmatprep.subr.mxu0 0.0
    %3757 = vmatpush1.msra.mxu0 0.0
    %3758 = vmatprep.subr.mxu0 0.0
    %3759 = vmatpush1.msra.mxu0 0.0
    %3760 = vmatprep.subr.mxu0 0.0
    %3761 = vmatpush1.msra.mxu0 0.0
    %3762 = vmatprep.subr.mxu0 0.0
    %3763 = vmatpush1.msra.mxu0 0.0
    %3764 = vmatprep.subr.mxu0 0.0
    %3765 = vmatpush1.msra.mxu0 0.0
    %3766 = vmatprep.subr.mxu0 0.0
    %3767 = vmatpush1.msra.mxu0 0.0
    %3768 = vmatprep.subr.mxu0 0.0
    %3769 = vmatpush1.msra.mxu0 0.0
    %3770 = vmatprep.subr.mxu0 0.0
    %3771 = vmatpush1.msra.mxu0 0.0
    %3772 = vmatprep.subr.mxu0 0.0
    %3773 = vmatpush1.msra.mxu0 0.0
    %3774 = vmatprep.subr.mxu0 0.0
    %3775 = vmatpush1.msra.mxu0 0.0
    %3776 = vmatprep.subr.mxu0 0.0
    %3777 = vmatpush1.msra.mxu0 0.0
    %3778 = vmatprep.subr.mxu0 0.0
    %3779 = vmatpush1.msra.mxu0 0.0
    %3780 = vmatprep.subr.mxu0 0.0
    %3781 = vmatpush1.msra.mxu0 0.0
    %3782 = vmatprep.subr.mxu0 0.0
    %3783 = vmatpush1.msra.mxu0 0.0
    %3784 = vmatprep.subr.mxu0 0.0
    %3785 = vmatpush1.msra.mxu0 0.0
    %3786 = vmatprep.subr.mxu0 0.0
    %3787 = vmatpush1.msra.mxu0 0.0
    %3788 = vmatprep.subr.mxu0 0.0
    %3789 = vmatpush1.msra.mxu0 0.0
    %3790 = vmatprep.subr.mxu0 0.0
    %3791 = vmatpush1.msra.mxu0 0.0
    %3792 = vmatprep.subr.mxu0 0.0
    %3793 = vmatpush1.msra.mxu0 0.0
    %3794 = vmatprep.subr.mxu0 0.0
    %3795 = vmatpush1.msra.mxu0 0.0
    %3796 = vmatprep.subr.mxu0 0.0
    %3797 = vmatpush1.msra.mxu0 0.0
    %3798 = vmatprep.subr.mxu0 0.0
    %3799 = vmatpush1.msra.mxu0 0.0
    %3800 = vmatprep.subr.mxu0 0.0
    %3801 = vmatpush1.msra.mxu0 0.0
    %3802 = vmatprep.subr.mxu0 0.0
    %3803 = vmatpush1.msra.mxu0 0.0
    %3804 = vmatprep.mubr.f32.mxu0 0.0
    %3805 = vmatmul.mubr.f32.gmra.mrb[0].mxu0 %v3735
    %v3806 = vpop.f32.mrb[0].mxu0
    %v3807 = vadd.f32 0.0, %v3806
    %v3808 = vpop.f32.mrb[0].mxu0
    %3809 = vdwg.mxu0
    %s3810 = scalar_lea.vmem %s4, 768
    %v3811 = vld [vmem:[%s3810] sm:$0xff]
    %v3812 = vld [vmem:[%s3810 + $0x8] sm:$0xff]
    %v3813 = vld [vmem:[%s3810 + $0x10] sm:$0xff]
    %v3814 = vld [vmem:[%s3810 + $0x18] sm:$0xff]
    %v3815 = vld [vmem:[%s3810 + $0x20] sm:$0xff]
    %v3816 = vld [vmem:[%s3810 + $0x28] sm:$0xff]
    %v3817 = vld [vmem:[%s3810 + $0x30] sm:$0xff]
    %v3818 = vld [vmem:[%s3810 + $0x38] sm:$0xff]
    %v3819 = vld [vmem:[%s3810 + $0x40] sm:$0xff]
    %v3820 = vld [vmem:[%s3810 + $0x48] sm:$0xff]
    %v3821 = vld [vmem:[%s3810 + $0x50] sm:$0xff]
    %v3822 = vld [vmem:[%s3810 + $0x58] sm:$0xff]
    %v3823 = vld [vmem:[%s3810 + $0x60] sm:$0xff]
    %v3824 = vld [vmem:[%s3810 + $0x68] sm:$0xff]
    %v3825 = vld [vmem:[%s3810 + $0x70] sm:$0xff]
    %v3826 = vld [vmem:[%s3810 + $0x78] sm:$0xff]
    %v3827 = vld [vmem:[%s3810 + $0x80] sm:$0xff]
    %v3828 = vld [vmem:[%s3810 + $0x88] sm:$0xff]
    %v3829 = vld [vmem:[%s3810 + $0x90] sm:$0xff]
    %v3830 = vld [vmem:[%s3810 + $0x98] sm:$0xff]
    %v3831 = vld [vmem:[%s3810 + $0xa0] sm:$0xff]
    %v3832 = vld [vmem:[%s3810 + $0xa8] sm:$0xff]
    %v3833 = vld [vmem:[%s3810 + $0xb0] sm:$0xff]
    %v3834 = vld [vmem:[%s3810 + $0xb8] sm:$0xff]
    %v3835 = vld [vmem:[%s3810 + $0xc0] sm:$0xff]
    %v3836 = vld [vmem:[%s3810 + $0xc8] sm:$0xff]
    %v3837 = vld [vmem:[%s3810 + $0xd0] sm:$0xff]
    %v3838 = vld [vmem:[%s3810 + $0xd8] sm:$0xff]
    %v3839 = vld [vmem:[%s3810 + $0xe0] sm:$0xff]
    %v3840 = vld [vmem:[%s3810 + $0xe8] sm:$0xff]
    %v3841 = vld [vmem:[%s3810 + $0xf0] sm:$0xff]
    %v3842 = vld [vmem:[%s3810 + $0xf8] sm:$0xff]
    %v3844 = vsel %vm3151, %v3579, 0
    %v3847 = vsel %vm3151, %v3811, 0
    %v3850 = vsel %vm3151, %v3812, 0
    %v3853 = vsel %vm3151, %v3813, 0
    %v3856 = vsel %vm3151, %v3814, 0
    %v3859 = vsel %vm3151, %v3815, 0
    %v3862 = vsel %vm3151, %v3816, 0
    %v3865 = vsel %vm3151, %v3817, 0
    %v3868 = vsel %vm3151, %v3818, 0
    %3870 = vmatprep.subr.mxu0 0.0
    %3871 = vmatpush1.xpose.msra.mxu0 %v3847
    %3872 = vmatprep.subr.mxu0 0.0
    %3873 = vmatpush1.xpose.msra.mxu0 %v3850
    %3874 = vmatprep.subr.mxu0 0.0
    %3875 = vmatpush1.xpose.msra.mxu0 %v3853
    %3876 = vmatprep.subr.mxu0 0.0
    %3877 = vmatpush1.xpose.msra.mxu0 %v3856
    %3878 = vmatprep.subr.mxu0 0.0
    %3879 = vmatpush1.xpose.msra.mxu0 %v3859
    %3880 = vmatprep.subr.mxu0 0.0
    %3881 = vmatpush1.xpose.msra.mxu0 %v3862
    %3882 = vmatprep.subr.mxu0 0.0
    %3883 = vmatpush1.xpose.msra.mxu0 %v3865
    %3884 = vmatprep.subr.mxu0 0.0
    %3885 = vmatpush1.xpose.msra.mxu0 %v3868
    %3886 = vmatprep.subr.mxu0 0.0
    %3887 = vmatpush1.xpose.msra.mxu0 0.0
    %3888 = vmatprep.subr.mxu0 0.0
    %3889 = vmatpush1.xpose.msra.mxu0 0.0
    %3890 = vmatprep.subr.mxu0 0.0
    %3891 = vmatpush1.xpose.msra.mxu0 0.0
    %3892 = vmatprep.subr.mxu0 0.0
    %3893 = vmatpush1.xpose.msra.mxu0 0.0
    %3894 = vmatprep.subr.mxu0 0.0
    %3895 = vmatpush1.xpose.msra.mxu0 0.0
    %3896 = vmatprep.subr.mxu0 0.0
    %3897 = vmatpush1.xpose.msra.mxu0 0.0
    %3898 = vmatprep.subr.mxu0 0.0
    %3899 = vmatpush1.xpose.msra.mxu0 0.0
    %3900 = vmatprep.subr.mxu0 0.0
    %3901 = vmatpush1.xpose.msra.mxu0 0.0
    %3902 = vmatprep.subr.mxu0 0.0
    %3903 = vmatpush1.xpose.msra.mxu0 0.0
    %3904 = vmatprep.subr.mxu0 0.0
    %3905 = vmatpush1.xpose.msra.mxu0 0.0
    %3906 = vmatprep.subr.mxu0 0.0
    %3907 = vmatpush1.xpose.msra.mxu0 0.0
    %3908 = vmatprep.subr.mxu0 0.0
    %3909 = vmatpush1.xpose.msra.mxu0 0.0
    %3910 = vmatprep.subr.mxu0 0.0
    %3911 = vmatpush1.xpose.msra.mxu0 0.0
    %3912 = vmatprep.subr.mxu0 0.0
    %3913 = vmatpush1.xpose.msra.mxu0 0.0
    %3914 = vmatprep.subr.mxu0 0.0
    %3915 = vmatpush1.xpose.msra.mxu0 0.0
    %3916 = vmatprep.subr.mxu0 0.0
    %3917 = vmatpush1.xpose.msra.mxu0 0.0
    %3918 = vmatprep.subr.mxu0 0.0
    %3919 = vmatpush1.xpose.msra.mxu0 0.0
    %3920 = vmatprep.subr.mxu0 0.0
    %3921 = vmatpush1.xpose.msra.mxu0 0.0
    %3922 = vmatprep.subr.mxu0 0.0
    %3923 = vmatpush1.xpose.msra.mxu0 0.0
    %3924 = vmatprep.subr.mxu0 0.0
    %3925 = vmatpush1.xpose.msra.mxu0 0.0
    %3926 = vmatprep.subr.mxu0 0.0
    %3927 = vmatpush1.xpose.msra.mxu0 0.0
    %3928 = vmatprep.subr.mxu0 0.0
    %3929 = vmatpush1.xpose.msra.mxu0 0.0
    %3930 = vmatprep.subr.mxu0 0.0
    %3931 = vmatpush1.xpose.msra.mxu0 0.0
    %3932 = vmatprep.subr.mxu0 0.0
    %3933 = vmatpush1.xpose.msra.mxu0 0.0
    %3934 = vmatprep.mubr.f32.mxu0 0.0
    %3935 = vmatmul.mubr.f32.gmra.mrb[0].mxu0 %v3844
    %v3936 = vpop.f32.mrb[0].mxu0
    %v3937 = vadd.f32 0.0, %v3936
    %v3938 = vpop.f32.mrb[0].mxu0
    %3939 = vdwg.mxu0
    %v3941 = vsel %vm3151, %v3655, 0
    %v3944 = vsel %vm3151, %v3819, 0
    %v3947 = vsel %vm3151, %v3820, 0
    %v3950 = vsel %vm3151, %v3821, 0
    %v3953 = vsel %vm3151, %v3822, 0
    %v3956 = vsel %vm3151, %v3823, 0
    %v3959 = vsel %vm3151, %v3824, 0
    %v3962 = vsel %vm3151, %v3825, 0
    %v3965 = vsel %vm3151, %v3826, 0
    %3967 = vmatprep.subr.mxu0 0.0
    %3968 = vmatpush1.xpose.msra.mxu0 %v3944
    %3969 = vmatprep.subr.mxu0 0.0
    %3970 = vmatpush1.xpose.msra.mxu0 %v3947
    %3971 = vmatprep.subr.mxu0 0.0
    %3972 = vmatpush1.xpose.msra.mxu0 %v3950
    %3973 = vmatprep.subr.mxu0 0.0
    %3974 = vmatpush1.xpose.msra.mxu0 %v3953
    %3975 = vmatprep.subr.mxu0 0.0
    %3976 = vmatpush1.xpose.msra.mxu0 %v3956
    %3977 = vmatprep.subr.mxu0 0.0
    %3978 = vmatpush1.xpose.msra.mxu0 %v3959
    %3979 = vmatprep.subr.mxu0 0.0
    %3980 = vmatpush1.xpose.msra.mxu0 %v3962
    %3981 = vmatprep.subr.mxu0 0.0
    %3982 = vmatpush1.xpose.msra.mxu0 %v3965
    %3983 = vmatprep.subr.mxu0 0.0
    %3984 = vmatpush1.xpose.msra.mxu0 0.0
    %3985 = vmatprep.subr.mxu0 0.0
    %3986 = vmatpush1.xpose.msra.mxu0 0.0
    %3987 = vmatprep.subr.mxu0 0.0
    %3988 = vmatpush1.xpose.msra.mxu0 0.0
    %3989 = vmatprep.subr.mxu0 0.0
    %3990 = vmatpush1.xpose.msra.mxu0 0.0
    %3991 = vmatprep.subr.mxu0 0.0
    %3992 = vmatpush1.xpose.msra.mxu0 0.0
    %3993 = vmatprep.subr.mxu0 0.0
    %3994 = vmatpush1.xpose.msra.mxu0 0.0
    %3995 = vmatprep.subr.mxu0 0.0
    %3996 = vmatpush1.xpose.msra.mxu0 0.0
    %3997 = vmatprep.subr.mxu0 0.0
    %3998 = vmatpush1.xpose.msra.mxu0 0.0
    %3999 = vmatprep.subr.mxu0 0.0
    %4000 = vmatpush1.xpose.msra.mxu0 0.0
    %4001 = vmatprep.subr.mxu0 0.0
    %4002 = vmatpush1.xpose.msra.mxu0 0.0
    %4003 = vmatprep.subr.mxu0 0.0
    %4004 = vmatpush1.xpose.msra.mxu0 0.0
    %4005 = vmatprep.subr.mxu0 0.0
    %4006 = vmatpush1.xpose.msra.mxu0 0.0
    %4007 = vmatprep.subr.mxu0 0.0
    %4008 = vmatpush1.xpose.msra.mxu0 0.0
    %4009 = vmatprep.subr.mxu0 0.0
    %4010 = vmatpush1.xpose.msra.mxu0 0.0
    %4011 = vmatprep.subr.mxu0 0.0
    %4012 = vmatpush1.xpose.msra.mxu0 0.0
    %4013 = vmatprep.subr.mxu0 0.0
    %4014 = vmatpush1.xpose.msra.mxu0 0.0
    %4015 = vmatprep.subr.mxu0 0.0
    %4016 = vmatpush1.xpose.msra.mxu0 0.0
    %4017 = vmatprep.subr.mxu0 0.0
    %4018 = vmatpush1.xpose.msra.mxu0 0.0
    %4019 = vmatprep.subr.mxu0 0.0
    %4020 = vmatpush1.xpose.msra.mxu0 0.0
    %4021 = vmatprep.subr.mxu0 0.0
    %4022 = vmatpush1.xpose.msra.mxu0 0.0
    %4023 = vmatprep.subr.mxu0 0.0
    %4024 = vmatpush1.xpose.msra.mxu0 0.0
    %4025 = vmatprep.subr.mxu0 0.0
    %4026 = vmatpush1.xpose.msra.mxu0 0.0
    %4027 = vmatprep.subr.mxu0 0.0
    %4028 = vmatpush1.xpose.msra.mxu0 0.0
    %4029 = vmatprep.subr.mxu0 0.0
    %4030 = vmatpush1.xpose.msra.mxu0 0.0
    %4031 = vmatprep.mubr.f32.mxu0 0.0
    %4032 = vmatmul.mubr.f32.gmra.mrb[0].mxu0 %v3941
    %v4033 = vpop.f32.mrb[0].mxu0
    %v4034 = vadd.f32 0.0, %v4033
    %v4035 = vpop.f32.mrb[0].mxu0
    %4036 = vdwg.mxu0
    %v4038 = vsel %vm3151, %v3731, 0
    %v4041 = vsel %vm3151, %v3827, 0
    %v4044 = vsel %vm3151, %v3828, 0
    %v4047 = vsel %vm3151, %v3829, 0
    %v4050 = vsel %vm3151, %v3830, 0
    %v4053 = vsel %vm3151, %v3831, 0
    %v4056 = vsel %vm3151, %v3832, 0
    %v4059 = vsel %vm3151, %v3833, 0
    %v4062 = vsel %vm3151, %v3834, 0
    %4064 = vmatprep.subr.mxu0 0.0
    %4065 = vmatpush1.xpose.msra.mxu0 %v4041
    %4066 = vmatprep.subr.mxu0 0.0
    %4067 = vmatpush1.xpose.msra.mxu0 %v4044
    %4068 = vmatprep.subr.mxu0 0.0
    %4069 = vmatpush1.xpose.msra.mxu0 %v4047
    %4070 = vmatprep.subr.mxu0 0.0
    %4071 = vmatpush1.xpose.msra.mxu0 %v4050
    %4072 = vmatprep.subr.mxu0 0.0
    %4073 = vmatpush1.xpose.msra.mxu0 %v4053
    %4074 = vmatprep.subr.mxu0 0.0
    %4075 = vmatpush1.xpose.msra.mxu0 %v4056
    %4076 = vmatprep.subr.mxu0 0.0
    %4077 = vmatpush1.xpose.msra.mxu0 %v4059
    %4078 = vmatprep.subr.mxu0 0.0
    %4079 = vmatpush1.xpose.msra.mxu0 %v4062
    %4080 = vmatprep.subr.mxu0 0.0
    %4081 = vmatpush1.xpose.msra.mxu0 0.0
    %4082 = vmatprep.subr.mxu0 0.0
    %4083 = vmatpush1.xpose.msra.mxu0 0.0
    %4084 = vmatprep.subr.mxu0 0.0
    %4085 = vmatpush1.xpose.msra.mxu0 0.0
    %4086 = vmatprep.subr.mxu0 0.0
    %4087 = vmatpush1.xpose.msra.mxu0 0.0
    %4088 = vmatprep.subr.mxu0 0.0
    %4089 = vmatpush1.xpose.msra.mxu0 0.0
    %4090 = vmatprep.subr.mxu0 0.0
    %4091 = vmatpush1.xpose.msra.mxu0 0.0
    %4092 = vmatprep.subr.mxu0 0.0
    %4093 = vmatpush1.xpose.msra.mxu0 0.0
    %4094 = vmatprep.subr.mxu0 0.0
    %4095 = vmatpush1.xpose.msra.mxu0 0.0
    %4096 = vmatprep.subr.mxu0 0.0
    %4097 = vmatpush1.xpose.msra.mxu0 0.0
    %4098 = vmatprep.subr.mxu0 0.0
    %4099 = vmatpush1.xpose.msra.mxu0 0.0
    %4100 = vmatprep.subr.mxu0 0.0
    %4101 = vmatpush1.xpose.msra.mxu0 0.0
    %4102 = vmatprep.subr.mxu0 0.0
    %4103 = vmatpush1.xpose.msra.mxu0 0.0
    %4104 = vmatprep.subr.mxu0 0.0
    %4105 = vmatpush1.xpose.msra.mxu0 0.0
    %4106 = vmatprep.subr.mxu0 0.0
    %4107 = vmatpush1.xpose.msra.mxu0 0.0
    %4108 = vmatprep.subr.mxu0 0.0
    %4109 = vmatpush1.xpose.msra.mxu0 0.0
    %4110 = vmatprep.subr.mxu0 0.0
    %4111 = vmatpush1.xpose.msra.mxu0 0.0
    %4112 = vmatprep.subr.mxu0 0.0
    %4113 = vmatpush1.xpose.msra.mxu0 0.0
    %4114 = vmatprep.subr.mxu0 0.0
    %4115 = vmatpush1.xpose.msra.mxu0 0.0
    %4116 = vmatprep.subr.mxu0 0.0
    %4117 = vmatpush1.xpose.msra.mxu0 0.0
    %4118 = vmatprep.subr.mxu0 0.0
    %4119 = vmatpush1.xpose.msra.mxu0 0.0
    %4120 = vmatprep.subr.mxu0 0.0
    %4121 = vmatpush1.xpose.msra.mxu0 0.0
    %4122 = vmatprep.subr.mxu0 0.0
    %4123 = vmatpush1.xpose.msra.mxu0 0.0
    %4124 = vmatprep.subr.mxu0 0.0
    %4125 = vmatpush1.xpose.msra.mxu0 0.0
    %4126 = vmatprep.subr.mxu0 0.0
    %4127 = vmatpush1.xpose.msra.mxu0 0.0
    %4128 = vmatprep.mubr.f32.mxu0 0.0
    %4129 = vmatmul.mubr.f32.gmra.mrb[0].mxu0 %v4038
    %v4130 = vpop.f32.mrb[0].mxu0
    %v4131 = vadd.f32 0.0, %v4130
    %v4132 = vpop.f32.mrb[0].mxu0
    %4133 = vdwg.mxu0
    %v4135 = vsel %vm3151, %v3807, 0
    %v4138 = vsel %vm3151, %v3835, 0
    %v4141 = vsel %vm3151, %v3836, 0
    %v4144 = vsel %vm3151, %v3837, 0
    %v4147 = vsel %vm3151, %v3838, 0
    %v4150 = vsel %vm3151, %v3839, 0
    %v4153 = vsel %vm3151, %v3840, 0
    %v4156 = vsel %vm3151, %v3841, 0
    %v4159 = vsel %vm3151, %v3842, 0
    %4161 = vmatprep.subr.mxu0 0.0
    %4162 = vmatpush1.xpose.msra.mxu0 %v4138
    %4163 = vmatprep.subr.mxu0 0.0
    %4164 = vmatpush1.xpose.msra.mxu0 %v4141
    %4165 = vmatprep.subr.mxu0 0.0
    %4166 = vmatpush1.xpose.msra.mxu0 %v4144
    %4167 = vmatprep.subr.mxu0 0.0
    %4168 = vmatpush1.xpose.msra.mxu0 %v4147
    %4169 = vmatprep.subr.mxu0 0.0
    %4170 = vmatpush1.xpose.msra.mxu0 %v4150
    %4171 = vmatprep.subr.mxu0 0.0
    %4172 = vmatpush1.xpose.msra.mxu0 %v4153
    %4173 = vmatprep.subr.mxu0 0.0
    %4174 = vmatpush1.xpose.msra.mxu0 %v4156
    %4175 = vmatprep.subr.mxu0 0.0
    %4176 = vmatpush1.xpose.msra.mxu0 %v4159
    %4177 = vmatprep.subr.mxu0 0.0
    %4178 = vmatpush1.xpose.msra.mxu0 0.0
    %4179 = vmatprep.subr.mxu0 0.0
    %4180 = vmatpush1.xpose.msra.mxu0 0.0
    %4181 = vmatprep.subr.mxu0 0.0
    %4182 = vmatpush1.xpose.msra.mxu0 0.0
    %4183 = vmatprep.subr.mxu0 0.0
    %4184 = vmatpush1.xpose.msra.mxu0 0.0
    %4185 = vmatprep.subr.mxu0 0.0
    %4186 = vmatpush1.xpose.msra.mxu0 0.0
    %4187 = vmatprep.subr.mxu0 0.0
    %4188 = vmatpush1.xpose.msra.mxu0 0.0
    %4189 = vmatprep.subr.mxu0 0.0
    %4190 = vmatpush1.xpose.msra.mxu0 0.0
    %4191 = vmatprep.subr.mxu0 0.0
    %4192 = vmatpush1.xpose.msra.mxu0 0.0
    %4193 = vmatprep.subr.mxu0 0.0
    %4194 = vmatpush1.xpose.msra.mxu0 0.0
    %4195 = vmatprep.subr.mxu0 0.0
    %4196 = vmatpush1.xpose.msra.mxu0 0.0
    %4197 = vmatprep.subr.mxu0 0.0
    %4198 = vmatpush1.xpose.msra.mxu0 0.0
    %4199 = vmatprep.subr.mxu0 0.0
    %4200 = vmatpush1.xpose.msra.mxu0 0.0
    %4201 = vmatprep.subr.mxu0 0.0
    %4202 = vmatpush1.xpose.msra.mxu0 0.0
    %4203 = vmatprep.subr.mxu0 0.0
    %4204 = vmatpush1.xpose.msra.mxu0 0.0
    %4205 = vmatprep.subr.mxu0 0.0
    %4206 = vmatpush1.xpose.msra.mxu0 0.0
    %4207 = vmatprep.subr.mxu0 0.0
    %4208 = vmatpush1.xpose.msra.mxu0 0.0
    %4209 = vmatprep.subr.mxu0 0.0
    %4210 = vmatpush1.xpose.msra.mxu0 0.0
    %4211 = vmatprep.subr.mxu0 0.0
    %4212 = vmatpush1.xpose.msra.mxu0 0.0
    %4213 = vmatprep.subr.mxu0 0.0
    %4214 = vmatpush1.xpose.msra.mxu0 0.0
    %4215 = vmatprep.subr.mxu0 0.0
    %4216 = vmatpush1.xpose.msra.mxu0 0.0
    %4217 = vmatprep.subr.mxu0 0.0
    %4218 = vmatpush1.xpose.msra.mxu0 0.0
    %4219 = vmatprep.subr.mxu0 0.0
    %4220 = vmatpush1.xpose.msra.mxu0 0.0
    %4221 = vmatprep.subr.mxu0 0.0
    %4222 = vmatpush1.xpose.msra.mxu0 0.0
    %4223 = vmatprep.subr.mxu0 0.0
    %4224 = vmatpush1.xpose.msra.mxu0 0.0
    %4225 = vmatprep.mubr.f32.mxu0 0.0
    %4226 = vmatmul.mubr.f32.gmra.mrb[0].mxu0 %v4135
    %v4227 = vpop.f32.mrb[0].mxu0
    %v4228 = vadd.f32 0.0, %v4227
    %v4229 = vpop.f32.mrb[0].mxu0
    %4230 = vdwg.mxu0
    %v4231 = vsel %vm2090, %v3937, 0.0
    %v4232 = vsel %vm2090, %v4034, 0.0
    %v4233 = vadd.f32 %v4231, %v4232
    %v4234 = vsel %vm2090, %v4131, 0.0
    %v4235 = vadd.f32 %v4233, %v4234
    %v4236 = vsel %vm2090, %v4228, 0.0
    %v4237 = vadd.f32 %v4235, %v4236
    %v4238 = vld [vmem:[%s3 + $0x18] sm:$0x1]
    %v4239 = vlaneseq
    %v4240 = vshrl.u32 %v4239, 7
    %v4241 = vsub.s32 0, %v4240
    %v4242 = vrot.slane %v4238, %v4241
    %v4243 = vadd.f32 %v4237, %v4242
    %v4244 = vadd.f32 %v2114, %v4243
    %v4245 = vld [vmem:[%s3 + $0x19] sm:$0x1]
    %v4246 = vld [vmem:[%s3 + $0x1a] sm:$0x1]
    %v4247 = vsel %vm2090, %v4244, 0.0
    %4248 = vadd.xlane.f32.xlu0 %v4247
    %v4249 = vpop.xlane.xlu0 %4248
    %v4250 = vmul.f32 %v4249, %v1036
    %v4251 = vsub.f32 %v4244, %v4250
    %v4252 = vmul.f32 %v4251, %v4251
    %v4253 = vsel %vm2090, %v4252, 0.0
    %4254 = vadd.xlane.f32.xlu0 %v4253
    %v4255 = vpop.xlane.xlu0 %4254
    %v4256 = vmul.f32 %v4255, %v1036
    %v4257 = vadd.f32 %v4256, 1e-05
    %v4258 = vrsqrt.pop %v4257
    %v4259 = vmul.f32 %v4251, %v4258
    %v4260 = vlaneseq
    %v4261 = vshrl.u32 %v4260, 7
    %v4262 = vsub.s32 0, %v4261
    %v4263 = vrot.slane %v4245, %v4262
    %v4264 = vmul.f32 %v4259, %v4263
    %v4265 = vlaneseq
    %v4266 = vshrl.u32 %v4265, 7
    %v4267 = vsub.s32 0, %v4266
    %v4268 = vrot.slane %v4246, %v4267
    %v4269 = vadd.f32 %v4264, %v4268
    %s4270 = smul.u32 4, 8
    %s4271 = smul.u32 %s4270, 16
    %s4272 = sshll.u32 %s4271, 4
    %4273 = dma.done [#allocation4], %s4272
    %v4274 = vpack.c.bf16 %v4269, %v4269
    %v4275 = vld [vmem:[#allocation2] sm:$0xff]
    %v4276 = vld [vmem:[#allocation2 + $0x8] sm:$0xff]
    %v4277 = vld [vmem:[#allocation2 + $0x10] sm:$0xff]
    %v4278 = vld [vmem:[#allocation2 + $0x18] sm:$0xff]
    %v4279 = vld [vmem:[#allocation2 + $0x20] sm:$0xff]
    %v4280 = vld [vmem:[#allocation2 + $0x28] sm:$0xff]
    %v4281 = vld [vmem:[#allocation2 + $0x30] sm:$0xff]
    %v4282 = vld [vmem:[#allocation2 + $0x38] sm:$0xff]
    %v4283 = vld [vmem:[#allocation2 + $0x40] sm:$0xff]
    %v4284 = vld [vmem:[#allocation2 + $0x48] sm:$0xff]
    %v4285 = vld [vmem:[#allocation2 + $0x50] sm:$0xff]
    %v4286 = vld [vmem:[#allocation2 + $0x58] sm:$0xff]
    %v4287 = vld [vmem:[#allocation2 + $0x60] sm:$0xff]
    %v4288 = vld [vmem:[#allocation2 + $0x68] sm:$0xff]
    %v4289 = vld [vmem:[#allocation2 + $0x70] sm:$0xff]
    %v4290 = vld [vmem:[#allocation2 + $0x78] sm:$0xff]
    %v4291 = vld [vmem:[#allocation2 + $0x80] sm:$0xff]
    %v4292 = vld [vmem:[#allocation2 + $0x88] sm:$0xff]
    %v4293 = vld [vmem:[#allocation2 + $0x90] sm:$0xff]
    %v4294 = vld [vmem:[#allocation2 + $0x98] sm:$0xff]
    %v4295 = vld [vmem:[#allocation2 + $0xa0] sm:$0xff]
    %v4296 = vld [vmem:[#allocation2 + $0xa8] sm:$0xff]
    %v4297 = vld [vmem:[#allocation2 + $0xb0] sm:$0xff]
    %v4298 = vld [vmem:[#allocation2 + $0xb8] sm:$0xff]
    %v4299 = vld [vmem:[#allocation2 + $0xc0] sm:$0xff]
    %v4300 = vld [vmem:[#allocation2 + $0xc8] sm:$0xff]
    %v4301 = vld [vmem:[#allocation2 + $0xd0] sm:$0xff]
    %v4302 = vld [vmem:[#allocation2 + $0xd8] sm:$0xff]
    %v4303 = vld [vmem:[#allocation2 + $0xe0] sm:$0xff]
    %v4304 = vld [vmem:[#allocation2 + $0xe8] sm:$0xff]
    %v4305 = vld [vmem:[#allocation2 + $0xf0] sm:$0xff]
    %v4306 = vld [vmem:[#allocation2 + $0xf8] sm:$0xff]
    %v4307 = vld [vmem:[#allocation2 + $0x100] sm:$0xff]
    %v4308 = vld [vmem:[#allocation2 + $0x108] sm:$0xff]
    %v4309 = vld [vmem:[#allocation2 + $0x110] sm:$0xff]
    %v4310 = vld [vmem:[#allocation2 + $0x118] sm:$0xff]
    %v4311 = vld [vmem:[#allocation2 + $0x120] sm:$0xff]
    %v4312 = vld [vmem:[#allocation2 + $0x128] sm:$0xff]
    %v4313 = vld [vmem:[#allocation2 + $0x130] sm:$0xff]
    %v4314 = vld [vmem:[#allocation2 + $0x138] sm:$0xff]
    %v4315 = vld [vmem:[#allocation2 + $0x140] sm:$0xff]
    %v4316 = vld [vmem:[#allocation2 + $0x148] sm:$0xff]
    %v4317 = vld [vmem:[#allocation2 + $0x150] sm:$0xff]
    %v4318 = vld [vmem:[#allocation2 + $0x158] sm:$0xff]
    %v4319 = vld [vmem:[#allocation2 + $0x160] sm:$0xff]
    %v4320 = vld [vmem:[#allocation2 + $0x168] sm:$0xff]
    %v4321 = vld [vmem:[#allocation2 + $0x170] sm:$0xff]
    %v4322 = vld [vmem:[#allocation2 + $0x178] sm:$0xff]
    %v4323 = vld [vmem:[#allocation2 + $0x180] sm:$0xff]
    %v4324 = vld [vmem:[#allocation2 + $0x188] sm:$0xff]
    %v4325 = vld [vmem:[#allocation2 + $0x190] sm:$0xff]
    %v4326 = vld [vmem:[#allocation2 + $0x198] sm:$0xff]
    %v4327 = vld [vmem:[#allocation2 + $0x1a0] sm:$0xff]
    %v4328 = vld [vmem:[#allocation2 + $0x1a8] sm:$0xff]
    %v4329 = vld [vmem:[#allocation2 + $0x1b0] sm:$0xff]
    %v4330 = vld [vmem:[#allocation2 + $0x1b8] sm:$0xff]
    %v4331 = vld [vmem:[#allocation2 + $0x1c0] sm:$0xff]
    %v4332 = vld [vmem:[#allocation2 + $0x1c8] sm:$0xff]
    %v4333 = vld [vmem:[#allocation2 + $0x1d0] sm:$0xff]
    %v4334 = vld [vmem:[#allocation2 + $0x1d8] sm:$0xff]
    %v4335 = vld [vmem:[#allocation2 + $0x1e0] sm:$0xff]
    %v4336 = vld [vmem:[#allocation2 + $0x1e8] sm:$0xff]
    %v4337 = vld [vmem:[#allocation2 + $0x1f0] sm:$0xff]
    %v4338 = vld [vmem:[#allocation2 + $0x1f8] sm:$0xff]
    %v4339 = vld [vmem:[%s6] sm:$0xff]
    %v4340 = vld [vmem:[%s6 + $0x8] sm:$0xff]
    %v4343 = vlaneseq
    %v4344 = vshrl.u32 %v4343, 7
    %v4345 = vsub.s32 0, %v4344
    %v4346 = vrot.slane %v4339, %v4345
    %v4347 = vlaneseq
    %v4348 = vshrl.u32 %v4347, 7
    %v4349 = vsub.s32 1, %v4348
    %v4350 = vrot.slane %v4339, %v4349
    %v4351 = vlaneseq
    %v4352 = vshrl.u32 %v4351, 7
    %v4353 = vsub.s32 2, %v4352
    %v4354 = vrot.slane %v4339, %v4353
    %v4355 = vlaneseq
    %v4356 = vshrl.u32 %v4355, 7
    %v4357 = vsub.s32 3, %v4356
    %v4358 = vrot.slane %v4339, %v4357
    %v4359 = vlaneseq
    %v4360 = vshrl.u32 %v4359, 7
    %v4361 = vsub.s32 4, %v4360
    %v4362 = vrot.slane %v4339, %v4361
    %v4363 = vlaneseq
    %v4364 = vshrl.u32 %v4363, 7
    %v4365 = vsub.s32 5, %v4364
    %v4366 = vrot.slane %v4339, %v4365
    %v4367 = vlaneseq
    %v4368 = vshrl.u32 %v4367, 7
    %v4369 = vsub.s32 6, %v4368
    %v4370 = vrot.slane %v4339, %v4369
    %v4371 = vlaneseq
    %v4372 = vshrl.u32 %v4371, 7
    %v4373 = vsub.s32 7, %v4372
    %v4374 = vrot.slane %v4339, %v4373
    %v4375 = vlaneseq
    %v4376 = vshrl.u32 %v4375, 7
    %v4377 = vsub.s32 0, %v4376
    %v4378 = vrot.slane %v4340, %v4377
    %v4379 = vlaneseq
    %v4380 = vshrl.u32 %v4379, 7
    %v4381 = vsub.s32 1, %v4380
    %v4382 = vrot.slane %v4340, %v4381
    %v4383 = vlaneseq
    %v4384 = vshrl.u32 %v4383, 7
    %v4385 = vsub.s32 2, %v4384
    %v4386 = vrot.slane %v4340, %v4385
    %v4387 = vlaneseq
    %v4388 = vshrl.u32 %v4387, 7
    %v4389 = vsub.s32 3, %v4388
    %v4390 = vrot.slane %v4340, %v4389
    %v4391 = vlaneseq
    %v4392 = vshrl.u32 %v4391, 7
    %v4393 = vsub.s32 4, %v4392
    %v4394 = vrot.slane %v4340, %v4393
    %v4395 = vlaneseq
    %v4396 = vshrl.u32 %v4395, 7
    %v4397 = vsub.s32 5, %v4396
    %v4398 = vrot.slane %v4340, %v4397
    %v4399 = vlaneseq
    %v4400 = vshrl.u32 %v4399, 7
    %v4401 = vsub.s32 6, %v4400
    %v4402 = vrot.slane %v4340, %v4401
    %v4403 = vlaneseq
    %v4404 = vshrl.u32 %v4403, 7
    %v4405 = vsub.s32 7, %v4404
    %v4406 = vrot.slane %v4340, %v4405
    %v4424 = vsel %vm1023, %v4274, 0
    %4426 = vmatprep.subr.bf16.mxu0 %v4276
    %4427 = vmatpush1.bf16.msra.mxu0 %v4275
    %4428 = vmatprep.subr.bf16.mxu0 %v4292
    %4429 = vmatpush1.bf16.msra.mxu0 %v4291
    %4430 = vmatprep.subr.bf16.mxu0 %v4308
    %4431 = vmatpush1.bf16.msra.mxu0 %v4307
    %4432 = vmatprep.subr.bf16.mxu0 %v4324
    %4433 = vmatpush1.bf16.msra.mxu0 %v4323
    %4434 = vmatprep.subr.bf16.mxu0 0
    %4435 = vmatpush1.bf16.msra.mxu0 0
    %4436 = vmatprep.subr.bf16.mxu0 0
    %4437 = vmatpush1.bf16.msra.mxu0 0
    %4438 = vmatprep.subr.bf16.mxu0 0
    %4439 = vmatpush1.bf16.msra.mxu0 0
    %4440 = vmatprep.subr.bf16.mxu0 0
    %4441 = vmatpush1.bf16.msra.mxu0 0
    %4442 = vmatprep.subr.bf16.mxu0 0
    %4443 = vmatpush1.bf16.msra.mxu0 0
    %4444 = vmatprep.subr.bf16.mxu0 0
    %4445 = vmatpush1.bf16.msra.mxu0 0
    %4446 = vmatprep.subr.bf16.mxu0 0
    %4447 = vmatpush1.bf16.msra.mxu0 0
    %4448 = vmatprep.subr.bf16.mxu0 0
    %4449 = vmatpush1.bf16.msra.mxu0 0
    %4450 = vmatprep.subr.bf16.mxu0 0
    %4451 = vmatpush1.bf16.msra.mxu0 0
    %4452 = vmatprep.subr.bf16.mxu0 0
    %4453 = vmatpush1.bf16.msra.mxu0 0
    %4454 = vmatprep.subr.bf16.mxu0 0
    %4455 = vmatpush1.bf16.msra.mxu0 0
    %4456 = vmatprep.subr.bf16.mxu0 0
    %4457 = vmatpush1.bf16.msra.mxu0 0
    %4458 = vmatprep.mubr.bf16.mxu0 0
    %4459 = vmatmul.mubr.bf16.gmra.mrb[0].mxu0 %v4424
    %v4460 = vpop.f32.mrb[0].mxu0
    %v4461 = vadd.f32 %v4346, %v4460
    %v4462 = vpop.f32.mrb[0].mxu0
    %v4463 = vadd.f32 %v4350, %v4462
    %v4464 = vpop.f32.mrb[0].mxu0
    %v4465 = vpop.f32.mrb[0].mxu0
    %4466 = vdwg.mxu0
    %4467 = vmatprep.subr.bf16.mxu0 %v4278
    %4468 = vmatpush1.bf16.msra.mxu0 %v4277
    %4469 = vmatprep.subr.bf16.mxu0 %v4294
    %4470 = vmatpush1.bf16.msra.mxu0 %v4293
    %4471 = vmatprep.subr.bf16.mxu0 %v4310
    %4472 = vmatpush1.bf16.msra.mxu0 %v4309
    %4473 = vmatprep.subr.bf16.mxu0 %v4326
    %4474 = vmatpush1.bf16.msra.mxu0 %v4325
    %4475 = vmatprep.subr.bf16.mxu0 0
    %4476 = vmatpush1.bf16.msra.mxu0 0
    %4477 = vmatprep.subr.bf16.mxu0 0
    %4478 = vmatpush1.bf16.msra.mxu0 0
    %4479 = vmatprep.subr.bf16.mxu0 0
    %4480 = vmatpush1.bf16.msra.mxu0 0
    %4481 = vmatprep.subr.bf16.mxu0 0
    %4482 = vmatpush1.bf16.msra.mxu0 0
    %4483 = vmatprep.subr.bf16.mxu0 0
    %4484 = vmatpush1.bf16.msra.mxu0 0
    %4485 = vmatprep.subr.bf16.mxu0 0
    %4486 = vmatpush1.bf16.msra.mxu0 0
    %4487 = vmatprep.subr.bf16.mxu0 0
    %4488 = vmatpush1.bf16.msra.mxu0 0
    %4489 = vmatprep.subr.bf16.mxu0 0
    %4490 = vmatpush1.bf16.msra.mxu0 0
    %4491 = vmatprep.subr.bf16.mxu0 0
    %4492 = vmatpush1.bf16.msra.mxu0 0
    %4493 = vmatprep.subr.bf16.mxu0 0
    %4494 = vmatpush1.bf16.msra.mxu0 0
    %4495 = vmatprep.subr.bf16.mxu0 0
    %4496 = vmatpush1.bf16.msra.mxu0 0
    %4497 = vmatprep.subr.bf16.mxu0 0
    %4498 = vmatpush1.bf16.msra.mxu0 0
    %4499 = vmatprep.mubr.bf16.mxu0 0
    %4500 = vmatmul.mubr.bf16.gmra.mrb[0].mxu0 %v4424
    %v4501 = vpop.f32.mrb[0].mxu0
    %v4502 = vadd.f32 %v4354, %v4501
    %v4503 = vpop.f32.mrb[0].mxu0
    %v4504 = vadd.f32 %v4358, %v4503
    %v4505 = vpop.f32.mrb[0].mxu0
    %v4506 = vpop.f32.mrb[0].mxu0
    %4507 = vdwg.mxu0
    %4508 = vmatprep.subr.bf16.mxu0 %v4280
    %4509 = vmatpush1.bf16.msra.mxu0 %v4279
    %4510 = vmatprep.subr.bf16.mxu0 %v4296
    %4511 = vmatpush1.bf16.msra.mxu0 %v4295
    %4512 = vmatprep.subr.bf16.mxu0 %v4312
    %4513 = vmatpush1.bf16.msra.mxu0 %v4311
    %4514 = vmatprep.subr.bf16.mxu0 %v4328
    %4515 = vmatpush1.bf16.msra.mxu0 %v4327
    %4516 = vmatprep.subr.bf16.mxu0 0
    %4517 = vmatpush1.bf16.msra.mxu0 0
    %4518 = vmatprep.subr.bf16.mxu0 0
    %4519 = vmatpush1.bf16.msra.mxu0 0
    %4520 = vmatprep.subr.bf16.mxu0 0
    %4521 = vmatpush1.bf16.msra.mxu0 0
    %4522 = vmatprep.subr.bf16.mxu0 0
    %4523 = vmatpush1.bf16.msra.mxu0 0
    %4524 = vmatprep.subr.bf16.mxu0 0
    %4525 = vmatpush1.bf16.msra.mxu0 0
    %4526 = vmatprep.subr.bf16.mxu0 0
    %4527 = vmatpush1.bf16.msra.mxu0 0
    %4528 = vmatprep.subr.bf16.mxu0 0
    %4529 = vmatpush1.bf16.msra.mxu0 0
    %4530 = vmatprep.subr.bf16.mxu0 0
    %4531 = vmatpush1.bf16.msra.mxu0 0
    %4532 = vmatprep.subr.bf16.mxu0 0
    %4533 = vmatpush1.bf16.msra.mxu0 0
    %4534 = vmatprep.subr.bf16.mxu0 0
    %4535 = vmatpush1.bf16.msra.mxu0 0
    %4536 = vmatprep.subr.bf16.mxu0 0
    %4537 = vmatpush1.bf16.msra.mxu0 0
    %4538 = vmatprep.subr.bf16.mxu0 0
    %4539 = vmatpush1.bf16.msra.mxu0 0
    %4540 = vmatprep.mubr.bf16.mxu0 0
    %4541 = vmatmul.mubr.bf16.gmra.mrb[0].mxu0 %v4424
    %v4542 = vpop.f32.mrb[0].mxu0
    %v4543 = vadd.f32 %v4362, %v4542
    %v4544 = vpop.f32.mrb[0].mxu0
    %v4545 = vadd.f32 %v4366, %v4544
    %v4546 = vpop.f32.mrb[0].mxu0
    %v4547 = vpop.f32.mrb[0].mxu0
    %4548 = vdwg.mxu0
    %4549 = vmatprep.subr.bf16.mxu0 %v4282
    %4550 = vmatpush1.bf16.msra.mxu0 %v4281
    %4551 = vmatprep.subr.bf16.mxu0 %v4298
    %4552 = vmatpush1.bf16.msra.mxu0 %v4297
    %4553 = vmatprep.subr.bf16.mxu0 %v4314
    %4554 = vmatpush1.bf16.msra.mxu0 %v4313
    %4555 = vmatprep.subr.bf16.mxu0 %v4330
    %4556 = vmatpush1.bf16.msra.mxu0 %v4329
    %4557 = vmatprep.subr.bf16.mxu0 0
    %4558 = vmatpush1.bf16.msra.mxu0 0
    %4559 = vmatprep.subr.bf16.mxu0 0
    %4560 = vmatpush1.bf16.msra.mxu0 0
    %4561 = vmatprep.subr.bf16.mxu0 0
    %4562 = vmatpush1.bf16.msra.mxu0 0
    %4563 = vmatprep.subr.bf16.mxu0 0
    %4564 = vmatpush1.bf16.msra.mxu0 0
    %4565 = vmatprep.subr.bf16.mxu0 0
    %4566 = vmatpush1.bf16.msra.mxu0 0
    %4567 = vmatprep.subr.bf16.mxu0 0
    %4568 = vmatpush1.bf16.msra.mxu0 0
    %4569 = vmatprep.subr.bf16.mxu0 0
    %4570 = vmatpush1.bf16.msra.mxu0 0
    %4571 = vmatprep.subr.bf16.mxu0 0
    %4572 = vmatpush1.bf16.msra.mxu0 0
    %4573 = vmatprep.subr.bf16.mxu0 0
    %4574 = vmatpush1.bf16.msra.mxu0 0
    %4575 = vmatprep.subr.bf16.mxu0 0
    %4576 = vmatpush1.bf16.msra.mxu0 0
    %4577 = vmatprep.subr.bf16.mxu0 0
    %4578 = vmatpush1.bf16.msra.mxu0 0
    %4579 = vmatprep.subr.bf16.mxu0 0
    %4580 = vmatpush1.bf16.msra.mxu0 0
    %4581 = vmatprep.mubr.bf16.mxu0 0
    %4582 = vmatmul.mubr.bf16.gmra.mrb[0].mxu0 %v4424
    %v4583 = vpop.f32.mrb[0].mxu0
    %v4584 = vadd.f32 %v4370, %v4583
    %v4585 = vpop.f32.mrb[0].mxu0
    %v4586 = vadd.f32 %v4374, %v4585
    %v4587 = vpop.f32.mrb[0].mxu0
    %v4588 = vpop.f32.mrb[0].mxu0
    %4589 = vdwg.mxu0
    %4590 = vmatprep.subr.bf16.mxu0 %v4284
    %4591 = vmatpush1.bf16.msra.mxu0 %v4283
    %4592 = vmatprep.subr.bf16.mxu0 %v4300
    %4593 = vmatpush1.bf16.msra.mxu0 %v4299
    %4594 = vmatprep.subr.bf16.mxu0 %v4316
    %4595 = vmatpush1.bf16.msra.mxu0 %v4315
    %4596 = vmatprep.subr.bf16.mxu0 %v4332
    %4597 = vmatpush1.bf16.msra.mxu0 %v4331
    %4598 = vmatprep.subr.bf16.mxu0 0
    %4599 = vmatpush1.bf16.msra.mxu0 0
    %4600 = vmatprep.subr.bf16.mxu0 0
    %4601 = vmatpush1.bf16.msra.mxu0 0
    %4602 = vmatprep.subr.bf16.mxu0 0
    %4603 = vmatpush1.bf16.msra.mxu0 0
    %4604 = vmatprep.subr.bf16.mxu0 0
    %4605 = vmatpush1.bf16.msra.mxu0 0
    %4606 = vmatprep.subr.bf16.mxu0 0
    %4607 = vmatpush1.bf16.msra.mxu0 0
    %4608 = vmatprep.subr.bf16.mxu0 0
    %4609 = vmatpush1.bf16.msra.mxu0 0
    %4610 = vmatprep.subr.bf16.mxu0 0
    %4611 = vmatpush1.bf16.msra.mxu0 0
    %4612 = vmatprep.subr.bf16.mxu0 0
    %4613 = vmatpush1.bf16.msra.mxu0 0
    %4614 = vmatprep.subr.bf16.mxu0 0
    %4615 = vmatpush1.bf16.msra.mxu0 0
    %4616 = vmatprep.subr.bf16.mxu0 0
    %4617 = vmatpush1.bf16.msra.mxu0 0
    %4618 = vmatprep.subr.bf16.mxu0 0
    %4619 = vmatpush1.bf16.msra.mxu0 0
    %4620 = vmatprep.subr.bf16.mxu0 0
    %4621 = vmatpush1.bf16.msra.mxu0 0
    %4622 = vmatprep.mubr.bf16.mxu0 0
    %4623 = vmatmul.mubr.bf16.gmra.mrb[0].mxu0 %v4424
    %v4624 = vpop.f32.mrb[0].mxu0
    %v4625 = vadd.f32 %v4378, %v4624
    %v4626 = vpop.f32.mrb[0].mxu0
    %v4627 = vadd.f32 %v4382, %v4626
    %v4628 = vpop.f32.mrb[0].mxu0
    %v4629 = vpop.f32.mrb[0].mxu0
    %4630 = vdwg.mxu0
    %4631 = vmatprep.subr.bf16.mxu0 %v4286
    %4632 = vmatpush1.bf16.msra.mxu0 %v4285
    %4633 = vmatprep.subr.bf16.mxu0 %v4302
    %4634 = vmatpush1.bf16.msra.mxu0 %v4301
    %4635 = vmatprep.subr.bf16.mxu0 %v4318
    %4636 = vmatpush1.bf16.msra.mxu0 %v4317
    %4637 = vmatprep.subr.bf16.mxu0 %v4334
    %4638 = vmatpush1.bf16.msra.mxu0 %v4333
    %4639 = vmatprep.subr.bf16.mxu0 0
    %4640 = vmatpush1.bf16.msra.mxu0 0
    %4641 = vmatprep.subr.bf16.mxu0 0
    %4642 = vmatpush1.bf16.msra.mxu0 0
    %4643 = vmatprep.subr.bf16.mxu0 0
    %4644 = vmatpush1.bf16.msra.mxu0 0
    %4645 = vmatprep.subr.bf16.mxu0 0
    %4646 = vmatpush1.bf16.msra.mxu0 0
    %4647 = vmatprep.subr.bf16.mxu0 0
    %4648 = vmatpush1.bf16.msra.mxu0 0
    %4649 = vmatprep.subr.bf16.mxu0 0
    %4650 = vmatpush1.bf16.msra.mxu0 0
    %4651 = vmatprep.subr.bf16.mxu0 0
    %4652 = vmatpush1.bf16.msra.mxu0 0
    %4653 = vmatprep.subr.bf16.mxu0 0
    %4654 = vmatpush1.bf16.msra.mxu0 0
    %4655 = vmatprep.subr.bf16.mxu0 0
    %4656 = vmatpush1.bf16.msra.mxu0 0
    %4657 = vmatprep.subr.bf16.mxu0 0
    %4658 = vmatpush1.bf16.msra.mxu0 0
    %4659 = vmatprep.subr.bf16.mxu0 0
    %4660 = vmatpush1.bf16.msra.mxu0 0
    %4661 = vmatprep.subr.bf16.mxu0 0
    %4662 = vmatpush1.bf16.msra.mxu0 0
    %4663 = vmatprep.mubr.bf16.mxu0 0
    %4664 = vmatmul.mubr.bf16.gmra.mrb[0].mxu0 %v4424
    %v4665 = vpop.f32.mrb[0].mxu0
    %v4666 = vadd.f32 %v4386, %v4665
    %v4667 = vpop.f32.mrb[0].mxu0
    %v4668 = vadd.f32 %v4390, %v4667
    %v4669 = vpop.f32.mrb[0].mxu0
    %v4670 = vpop.f32.mrb[0].mxu0
    %4671 = vdwg.mxu0
    %4672 = vmatprep.subr.bf16.mxu0 %v4288
    %4673 = vmatpush1.bf16.msra.mxu0 %v4287
    %4674 = vmatprep.subr.bf16.mxu0 %v4304
    %4675 = vmatpush1.bf16.msra.mxu0 %v4303
    %4676 = vmatprep.subr.bf16.mxu0 %v4320
    %4677 = vmatpush1.bf16.msra.mxu0 %v4319
    %4678 = vmatprep.subr.bf16.mxu0 %v4336
    %4679 = vmatpush1.bf16.msra.mxu0 %v4335
    %4680 = vmatprep.subr.bf16.mxu0 0
    %4681 = vmatpush1.bf16.msra.mxu0 0
    %4682 = vmatprep.subr.bf16.mxu0 0
    %4683 = vmatpush1.bf16.msra.mxu0 0
    %4684 = vmatprep.subr.bf16.mxu0 0
    %4685 = vmatpush1.bf16.msra.mxu0 0
    %4686 = vmatprep.subr.bf16.mxu0 0
    %4687 = vmatpush1.bf16.msra.mxu0 0
    %4688 = vmatprep.subr.bf16.mxu0 0
    %4689 = vmatpush1.bf16.msra.mxu0 0
    %4690 = vmatprep.subr.bf16.mxu0 0
    %4691 = vmatpush1.bf16.msra.mxu0 0
    %4692 = vmatprep.subr.bf16.mxu0 0
    %4693 = vmatpush1.bf16.msra.mxu0 0
    %4694 = vmatprep.subr.bf16.mxu0 0
    %4695 = vmatpush1.bf16.msra.mxu0 0
    %4696 = vmatprep.subr.bf16.mxu0 0
    %4697 = vmatpush1.bf16.msra.mxu0 0
    %4698 = vmatprep.subr.bf16.mxu0 0
    %4699 = vmatpush1.bf16.msra.mxu0 0
    %4700 = vmatprep.subr.bf16.mxu0 0
    %4701 = vmatpush1.bf16.msra.mxu0 0
    %4702 = vmatprep.subr.bf16.mxu0 0
    %4703 = vmatpush1.bf16.msra.mxu0 0
    %4704 = vmatprep.mubr.bf16.mxu0 0
    %4705 = vmatmul.mubr.bf16.gmra.mrb[0].mxu0 %v4424
    %v4706 = vpop.f32.mrb[0].mxu0
    %v4707 = vadd.f32 %v4394, %v4706
    %v4708 = vpop.f32.mrb[0].mxu0
    %v4709 = vadd.f32 %v4398, %v4708
    %v4710 = vpop.f32.mrb[0].mxu0
    %v4711 = vpop.f32.mrb[0].mxu0
    %4712 = vdwg.mxu0
    %4713 = vmatprep.subr.bf16.mxu0 %v4290
    %4714 = vmatpush1.bf16.msra.mxu0 %v4289
    %4715 = vmatprep.subr.bf16.mxu0 %v4306
    %4716 = vmatpush1.bf16.msra.mxu0 %v4305
    %4717 = vmatprep.subr.bf16.mxu0 %v4322
    %4718 = vmatpush1.bf16.msra.mxu0 %v4321
    %4719 = vmatprep.subr.bf16.mxu0 %v4338
    %4720 = vmatpush1.bf16.msra.mxu0 %v4337
    %4721 = vmatprep.subr.bf16.mxu0 0
    %4722 = vmatpush1.bf16.msra.mxu0 0
    %4723 = vmatprep.subr.bf16.mxu0 0
    %4724 = vmatpush1.bf16.msra.mxu0 0
    %4725 = vmatprep.subr.bf16.mxu0 0
    %4726 = vmatpush1.bf16.msra.mxu0 0
    %4727 = vmatprep.subr.bf16.mxu0 0
    %4728 = vmatpush1.bf16.msra.mxu0 0
    %4729 = vmatprep.subr.bf16.mxu0 0
    %4730 = vmatpush1.bf16.msra.mxu0 0
    %4731 = vmatprep.subr.bf16.mxu0 0
    %4732 = vmatpush1.bf16.msra.mxu0 0
    %4733 = vmatprep.subr.bf16.mxu0 0
    %4734 = vmatpush1.bf16.msra.mxu0 0
    %4735 = vmatprep.subr.bf16.mxu0 0
    %4736 = vmatpush1.bf16.msra.mxu0 0
    %4737 = vmatprep.subr.bf16.mxu0 0
    %4738 = vmatpush1.bf16.msra.mxu0 0
    %4739 = vmatprep.subr.bf16.mxu0 0
    %4740 = vmatpush1.bf16.msra.mxu0 0
    %4741 = vmatprep.subr.bf16.mxu0 0
    %4742 = vmatpush1.bf16.msra.mxu0 0
    %4743 = vmatprep.subr.bf16.mxu0 0
    %4744 = vmatpush1.bf16.msra.mxu0 0
    %4745 = vmatprep.mubr.bf16.mxu0 0
    %4746 = vmatmul.mubr.bf16.gmra.mrb[0].mxu0 %v4424
    %v4747 = vpop.f32.mrb[0].mxu0
    %v4748 = vadd.f32 %v4402, %v4747
    %v4749 = vpop.f32.mrb[0].mxu0
    %v4750 = vadd.f32 %v4406, %v4749
    %v4751 = vpop.f32.mrb[0].mxu0
    %v4752 = vpop.f32.mrb[0].mxu0
    %4753 = vdwg.mxu0
    %v4754 = vmax.f32 %v4461, 0.0
    %v4755 = vmax.f32 %v4463, 0.0
    %v4756 = vmax.f32 %v4502, 0.0
    %v4757 = vmax.f32 %v4504, 0.0
    %v4758 = vmax.f32 %v4543, 0.0
    %v4759 = vmax.f32 %v4545, 0.0
    %v4760 = vmax.f32 %v4584, 0.0
    %v4761 = vmax.f32 %v4586, 0.0
    %v4762 = vmax.f32 %v4625, 0.0
    %v4763 = vmax.f32 %v4627, 0.0
    %v4764 = vmax.f32 %v4666, 0.0
    %v4765 = vmax.f32 %v4668, 0.0
    %v4766 = vmax.f32 %v4707, 0.0
    %v4767 = vmax.f32 %v4709, 0.0
    %v4768 = vmax.f32 %v4748, 0.0
    %v4769 = vmax.f32 %v4750, 0.0
    %s4770 = smul.u32 4, 256
    %s4771 = smul.u32 %s4770, 1
    %s4772 = sshll.u32 %s4771, 4
    %4773 = dma.done %s590, %s4772
    %v4774 = vpack.c.bf16 %v4754, %v4754
    %v4775 = vpack.c.bf16 %v4755, %v4755
    %v4776 = vpack.c.bf16 %v4756, %v4756
    %v4777 = vpack.c.bf16 %v4757, %v4757
    %v4778 = vpack.c.bf16 %v4758, %v4758
    %v4779 = vpack.c.bf16 %v4759, %v4759
    %v4780 = vpack.c.bf16 %v4760, %v4760
    %v4781 = vpack.c.bf16 %v4761, %v4761
    %v4782 = vpack.c.bf16 %v4762, %v4762
    %v4783 = vpack.c.bf16 %v4763, %v4763
    %v4784 = vpack.c.bf16 %v4764, %v4764
    %v4785 = vpack.c.bf16 %v4765, %v4765
    %v4786 = vpack.c.bf16 %v4766, %v4766
    %v4787 = vpack.c.bf16 %v4767, %v4767
    %v4788 = vpack.c.bf16 %v4768, %v4768
    %v4789 = vpack.c.bf16 %v4769, %v4769
    %v4790 = vld [vmem:[#allocation3] sm:$0xff]
    %v4791 = vld [vmem:[#allocation3 + $0x8] sm:$0xff]
    %v4792 = vld [vmem:[#allocation3 + $0x10] sm:$0xff]
    %v4793 = vld [vmem:[#allocation3 + $0x18] sm:$0xff]
    %v4794 = vld [vmem:[#allocation3 + $0x20] sm:$0xff]
    %v4795 = vld [vmem:[#allocation3 + $0x28] sm:$0xff]
    %v4796 = vld [vmem:[#allocation3 + $0x30] sm:$0xff]
    %v4797 = vld [vmem:[#allocation3 + $0x38] sm:$0xff]
    %v4798 = vld [vmem:[#allocation3 + $0x40] sm:$0xff]
    %v4799 = vld [vmem:[#allocation3 + $0x48] sm:$0xff]
    %v4800 = vld [vmem:[#allocation3 + $0x50] sm:$0xff]
    %v4801 = vld [vmem:[#allocation3 + $0x58] sm:$0xff]
    %v4802 = vld [vmem:[#allocation3 + $0x60] sm:$0xff]
    %v4803 = vld [vmem:[#allocation3 + $0x68] sm:$0xff]
    %v4804 = vld [vmem:[#allocation3 + $0x70] sm:$0xff]
    %v4805 = vld [vmem:[#allocation3 + $0x78] sm:$0xff]
    %v4806 = vld [vmem:[#allocation3 + $0x80] sm:$0xff]
    %v4807 = vld [vmem:[#allocation3 + $0x88] sm:$0xff]
    %v4808 = vld [vmem:[#allocation3 + $0x90] sm:$0xff]
    %v4809 = vld [vmem:[#allocation3 + $0x98] sm:$0xff]
    %v4810 = vld [vmem:[#allocation3 + $0xa0] sm:$0xff]
    %v4811 = vld [vmem:[#allocation3 + $0xa8] sm:$0xff]
    %v4812 = vld [vmem:[#allocation3 + $0xb0] sm:$0xff]
    %v4813 = vld [vmem:[#allocation3 + $0xb8] sm:$0xff]
    %v4814 = vld [vmem:[#allocation3 + $0xc0] sm:$0xff]
    %v4815 = vld [vmem:[#allocation3 + $0xc8] sm:$0xff]
    %v4816 = vld [vmem:[#allocation3 + $0xd0] sm:$0xff]
    %v4817 = vld [vmem:[#allocation3 + $0xd8] sm:$0xff]
    %v4818 = vld [vmem:[#allocation3 + $0xe0] sm:$0xff]
    %v4819 = vld [vmem:[#allocation3 + $0xe8] sm:$0xff]
    %v4820 = vld [vmem:[#allocation3 + $0xf0] sm:$0xff]
    %v4821 = vld [vmem:[#allocation3 + $0xf8] sm:$0xff]
    %v4822 = vld [vmem:[#allocation3 + $0x100] sm:$0xff]
    %v4823 = vld [vmem:[#allocation3 + $0x108] sm:$0xff]
    %v4824 = vld [vmem:[#allocation3 + $0x110] sm:$0xff]
    %v4825 = vld [vmem:[#allocation3 + $0x118] sm:$0xff]
    %v4826 = vld [vmem:[#allocation3 + $0x120] sm:$0xff]
    %v4827 = vld [vmem:[#allocation3 + $0x128] sm:$0xff]
    %v4828 = vld [vmem:[#allocation3 + $0x130] sm:$0xff]
    %v4829 = vld [vmem:[#allocation3 + $0x138] sm:$0xff]
    %v4830 = vld [vmem:[#allocation3 + $0x140] sm:$0xff]
    %v4831 = vld [vmem:[#allocation3 + $0x148] sm:$0xff]
    %v4832 = vld [vmem:[#allocation3 + $0x150] sm:$0xff]
    %v4833 = vld [vmem:[#allocation3 + $0x158] sm:$0xff]
    %v4834 = vld [vmem:[#allocation3 + $0x160] sm:$0xff]
    %v4835 = vld [vmem:[#allocation3 + $0x168] sm:$0xff]
    %v4836 = vld [vmem:[#allocation3 + $0x170] sm:$0xff]
    %v4837 = vld [vmem:[#allocation3 + $0x178] sm:$0xff]
    %v4838 = vld [vmem:[#allocation3 + $0x180] sm:$0xff]
    %v4839 = vld [vmem:[#allocation3 + $0x188] sm:$0xff]
    %v4840 = vld [vmem:[#allocation3 + $0x190] sm:$0xff]
    %v4841 = vld [vmem:[#allocation3 + $0x198] sm:$0xff]
    %v4842 = vld [vmem:[#allocation3 + $0x1a0] sm:$0xff]
    %v4843 = vld [vmem:[#allocation3 + $0x1a8] sm:$0xff]
    %v4844 = vld [vmem:[#allocation3 + $0x1b0] sm:$0xff]
    %v4845 = vld [vmem:[#allocation3 + $0x1b8] sm:$0xff]
    %v4846 = vld [vmem:[#allocation3 + $0x1c0] sm:$0xff]
    %v4847 = vld [vmem:[#allocation3 + $0x1c8] sm:$0xff]
    %v4848 = vld [vmem:[#allocation3 + $0x1d0] sm:$0xff]
    %v4849 = vld [vmem:[#allocation3 + $0x1d8] sm:$0xff]
    %v4850 = vld [vmem:[#allocation3 + $0x1e0] sm:$0xff]
    %v4851 = vld [vmem:[#allocation3 + $0x1e8] sm:$0xff]
    %v4852 = vld [vmem:[#allocation3 + $0x1f0] sm:$0xff]
    %v4853 = vld [vmem:[#allocation3 + $0x1f8] sm:$0xff]
    %v4854 = vld [vmem:[#allocation3 + $0x200] sm:$0xff]
    %v4855 = vld [vmem:[#allocation3 + $0x208] sm:$0xff]
    %v4856 = vld [vmem:[#allocation3 + $0x210] sm:$0xff]
    %v4857 = vld [vmem:[#allocation3 + $0x218] sm:$0xff]
    %v4858 = vld [vmem:[#allocation3 + $0x220] sm:$0xff]
    %v4859 = vld [vmem:[#allocation3 + $0x228] sm:$0xff]
    %v4860 = vld [vmem:[#allocation3 + $0x230] sm:$0xff]
    %v4861 = vld [vmem:[#allocation3 + $0x238] sm:$0xff]
    %v4862 = vld [vmem:[#allocation3 + $0x240] sm:$0xff]
    %v4863 = vld [vmem:[#allocation3 + $0x248] sm:$0xff]
    %v4864 = vld [vmem:[#allocation3 + $0x250] sm:$0xff]
    %v4865 = vld [vmem:[#allocation3 + $0x258] sm:$0xff]
    %v4866 = vld [vmem:[#allocation3 + $0x260] sm:$0xff]
    %v4867 = vld [vmem:[#allocation3 + $0x268] sm:$0xff]
    %v4868 = vld [vmem:[#allocation3 + $0x270] sm:$0xff]
    %v4869 = vld [vmem:[#allocation3 + $0x278] sm:$0xff]
    %v4870 = vld [vmem:[#allocation3 + $0x280] sm:$0xff]
    %v4871 = vld [vmem:[#allocation3 + $0x288] sm:$0xff]
    %v4872 = vld [vmem:[#allocation3 + $0x290] sm:$0xff]
    %v4873 = vld [vmem:[#allocation3 + $0x298] sm:$0xff]
    %v4874 = vld [vmem:[#allocation3 + $0x2a0] sm:$0xff]
    %v4875 = vld [vmem:[#allocation3 + $0x2a8] sm:$0xff]
    %v4876 = vld [vmem:[#allocation3 + $0x2b0] sm:$0xff]
    %v4877 = vld [vmem:[#allocation3 + $0x2b8] sm:$0xff]
    %v4878 = vld [vmem:[#allocation3 + $0x2c0] sm:$0xff]
    %v4879 = vld [vmem:[#allocation3 + $0x2c8] sm:$0xff]
    %v4880 = vld [vmem:[#allocation3 + $0x2d0] sm:$0xff]
    %v4881 = vld [vmem:[#allocation3 + $0x2d8] sm:$0xff]
    %v4882 = vld [vmem:[#allocation3 + $0x2e0] sm:$0xff]
    %v4883 = vld [vmem:[#allocation3 + $0x2e8] sm:$0xff]
    %v4884 = vld [vmem:[#allocation3 + $0x2f0] sm:$0xff]
    %v4885 = vld [vmem:[#allocation3 + $0x2f8] sm:$0xff]
    %v4886 = vld [vmem:[#allocation3 + $0x300] sm:$0xff]
    %v4887 = vld [vmem:[#allocation3 + $0x308] sm:$0xff]
    %v4888 = vld [vmem:[#allocation3 + $0x310] sm:$0xff]
    %v4889 = vld [vmem:[#allocation3 + $0x318] sm:$0xff]
    %v4890 = vld [vmem:[#allocation3 + $0x320] sm:$0xff]
    %v4891 = vld [vmem:[#allocation3 + $0x328] sm:$0xff]
    %v4892 = vld [vmem:[#allocation3 + $0x330] sm:$0xff]
    %v4893 = vld [vmem:[#allocation3 + $0x338] sm:$0xff]
    %v4894 = vld [vmem:[#allocation3 + $0x340] sm:$0xff]
    %v4895 = vld [vmem:[#allocation3 + $0x348] sm:$0xff]
    %v4896 = vld [vmem:[#allocation3 + $0x350] sm:$0xff]
    %v4897 = vld [vmem:[#allocation3 + $0x358] sm:$0xff]
    %v4898 = vld [vmem:[#allocation3 + $0x360] sm:$0xff]
    %v4899 = vld [vmem:[#allocation3 + $0x368] sm:$0xff]
    %v4900 = vld [vmem:[#allocation3 + $0x370] sm:$0xff]
    %v4901 = vld [vmem:[#allocation3 + $0x378] sm:$0xff]
    %v4902 = vld [vmem:[#allocation3 + $0x380] sm:$0xff]
    %v4903 = vld [vmem:[#allocation3 + $0x388] sm:$0xff]
    %v4904 = vld [vmem:[#allocation3 + $0x390] sm:$0xff]
    %v4905 = vld [vmem:[#allocation3 + $0x398] sm:$0xff]
    %v4906 = vld [vmem:[#allocation3 + $0x3a0] sm:$0xff]
    %v4907 = vld [vmem:[#allocation3 + $0x3a8] sm:$0xff]
    %v4908 = vld [vmem:[#allocation3 + $0x3b0] sm:$0xff]
    %v4909 = vld [vmem:[#allocation3 + $0x3b8] sm:$0xff]
    %v4910 = vld [vmem:[#allocation3 + $0x3c0] sm:$0xff]
    %v4911 = vld [vmem:[#allocation3 + $0x3c8] sm:$0xff]
    %v4912 = vld [vmem:[#allocation3 + $0x3d0] sm:$0xff]
    %v4913 = vld [vmem:[#allocation3 + $0x3d8] sm:$0xff]
    %v4914 = vld [vmem:[#allocation3 + $0x3e0] sm:$0xff]
    %v4915 = vld [vmem:[#allocation3 + $0x3e8] sm:$0xff]
    %v4916 = vld [vmem:[#allocation3 + $0x3f0] sm:$0xff]
    %v4917 = vld [vmem:[#allocation3 + $0x3f8] sm:$0xff]
    %v4918 = vld [vmem:[%s3 + $0x1d] sm:$0x1]
    %v4919 = vlaneseq
    %v4920 = vshrl.u32 %v4919, 7
    %v4921 = vsub.s32 0, %v4920
    %v4922 = vrot.slane %v4918, %v4921
    %4923 = vmatprep.subr.bf16.mxu0 0
    %4924 = vmatpush1.bf16.msra.mxu0 %v4790
    %4925 = vmatprep.subr.bf16.mxu0 0
    %4926 = vmatpush1.bf16.msra.mxu0 %v4791
    %4927 = vmatprep.subr.bf16.mxu0 0
    %4928 = vmatpush1.bf16.msra.mxu0 %v4792
    %4929 = vmatprep.subr.bf16.mxu0 0
    %4930 = vmatpush1.bf16.msra.mxu0 %v4793
    %4931 = vmatprep.subr.bf16.mxu0 0
    %4932 = vmatpush1.bf16.msra.mxu0 %v4794
    %4933 = vmatprep.subr.bf16.mxu0 0
    %4934 = vmatpush1.bf16.msra.mxu0 %v4795
    %4935 = vmatprep.subr.bf16.mxu0 0
    %4936 = vmatpush1.bf16.msra.mxu0 %v4796
    %4937 = vmatprep.subr.bf16.mxu0 0
    %4938 = vmatpush1.bf16.msra.mxu0 %v4797
    %4939 = vmatprep.subr.bf16.mxu0 0
    %4940 = vmatpush1.bf16.msra.mxu0 %v4798
    %4941 = vmatprep.subr.bf16.mxu0 0
    %4942 = vmatpush1.bf16.msra.mxu0 %v4799
    %4943 = vmatprep.subr.bf16.mxu0 0
    %4944 = vmatpush1.bf16.msra.mxu0 %v4800
    %4945 = vmatprep.subr.bf16.mxu0 0
    %4946 = vmatpush1.bf16.msra.mxu0 %v4801
    %4947 = vmatprep.subr.bf16.mxu0 0
    %4948 = vmatpush1.bf16.msra.mxu0 %v4802
    %4949 = vmatprep.subr.bf16.mxu0 0
    %4950 = vmatpush1.bf16.msra.mxu0 %v4803
    %4951 = vmatprep.subr.bf16.mxu0 0
    %4952 = vmatpush1.bf16.msra.mxu0 %v4804
    %4953 = vmatprep.subr.bf16.mxu0 0
    %4954 = vmatpush1.bf16.msra.mxu0 %v4805
    %4955 = vmatprep.mubr.bf16.mxu0 %v4775
    %4956 = vmatmul.mubr.bf16.gmra.mrb[0].mxu0 %v4774
    %v4957 = vpop.f32.mrb[0].mxu0
    %v4958 = vadd.f32 %v4922, %v4957
    %v4959 = vpop.f32.mrb[0].mxu0
    %v4960 = vpop.f32.mrb[0].mxu0
    %v4961 = vpop.f32.mrb[0].mxu0
    %4962 = vdwg.mxu0
    %4963 = vmatprep.subr.bf16.mxu0 0
    %4964 = vmatpush1.bf16.msra.mxu0 %v4806
    %4965 = vmatprep.subr.bf16.mxu0 0
    %4966 = vmatpush1.bf16.msra.mxu0 %v4807
    %4967 = vmatprep.subr.bf16.mxu0 0
    %4968 = vmatpush1.bf16.msra.mxu0 %v4808
    %4969 = vmatprep.subr.bf16.mxu0 0
    %4970 = vmatpush1.bf16.msra.mxu0 %v4809
    %4971 = vmatprep.subr.bf16.mxu0 0
    %4972 = vmatpush1.bf16.msra.mxu0 %v4810
    %4973 = vmatprep.subr.bf16.mxu0 0
    %4974 = vmatpush1.bf16.msra.mxu0 %v4811
    %4975 = vmatprep.subr.bf16.mxu0 0
    %4976 = vmatpush1.bf16.msra.mxu0 %v4812
    %4977 = vmatprep.subr.bf16.mxu0 0
    %4978 = vmatpush1.bf16.msra.mxu0 %v4813
    %4979 = vmatprep.subr.bf16.mxu0 0
    %4980 = vmatpush1.bf16.msra.mxu0 %v4814
    %4981 = vmatprep.subr.bf16.mxu0 0
    %4982 = vmatpush1.bf16.msra.mxu0 %v4815
    %4983 = vmatprep.subr.bf16.mxu0 0
    %4984 = vmatpush1.bf16.msra.mxu0 %v4816
    %4985 = vmatprep.subr.bf16.mxu0 0
    %4986 = vmatpush1.bf16.msra.mxu0 %v4817
    %4987 = vmatprep.subr.bf16.mxu0 0
    %4988 = vmatpush1.bf16.msra.mxu0 %v4818
    %4989 = vmatprep.subr.bf16.mxu0 0
    %4990 = vmatpush1.bf16.msra.mxu0 %v4819
    %4991 = vmatprep.subr.bf16.mxu0 0
    %4992 = vmatpush1.bf16.msra.mxu0 %v4820
    %4993 = vmatprep.subr.bf16.mxu0 0
    %4994 = vmatpush1.bf16.msra.mxu0 %v4821
    %4995 = vmatprep.mubr.bf16.mxu0 %v4777
    %4996 = vmatmul.mubr.bf16.gmra.mrb[0].mxu0 %v4776
    %v4997 = vpop.f32.mrb[0].mxu0
    %v4998 = vadd.f32 %v4958, %v4997
    %v4999 = vpop.f32.mrb[0].mxu0
    %v5000 = vpop.f32.mrb[0].mxu0
    %v5001 = vpop.f32.mrb[0].mxu0
    %5002 = vdwg.mxu0
    %5003 = vmatprep.subr.bf16.mxu0 0
    %5004 = vmatpush1.bf16.msra.mxu0 %v4822
    %5005 = vmatprep.subr.bf16.mxu0 0
    %5006 = vmatpush1.bf16.msra.mxu0 %v4823
    %5007 = vmatprep.subr.bf16.mxu0 0
    %5008 = vmatpush1.bf16.msra.mxu0 %v4824
    %5009 = vmatprep.subr.bf16.mxu0 0
    %5010 = vmatpush1.bf16.msra.mxu0 %v4825
    %5011 = vmatprep.subr.bf16.mxu0 0
    %5012 = vmatpush1.bf16.msra.mxu0 %v4826
    %5013 = vmatprep.subr.bf16.mxu0 0
    %5014 = vmatpush1.bf16.msra.mxu0 %v4827
    %5015 = vmatprep.subr.bf16.mxu0 0
    %5016 = vmatpush1.bf16.msra.mxu0 %v4828
    %5017 = vmatprep.subr.bf16.mxu0 0
    %5018 = vmatpush1.bf16.msra.mxu0 %v4829
    %5019 = vmatprep.subr.bf16.mxu0 0
    %5020 = vmatpush1.bf16.msra.mxu0 %v4830
    %5021 = vmatprep.subr.bf16.mxu0 0
    %5022 = vmatpush1.bf16.msra.mxu0 %v4831
    %5023 = vmatprep.subr.bf16.mxu0 0
    %5024 = vmatpush1.bf16.msra.mxu0 %v4832
    %5025 = vmatprep.subr.bf16.mxu0 0
    %5026 = vmatpush1.bf16.msra.mxu0 %v4833
    %5027 = vmatprep.subr.bf16.mxu0 0
    %5028 = vmatpush1.bf16.msra.mxu0 %v4834
    %5029 = vmatprep.subr.bf16.mxu0 0
    %5030 = vmatpush1.bf16.msra.mxu0 %v4835
    %5031 = vmatprep.subr.bf16.mxu0 0
    %5032 = vmatpush1.bf16.msra.mxu0 %v4836
    %5033 = vmatprep.subr.bf16.mxu0 0
    %5034 = vmatpush1.bf16.msra.mxu0 %v4837
    %5035 = vmatprep.mubr.bf16.mxu0 %v4779
    %5036 = vmatmul.mubr.bf16.gmra.mrb[0].mxu0 %v4778
    %v5037 = vpop.f32.mrb[0].mxu0
    %v5038 = vadd.f32 %v4998, %v5037
    %v5039 = vpop.f32.mrb[0].mxu0
    %v5040 = vpop.f32.mrb[0].mxu0
    %v5041 = vpop.f32.mrb[0].mxu0
    %5042 = vdwg.mxu0
    %5043 = vmatprep.subr.bf16.mxu0 0
    %5044 = vmatpush1.bf16.msra.mxu0 %v4838
    %5045 = vmatprep.subr.bf16.mxu0 0
    %5046 = vmatpush1.bf16.msra.mxu0 %v4839
    %5047 = vmatprep.subr.bf16.mxu0 0
    %5048 = vmatpush1.bf16.msra.mxu0 %v4840
    %5049 = vmatprep.subr.bf16.mxu0 0
    %5050 = vmatpush1.bf16.msra.mxu0 %v4841
    %5051 = vmatprep.subr.bf16.mxu0 0
    %5052 = vmatpush1.bf16.msra.mxu0 %v4842
    %5053 = vmatprep.subr.bf16.mxu0 0
    %5054 = vmatpush1.bf16.msra.mxu0 %v4843
    %5055 = vmatprep.subr.bf16.mxu0 0
    %5056 = vmatpush1.bf16.msra.mxu0 %v4844
    %5057 = vmatprep.subr.bf16.mxu0 0
    %5058 = vmatpush1.bf16.msra.mxu0 %v4845
    %5059 = vmatprep.subr.bf16.mxu0 0
    %5060 = vmatpush1.bf16.msra.mxu0 %v4846
    %5061 = vmatprep.subr.bf16.mxu0 0
    %5062 = vmatpush1.bf16.msra.mxu0 %v4847
    %5063 = vmatprep.subr.bf16.mxu0 0
    %5064 = vmatpush1.bf16.msra.mxu0 %v4848
    %5065 = vmatprep.subr.bf16.mxu0 0
    %5066 = vmatpush1.bf16.msra.mxu0 %v4849
    %5067 = vmatprep.subr.bf16.mxu0 0
    %5068 = vmatpush1.bf16.msra.mxu0 %v4850
    %5069 = vmatprep.subr.bf16.mxu0 0
    %5070 = vmatpush1.bf16.msra.mxu0 %v4851
    %5071 = vmatprep.subr.bf16.mxu0 0
    %5072 = vmatpush1.bf16.msra.mxu0 %v4852
    %5073 = vmatprep.subr.bf16.mxu0 0
    %5074 = vmatpush1.bf16.msra.mxu0 %v4853
    %5075 = vmatprep.mubr.bf16.mxu0 %v4781
    %5076 = vmatmul.mubr.bf16.gmra.mrb[0].mxu0 %v4780
    %v5077 = vpop.f32.mrb[0].mxu0
    %v5078 = vadd.f32 %v5038, %v5077
    %v5079 = vpop.f32.mrb[0].mxu0
    %v5080 = vpop.f32.mrb[0].mxu0
    %v5081 = vpop.f32.mrb[0].mxu0
    %5082 = vdwg.mxu0
    %5083 = vmatprep.subr.bf16.mxu0 0
    %5084 = vmatpush1.bf16.msra.mxu0 %v4854
    %5085 = vmatprep.subr.bf16.mxu0 0
    %5086 = vmatpush1.bf16.msra.mxu0 %v4855
    %5087 = vmatprep.subr.bf16.mxu0 0
    %5088 = vmatpush1.bf16.msra.mxu0 %v4856
    %5089 = vmatprep.subr.bf16.mxu0 0
    %5090 = vmatpush1.bf16.msra.mxu0 %v4857
    %5091 = vmatprep.subr.bf16.mxu0 0
    %5092 = vmatpush1.bf16.msra.mxu0 %v4858
    %5093 = vmatprep.subr.bf16.mxu0 0
    %5094 = vmatpush1.bf16.msra.mxu0 %v4859
    %5095 = vmatprep.subr.bf16.mxu0 0
    %5096 = vmatpush1.bf16.msra.mxu0 %v4860
    %5097 = vmatprep.subr.bf16.mxu0 0
    %5098 = vmatpush1.bf16.msra.mxu0 %v4861
    %5099 = vmatprep.subr.bf16.mxu0 0
    %5100 = vmatpush1.bf16.msra.mxu0 %v4862
    %5101 = vmatprep.subr.bf16.mxu0 0
    %5102 = vmatpush1.bf16.msra.mxu0 %v4863
    %5103 = vmatprep.subr.bf16.mxu0 0
    %5104 = vmatpush1.bf16.msra.mxu0 %v4864
    %5105 = vmatprep.subr.bf16.mxu0 0
    %5106 = vmatpush1.bf16.msra.mxu0 %v4865
    %5107 = vmatprep.subr.bf16.mxu0 0
    %5108 = vmatpush1.bf16.msra.mxu0 %v4866
    %5109 = vmatprep.subr.bf16.mxu0 0
    %5110 = vmatpush1.bf16.msra.mxu0 %v4867
    %5111 = vmatprep.subr.bf16.mxu0 0
    %5112 = vmatpush1.bf16.msra.mxu0 %v4868
    %5113 = vmatprep.subr.bf16.mxu0 0
    %5114 = vmatpush1.bf16.msra.mxu0 %v4869
    %5115 = vmatprep.mubr.bf16.mxu0 %v4783
    %5116 = vmatmul.mubr.bf16.gmra.mrb[0].mxu0 %v4782
    %v5117 = vpop.f32.mrb[0].mxu0
    %v5118 = vadd.f32 %v5078, %v5117
    %v5119 = vpop.f32.mrb[0].mxu0
    %v5120 = vpop.f32.mrb[0].mxu0
    %v5121 = vpop.f32.mrb[0].mxu0
    %5122 = vdwg.mxu0
    %5123 = vmatprep.subr.bf16.mxu0 0
    %5124 = vmatpush1.bf16.msra.mxu0 %v4870
    %5125 = vmatprep.subr.bf16.mxu0 0
    %5126 = vmatpush1.bf16.msra.mxu0 %v4871
    %5127 = vmatprep.subr.bf16.mxu0 0
    %5128 = vmatpush1.bf16.msra.mxu0 %v4872
    %5129 = vmatprep.subr.bf16.mxu0 0
    %5130 = vmatpush1.bf16.msra.mxu0 %v4873
    %5131 = vmatprep.subr.bf16.mxu0 0
    %5132 = vmatpush1.bf16.msra.mxu0 %v4874
    %5133 = vmatprep.subr.bf16.mxu0 0
    %5134 = vmatpush1.bf16.msra.mxu0 %v4875
    %5135 = vmatprep.subr.bf16.mxu0 0
    %5136 = vmatpush1.bf16.msra.mxu0 %v4876
    %5137 = vmatprep.subr.bf16.mxu0 0
    %5138 = vmatpush1.bf16.msra.mxu0 %v4877
    %5139 = vmatprep.subr.bf16.mxu0 0
    %5140 = vmatpush1.bf16.msra.mxu0 %v4878
    %5141 = vmatprep.subr.bf16.mxu0 0
    %5142 = vmatpush1.bf16.msra.mxu0 %v4879
    %5143 = vmatprep.subr.bf16.mxu0 0
    %5144 = vmatpush1.bf16.msra.mxu0 %v4880
    %5145 = vmatprep.subr.bf16.mxu0 0
    %5146 = vmatpush1.bf16.msra.mxu0 %v4881
    %5147 = vmatprep.subr.bf16.mxu0 0
    %5148 = vmatpush1.bf16.msra.mxu0 %v4882
    %5149 = vmatprep.subr.bf16.mxu0 0
    %5150 = vmatpush1.bf16.msra.mxu0 %v4883
    %5151 = vmatprep.subr.bf16.mxu0 0
    %5152 = vmatpush1.bf16.msra.mxu0 %v4884
    %5153 = vmatprep.subr.bf16.mxu0 0
    %5154 = vmatpush1.bf16.msra.mxu0 %v4885
    %5155 = vmatprep.mubr.bf16.mxu0 %v4785
    %5156 = vmatmul.mubr.bf16.gmra.mrb[0].mxu0 %v4784
    %v5157 = vpop.f32.mrb[0].mxu0
    %v5158 = vadd.f32 %v5118, %v5157
    %v5159 = vpop.f32.mrb[0].mxu0
    %v5160 = vpop.f32.mrb[0].mxu0
    %v5161 = vpop.f32.mrb[0].mxu0
    %5162 = vdwg.mxu0
    %5163 = vmatprep.subr.bf16.mxu0 0
    %5164 = vmatpush1.bf16.msra.mxu0 %v4886
    %5165 = vmatprep.subr.bf16.mxu0 0
    %5166 = vmatpush1.bf16.msra.mxu0 %v4887
    %5167 = vmatprep.subr.bf16.mxu0 0
    %5168 = vmatpush1.bf16.msra.mxu0 %v4888
    %5169 = vmatprep.subr.bf16.mxu0 0
    %5170 = vmatpush1.bf16.msra.mxu0 %v4889
    %5171 = vmatprep.subr.bf16.mxu0 0
    %5172 = vmatpush1.bf16.msra.mxu0 %v4890
    %5173 = vmatprep.subr.bf16.mxu0 0
    %5174 = vmatpush1.bf16.msra.mxu0 %v4891
    %5175 = vmatprep.subr.bf16.mxu0 0
    %5176 = vmatpush1.bf16.msra.mxu0 %v4892
    %5177 = vmatprep.subr.bf16.mxu0 0
    %5178 = vmatpush1.bf16.msra.mxu0 %v4893
    %5179 = vmatprep.subr.bf16.mxu0 0
    %5180 = vmatpush1.bf16.msra.mxu0 %v4894
    %5181 = vmatprep.subr.bf16.mxu0 0
    %5182 = vmatpush1.bf16.msra.mxu0 %v4895
    %5183 = vmatprep.subr.bf16.mxu0 0
    %5184 = vmatpush1.bf16.msra.mxu0 %v4896
    %5185 = vmatprep.subr.bf16.mxu0 0
    %5186 = vmatpush1.bf16.msra.mxu0 %v4897
    %5187 = vmatprep.subr.bf16.mxu0 0
    %5188 = vmatpush1.bf16.msra.mxu0 %v4898
    %5189 = vmatprep.subr.bf16.mxu0 0
    %5190 = vmatpush1.bf16.msra.mxu0 %v4899
    %5191 = vmatprep.subr.bf16.mxu0 0
    %5192 = vmatpush1.bf16.msra.mxu0 %v4900
    %5193 = vmatprep.subr.bf16.mxu0 0
    %5194 = vmatpush1.bf16.msra.mxu0 %v4901
    %5195 = vmatprep.mubr.bf16.mxu0 %v4787
    %5196 = vmatmul.mubr.bf16.gmra.mrb[0].mxu0 %v4786
    %v5197 = vpop.f32.mrb[0].mxu0
    %v5198 = vadd.f32 %v5158, %v5197
    %v5199 = vpop.f32.mrb[0].mxu0
    %v5200 = vpop.f32.mrb[0].mxu0
    %v5201 = vpop.f32.mrb[0].mxu0
    %5202 = vdwg.mxu0
    %5203 = vmatprep.subr.bf16.mxu0 0
    %5204 = vmatpush1.bf16.msra.mxu0 %v4902
    %5205 = vmatprep.subr.bf16.mxu0 0
    %5206 = vmatpush1.bf16.msra.mxu0 %v4903
    %5207 = vmatprep.subr.bf16.mxu0 0
    %5208 = vmatpush1.bf16.msra.mxu0 %v4904
    %5209 = vmatprep.subr.bf16.mxu0 0
    %5210 = vmatpush1.bf16.msra.mxu0 %v4905
    %5211 = vmatprep.subr.bf16.mxu0 0
    %5212 = vmatpush1.bf16.msra.mxu0 %v4906
    %5213 = vmatprep.subr.bf16.mxu0 0
    %5214 = vmatpush1.bf16.msra.mxu0 %v4907
    %5215 = vmatprep.subr.bf16.mxu0 0
    %5216 = vmatpush1.bf16.msra.mxu0 %v4908
    %5217 = vmatprep.subr.bf16.mxu0 0
    %5218 = vmatpush1.bf16.msra.mxu0 %v4909
    %5219 = vmatprep.subr.bf16.mxu0 0
    %5220 = vmatpush1.bf16.msra.mxu0 %v4910
    %5221 = vmatprep.subr.bf16.mxu0 0
    %5222 = vmatpush1.bf16.msra.mxu0 %v4911
    %5223 = vmatprep.subr.bf16.mxu0 0
    %5224 = vmatpush1.bf16.msra.mxu0 %v4912
    %5225 = vmatprep.subr.bf16.mxu0 0
    %5226 = vmatpush1.bf16.msra.mxu0 %v4913
    %5227 = vmatprep.subr.bf16.mxu0 0
    %5228 = vmatpush1.bf16.msra.mxu0 %v4914
    %5229 = vmatprep.subr.bf16.mxu0 0
    %5230 = vmatpush1.bf16.msra.mxu0 %v4915
    %5231 = vmatprep.subr.bf16.mxu0 0
    %5232 = vmatpush1.bf16.msra.mxu0 %v4916
    %5233 = vmatprep.subr.bf16.mxu0 0
    %5234 = vmatpush1.bf16.msra.mxu0 %v4917
    %5235 = vmatprep.mubr.bf16.mxu0 %v4789
    %5236 = vmatmul.mubr.bf16.gmra.mrb[0].mxu0 %v4788
    %v5237 = vpop.f32.mrb[0].mxu0
    %v5238 = vadd.f32 %v5198, %v5237
    %v5239 = vpop.f32.mrb[0].mxu0
    %v5240 = vpop.f32.mrb[0].mxu0
    %v5241 = vpop.f32.mrb[0].mxu0
    %5242 = vdwg.mxu0
    %v5243 = vadd.f32 %v4269, %v5238
    %v5244 = vld [vmem:[%s3 + $0x1b] sm:$0x1]
    %v5245 = vld [vmem:[%s3 + $0x1c] sm:$0x1]
    %v5246 = vsel %vm2090, %v5243, 0.0
    %5247 = vadd.xlane.f32.xlu0 %v5246
    %v5248 = vpop.xlane.xlu0 %5247
    %v5249 = vmul.f32 %v5248, %v1036
    %v5250 = vsub.f32 %v5243, %v5249
    %v5251 = vmul.f32 %v5250, %v5250
    %v5252 = vsel %vm2090, %v5251, 0.0
    %5253 = vadd.xlane.f32.xlu0 %v5252
    %v5254 = vpop.xlane.xlu0 %5253
    %v5255 = vmul.f32 %v5254, %v1036
    %v5256 = vadd.f32 %v5255, 1e-05
    %v5257 = vrsqrt.pop %v5256
    %v5258 = vmul.f32 %v5250, %v5257
    %v5259 = vlaneseq
    %v5260 = vshrl.u32 %v5259, 7
    %v5261 = vsub.s32 0, %v5260
    %v5262 = vrot.slane %v5244, %v5261
    %v5263 = vmul.f32 %v5258, %v5262
    %v5264 = vlaneseq
    %v5265 = vshrl.u32 %v5264, 7
    %v5266 = vsub.s32 0, %v5265
    %v5267 = vrot.slane %v5245, %v5266
    %v5268 = vadd.f32 %v5263, %v5267
    %v5269 = vsel %vm2090, %v5268, 0.0
    %v5270 = vrot.slane %v5269, 4
    %v5271 = vadd.f32 %v5269, %v5270
    %v5272 = vrot.slane %v5271, 2
    %v5273 = vadd.f32 %v5271, %v5272
    %v5274 = vrot.slane %v5273, 1
    %v5275 = vadd.f32 %v5273, %v5274
    %v5276 = vmul.f32 %v5275, %v2122
    %v5277 = vadd.f32 %v5276, %v2123
    %vm5278 = vcmask 516096
    %5279 = vst.msk [vmem:[#allocation6] sm:$0x1] %vm5278, %v5277
    // Predicated region
    $region101: #{team_forward.1} parent=1 // pred_check
      _
    $region102: #{team_forward.1} parent=1 // pred_check_branch
      %5281 = sbr.rel (0) target = $region104
    $region103: #{team_forward.1} parent=1 // pred_region
      %s5283 = ssub.s32 16, 16
      %5284 = vsyncadd [#allocation7], %s5283
      %s5286 = sshll.u32 [#allocation6], 4
      %s5287 = int_to_ptr.vmem [resolvable:$true] %s5286
      %5289 = dma.vmem_to_hbm [thread:$0]  %s5287, 16, %s9, [#allocation7]
    $region104: #{team_forward.1} parent=1 // pred_fallthru
      _
    // Predicated region
    $region105: #{team_forward.1} parent=1 // pred_check
      _
    $region106: #{team_forward.1} parent=1 // pred_check_branch
      %5291 = sbr.rel (0) target = $region108
    $region107: #{team_forward.1} parent=1 // pred_region
      %5292 = dma.done [#allocation7], 16
    $region108: #{team_forward.1} parent=1 // pred_fallthru
      _
    %5293 = vsyncpa [#allocation7], 1
  %5294 = vsyncmov [#allocation4]
  %s5295 = vpop.sfrf %5294
  %p5296 = scmp.eq.s32.totalorder %s5295, 0
  %p5297 = pneg %p5296
  %5299 = shalt.err (%p5297)
  %s5300 = scalar_lea.sflag [#allocation4], 1
  %5301 = vsyncmov %s5300
  %s5302 = vpop.sfrf %5301
  %p5303 = scmp.eq.s32.totalorder %s5302, 0
  %p5304 = pneg %p5303
  %5306 = shalt.err (%p5304)

</llo_original>
